<compile_context>
chip_gen: v7x
topology: tpu7x:2x2x1
jax: 0.10.0
libtpu: 0.0.40
codegen_flags: <defaults>
</compile_context>

<pallas_src>
import functools
import numpy as np
import jax
import jax.numpy as jnp
from jax import lax
from jax.experimental import pallas as pl
from jax.experimental.pallas import tpu as pltpu

_LN_EPS = 1e-5
_VMEM_LIMIT = 48 * 1024 * 1024      # leaves headroom inside v7x's 64 MiB physical VMEM

_c2 = lambda *_: (0, 0)
_c3 = lambda *_: (0, 0, 0)


# ----------------------------- in-kernel math helpers ------------------------------

def _layer_norm(x, g, b):
    mu = jnp.mean(x, axis=-1, keepdims=True)
    var = jnp.mean(jnp.square(x - mu), axis=-1, keepdims=True)
    return (x - mu) * lax.rsqrt(var + _LN_EPS) * g + b


def _erf(x):
    # Abramowitz & Stegun 7.1.26 (|err| ~1.5e-7); the divide runs on the EUP slot.
    a1, a2, a3, a4, a5 = 0.254829592, -0.284496736, 1.421413741, -1.453152027, 1.061405429
    p = 0.3275911
    sgn = jnp.where(x >= 0.0, 1.0, -1.0)
    ax = jnp.abs(x)
    t = pl.reciprocal(1.0 + p * ax, approx=True)
    poly = ((((a5 * t + a4) * t + a3) * t + a2) * t + a1) * t
    return sgn * (1.0 - poly * jnp.exp(-ax * ax))


def _gelu(x):
    # exact GELU (nn.GELU default) via the erf approximation above
    return 0.5 * x * (1.0 + _erf(x * 0.7071067811865476))


def _row_tile(m, target=512):
    """Largest multiple-of-8 divisor of m that is <= target (full array if small)."""
    if m <= target:
        return m
    for t in range(target, 7, -1):
        if m % t == 0 and t % 8 == 0:
            return t
    return m


# ----------------------------- Pallas kernels ------------------------------

def _patch_embed_kernel(x_ref, w_ref, b_ref, g_ref, beta_ref, o_ref):
    # fused: patch matmul (bf16 MXU, f32 acc) -> +bias -> LayerNorm -> bf16 out
    h = jnp.dot(x_ref[...], w_ref[...], preferred_element_type=jnp.float32) + b_ref[...]
    o_ref[...] = _layer_norm(h, g_ref[...], beta_ref[...]).astype(o_ref.dtype)


def _swin_block_kernel(*refs, has_mask, has_final):
    # fused full Swin block on one chunk of windows (window-layout tokens):
    #   LN1 -> qkv -> head-batched attention (+rel bias, +shift mask) -> per-head-acc proj
    #   -> residual -> LN2 -> fc1 -> GELU -> fc2 -> residual [-> final model LayerNorm]
    (x_ref, g1_ref, b1_ref, qkvw_ref, qkvb_ref,
     projw_ref, projb_ref, rb_ref) = refs[:8]
    i = 8
    mask_ref = None
    if has_mask:
        mask_ref = refs[i]
        i += 1
    g2_ref, b2_ref, w1_ref, c1_ref, w2_ref, c2_ref = refs[i:i + 6]
    i += 6
    fg_ref = fb_ref = None
    if has_final:
        fg_ref, fb_ref = refs[i], refs[i + 1]
        i += 2
    o_ref = refs[-1]

    _, wpb, N, C = x_ref.shape          # wpb windows of N tokens each
    nH = rb_ref.shape[0]
    Dh = C // nH
    M = wpb * N

    xw = x_ref[0].astype(jnp.float32).reshape(M, C)

    # LN1 -> qkv (scale already folded into the q columns of qkv_w / qkv_b at init)
    h = _layer_norm(xw, g1_ref[...], b1_ref[...])
    qkv = jnp.dot(h.astype(jnp.bfloat16), qkvw_ref[...],
                  preferred_element_type=jnp.float32) + qkvb_ref[...]      # (M, 3C)

    # regroup heads into the leading batch dim -> one batched QK^T / PV einsum pair
    def heads(base):
        hs = [qkv[:, base + hd * Dh: base + (hd + 1) * Dh].reshape(wpb, N, Dh)
              for hd in range(nH)]
        return jnp.concatenate(hs, axis=0).astype(jnp.bfloat16)           # (nH*wpb, N, Dh)

    qh, kh, vh = heads(0), heads(C), heads(2 * C)

    s = jnp.einsum('bnd,bmd->bnm', qh, kh,
                   preferred_element_type=jnp.float32)                    # (nH*wpb, N, N)
    s = s.reshape(nH, wpb, N, N) + rb_ref[...][:, None]                   # + rel-pos bias
    if has_mask:
        s = s + mask_ref[...][None]                                       # + shift mask
    m = jnp.max(s, axis=-1, keepdims=True)
    p = jnp.exp(s - m)
    p = p * pl.reciprocal(jnp.sum(p, axis=-1, keepdims=True), approx=True)
    p = p.reshape(nH * wpb, N, N).astype(jnp.bfloat16)

    o = jnp.einsum('bnm,bmd->bnd', p, vh,
                   preferred_element_type=jnp.float32)                    # (nH*wpb, N, Dh)
    o = o.reshape(nH, M, Dh)

    # output projection accumulated per head (no head concat / lane re-pack)
    attn = projb_ref[...].astype(jnp.float32)
    for hd in range(nH):
        attn = attn + jnp.dot(o[hd].astype(jnp.bfloat16), projw_ref[hd],
                              preferred_element_type=jnp.float32)
    x1 = xw + attn                                                        # residual

    # LN2 -> fc1 -> GELU -> fc2 -> residual
    h2 = _layer_norm(x1, g2_ref[...], b2_ref[...])
    h2 = jnp.dot(h2.astype(jnp.bfloat16), w1_ref[...],
                 preferred_element_type=jnp.float32) + c1_ref[...]
    h2 = _gelu(h2)
    h2 = jnp.dot(h2.astype(jnp.bfloat16), w2_ref[...],
                 preferred_element_type=jnp.float32) + c2_ref[...]
    y = x1 + h2

    if has_final:                       # model-level final LayerNorm folded in
        y = _layer_norm(y, fg_ref[...], fb_ref[...])

    o_ref[0] = y.reshape(wpb, N, C).astype(o_ref.dtype)


def _merge_kernel(x_ref, g_ref, b_ref, w_ref, o_ref):
    # fused PatchMerging: in-kernel 2x2 gather -> LayerNorm -> bias-free reduction matmul.
    # x block (1, 1, 2, W/2, 2C): rows dh=0 / dh=1 of one output row; lanes are (dw, c).
    top = x_ref[0, 0, 0].astype(jnp.float32)          # (W/2, 2C)
    bot = x_ref[0, 0, 1].astype(jnp.float32)
    x4 = jnp.concatenate([top, bot], axis=-1)         # (W/2, 4C), lane order (dh, dw, c)
    h = _layer_norm(x4, g_ref[...], b_ref[...])
    o_ref[0, 0] = jnp.dot(h.astype(jnp.bfloat16), w_ref[...],
                          preferred_element_type=jnp.float32).astype(o_ref.dtype)


# ----------------------------- kernel wrappers ------------------------------

def patch_embed_forward(imgs, p, patch_size):
    # strided conv (kernel == stride) as a patch matmul fused with its LayerNorm
    B, Cin, H, W = imgs.shape
    ps = patch_size
    Hp, Wp = H // ps, W // ps
    x = imgs.astype(jnp.bfloat16).reshape(B, Cin, Hp, ps, Wp, ps)
    x = x.transpose(0, 2, 4, 1, 3, 5).reshape(B * Hp * Wp, Cin * ps * ps)
    M, K = x.shape
    E = p["proj_w"].shape[1]
    tm = _row_tile(M)
    out = pl.pallas_call(
        _patch_embed_kernel,
        out_shape=jax.ShapeDtypeStruct((M, E), jnp.bfloat16),
        grid=(M // tm,),
        in_specs=[
            pl.BlockSpec((tm, K), lambda i: (i, 0)),
            pl.BlockSpec((K, E), _c2),
            pl.BlockSpec((1, E), _c2),
            pl.BlockSpec((1, E), _c2),
            pl.BlockSpec((1, E), _c2),
        ],
        out_specs=pl.BlockSpec((tm, E), lambda i: (i, 0)),
        compiler_params=pltpu.CompilerParams(dimension_semantics=("parallel",),
                                             vmem_limit_bytes=_VMEM_LIMIT),
    )(x, p["proj_w"], p["proj_b"], p["norm_g"], p["norm_b"])
    return out.reshape(B, Hp, Wp, E)


def _swin_block_call(xw, p, wpb, final_ln):
    """xw: (B, nW, N, C) bf16 window-partitioned tokens; one grid step = wpb windows."""
    B, nW, N, C = xw.shape
    nH = p["rel_bias"].shape[0]
    Hd = p["fc1_w"].shape[1]
    has_mask = "attn_mask" in p
    has_final = final_ln is not None
    out_dtype = jnp.float32 if has_final else jnp.bfloat16

    kern = functools.partial(_swin_block_kernel, has_mask=has_mask, has_final=has_final)

    in_specs = [
        pl.BlockSpec((1, wpb, N, C), lambda b, r: (b, r, 0, 0)),
        pl.BlockSpec((1, C), _c2), pl.BlockSpec((1, C), _c2),          # norm1
        pl.BlockSpec((C, 3 * C), _c2), pl.BlockSpec((1, 3 * C), _c2),  # qkv (scale folded)
        pl.BlockSpec((nH, C // nH, C), _c3),                           # proj w, per head
        pl.BlockSpec((1, C), _c2),                                     # proj b
        pl.BlockSpec((nH, N, N), _c3),                                 # rel-pos bias
    ]
    inputs = [xw, p["norm1_g"], p["norm1_b"], p["qkv_w"], p["qkv_b"],
              p["proj_w"], p["proj_b"], p["rel_bias"]]
    if has_mask:
        in_specs.append(pl.BlockSpec((wpb, N, N), lambda b, r: (r, 0, 0)))
        inputs.append(p["attn_mask"])
    in_specs += [
        pl.BlockSpec((1, C), _c2), pl.BlockSpec((1, C), _c2),          # norm2
        pl.BlockSpec((C, Hd), _c2), pl.BlockSpec((1, Hd), _c2),        # fc1
        pl.BlockSpec((Hd, C), _c2), pl.BlockSpec((1, C), _c2),         # fc2
    ]
    inputs += [p["norm2_g"], p["norm2_b"], p["fc1_w"], p["fc1_b"], p["fc2_w"], p["fc2_b"]]
    if has_final:
        in_specs += [pl.BlockSpec((1, C), _c2), pl.BlockSpec((1, C), _c2)]
        inputs += list(final_ln)

    return pl.pallas_call(
        kern,
        out_shape=jax.ShapeDtypeStruct((B, nW, N, C), out_dtype),
        grid=(B, nW // wpb),
        in_specs=in_specs,
        out_specs=pl.BlockSpec((1, wpb, N, C), lambda b, r: (b, r, 0, 0)),
        compiler_params=pltpu.CompilerParams(
            dimension_semantics=("parallel", "parallel"),
            vmem_limit_bytes=_VMEM_LIMIT),
    )(*inputs)


def patch_merging_forward(x, p):
    """x: (B, H, W, C) bf16 -> (B, H/2, W/2, 2C) bf16; 2x2 gather done in-kernel."""
    B, H, W, C = x.shape
    # free metadata reshape: splits H into (H/2, 2) and merges (dw, c) into the lane dim
    x2 = x.reshape(B, H // 2, 2, W // 2, 2 * C)
    Co = p["red_w"].shape[1]
    return pl.pallas_call(
        _merge_kernel,
        out_shape=jax.ShapeDtypeStruct((B, H // 2, W // 2, Co), jnp.bfloat16),
        grid=(B, H // 2),
        in_specs=[
            pl.BlockSpec((1, 1, 2, W // 2, 2 * C), lambda b, r: (b, r, 0, 0, 0)),
            pl.BlockSpec((1, 4 * C), _c2),
            pl.BlockSpec((1, 4 * C), _c2),
            pl.BlockSpec((4 * C, Co), _c2),
        ],
        out_specs=pl.BlockSpec((1, 1, W // 2, Co), lambda b, r: (b, r, 0, 0)),
        compiler_params=pltpu.CompilerParams(
            dimension_semantics=("parallel", "parallel"),
            vmem_limit_bytes=_VMEM_LIMIT),
    )(x2, p["norm_g"], p["norm_b"], p["red_w"])


# ----------------------------- Swin helpers (host-side glue / constants) ------------------------------

def window_partition(x, ws):
    B, H, W, C = x.shape
    x = x.reshape(B, H // ws, ws, W // ws, ws, C).transpose(0, 1, 3, 2, 4, 5)
    return x.reshape(B, (H // ws) * (W // ws), ws * ws, C)


def window_reverse(xw, ws, H, W):
    B, _, _, C = xw.shape
    x = xw.reshape(B, H // ws, W // ws, ws, ws, C).transpose(0, 1, 3, 2, 4, 5)
    return x.reshape(B, H, W, C)


def relative_position_index(ws):
    coords = np.stack(np.meshgrid(np.arange(ws), np.arange(ws), indexing="ij"))
    coords_flat = coords.reshape(2, -1)
    rel = coords_flat[:, :, None] - coords_flat[:, None, :]
    rel = rel.transpose(1, 2, 0).astype(np.int64)
    rel[:, :, 0] += ws - 1
    rel[:, :, 1] += ws - 1
    rel[:, :, 0] *= 2 * ws - 1
    return rel.sum(-1).astype(np.int32)      # (ws*ws, ws*ws)


def shifted_window_attn_mask(H, W, ws, shift):
    N = ws * ws
    img_mask = np.zeros((1, H, W, 1), np.float32)
    cnt = 0
    for hs in (slice(0, -ws), slice(-ws, -shift), slice(-shift, None)):
        for wsl in (slice(0, -ws), slice(-ws, -shift), slice(-shift, None)):
            img_mask[:, hs, wsl, :] = cnt
            cnt += 1
    mw = img_mask.reshape(1, H // ws, ws, W // ws, ws, 1)
    mw = mw.transpose(0, 1, 3, 2, 4, 5).reshape(-1, N)
    attn_mask = mw[:, None, :] - mw[:, :, None]
    return np.where(attn_mask != 0, -100.0, 0.0).astype(np.float32)


# ----------------------------- Parameters ------------------------------

def init_swin_params(key, *, img_size, patch_size, in_chans, embed_dim,
                     depths, num_heads, window_size, mlp_ratio=4):
    keys = iter(jax.random.split(key, 256))
    bf16 = jnp.bfloat16

    def nrm(shape, std=0.02):
        return std * jax.random.normal(next(keys), shape, jnp.float32)

    def zeros(*s):
        return jnp.zeros(s, jnp.float32)

    def ones(*s):
        return jnp.ones(s, jnp.float32)

    params = {"patch_embed": dict(
        proj_w=nrm((in_chans * patch_size * patch_size, embed_dim)).astype(bf16),
        proj_b=zeros(1, embed_dim),
        norm_g=ones(1, embed_dim), norm_b=zeros(1, embed_dim))}

    patches_res = img_size // patch_size
    num_layers = len(depths)
    layers = []
    for li in range(num_layers):
        dim = embed_dim * (2 ** li)
        H = W = patches_res // (2 ** li)
        nh = num_heads[li]
        Dh = dim // nh
        blocks = []
        for bi in range(depths[li]):
            if min(H, W) <= window_size:
                ws_eff, shift = min(H, W), 0
            else:
                ws_eff = window_size
                shift = 0 if bi % 2 == 0 else window_size // 2
            hidden = dim * mlp_ratio
            N = ws_eff * ws_eff

            # hoisted (input-independent) gather of the relative-position bias: (nH, N, N)
            table = nrm(((2 * ws_eff - 1) ** 2, nh))
            rel_idx = relative_position_index(ws_eff)
            rel_bias = jnp.take(table, jnp.asarray(rel_idx.reshape(-1)), axis=0)
            rel_bias = rel_bias.reshape(N, N, nh).transpose(2, 0, 1)

            # fold the attention scale into the q columns of the qkv projection
            scale = float(Dh) ** -0.5
            scale_col = jnp.concatenate(
                [jnp.full((dim,), scale, jnp.float32), jnp.ones((2 * dim,), jnp.float32)])
            qkv_w = nrm((dim, 3 * dim)) * scale_col[None, :]
            qkv_b = zeros(1, 3 * dim) * scale_col[None, :]

            # output projection stored per head: rows of the (C, C) matrix grouped (head, Dh)
            proj_w = nrm((dim, dim)).reshape(nh, Dh, dim)

            blk = dict(
                window_size=ws_eff, shift_size=shift,
                norm1_g=ones(1, dim), norm1_b=zeros(1, dim),
                qkv_w=qkv_w.astype(bf16), qkv_b=qkv_b,
                proj_w=proj_w.astype(bf16), proj_b=zeros(1, dim),
                rel_bias=rel_bias,
                norm2_g=ones(1, dim), norm2_b=zeros(1, dim),
                fc1_w=nrm((dim, hidden)).astype(bf16), fc1_b=zeros(1, hidden),
                fc2_w=nrm((hidden, dim)).astype(bf16), fc2_b=zeros(1, dim),
            )
            if shift > 0:
                blk["attn_mask"] = jnp.asarray(shifted_window_attn_mask(H, W, ws_eff, shift))
            blocks.append(blk)

        downsample = None
        if li < num_layers - 1:
            # merge kernel consumes the 4C vector in (dh, dw, c) lane order; permute the
            # standard PyTorch [x0|x1|x2|x3] = [(0,0),(1,0),(0,1),(1,1)] row order accordingly.
            perm = np.concatenate([np.arange(0, dim), np.arange(2 * dim, 3 * dim),
                                   np.arange(dim, 2 * dim), np.arange(3 * dim, 4 * dim)])
            g4 = jnp.ones((4 * dim,), jnp.float32)
            b4 = jnp.zeros((4 * dim,), jnp.float32)
            red_w = nrm((4 * dim, 2 * dim))
            downsample = dict(
                norm_g=g4[perm].reshape(1, 4 * dim),
                norm_b=b4[perm].reshape(1, 4 * dim),
                red_w=red_w[perm, :].astype(bf16),       # Linear(4C, 2C, bias=False)
            )
        layers.append(dict(resolution=(H, W), num_heads=nh,
                           blocks=blocks, downsample=downsample))
    params["layers"] = layers
    final_dim = embed_dim * (2 ** (num_layers - 1))
    params["norm_g"] = ones(1, final_dim)
    params["norm_b"] = zeros(1, final_dim)
    return params


# ----------------------------- Forward ------------------------------

def swin_block_forward(x, p, final_ln=None):
    """x: (B, H, W, C) bf16 image-layout tokens; returns same layout."""
    B, H, W, C = x.shape
    ws, shift = p["window_size"], p["shift_size"]
    nWw = W // ws

    h = x
    if shift > 0:
        h = jnp.roll(h, shift=(-shift, -shift), axis=(1, 2))
    # TODO(synk): roll + window partition/reverse stay as (bf16) XLA glue; folding them into
    # BlockSpec index_maps needs sub-8-sublane (ws < 8) relayouts Mosaic can't express here.
    xw = window_partition(h, ws)                      # (B, nW, N, C)

    yw = _swin_block_call(xw, p, nWw, final_ln)       # fused attention + MLP (+ final LN)

    y = window_reverse(yw, ws, H, W)
    if shift > 0:
        y = jnp.roll(y, shift=(shift, shift), axis=(1, 2))
    return y


def swin_forward(params, imgs, *, patch_size):
    x = patch_embed_forward(imgs, params["patch_embed"], patch_size)   # (B, Hp, Wp, E) bf16
    # absolute_pos_embed is None (timm ape=False) -> skipped; pos_drop identity at inference.
    layers = params["layers"]
    for li, layer in enumerate(layers):
        blocks = layer["blocks"]
        for bi, blk in enumerate(blocks):
            is_last = (li == len(layers) - 1) and (bi == len(blocks) - 1)
            final_ln = (params["norm_g"], params["norm_b"]) if is_last else None
            x = swin_block_forward(x, blk, final_ln)
        if layer["downsample"] is not None:
            x = patch_merging_forward(x, layer["downsample"])
    B, H, W, C = x.shape
    return x.reshape(B, H * W, C)


def encoder_forward(params, batch, cfg):
    """Mirrors Encoder.forward: returns (output_dict, kwargs)."""
    fwd = jax.jit(functools.partial(swin_forward, params, patch_size=cfg["patch_size"]))
    encoder_outputs = fwd(batch["imgs"])
    output_dict = {"encoder_outputs": encoder_outputs}
    kwargs = {"patch_size": cfg["patch_size"] * 8}    # Encoder.get_patch_size for swin
    return output_dict, kwargs


# ----------------------------- Main ------------------------------

if __name__ == "__main__":
    cfg = dict(img_size=16, patch_size=2, in_chans=4, embed_dim=16,
               depths=(2, 2), num_heads=(2, 4), window_size=4)
    key = jax.random.PRNGKey(0)
    pkey, xkey = jax.random.split(key)
    params = init_swin_params(pkey, **cfg)

    imgs = jax.random.normal(
        xkey, (2, cfg["in_chans"], cfg["img_size"], cfg["img_size"]), jnp.float32)
    batch = {"imgs": imgs}

    output_dict, kwargs = encoder_forward(params, batch, cfg)
    out = jax.block_until_ready(output_dict["encoder_outputs"])
    assert out.shape == (2, 16, 32), out.shape
    assert bool(jnp.all(jnp.isfinite(out)))
    assert kwargs["patch_size"] == 16
    print("KERNEL_OK")
</pallas_src>

<mosaic_0001>
module attributes {stable_mosaic.version = 11 : i64} {
  func.func @_patch_embed_kernel(%arg0: i32, %arg1: memref<128x16xbf16, #tpu.memory_space<vmem>>, %arg2: memref<16x16xbf16, #tpu.memory_space<vmem>>, %arg3: memref<1x16xf32, #tpu.memory_space<vmem>>, %arg4: memref<1x16xf32, #tpu.memory_space<vmem>>, %arg5: memref<1x16xf32, #tpu.memory_space<vmem>>, %arg6: memref<128x16xbf16, #tpu.memory_space<vmem>>) attributes {dimension_semantics = [#tpu.dimension_semantics<parallel>], iteration_bounds = array<i64: 1>, scalar_prefetch = 0 : i64, scratch_operands = 0 : i64, tpu.core_type = #tpu.core_type<tc>, window_params = [{transform_indices = @transform_0, window_bounds = array<i64: 128, 16>}, {pipeline_mode = #tpu.pipeline_mode<synchronous>, transform_indices = @transform_1, window_bounds = array<i64: 16, 16>}, {pipeline_mode = #tpu.pipeline_mode<synchronous>, transform_indices = @transform_2, window_bounds = array<i64: 1, 16>}, {pipeline_mode = #tpu.pipeline_mode<synchronous>, transform_indices = @transform_3, window_bounds = array<i64: 1, 16>}, {pipeline_mode = #tpu.pipeline_mode<synchronous>, transform_indices = @transform_4, window_bounds = array<i64: 1, 16>}, {transform_indices = @transform_5, window_bounds = array<i64: 128, 16>}]} {
    %c0 = arith.constant 0 : index
    %c0_0 = arith.constant 0 : index
    %0 = vector.load %arg1[%c0, %c0_0] : memref<128x16xbf16, #tpu.memory_space<vmem>>, vector<128x16xbf16>
    %c0_1 = arith.constant 0 : index
    %c0_2 = arith.constant 0 : index
    %1 = vector.load %arg2[%c0_1, %c0_2] : memref<16x16xbf16, #tpu.memory_space<vmem>>, vector<16x16xbf16>
    %cst = arith.constant dense<0.000000e+00> : vector<128x16xf32>
    %2 = tpu.matmul %0, %1, %cst {dimension_numbers = #tpu.dot_dimension_numbers<[1], [0], [0], [1], [0, 0, 1, 1], [], []>} : vector<128x16xbf16>, vector<16x16xbf16>, vector<128x16xf32> -> vector<128x16xf32>
    %c0_3 = arith.constant 0 : index
    %c0_4 = arith.constant 0 : index
    %3 = vector.load %arg3[%c0_3, %c0_4] : memref<1x16xf32, #tpu.memory_space<vmem>>, vector<1x16xf32>
    %4 = vector.broadcast %3 : vector<1x16xf32> to vector<128x16xf32>
    %5 = arith.addf %2, %4 : vector<128x16xf32>
    %c0_5 = arith.constant 0 : index
    %c0_6 = arith.constant 0 : index
    %6 = vector.load %arg4[%c0_5, %c0_6] : memref<1x16xf32, #tpu.memory_space<vmem>>, vector<1x16xf32>
    %c0_7 = arith.constant 0 : index
    %c0_8 = arith.constant 0 : index
    %7 = vector.load %arg5[%c0_7, %c0_8] : memref<1x16xf32, #tpu.memory_space<vmem>>, vector<1x16xf32>
    %cst_9 = arith.constant dense<0.000000e+00> : vector<128xf32>
    %8 = vector.multi_reduction <add>, %5, %cst_9 [1] : vector<128x16xf32> to vector<128xf32>
    %9 = vector.shape_cast %8 : vector<128xf32> to vector<128x1xf32>
    %cst_10 = arith.constant 1.600000e+01 : f32
    %10 = vector.broadcast %cst_10 : f32 to vector<128x1xf32>
    %11 = arith.divf %9, %10 : vector<128x1xf32>
    %12 = vector.broadcast %11 : vector<128x1xf32> to vector<128x16xf32>
    %13 = arith.subf %5, %12 : vector<128x16xf32>
    %14 = arith.mulf %13, %13 : vector<128x16xf32>
    %cst_11 = arith.constant dense<0.000000e+00> : vector<128xf32>
    %15 = vector.multi_reduction <add>, %14, %cst_11 [1] : vector<128x16xf32> to vector<128xf32>
    %16 = vector.shape_cast %15 : vector<128xf32> to vector<128x1xf32>
    %cst_12 = arith.constant 1.600000e+01 : f32
    %17 = vector.broadcast %cst_12 : f32 to vector<128x1xf32>
    %18 = arith.divf %16, %17 : vector<128x1xf32>
    %19 = vector.broadcast %11 : vector<128x1xf32> to vector<128x16xf32>
    %20 = arith.subf %5, %19 : vector<128x16xf32>
    %cst_13 = arith.constant 9.99999974E-6 : f32
    %21 = vector.broadcast %cst_13 : f32 to vector<128x1xf32>
    %22 = arith.addf %18, %21 : vector<128x1xf32>
    %23 = math.rsqrt %22 : vector<128x1xf32>
    %24 = vector.broadcast %23 : vector<128x1xf32> to vector<128x16xf32>
    %25 = arith.mulf %20, %24 : vector<128x16xf32>
    %26 = vector.broadcast %6 : vector<1x16xf32> to vector<128x16xf32>
    %27 = arith.mulf %25, %26 : vector<128x16xf32>
    %28 = vector.broadcast %7 : vector<1x16xf32> to vector<128x16xf32>
    %29 = arith.addf %27, %28 : vector<128x16xf32>
    %30 = arith.truncf %29 : vector<128x16xf32> to vector<128x16xbf16>
    %c0_14 = arith.constant 0 : index
    %c0_15 = arith.constant 0 : index
    %31 = vector.load %arg6[%c0_14, %c0_15] : memref<128x16xbf16, #tpu.memory_space<vmem>>, vector<128x16xbf16>
    tpu.vector_store %arg6[%c0_14, %c0_15], %30 {strides = array<i32>} : memref<128x16xbf16, #tpu.memory_space<vmem>>, vector<128x16xbf16>,
    return
  }
  func.func @transform_0(%arg0: i32) -> (i32, i32) {
    %c0_i32 = arith.constant 0 : i32
    %c0_i32_0 = arith.constant 0 : i32
    return %arg0, %c0_i32 : i32, i32
  }
  func.func @transform_1(%arg0: i32) -> (i32, i32) {
    %c0_i32 = arith.constant 0 : i32
    %c0_i32_0 = arith.constant 0 : i32
    %c0_i32_1 = arith.constant 0 : i32
    return %c0_i32, %c0_i32_0 : i32, i32
  }
  func.func @transform_2(%arg0: i32) -> (i32, i32) {
    %c0_i32 = arith.constant 0 : i32
    %c0_i32_0 = arith.constant 0 : i32
    %c0_i32_1 = arith.constant 0 : i32
    return %c0_i32, %c0_i32_0 : i32, i32
  }
  func.func @transform_3(%arg0: i32) -> (i32, i32) {
    %c0_i32 = arith.constant 0 : i32
    %c0_i32_0 = arith.constant 0 : i32
    %c0_i32_1 = arith.constant 0 : i32
    return %c0_i32, %c0_i32_0 : i32, i32
  }
  func.func @transform_4(%arg0: i32) -> (i32, i32) {
    %c0_i32 = arith.constant 0 : i32
    %c0_i32_0 = arith.constant 0 : i32
    %c0_i32_1 = arith.constant 0 : i32
    return %c0_i32, %c0_i32_0 : i32, i32
  }
  func.func @transform_5(%arg0: i32) -> (i32, i32) {
    %c0_i32 = arith.constant 0 : i32
    %c0_i32_0 = arith.constant 0 : i32
    return %arg0, %c0_i32 : i32, i32
  }
}

module attributes {stable_mosaic.version = 11 : i64} {
  func.func @_swin_block_kernel(%arg0: i32, %arg1: i32, %arg2: memref<1x2x16x16xbf16, #tpu.memory_space<vmem>>, %arg3: memref<1x16xf32, #tpu.memory_space<vmem>>, %arg4: memref<1x16xf32, #tpu.memory_space<vmem>>, %arg5: memref<16x48xbf16, #tpu.memory_space<vmem>>, %arg6: memref<1x48xf32, #tpu.memory_space<vmem>>, %arg7: memref<2x8x16xbf16, #tpu.memory_space<vmem>>, %arg8: memref<1x16xf32, #tpu.memory_space<vmem>>, %arg9: memref<2x16x16xf32, #tpu.memory_space<vmem>>, %arg10: memref<1x16xf32, #tpu.memory_space<vmem>>, %arg11: memref<1x16xf32, #tpu.memory_space<vmem>>, %arg12: memref<16x64xbf16, #tpu.memory_space<vmem>>, %arg13: memref<1x64xf32, #tpu.memory_space<vmem>>, %arg14: memref<64x16xbf16, #tpu.memory_space<vmem>>, %arg15: memref<1x16xf32, #tpu.memory_space<vmem>>, %arg16: memref<1x2x16x16xbf16, #tpu.memory_space<vmem>>) attributes {dimension_semantics = [#tpu.dimension_semantics<parallel>, #tpu.dimension_semantics<parallel>], iteration_bounds = array<i64: 2, 2>, scalar_prefetch = 0 : i64, scratch_operands = 0 : i64, tpu.core_type = #tpu.core_type<tc>, window_params = [{transform_indices = @transform_0, window_bounds = array<i64: 1, 2, 16, 16>}, {pipeline_mode = #tpu.pipeline_mode<synchronous>, transform_indices = @transform_1, window_bounds = array<i64: 1, 16>}, {pipeline_mode = #tpu.pipeline_mode<synchronous>, transform_indices = @transform_2, window_bounds = array<i64: 1, 16>}, {pipeline_mode = #tpu.pipeline_mode<synchronous>, transform_indices = @transform_3, window_bounds = array<i64: 16, 48>}, {pipeline_mode = #tpu.pipeline_mode<synchronous>, transform_indices = @transform_4, window_bounds = array<i64: 1, 48>}, {pipeline_mode = #tpu.pipeline_mode<synchronous>, transform_indices = @transform_5, window_bounds = array<i64: 2, 8, 16>}, {pipeline_mode = #tpu.pipeline_mode<synchronous>, transform_indices = @transform_6, window_bounds = array<i64: 1, 16>}, {pipeline_mode = #tpu.pipeline_mode<synchronous>, transform_indices = @transform_7, window_bounds = array<i64: 2, 16, 16>}, {pipeline_mode = #tpu.pipeline_mode<synchronous>, transform_indices = @transform_8, window_bounds = array<i64: 1, 16>}, {pipeline_mode = #tpu.pipeline_mode<synchronous>, transform_indices = @transform_9, window_bounds = array<i64: 1, 16>}, {pipeline_mode = #tpu.pipeline_mode<synchronous>, transform_indices = @transform_10, window_bounds = array<i64: 16, 64>}, {pipeline_mode = #tpu.pipeline_mode<synchronous>, transform_indices = @transform_11, window_bounds = array<i64: 1, 64>}, {pipeline_mode = #tpu.pipeline_mode<synchronous>, transform_indices = @transform_12, window_bounds = array<i64: 64, 16>}, {pipeline_mode = #tpu.pipeline_mode<synchronous>, transform_indices = @transform_13, window_bounds = array<i64: 1, 16>}, {transform_indices = @transform_14, window_bounds = array<i64: 1, 2, 16, 16>}]} {
    %c0 = arith.constant 0 : index
    %c0_0 = arith.constant 0 : index
    %c0_1 = arith.constant 0 : index
    %c0_2 = arith.constant 0 : index
    %0 = vector.load %arg2[%c0, %c0_0, %c0_1, %c0_2] : memref<1x2x16x16xbf16, #tpu.memory_space<vmem>>, vector<1x2x16x16xbf16>
    %1 = vector.shape_cast %0 : vector<1x2x16x16xbf16> to vector<2x16x16xbf16>
    %2 = arith.extf %1 : vector<2x16x16xbf16> to vector<2x16x16xf32>
    %3 = vector.shape_cast %2 : vector<2x16x16xf32> to vector<32x16xf32>
    %c0_3 = arith.constant 0 : index
    %c0_4 = arith.constant 0 : index
    %4 = vector.load %arg3[%c0_3, %c0_4] : memref<1x16xf32, #tpu.memory_space<vmem>>, vector<1x16xf32>
    %c0_5 = arith.constant 0 : index
    %c0_6 = arith.constant 0 : index
    %5 = vector.load %arg4[%c0_5, %c0_6] : memref<1x16xf32, #tpu.memory_space<vmem>>, vector<1x16xf32>
    %cst = arith.constant dense<0.000000e+00> : vector<32xf32>
    %6 = vector.multi_reduction <add>, %3, %cst [1] : vector<32x16xf32> to vector<32xf32>
    %7 = vector.shape_cast %6 : vector<32xf32> to vector<32x1xf32>
    %cst_7 = arith.constant 1.600000e+01 : f32
    %8 = vector.broadcast %cst_7 : f32 to vector<32x1xf32>
    %9 = arith.divf %7, %8 : vector<32x1xf32>
    %10 = vector.broadcast %9 : vector<32x1xf32> to vector<32x16xf32>
    %11 = arith.subf %3, %10 : vector<32x16xf32>
    %12 = arith.mulf %11, %11 : vector<32x16xf32>
    %cst_8 = arith.constant dense<0.000000e+00> : vector<32xf32>
    %13 = vector.multi_reduction <add>, %12, %cst_8 [1] : vector<32x16xf32> to vector<32xf32>
    %14 = vector.shape_cast %13 : vector<32xf32> to vector<32x1xf32>
    %cst_9 = arith.constant 1.600000e+01 : f32
    %15 = vector.broadcast %cst_9 : f32 to vector<32x1xf32>
    %16 = arith.divf %14, %15 : vector<32x1xf32>
    %17 = vector.broadcast %9 : vector<32x1xf32> to vector<32x16xf32>
    %18 = arith.subf %3, %17 : vector<32x16xf32>
    %cst_10 = arith.constant 9.99999974E-6 : f32
    %19 = vector.broadcast %cst_10 : f32 to vector<32x1xf32>
    %20 = arith.addf %16, %19 : vector<32x1xf32>
    %21 = math.rsqrt %20 : vector<32x1xf32>
    %22 = vector.broadcast %21 : vector<32x1xf32> to vector<32x16xf32>
    %23 = arith.mulf %18, %22 : vector<32x16xf32>
    %24 = vector.broadcast %4 : vector<1x16xf32> to vector<32x16xf32>
    %25 = arith.mulf %23, %24 : vector<32x16xf32>
    %26 = vector.broadcast %5 : vector<1x16xf32> to vector<32x16xf32>
    %27 = arith.addf %25, %26 : vector<32x16xf32>
    %28 = arith.truncf %27 : vector<32x16xf32> to vector<32x16xbf16>
    %c0_11 = arith.constant 0 : index
    %c0_12 = arith.constant 0 : index
    %29 = vector.load %arg5[%c0_11, %c0_12] : memref<16x48xbf16, #tpu.memory_space<vmem>>, vector<16x48xbf16>
    %cst_13 = arith.constant dense<0.000000e+00> : vector<32x48xf32>
    %30 = tpu.matmul %28, %29, %cst_13 {dimension_numbers = #tpu.dot_dimension_numbers<[1], [0], [0], [1], [0, 0, 1, 1], [], []>} : vector<32x16xbf16>, vector<16x48xbf16>, vector<32x48xf32> -> vector<32x48xf32>
    %c0_14 = arith.constant 0 : index
    %c0_15 = arith.constant 0 : index
    %31 = vector.load %arg6[%c0_14, %c0_15] : memref<1x48xf32, #tpu.memory_space<vmem>>, vector<1x48xf32>
    %32 = vector.broadcast %31 : vector<1x48xf32> to vector<32x48xf32>
    %33 = arith.addf %30, %32 : vector<32x48xf32>
    %34 = vector.extract_strided_slice %33 {offsets = [0, 0], sizes = [32, 8], strides = [1, 1]} : vector<32x48xf32> to vector<32x8xf32>
    %35 = vector.shape_cast %34 : vector<32x8xf32> to vector<2x16x8xf32>
    %36 = vector.extract_strided_slice %33 {offsets = [0, 8], sizes = [32, 8], strides = [1, 1]} : vector<32x48xf32> to vector<32x8xf32>
    %37 = vector.shape_cast %36 : vector<32x8xf32> to vector<2x16x8xf32>
    %38 = tpu.concatenate %35, %37 in 0 : vector<2x16x8xf32>, vector<2x16x8xf32> -> vector<4x16x8xf32>
    %39 = arith.truncf %38 : vector<4x16x8xf32> to vector<4x16x8xbf16>
    %40 = vector.extract_strided_slice %33 {offsets = [0, 16], sizes = [32, 8], strides = [1, 1]} : vector<32x48xf32> to vector<32x8xf32>
    %41 = vector.shape_cast %40 : vector<32x8xf32> to vector<2x16x8xf32>
    %42 = vector.extract_strided_slice %33 {offsets = [0, 24], sizes = [32, 8], strides = [1, 1]} : vector<32x48xf32> to vector<32x8xf32>
    %43 = vector.shape_cast %42 : vector<32x8xf32> to vector<2x16x8xf32>
    %44 = tpu.concatenate %41, %43 in 0 : vector<2x16x8xf32>, vector<2x16x8xf32> -> vector<4x16x8xf32>
    %45 = arith.truncf %44 : vector<4x16x8xf32> to vector<4x16x8xbf16>
    %46 = vector.extract_strided_slice %33 {offsets = [0, 32], sizes = [32, 8], strides = [1, 1]} : vector<32x48xf32> to vector<32x8xf32>
    %47 = vector.shape_cast %46 : vector<32x8xf32> to vector<2x16x8xf32>
    %48 = vector.extract_strided_slice %33 {offsets = [0, 40], sizes = [32, 8], strides = [1, 1]} : vector<32x48xf32> to vector<32x8xf32>
    %49 = vector.shape_cast %48 : vector<32x8xf32> to vector<2x16x8xf32>
    %50 = tpu.concatenate %47, %49 in 0 : vector<2x16x8xf32>, vector<2x16x8xf32> -> vector<4x16x8xf32>
    %51 = arith.truncf %50 : vector<4x16x8xf32> to vector<4x16x8xbf16>
    "tpu.trace_start"() <{level = 10 : i32, message = "bnd,bmd->bnm"}> : () -> ()
    %cst_16 = arith.constant dense<0.000000e+00> : vector<4x16x16xf32>
    %52 = tpu.matmul %39, %45, %cst_16 {dimension_numbers = #tpu.dot_dimension_numbers<[2], [2], [1], [1], [0, 0, 0, 1, 1, 1], [0], [0]>} : vector<4x16x8xbf16>, vector<4x16x8xbf16>, vector<4x16x16xf32> -> vector<4x16x16xf32>
    "tpu.trace_stop"() : () -> ()
    %53 = vector.shape_cast %52 : vector<4x16x16xf32> to vector<2x2x16x16xf32>
    %c0_17 = arith.constant 0 : index
    %c0_18 = arith.constant 0 : index
    %c0_19 = arith.constant 0 : index
    %54 = vector.load %arg9[%c0_17, %c0_18, %c0_19] : memref<2x16x16xf32, #tpu.memory_space<vmem>>, vector<2x16x16xf32>
    %55 = vector.shape_cast %54 : vector<2x16x16xf32> to vector<2x1x16x16xf32>
    %56 = vector.broadcast %55 : vector<2x1x16x16xf32> to vector<2x2x16x16xf32>
    %57 = arith.addf %53, %56 : vector<2x2x16x16xf32>
    %cst_20 = arith.constant dense<0xFF800000> : vector<2x2x16xf32>
    %58 = vector.multi_reduction <maximumf>, %57, %cst_20 [3] : vector<2x2x16x16xf32> to vector<2x2x16xf32>
    %59 = vector.shape_cast %58 : vector<2x2x16xf32> to vector<2x2x16x1xf32>
    %60 = vector.broadcast %59 : vector<2x2x16x1xf32> to vector<2x2x16x16xf32>
    %61 = arith.subf %57, %60 : vector<2x2x16x16xf32>
    %62 = math.exp %61 : vector<2x2x16x16xf32>
    %cst_21 = arith.constant dense<0.000000e+00> : vector<2x2x16xf32>
    %63 = vector.multi_reduction <add>, %62, %cst_21 [3] : vector<2x2x16x16xf32> to vector<2x2x16xf32>
    %64 = vector.shape_cast %63 : vector<2x2x16xf32> to vector<2x2x16x1xf32>
    %65 = tpu.reciprocal %64 {approx = true} : vector<2x2x16x1xf32> -> vector<2x2x16x1xf32>
    %66 = vector.broadcast %65 : vector<2x2x16x1xf32> to vector<2x2x16x16xf32>
    %67 = arith.mulf %62, %66 : vector<2x2x16x16xf32>
    %68 = vector.shape_cast %67 : vector<2x2x16x16xf32> to vector<4x16x16xf32>
    %69 = arith.truncf %68 : vector<4x16x16xf32> to vector<4x16x16xbf16>
    "tpu.trace_start"() <{level = 10 : i32, message = "bnm,bmd->bnd"}> : () -> ()
    %cst_22 = arith.constant dense<0.000000e+00> : vector<4x16x8xf32>
    %70 = tpu.matmul %69, %51, %cst_22 {dimension_numbers = #tpu.dot_dimension_numbers<[2], [1], [1], [2], [0, 0, 0, 1, 1, 2], [0], [0]>} : vector<4x16x16xbf16>, vector<4x16x8xbf16>, vector<4x16x8xf32> -> vector<4x16x8xf32>
    "tpu.trace_stop"() : () -> ()
    %71 = vector.shape_cast %70 : vector<4x16x8xf32> to vector<2x32x8xf32>
    %c0_23 = arith.constant 0 : index
    %c0_24 = arith.constant 0 : index
    %72 = vector.load %arg8[%c0_23, %c0_24] : memref<1x16xf32, #tpu.memory_space<vmem>>, vector<1x16xf32>
    %73 = vector.extract_strided_slice %71 {offsets = [0, 0, 0], sizes = [1, 32, 8], strides = [1, 1, 1]} : vector<2x32x8xf32> to vector<1x32x8xf32>
    %74 = vector.shape_cast %73 : vector<1x32x8xf32> to vector<32x8xf32>
    %75 = arith.truncf %74 : vector<32x8xf32> to vector<32x8xbf16>
    %c0_25 = arith.constant 0 : index
    %c0_26 = arith.constant 0 : index
    %c0_27 = arith.constant 0 : index
    %76 = vector.load %arg7[%c0_25, %c0_26, %c0_27] : memref<2x8x16xbf16, #tpu.memory_space<vmem>>, vector<1x8x16xbf16>
    %77 = vector.shape_cast %76 : vector<1x8x16xbf16> to vector<8x16xbf16>
    %cst_28 = arith.constant dense<0.000000e+00> : vector<32x16xf32>
    %78 = tpu.matmul %75, %77, %cst_28 {dimension_numbers = #tpu.dot_dimension_numbers<[1], [0], [0], [1], [0, 0, 1, 1], [], []>} : vector<32x8xbf16>, vector<8x16xbf16>, vector<32x16xf32> -> vector<32x16xf32>
    %79 = vector.broadcast %72 : vector<1x16xf32> to vector<32x16xf32>
    %80 = arith.addf %79, %78 : vector<32x16xf32>
    %81 = vector.extract_strided_slice %71 {offsets = [1, 0, 0], sizes = [1, 32, 8], strides = [1, 1, 1]} : vector<2x32x8xf32> to vector<1x32x8xf32>
    %82 = vector.shape_cast %81 : vector<1x32x8xf32> to vector<32x8xf32>
    %83 = arith.truncf %82 : vector<32x8xf32> to vector<32x8xbf16>
    %c1 = arith.constant 1 : index
    %c0_29 = arith.constant 0 : index
    %c0_30 = arith.constant 0 : index
    %84 = vector.load %arg7[%c1, %c0_29, %c0_30] : memref<2x8x16xbf16, #tpu.memory_space<vmem>>, vector<1x8x16xbf16>
    %85 = vector.shape_cast %84 : vector<1x8x16xbf16> to vector<8x16xbf16>
    %cst_31 = arith.constant dense<0.000000e+00> : vector<32x16xf32>
    %86 = tpu.matmul %83, %85, %cst_31 {dimension_numbers = #tpu.dot_dimension_numbers<[1], [0], [0], [1], [0, 0, 1, 1], [], []>} : vector<32x8xbf16>, vector<8x16xbf16>, vector<32x16xf32> -> vector<32x16xf32>
    %87 = arith.addf %80, %86 : vector<32x16xf32>
    %88 = arith.addf %3, %87 : vector<32x16xf32>
    %c0_32 = arith.constant 0 : index
    %c0_33 = arith.constant 0 : index
    %89 = vector.load %arg10[%c0_32, %c0_33] : memref<1x16xf32, #tpu.memory_space<vmem>>, vector<1x16xf32>
    %c0_34 = arith.constant 0 : index
    %c0_35 = arith.constant 0 : index
    %90 = vector.load %arg11[%c0_34, %c0_35] : memref<1x16xf32, #tpu.memory_space<vmem>>, vector<1x16xf32>
    %cst_36 = arith.constant dense<0.000000e+00> : vector<32xf32>
    %91 = vector.multi_reduction <add>, %88, %cst_36 [1] : vector<32x16xf32> to vector<32xf32>
    %92 = vector.shape_cast %91 : vector<32xf32> to vector<32x1xf32>
    %cst_37 = arith.constant 1.600000e+01 : f32
    %93 = vector.broadcast %cst_37 : f32 to vector<32x1xf32>
    %94 = arith.divf %92, %93 : vector<32x1xf32>
    %95 = vector.broadcast %94 : vector<32x1xf32> to vector<32x16xf32>
    %96 = arith.subf %88, %95 : vector<32x16xf32>
    %97 = arith.mulf %96, %96 : vector<32x16xf32>
    %cst_38 = arith.constant dense<0.000000e+00> : vector<32xf32>
    %98 = vector.multi_reduction <add>, %97, %cst_38 [1] : vector<32x16xf32> to vector<32xf32>
    %99 = vector.shape_cast %98 : vector<32xf32> to vector<32x1xf32>
    %cst_39 = arith.constant 1.600000e+01 : f32
    %100 = vector.broadcast %cst_39 : f32 to vector<32x1xf32>
    %101 = arith.divf %99, %100 : vector<32x1xf32>
    %102 = vector.broadcast %94 : vector<32x1xf32> to vector<32x16xf32>
    %103 = arith.subf %88, %102 : vector<32x16xf32>
    %cst_40 = arith.constant 9.99999974E-6 : f32
    %104 = vector.broadcast %cst_40 : f32 to vector<32x1xf32>
    %105 = arith.addf %101, %104 : vector<32x1xf32>
    %106 = math.rsqrt %105 : vector<32x1xf32>
    %107 = vector.broadcast %106 : vector<32x1xf32> to vector<32x16xf32>
    %108 = arith.mulf %103, %107 : vector<32x16xf32>
    %109 = vector.broadcast %89 : vector<1x16xf32> to vector<32x16xf32>
    %110 = arith.mulf %108, %109 : vector<32x16xf32>
    %111 = vector.broadcast %90 : vector<1x16xf32> to vector<32x16xf32>
    %112 = arith.addf %110, %111 : vector<32x16xf32>
    %113 = arith.truncf %112 : vector<32x16xf32> to vector<32x16xbf16>
    %c0_41 = arith.constant 0 : index
    %c0_42 = arith.constant 0 : index
    %114 = vector.load %arg12[%c0_41, %c0_42] : memref<16x64xbf16, #tpu.memory_space<vmem>>, vector<16x64xbf16>
    %cst_43 = arith.constant dense<0.000000e+00> : vector<32x64xf32>
    %115 = tpu.matmul %113, %114, %cst_43 {dimension_numbers = #tpu.dot_dimension_numbers<[1], [0], [0], [1], [0, 0, 1, 1], [], []>} : vector<32x16xbf16>, vector<16x64xbf16>, vector<32x64xf32> -> vector<32x64xf32>
    %c0_44 = arith.constant 0 : index
    %c0_45 = arith.constant 0 : index
    %116 = vector.load %arg13[%c0_44, %c0_45] : memref<1x64xf32, #tpu.memory_space<vmem>>, vector<1x64xf32>
    %117 = vector.broadcast %116 : vector<1x64xf32> to vector<32x64xf32>
    %118 = arith.addf %115, %117 : vector<32x64xf32>
    %cst_46 = arith.constant 5.000000e-01 : f32
    %119 = vector.broadcast %cst_46 : f32 to vector<32x64xf32>
    %120 = arith.mulf %119, %118 : vector<32x64xf32>
    %cst_47 = arith.constant 0.707106769 : f32
    %121 = vector.broadcast %cst_47 : f32 to vector<32x64xf32>
    %122 = arith.mulf %118, %121 : vector<32x64xf32>
    %cst_48 = arith.constant 0.000000e+00 : f32
    %123 = vector.broadcast %cst_48 : f32 to vector<32x64xf32>
    %124 = arith.cmpf oge, %122, %123 : vector<32x64xf32>
    %cst_49 = arith.constant 1.000000e+00 : f32
    %cst_50 = arith.constant -1.000000e+00 : f32
    %125 = vector.broadcast %cst_49 : f32 to vector<32x64xf32>
    %126 = vector.broadcast %cst_50 : f32 to vector<32x64xf32>
    %127 = arith.select %124, %125, %126 : vector<32x64xi1>, vector<32x64xf32>
    %128 = math.absf %122 : vector<32x64xf32>
    %cst_51 = arith.constant 0.327591091 : f32
    %129 = vector.broadcast %cst_51 : f32 to vector<32x64xf32>
    %130 = arith.mulf %129, %128 : vector<32x64xf32>
    %cst_52 = arith.constant 1.000000e+00 : f32
    %131 = vector.broadcast %cst_52 : f32 to vector<32x64xf32>
    %132 = arith.addf %131, %130 : vector<32x64xf32>
    %133 = tpu.reciprocal %132 {approx = true} : vector<32x64xf32> -> vector<32x64xf32>
    %cst_53 = arith.constant 1.06140542 : f32
    %134 = vector.broadcast %cst_53 : f32 to vector<32x64xf32>
    %135 = arith.mulf %134, %133 : vector<32x64xf32>
    %cst_54 = arith.constant -1.45315206 : f32
    %136 = vector.broadcast %cst_54 : f32 to vector<32x64xf32>
    %137 = arith.addf %135, %136 : vector<32x64xf32>
    %138 = arith.mulf %137, %133 : vector<32x64xf32>
    %cst_55 = arith.constant 1.42141378 : f32
    %139 = vector.broadcast %cst_55 : f32 to vector<32x64xf32>
    %140 = arith.addf %138, %139 : vector<32x64xf32>
    %141 = arith.mulf %140, %133 : vector<32x64xf32>
    %cst_56 = arith.constant -0.284496725 : f32
    %142 = vector.broadcast %cst_56 : f32 to vector<32x64xf32>
    %143 = arith.addf %141, %142 : vector<32x64xf32>
    %144 = arith.mulf %143, %133 : vector<32x64xf32>
    %cst_57 = arith.constant 0.254829586 : f32
    %145 = vector.broadcast %cst_57 : f32 to vector<32x64xf32>
    %146 = arith.addf %144, %145 : vector<32x64xf32>
    %147 = arith.mulf %146, %133 : vector<32x64xf32>
    %cst_58 = arith.constant 0.000000e+00 : f32
    %148 = vector.broadcast %cst_58 : f32 to vector<32x64xf32>
    %149 = arith.subf %148, %128 : vector<32x64xf32>
    %150 = arith.mulf %149, %128 : vector<32x64xf32>
    %151 = math.exp %150 : vector<32x64xf32>
    %152 = arith.mulf %147, %151 : vector<32x64xf32>
    %cst_59 = arith.constant 1.000000e+00 : f32
    %153 = vector.broadcast %cst_59 : f32 to vector<32x64xf32>
    %154 = arith.subf %153, %152 : vector<32x64xf32>
    %155 = arith.mulf %127, %154 : vector<32x64xf32>
    %cst_60 = arith.constant 1.000000e+00 : f32
    %156 = vector.broadcast %cst_60 : f32 to vector<32x64xf32>
    %157 = arith.addf %156, %155 : vector<32x64xf32>
    %158 = arith.mulf %120, %157 : vector<32x64xf32>
    %159 = arith.truncf %158 : vector<32x64xf32> to vector<32x64xbf16>
    %c0_61 = arith.constant 0 : index
    %c0_62 = arith.constant 0 : index
    %160 = vector.load %arg14[%c0_61, %c0_62] : memref<64x16xbf16, #tpu.memory_space<vmem>>, vector<64x16xbf16>
    %cst_63 = arith.constant dense<0.000000e+00> : vector<32x16xf32>
    %161 = tpu.matmul %159, %160, %cst_63 {dimension_numbers = #tpu.dot_dimension_numbers<[1], [0], [0], [1], [0, 0, 1, 1], [], []>} : vector<32x64xbf16>, vector<64x16xbf16>, vector<32x16xf32> -> vector<32x16xf32>
    %c0_64 = arith.constant 0 : index
    %c0_65 = arith.constant 0 : index
    %162 = vector.load %arg15[%c0_64, %c0_65] : memref<1x16xf32, #tpu.memory_space<vmem>>, vector<1x16xf32>
    %163 = vector.broadcast %162 : vector<1x16xf32> to vector<32x16xf32>
    %164 = arith.addf %161, %163 : vector<32x16xf32>
    %165 = arith.addf %88, %164 : vector<32x16xf32>
    %166 = vector.shape_cast %165 : vector<32x16xf32> to vector<2x16x16xf32>
    %167 = arith.truncf %166 : vector<2x16x16xf32> to vector<2x16x16xbf16>
    %c0_66 = arith.constant 0 : index
    %c0_67 = arith.constant 0 : index
    %c0_68 = arith.constant 0 : index
    %c0_69 = arith.constant 0 : index
    %168 = vector.load %arg16[%c0_66, %c0_67, %c0_68, %c0_69] : memref<1x2x16x16xbf16, #tpu.memory_space<vmem>>, vector<1x2x16x16xbf16>
    %169 = vector.shape_cast %168 : vector<1x2x16x16xbf16> to vector<2x16x16xbf16>
    %170 = vector.shape_cast %167 : vector<2x16x16xbf16> to vector<1x2x16x16xbf16>
    tpu.vector_store %arg16[%c0_66, %c0_67, %c0_68, %c0_69], %170 {strides = array<i32>} : memref<1x2x16x16xbf16, #tpu.memory_space<vmem>>, vector<1x2x16x16xbf16>,
    return
  }
  func.func @transform_0(%arg0: i32, %arg1: i32) -> (i32, i32, i32, i32) {
    %c0_i32 = arith.constant 0 : i32
    %c0_i32_0 = arith.constant 0 : i32
    %c0_i32_1 = arith.constant 0 : i32
    return %arg0, %arg1, %c0_i32, %c0_i32_0 : i32, i32, i32, i32
  }
  func.func @transform_1(%arg0: i32, %arg1: i32) -> (i32, i32) {
    %c0_i32 = arith.constant 0 : i32
    %c0_i32_0 = arith.constant 0 : i32
    %c0_i32_1 = arith.constant 0 : i32
    return %c0_i32, %c0_i32_0 : i32, i32
  }
  func.func @transform_2(%arg0: i32, %arg1: i32) -> (i32, i32) {
    %c0_i32 = arith.constant 0 : i32
    %c0_i32_0 = arith.constant 0 : i32
    %c0_i32_1 = arith.constant 0 : i32
    return %c0_i32, %c0_i32_0 : i32, i32
  }
  func.func @transform_3(%arg0: i32, %arg1: i32) -> (i32, i32) {
    %c0_i32 = arith.constant 0 : i32
    %c0_i32_0 = arith.constant 0 : i32
    %c0_i32_1 = arith.constant 0 : i32
    return %c0_i32, %c0_i32_0 : i32, i32
  }
  func.func @transform_4(%arg0: i32, %arg1: i32) -> (i32, i32) {
    %c0_i32 = arith.constant 0 : i32
    %c0_i32_0 = arith.constant 0 : i32
    %c0_i32_1 = arith.constant 0 : i32
    return %c0_i32, %c0_i32_0 : i32, i32
  }
  func.func @transform_5(%arg0: i32, %arg1: i32) -> (i32, i32, i32) {
    %c0_i32 = arith.constant 0 : i32
    %c0_i32_0 = arith.constant 0 : i32
    %c0_i32_1 = arith.constant 0 : i32
    %c0_i32_2 = arith.constant 0 : i32
    return %c0_i32, %c0_i32_0, %c0_i32_1 : i32, i32, i32
  }
  func.func @transform_6(%arg0: i32, %arg1: i32) -> (i32, i32) {
    %c0_i32 = arith.constant 0 : i32
    %c0_i32_0 = arith.constant 0 : i32
    %c0_i32_1 = arith.constant 0 : i32
    return %c0_i32, %c0_i32_0 : i32, i32
  }
  func.func @transform_7(%arg0: i32, %arg1: i32) -> (i32, i32, i32) {
    %c0_i32 = arith.constant 0 : i32
    %c0_i32_0 = arith.constant 0 : i32
    %c0_i32_1 = arith.constant 0 : i32
    %c0_i32_2 = arith.constant 0 : i32
    return %c0_i32, %c0_i32_0, %c0_i32_1 : i32, i32, i32
  }
  func.func @transform_8(%arg0: i32, %arg1: i32) -> (i32, i32) {
    %c0_i32 = arith.constant 0 : i32
    %c0_i32_0 = arith.constant 0 : i32
    %c0_i32_1 = arith.constant 0 : i32
    return %c0_i32, %c0_i32_0 : i32, i32
  }
  func.func @transform_9(%arg0: i32, %arg1: i32) -> (i32, i32) {
    %c0_i32 = arith.constant 0 : i32
    %c0_i32_0 = arith.constant 0 : i32
    %c0_i32_1 = arith.constant 0 : i32
    return %c0_i32, %c0_i32_0 : i32, i32
  }
  func.func @transform_10(%arg0: i32, %arg1: i32) -> (i32, i32) {
    %c0_i32 = arith.constant 0 : i32
    %c0_i32_0 = arith.constant 0 : i32
    %c0_i32_1 = arith.constant 0 : i32
    return %c0_i32, %c0_i32_0 : i32, i32
  }
  func.func @transform_11(%arg0: i32, %arg1: i32) -> (i32, i32) {
    %c0_i32 = arith.constant 0 : i32
    %c0_i32_0 = arith.constant 0 : i32
    %c0_i32_1 = arith.constant 0 : i32
    return %c0_i32, %c0_i32_0 : i32, i32
  }
  func.func @transform_12(%arg0: i32, %arg1: i32) -> (i32, i32) {
    %c0_i32 = arith.constant 0 : i32
    %c0_i32_0 = arith.constant 0 : i32
    %c0_i32_1 = arith.constant 0 : i32
    return %c0_i32, %c0_i32_0 : i32, i32
  }
  func.func @transform_13(%arg0: i32, %arg1: i32) -> (i32, i32) {
    %c0_i32 = arith.constant 0 : i32
    %c0_i32_0 = arith.constant 0 : i32
    %c0_i32_1 = arith.constant 0 : i32
    return %c0_i32, %c0_i32_0 : i32, i32
  }
  func.func @transform_14(%arg0: i32, %arg1: i32) -> (i32, i32, i32, i32) {
    %c0_i32 = arith.constant 0 : i32
    %c0_i32_0 = arith.constant 0 : i32
    %c0_i32_1 = arith.constant 0 : i32
    return %arg0, %arg1, %c0_i32, %c0_i32_0 : i32, i32, i32, i32
  }
}

module attributes {stable_mosaic.version = 11 : i64} {
  func.func @_swin_block_kernel(%arg0: i32, %arg1: i32, %arg2: memref<1x2x16x16xbf16, #tpu.memory_space<vmem>>, %arg3: memref<1x16xf32, #tpu.memory_space<vmem>>, %arg4: memref<1x16xf32, #tpu.memory_space<vmem>>, %arg5: memref<16x48xbf16, #tpu.memory_space<vmem>>, %arg6: memref<1x48xf32, #tpu.memory_space<vmem>>, %arg7: memref<2x8x16xbf16, #tpu.memory_space<vmem>>, %arg8: memref<1x16xf32, #tpu.memory_space<vmem>>, %arg9: memref<2x16x16xf32, #tpu.memory_space<vmem>>, %arg10: memref<2x16x16xf32, #tpu.memory_space<vmem>>, %arg11: memref<1x16xf32, #tpu.memory_space<vmem>>, %arg12: memref<1x16xf32, #tpu.memory_space<vmem>>, %arg13: memref<16x64xbf16, #tpu.memory_space<vmem>>, %arg14: memref<1x64xf32, #tpu.memory_space<vmem>>, %arg15: memref<64x16xbf16, #tpu.memory_space<vmem>>, %arg16: memref<1x16xf32, #tpu.memory_space<vmem>>, %arg17: memref<1x2x16x16xbf16, #tpu.memory_space<vmem>>) attributes {dimension_semantics = [#tpu.dimension_semantics<parallel>, #tpu.dimension_semantics<parallel>], iteration_bounds = array<i64: 2, 2>, scalar_prefetch = 0 : i64, scratch_operands = 0 : i64, tpu.core_type = #tpu.core_type<tc>, window_params = [{transform_indices = @transform_0, window_bounds = array<i64: 1, 2, 16, 16>}, {pipeline_mode = #tpu.pipeline_mode<synchronous>, transform_indices = @transform_1, window_bounds = array<i64: 1, 16>}, {pipeline_mode = #tpu.pipeline_mode<synchronous>, transform_indices = @transform_2, window_bounds = array<i64: 1, 16>}, {pipeline_mode = #tpu.pipeline_mode<synchronous>, transform_indices = @transform_3, window_bounds = array<i64: 16, 48>}, {pipeline_mode = #tpu.pipeline_mode<synchronous>, transform_indices = @transform_4, window_bounds = array<i64: 1, 48>}, {pipeline_mode = #tpu.pipeline_mode<synchronous>, transform_indices = @transform_5, window_bounds = array<i64: 2, 8, 16>}, {pipeline_mode = #tpu.pipeline_mode<synchronous>, transform_indices = @transform_6, window_bounds = array<i64: 1, 16>}, {pipeline_mode = #tpu.pipeline_mode<synchronous>, transform_indices = @transform_7, window_bounds = array<i64: 2, 16, 16>}, {transform_indices = @transform_8, window_bounds = array<i64: 2, 16, 16>}, {pipeline_mode = #tpu.pipeline_mode<synchronous>, transform_indices = @transform_9, window_bounds = array<i64: 1, 16>}, {pipeline_mode = #tpu.pipeline_mode<synchronous>, transform_indices = @transform_10, window_bounds = array<i64: 1, 16>}, {pipeline_mode = #tpu.pipeline_mode<synchronous>, transform_indices = @transform_11, window_bounds = array<i64: 16, 64>}, {pipeline_mode = #tpu.pipeline_mode<synchronous>, transform_indices = @transform_12, window_bounds = array<i64: 1, 64>}, {pipeline_mode = #tpu.pipeline_mode<synchronous>, transform_indices = @transform_13, window_bounds = array<i64: 64, 16>}, {pipeline_mode = #tpu.pipeline_mode<synchronous>, transform_indices = @transform_14, window_bounds = array<i64: 1, 16>}, {transform_indices = @transform_15, window_bounds = array<i64: 1, 2, 16, 16>}]} {
    %c0 = arith.constant 0 : index
    %c0_0 = arith.constant 0 : index
    %c0_1 = arith.constant 0 : index
    %c0_2 = arith.constant 0 : index
    %0 = vector.load %arg2[%c0, %c0_0, %c0_1, %c0_2] : memref<1x2x16x16xbf16, #tpu.memory_space<vmem>>, vector<1x2x16x16xbf16>
    %1 = vector.shape_cast %0 : vector<1x2x16x16xbf16> to vector<2x16x16xbf16>
    %2 = arith.extf %1 : vector<2x16x16xbf16> to vector<2x16x16xf32>
    %3 = vector.shape_cast %2 : vector<2x16x16xf32> to vector<32x16xf32>
    %c0_3 = arith.constant 0 : index
    %c0_4 = arith.constant 0 : index
    %4 = vector.load %arg3[%c0_3, %c0_4] : memref<1x16xf32, #tpu.memory_space<vmem>>, vector<1x16xf32>
    %c0_5 = arith.constant 0 : index
    %c0_6 = arith.constant 0 : index
    %5 = vector.load %arg4[%c0_5, %c0_6] : memref<1x16xf32, #tpu.memory_space<vmem>>, vector<1x16xf32>
    %cst = arith.constant dense<0.000000e+00> : vector<32xf32>
    %6 = vector.multi_reduction <add>, %3, %cst [1] : vector<32x16xf32> to vector<32xf32>
    %7 = vector.shape_cast %6 : vector<32xf32> to vector<32x1xf32>
    %cst_7 = arith.constant 1.600000e+01 : f32
    %8 = vector.broadcast %cst_7 : f32 to vector<32x1xf32>
    %9 = arith.divf %7, %8 : vector<32x1xf32>
    %10 = vector.broadcast %9 : vector<32x1xf32> to vector<32x16xf32>
    %11 = arith.subf %3, %10 : vector<32x16xf32>
    %12 = arith.mulf %11, %11 : vector<32x16xf32>
    %cst_8 = arith.constant dense<0.000000e+00> : vector<32xf32>
    %13 = vector.multi_reduction <add>, %12, %cst_8 [1] : vector<32x16xf32> to vector<32xf32>
    %14 = vector.shape_cast %13 : vector<32xf32> to vector<32x1xf32>
    %cst_9 = arith.constant 1.600000e+01 : f32
    %15 = vector.broadcast %cst_9 : f32 to vector<32x1xf32>
    %16 = arith.divf %14, %15 : vector<32x1xf32>
    %17 = vector.broadcast %9 : vector<32x1xf32> to vector<32x16xf32>
    %18 = arith.subf %3, %17 : vector<32x16xf32>
    %cst_10 = arith.constant 9.99999974E-6 : f32
    %19 = vector.broadcast %cst_10 : f32 to vector<32x1xf32>
    %20 = arith.addf %16, %19 : vector<32x1xf32>
    %21 = math.rsqrt %20 : vector<32x1xf32>
    %22 = vector.broadcast %21 : vector<32x1xf32> to vector<32x16xf32>
    %23 = arith.mulf %18, %22 : vector<32x16xf32>
    %24 = vector.broadcast %4 : vector<1x16xf32> to vector<32x16xf32>
    %25 = arith.mulf %23, %24 : vector<32x16xf32>
    %26 = vector.broadcast %5 : vector<1x16xf32> to vector<32x16xf32>
    %27 = arith.addf %25, %26 : vector<32x16xf32>
    %28 = arith.truncf %27 : vector<32x16xf32> to vector<32x16xbf16>
    %c0_11 = arith.constant 0 : index
    %c0_12 = arith.constant 0 : index
    %29 = vector.load %arg5[%c0_11, %c0_12] : memref<16x48xbf16, #tpu.memory_space<vmem>>, vector<16x48xbf16>
    %cst_13 = arith.constant dense<0.000000e+00> : vector<32x48xf32>
    %30 = tpu.matmul %28, %29, %cst_13 {dimension_numbers = #tpu.dot_dimension_numbers<[1], [0], [0], [1], [0, 0, 1, 1], [], []>} : vector<32x16xbf16>, vector<16x48xbf16>, vector<32x48xf32> -> vector<32x48xf32>
    %c0_14 = arith.constant 0 : index
    %c0_15 = arith.constant 0 : index
    %31 = vector.load %arg6[%c0_14, %c0_15] : memref<1x48xf32, #tpu.memory_space<vmem>>, vector<1x48xf32>
    %32 = vector.broadcast %31 : vector<1x48xf32> to vector<32x48xf32>
    %33 = arith.addf %30, %32 : vector<32x48xf32>
    %34 = vector.extract_strided_slice %33 {offsets = [0, 0], sizes = [32, 8], strides = [1, 1]} : vector<32x48xf32> to vector<32x8xf32>
    %35 = vector.shape_cast %34 : vector<32x8xf32> to vector<2x16x8xf32>
    %36 = vector.extract_strided_slice %33 {offsets = [0, 8], sizes = [32, 8], strides = [1, 1]} : vector<32x48xf32> to vector<32x8xf32>
    %37 = vector.shape_cast %36 : vector<32x8xf32> to vector<2x16x8xf32>
    %38 = tpu.concatenate %35, %37 in 0 : vector<2x16x8xf32>, vector<2x16x8xf32> -> vector<4x16x8xf32>
    %39 = arith.truncf %38 : vector<4x16x8xf32> to vector<4x16x8xbf16>
    %40 = vector.extract_strided_slice %33 {offsets = [0, 16], sizes = [32, 8], strides = [1, 1]} : vector<32x48xf32> to vector<32x8xf32>
    %41 = vector.shape_cast %40 : vector<32x8xf32> to vector<2x16x8xf32>
    %42 = vector.extract_strided_slice %33 {offsets = [0, 24], sizes = [32, 8], strides = [1, 1]} : vector<32x48xf32> to vector<32x8xf32>
    %43 = vector.shape_cast %42 : vector<32x8xf32> to vector<2x16x8xf32>
    %44 = tpu.concatenate %41, %43 in 0 : vector<2x16x8xf32>, vector<2x16x8xf32> -> vector<4x16x8xf32>
    %45 = arith.truncf %44 : vector<4x16x8xf32> to vector<4x16x8xbf16>
    %46 = vector.extract_strided_slice %33 {offsets = [0, 32], sizes = [32, 8], strides = [1, 1]} : vector<32x48xf32> to vector<32x8xf32>
    %47 = vector.shape_cast %46 : vector<32x8xf32> to vector<2x16x8xf32>
    %48 = vector.extract_strided_slice %33 {offsets = [0, 40], sizes = [32, 8], strides = [1, 1]} : vector<32x48xf32> to vector<32x8xf32>
    %49 = vector.shape_cast %48 : vector<32x8xf32> to vector<2x16x8xf32>
    %50 = tpu.concatenate %47, %49 in 0 : vector<2x16x8xf32>, vector<2x16x8xf32> -> vector<4x16x8xf32>
    %51 = arith.truncf %50 : vector<4x16x8xf32> to vector<4x16x8xbf16>
    "tpu.trace_start"() <{level = 10 : i32, message = "bnd,bmd->bnm"}> : () -> ()
    %cst_16 = arith.constant dense<0.000000e+00> : vector<4x16x16xf32>
    %52 = tpu.matmul %39, %45, %cst_16 {dimension_numbers = #tpu.dot_dimension_numbers<[2], [2], [1], [1], [0, 0, 0, 1, 1, 1], [0], [0]>} : vector<4x16x8xbf16>, vector<4x16x8xbf16>, vector<4x16x16xf32> -> vector<4x16x16xf32>
    "tpu.trace_stop"() : () -> ()
    %53 = vector.shape_cast %52 : vector<4x16x16xf32> to vector<2x2x16x16xf32>
    %c0_17 = arith.constant 0 : index
    %c0_18 = arith.constant 0 : index
    %c0_19 = arith.constant 0 : index
    %54 = vector.load %arg9[%c0_17, %c0_18, %c0_19] : memref<2x16x16xf32, #tpu.memory_space<vmem>>, vector<2x16x16xf32>
    %55 = vector.shape_cast %54 : vector<2x16x16xf32> to vector<2x1x16x16xf32>
    %56 = vector.broadcast %55 : vector<2x1x16x16xf32> to vector<2x2x16x16xf32>
    %57 = arith.addf %53, %56 : vector<2x2x16x16xf32>
    %c0_20 = arith.constant 0 : index
    %c0_21 = arith.constant 0 : index
    %c0_22 = arith.constant 0 : index
    %58 = vector.load %arg10[%c0_20, %c0_21, %c0_22] : memref<2x16x16xf32, #tpu.memory_space<vmem>>, vector<2x16x16xf32>
    %59 = vector.shape_cast %58 : vector<2x16x16xf32> to vector<1x2x16x16xf32>
    %60 = vector.broadcast %59 : vector<1x2x16x16xf32> to vector<2x2x16x16xf32>
    %61 = arith.addf %57, %60 : vector<2x2x16x16xf32>
    %cst_23 = arith.constant dense<0xFF800000> : vector<2x2x16xf32>
    %62 = vector.multi_reduction <maximumf>, %61, %cst_23 [3] : vector<2x2x16x16xf32> to vector<2x2x16xf32>
    %63 = vector.shape_cast %62 : vector<2x2x16xf32> to vector<2x2x16x1xf32>
    %64 = vector.broadcast %63 : vector<2x2x16x1xf32> to vector<2x2x16x16xf32>
    %65 = arith.subf %61, %64 : vector<2x2x16x16xf32>
    %66 = math.exp %65 : vector<2x2x16x16xf32>
    %cst_24 = arith.constant dense<0.000000e+00> : vector<2x2x16xf32>
    %67 = vector.multi_reduction <add>, %66, %cst_24 [3] : vector<2x2x16x16xf32> to vector<2x2x16xf32>
    %68 = vector.shape_cast %67 : vector<2x2x16xf32> to vector<2x2x16x1xf32>
    %69 = tpu.reciprocal %68 {approx = true} : vector<2x2x16x1xf32> -> vector<2x2x16x1xf32>
    %70 = vector.broadcast %69 : vector<2x2x16x1xf32> to vector<2x2x16x16xf32>
    %71 = arith.mulf %66, %70 : vector<2x2x16x16xf32>
    %72 = vector.shape_cast %71 : vector<2x2x16x16xf32> to vector<4x16x16xf32>
    %73 = arith.truncf %72 : vector<4x16x16xf32> to vector<4x16x16xbf16>
    "tpu.trace_start"() <{level = 10 : i32, message = "bnm,bmd->bnd"}> : () -> ()
    %cst_25 = arith.constant dense<0.000000e+00> : vector<4x16x8xf32>
    %74 = tpu.matmul %73, %51, %cst_25 {dimension_numbers = #tpu.dot_dimension_numbers<[2], [1], [1], [2], [0, 0, 0, 1, 1, 2], [0], [0]>} : vector<4x16x16xbf16>, vector<4x16x8xbf16>, vector<4x16x8xf32> -> vector<4x16x8xf32>
    "tpu.trace_stop"() : () -> ()
    %75 = vector.shape_cast %74 : vector<4x16x8xf32> to vector<2x32x8xf32>
    %c0_26 = arith.constant 0 : index
    %c0_27 = arith.constant 0 : index
    %76 = vector.load %arg8[%c0_26, %c0_27] : memref<1x16xf32, #tpu.memory_space<vmem>>, vector<1x16xf32>
    %77 = vector.extract_strided_slice %75 {offsets = [0, 0, 0], sizes = [1, 32, 8], strides = [1, 1, 1]} : vector<2x32x8xf32> to vector<1x32x8xf32>
    %78 = vector.shape_cast %77 : vector<1x32x8xf32> to vector<32x8xf32>
    %79 = arith.truncf %78 : vector<32x8xf32> to vector<32x8xbf16>
    %c0_28 = arith.constant 0 : index
    %c0_29 = arith.constant 0 : index
    %c0_30 = arith.constant 0 : index
    %80 = vector.load %arg7[%c0_28, %c0_29, %c0_30] : memref<2x8x16xbf16, #tpu.memory_space<vmem>>, vector<1x8x16xbf16>
    %81 = vector.shape_cast %80 : vector<1x8x16xbf16> to vector<8x16xbf16>
    %cst_31 = arith.constant dense<0.000000e+00> : vector<32x16xf32>
    %82 = tpu.matmul %79, %81, %cst_31 {dimension_numbers = #tpu.dot_dimension_numbers<[1], [0], [0], [1], [0, 0, 1, 1], [], []>} : vector<32x8xbf16>, vector<8x16xbf16>, vector<32x16xf32> -> vector<32x16xf32>
    %83 = vector.broadcast %76 : vector<1x16xf32> to vector<32x16xf32>
    %84 = arith.addf %83, %82 : vector<32x16xf32>
    %85 = vector.extract_strided_slice %75 {offsets = [1, 0, 0], sizes = [1, 32, 8], strides = [1, 1, 1]} : vector<2x32x8xf32> to vector<1x32x8xf32>
    %86 = vector.shape_cast %85 : vector<1x32x8xf32> to vector<32x8xf32>
    %87 = arith.truncf %86 : vector<32x8xf32> to vector<32x8xbf16>
    %c1 = arith.constant 1 : index
    %c0_32 = arith.constant 0 : index
    %c0_33 = arith.constant 0 : index
    %88 = vector.load %arg7[%c1, %c0_32, %c0_33] : memref<2x8x16xbf16, #tpu.memory_space<vmem>>, vector<1x8x16xbf16>
    %89 = vector.shape_cast %88 : vector<1x8x16xbf16> to vector<8x16xbf16>
    %cst_34 = arith.constant dense<0.000000e+00> : vector<32x16xf32>
    %90 = tpu.matmul %87, %89, %cst_34 {dimension_numbers = #tpu.dot_dimension_numbers<[1], [0], [0], [1], [0, 0, 1, 1], [], []>} : vector<32x8xbf16>, vector<8x16xbf16>, vector<32x16xf32> -> vector<32x16xf32>
    %91 = arith.addf %84, %90 : vector<32x16xf32>
    %92 = arith.addf %3, %91 : vector<32x16xf32>
    %c0_35 = arith.constant 0 : index
    %c0_36 = arith.constant 0 : index
    %93 = vector.load %arg11[%c0_35, %c0_36] : memref<1x16xf32, #tpu.memory_space<vmem>>, vector<1x16xf32>
    %c0_37 = arith.constant 0 : index
    %c0_38 = arith.constant 0 : index
    %94 = vector.load %arg12[%c0_37, %c0_38] : memref<1x16xf32, #tpu.memory_space<vmem>>, vector<1x16xf32>
    %cst_39 = arith.constant dense<0.000000e+00> : vector<32xf32>
    %95 = vector.multi_reduction <add>, %92, %cst_39 [1] : vector<32x16xf32> to vector<32xf32>
    %96 = vector.shape_cast %95 : vector<32xf32> to vector<32x1xf32>
    %cst_40 = arith.constant 1.600000e+01 : f32
    %97 = vector.broadcast %cst_40 : f32 to vector<32x1xf32>
    %98 = arith.divf %96, %97 : vector<32x1xf32>
    %99 = vector.broadcast %98 : vector<32x1xf32> to vector<32x16xf32>
    %100 = arith.subf %92, %99 : vector<32x16xf32>
    %101 = arith.mulf %100, %100 : vector<32x16xf32>
    %cst_41 = arith.constant dense<0.000000e+00> : vector<32xf32>
    %102 = vector.multi_reduction <add>, %101, %cst_41 [1] : vector<32x16xf32> to vector<32xf32>
    %103 = vector.shape_cast %102 : vector<32xf32> to vector<32x1xf32>
    %cst_42 = arith.constant 1.600000e+01 : f32
    %104 = vector.broadcast %cst_42 : f32 to vector<32x1xf32>
    %105 = arith.divf %103, %104 : vector<32x1xf32>
    %106 = vector.broadcast %98 : vector<32x1xf32> to vector<32x16xf32>
    %107 = arith.subf %92, %106 : vector<32x16xf32>
    %cst_43 = arith.constant 9.99999974E-6 : f32
    %108 = vector.broadcast %cst_43 : f32 to vector<32x1xf32>
    %109 = arith.addf %105, %108 : vector<32x1xf32>
    %110 = math.rsqrt %109 : vector<32x1xf32>
    %111 = vector.broadcast %110 : vector<32x1xf32> to vector<32x16xf32>
    %112 = arith.mulf %107, %111 : vector<32x16xf32>
    %113 = vector.broadcast %93 : vector<1x16xf32> to vector<32x16xf32>
    %114 = arith.mulf %112, %113 : vector<32x16xf32>
    %115 = vector.broadcast %94 : vector<1x16xf32> to vector<32x16xf32>
    %116 = arith.addf %114, %115 : vector<32x16xf32>
    %117 = arith.truncf %116 : vector<32x16xf32> to vector<32x16xbf16>
    %c0_44 = arith.constant 0 : index
    %c0_45 = arith.constant 0 : index
    %118 = vector.load %arg13[%c0_44, %c0_45] : memref<16x64xbf16, #tpu.memory_space<vmem>>, vector<16x64xbf16>
    %cst_46 = arith.constant dense<0.000000e+00> : vector<32x64xf32>
    %119 = tpu.matmul %117, %118, %cst_46 {dimension_numbers = #tpu.dot_dimension_numbers<[1], [0], [0], [1], [0, 0, 1, 1], [], []>} : vector<32x16xbf16>, vector<16x64xbf16>, vector<32x64xf32> -> vector<32x64xf32>
    %c0_47 = arith.constant 0 : index
    %c0_48 = arith.constant 0 : index
    %120 = vector.load %arg14[%c0_47, %c0_48] : memref<1x64xf32, #tpu.memory_space<vmem>>, vector<1x64xf32>
    %121 = vector.broadcast %120 : vector<1x64xf32> to vector<32x64xf32>
    %122 = arith.addf %119, %121 : vector<32x64xf32>
    %cst_49 = arith.constant 5.000000e-01 : f32
    %123 = vector.broadcast %cst_49 : f32 to vector<32x64xf32>
    %124 = arith.mulf %123, %122 : vector<32x64xf32>
    %cst_50 = arith.constant 0.707106769 : f32
    %125 = vector.broadcast %cst_50 : f32 to vector<32x64xf32>
    %126 = arith.mulf %122, %125 : vector<32x64xf32>
    %cst_51 = arith.constant 0.000000e+00 : f32
    %127 = vector.broadcast %cst_51 : f32 to vector<32x64xf32>
    %128 = arith.cmpf oge, %126, %127 : vector<32x64xf32>
    %cst_52 = arith.constant 1.000000e+00 : f32
    %cst_53 = arith.constant -1.000000e+00 : f32
    %129 = vector.broadcast %cst_52 : f32 to vector<32x64xf32>
    %130 = vector.broadcast %cst_53 : f32 to vector<32x64xf32>
    %131 = arith.select %128, %129, %130 : vector<32x64xi1>, vector<32x64xf32>
    %132 = math.absf %126 : vector<32x64xf32>
    %cst_54 = arith.constant 0.327591091 : f32
    %133 = vector.broadcast %cst_54 : f32 to vector<32x64xf32>
    %134 = arith.mulf %133, %132 : vector<32x64xf32>
    %cst_55 = arith.constant 1.000000e+00 : f32
    %135 = vector.broadcast %cst_55 : f32 to vector<32x64xf32>
    %136 = arith.addf %135, %134 : vector<32x64xf32>
    %137 = tpu.reciprocal %136 {approx = true} : vector<32x64xf32> -> vector<32x64xf32>
    %cst_56 = arith.constant 1.06140542 : f32
    %138 = vector.broadcast %cst_56 : f32 to vector<32x64xf32>
    %139 = arith.mulf %138, %137 : vector<32x64xf32>
    %cst_57 = arith.constant -1.45315206 : f32
    %140 = vector.broadcast %cst_57 : f32 to vector<32x64xf32>
    %141 = arith.addf %139, %140 : vector<32x64xf32>
    %142 = arith.mulf %141, %137 : vector<32x64xf32>
    %cst_58 = arith.constant 1.42141378 : f32
    %143 = vector.broadcast %cst_58 : f32 to vector<32x64xf32>
    %144 = arith.addf %142, %143 : vector<32x64xf32>
    %145 = arith.mulf %144, %137 : vector<32x64xf32>
    %cst_59 = arith.constant -0.284496725 : f32
    %146 = vector.broadcast %cst_59 : f32 to vector<32x64xf32>
    %147 = arith.addf %145, %146 : vector<32x64xf32>
    %148 = arith.mulf %147, %137 : vector<32x64xf32>
    %cst_60 = arith.constant 0.254829586 : f32
    %149 = vector.broadcast %cst_60 : f32 to vector<32x64xf32>
    %150 = arith.addf %148, %149 : vector<32x64xf32>
    %151 = arith.mulf %150, %137 : vector<32x64xf32>
    %cst_61 = arith.constant 0.000000e+00 : f32
    %152 = vector.broadcast %cst_61 : f32 to vector<32x64xf32>
    %153 = arith.subf %152, %132 : vector<32x64xf32>
    %154 = arith.mulf %153, %132 : vector<32x64xf32>
    %155 = math.exp %154 : vector<32x64xf32>
    %156 = arith.mulf %151, %155 : vector<32x64xf32>
    %cst_62 = arith.constant 1.000000e+00 : f32
    %157 = vector.broadcast %cst_62 : f32 to vector<32x64xf32>
    %158 = arith.subf %157, %156 : vector<32x64xf32>
    %159 = arith.mulf %131, %158 : vector<32x64xf32>
    %cst_63 = arith.constant 1.000000e+00 : f32
    %160 = vector.broadcast %cst_63 : f32 to vector<32x64xf32>
    %161 = arith.addf %160, %159 : vector<32x64xf32>
    %162 = arith.mulf %124, %161 : vector<32x64xf32>
    %163 = arith.truncf %162 : vector<32x64xf32> to vector<32x64xbf16>
    %c0_64 = arith.constant 0 : index
    %c0_65 = arith.constant 0 : index
    %164 = vector.load %arg15[%c0_64, %c0_65] : memref<64x16xbf16, #tpu.memory_space<vmem>>, vector<64x16xbf16>
    %cst_66 = arith.constant dense<0.000000e+00> : vector<32x16xf32>
    %165 = tpu.matmul %163, %164, %cst_66 {dimension_numbers = #tpu.dot_dimension_numbers<[1], [0], [0], [1], [0, 0, 1, 1], [], []>} : vector<32x64xbf16>, vector<64x16xbf16>, vector<32x16xf32> -> vector<32x16xf32>
    %c0_67 = arith.constant 0 : index
    %c0_68 = arith.constant 0 : index
    %166 = vector.load %arg16[%c0_67, %c0_68] : memref<1x16xf32, #tpu.memory_space<vmem>>, vector<1x16xf32>
    %167 = vector.broadcast %166 : vector<1x16xf32> to vector<32x16xf32>
    %168 = arith.addf %165, %167 : vector<32x16xf32>
    %169 = arith.addf %92, %168 : vector<32x16xf32>
    %170 = vector.shape_cast %169 : vector<32x16xf32> to vector<2x16x16xf32>
    %171 = arith.truncf %170 : vector<2x16x16xf32> to vector<2x16x16xbf16>
    %c0_69 = arith.constant 0 : index
    %c0_70 = arith.constant 0 : index
    %c0_71 = arith.constant 0 : index
    %c0_72 = arith.constant 0 : index
    %172 = vector.load %arg17[%c0_69, %c0_70, %c0_71, %c0_72] : memref<1x2x16x16xbf16, #tpu.memory_space<vmem>>, vector<1x2x16x16xbf16>
    %173 = vector.shape_cast %172 : vector<1x2x16x16xbf16> to vector<2x16x16xbf16>
    %174 = vector.shape_cast %171 : vector<2x16x16xbf16> to vector<1x2x16x16xbf16>
    tpu.vector_store %arg17[%c0_69, %c0_70, %c0_71, %c0_72], %174 {strides = array<i32>} : memref<1x2x16x16xbf16, #tpu.memory_space<vmem>>, vector<1x2x16x16xbf16>,
    return
  }
  func.func @transform_0(%arg0: i32, %arg1: i32) -> (i32, i32, i32, i32) {
    %c0_i32 = arith.constant 0 : i32
    %c0_i32_0 = arith.constant 0 : i32
    %c0_i32_1 = arith.constant 0 : i32
    return %arg0, %arg1, %c0_i32, %c0_i32_0 : i32, i32, i32, i32
  }
  func.func @transform_1(%arg0: i32, %arg1: i32) -> (i32, i32) {
    %c0_i32 = arith.constant 0 : i32
    %c0_i32_0 = arith.constant 0 : i32
    %c0_i32_1 = arith.constant 0 : i32
    return %c0_i32, %c0_i32_0 : i32, i32
  }
  func.func @transform_2(%arg0: i32, %arg1: i32) -> (i32, i32) {
    %c0_i32 = arith.constant 0 : i32
    %c0_i32_0 = arith.constant 0 : i32
    %c0_i32_1 = arith.constant 0 : i32
    return %c0_i32, %c0_i32_0 : i32, i32
  }
  func.func @transform_3(%arg0: i32, %arg1: i32) -> (i32, i32) {
    %c0_i32 = arith.constant 0 : i32
    %c0_i32_0 = arith.constant 0 : i32
    %c0_i32_1 = arith.constant 0 : i32
    return %c0_i32, %c0_i32_0 : i32, i32
  }
  func.func @transform_4(%arg0: i32, %arg1: i32) -> (i32, i32) {
    %c0_i32 = arith.constant 0 : i32
    %c0_i32_0 = arith.constant 0 : i32
    %c0_i32_1 = arith.constant 0 : i32
    return %c0_i32, %c0_i32_0 : i32, i32
  }
  func.func @transform_5(%arg0: i32, %arg1: i32) -> (i32, i32, i32) {
    %c0_i32 = arith.constant 0 : i32
    %c0_i32_0 = arith.constant 0 : i32
    %c0_i32_1 = arith.constant 0 : i32
    %c0_i32_2 = arith.constant 0 : i32
    return %c0_i32, %c0_i32_0, %c0_i32_1 : i32, i32, i32
  }
  func.func @transform_6(%arg0: i32, %arg1: i32) -> (i32, i32) {
    %c0_i32 = arith.constant 0 : i32
    %c0_i32_0 = arith.constant 0 : i32
    %c0_i32_1 = arith.constant 0 : i32
    return %c0_i32, %c0_i32_0 : i32, i32
  }
  func.func @transform_7(%arg0: i32, %arg1: i32) -> (i32, i32, i32) {
    %c0_i32 = arith.constant 0 : i32
    %c0_i32_0 = arith.constant 0 : i32
    %c0_i32_1 = arith.constant 0 : i32
    %c0_i32_2 = arith.constant 0 : i32
    return %c0_i32, %c0_i32_0, %c0_i32_1 : i32, i32, i32
  }
  func.func @transform_8(%arg0: i32, %arg1: i32) -> (i32, i32, i32) {
    %c0_i32 = arith.constant 0 : i32
    %c0_i32_0 = arith.constant 0 : i32
    %c0_i32_1 = arith.constant 0 : i32
    return %arg1, %c0_i32, %c0_i32_0 : i32, i32, i32
  }
  func.func @transform_9(%arg0: i32, %arg1: i32) -> (i32, i32) {
    %c0_i32 = arith.constant 0 : i32
    %c0_i32_0 = arith.constant 0 : i32
    %c0_i32_1 = arith.constant 0 : i32
    return %c0_i32, %c0_i32_0 : i32, i32
  }
  func.func @transform_10(%arg0: i32, %arg1: i32) -> (i32, i32) {
    %c0_i32 = arith.constant 0 : i32
    %c0_i32_0 = arith.constant 0 : i32
    %c0_i32_1 = arith.constant 0 : i32
    return %c0_i32, %c0_i32_0 : i32, i32
  }
  func.func @transform_11(%arg0: i32, %arg1: i32) -> (i32, i32) {
    %c0_i32 = arith.constant 0 : i32
    %c0_i32_0 = arith.constant 0 : i32
    %c0_i32_1 = arith.constant 0 : i32
    return %c0_i32, %c0_i32_0 : i32, i32
  }
  func.func @transform_12(%arg0: i32, %arg1: i32) -> (i32, i32) {
    %c0_i32 = arith.constant 0 : i32
    %c0_i32_0 = arith.constant 0 : i32
    %c0_i32_1 = arith.constant 0 : i32
    return %c0_i32, %c0_i32_0 : i32, i32
  }
  func.func @transform_13(%arg0: i32, %arg1: i32) -> (i32, i32) {
    %c0_i32 = arith.constant 0 : i32
    %c0_i32_0 = arith.constant 0 : i32
    %c0_i32_1 = arith.constant 0 : i32
    return %c0_i32, %c0_i32_0 : i32, i32
  }
  func.func @transform_14(%arg0: i32, %arg1: i32) -> (i32, i32) {
    %c0_i32 = arith.constant 0 : i32
    %c0_i32_0 = arith.constant 0 : i32
    %c0_i32_1 = arith.constant 0 : i32
    return %c0_i32, %c0_i32_0 : i32, i32
  }
  func.func @transform_15(%arg0: i32, %arg1: i32) -> (i32, i32, i32, i32) {
    %c0_i32 = arith.constant 0 : i32
    %c0_i32_0 = arith.constant 0 : i32
    %c0_i32_1 = arith.constant 0 : i32
    return %arg0, %arg1, %c0_i32, %c0_i32_0 : i32, i32, i32, i32
  }
}

module attributes {stable_mosaic.version = 11 : i64} {
  func.func @_swin_block_kernel(%arg0: i32, %arg1: i32, %arg2: memref<1x1x16x32xbf16, #tpu.memory_space<vmem>>, %arg3: memref<1x32xf32, #tpu.memory_space<vmem>>, %arg4: memref<1x32xf32, #tpu.memory_space<vmem>>, %arg5: memref<32x96xbf16, #tpu.memory_space<vmem>>, %arg6: memref<1x96xf32, #tpu.memory_space<vmem>>, %arg7: memref<4x8x32xbf16, #tpu.memory_space<vmem>>, %arg8: memref<1x32xf32, #tpu.memory_space<vmem>>, %arg9: memref<4x16x16xf32, #tpu.memory_space<vmem>>, %arg10: memref<1x32xf32, #tpu.memory_space<vmem>>, %arg11: memref<1x32xf32, #tpu.memory_space<vmem>>, %arg12: memref<32x128xbf16, #tpu.memory_space<vmem>>, %arg13: memref<1x128xf32, #tpu.memory_space<vmem>>, %arg14: memref<128x32xbf16, #tpu.memory_space<vmem>>, %arg15: memref<1x32xf32, #tpu.memory_space<vmem>>, %arg16: memref<1x1x16x32xbf16, #tpu.memory_space<vmem>>) attributes {dimension_semantics = [#tpu.dimension_semantics<parallel>, #tpu.dimension_semantics<parallel>], iteration_bounds = array<i64: 2, 1>, scalar_prefetch = 0 : i64, scratch_operands = 0 : i64, tpu.core_type = #tpu.core_type<tc>, window_params = [{transform_indices = @transform_0, window_bounds = array<i64: 1, 1, 16, 32>}, {pipeline_mode = #tpu.pipeline_mode<synchronous>, transform_indices = @transform_1, window_bounds = array<i64: 1, 32>}, {pipeline_mode = #tpu.pipeline_mode<synchronous>, transform_indices = @transform_2, window_bounds = array<i64: 1, 32>}, {pipeline_mode = #tpu.pipeline_mode<synchronous>, transform_indices = @transform_3, window_bounds = array<i64: 32, 96>}, {pipeline_mode = #tpu.pipeline_mode<synchronous>, transform_indices = @transform_4, window_bounds = array<i64: 1, 96>}, {pipeline_mode = #tpu.pipeline_mode<synchronous>, transform_indices = @transform_5, window_bounds = array<i64: 4, 8, 32>}, {pipeline_mode = #tpu.pipeline_mode<synchronous>, transform_indices = @transform_6, window_bounds = array<i64: 1, 32>}, {pipeline_mode = #tpu.pipeline_mode<synchronous>, transform_indices = @transform_7, window_bounds = array<i64: 4, 16, 16>}, {pipeline_mode = #tpu.pipeline_mode<synchronous>, transform_indices = @transform_8, window_bounds = array<i64: 1, 32>}, {pipeline_mode = #tpu.pipeline_mode<synchronous>, transform_indices = @transform_9, window_bounds = array<i64: 1, 32>}, {pipeline_mode = #tpu.pipeline_mode<synchronous>, transform_indices = @transform_10, window_bounds = array<i64: 32, 128>}, {pipeline_mode = #tpu.pipeline_mode<synchronous>, transform_indices = @transform_11, window_bounds = array<i64: 1, 128>}, {pipeline_mode = #tpu.pipeline_mode<synchronous>, transform_indices = @transform_12, window_bounds = array<i64: 128, 32>}, {pipeline_mode = #tpu.pipeline_mode<synchronous>, transform_indices = @transform_13, window_bounds = array<i64: 1, 32>}, {transform_indices = @transform_14, window_bounds = array<i64: 1, 1, 16, 32>}]} {
    %c0 = arith.constant 0 : index
    %c0_0 = arith.constant 0 : index
    %c0_1 = arith.constant 0 : index
    %c0_2 = arith.constant 0 : index
    %0 = vector.load %arg2[%c0, %c0_0, %c0_1, %c0_2] : memref<1x1x16x32xbf16, #tpu.memory_space<vmem>>, vector<1x1x16x32xbf16>
    %1 = vector.shape_cast %0 : vector<1x1x16x32xbf16> to vector<1x16x32xbf16>
    %2 = arith.extf %1 : vector<1x16x32xbf16> to vector<1x16x32xf32>
    %3 = vector.shape_cast %2 : vector<1x16x32xf32> to vector<16x32xf32>
    %c0_3 = arith.constant 0 : index
    %c0_4 = arith.constant 0 : index
    %4 = vector.load %arg3[%c0_3, %c0_4] : memref<1x32xf32, #tpu.memory_space<vmem>>, vector<1x32xf32>
    %c0_5 = arith.constant 0 : index
    %c0_6 = arith.constant 0 : index
    %5 = vector.load %arg4[%c0_5, %c0_6] : memref<1x32xf32, #tpu.memory_space<vmem>>, vector<1x32xf32>
    %cst = arith.constant dense<0.000000e+00> : vector<16xf32>
    %6 = vector.multi_reduction <add>, %3, %cst [1] : vector<16x32xf32> to vector<16xf32>
    %7 = vector.shape_cast %6 : vector<16xf32> to vector<16x1xf32>
    %cst_7 = arith.constant 3.200000e+01 : f32
    %8 = vector.broadcast %cst_7 : f32 to vector<16x1xf32>
    %9 = arith.divf %7, %8 : vector<16x1xf32>
    %10 = vector.broadcast %9 : vector<16x1xf32> to vector<16x32xf32>
    %11 = arith.subf %3, %10 : vector<16x32xf32>
    %12 = arith.mulf %11, %11 : vector<16x32xf32>
    %cst_8 = arith.constant dense<0.000000e+00> : vector<16xf32>
    %13 = vector.multi_reduction <add>, %12, %cst_8 [1] : vector<16x32xf32> to vector<16xf32>
    %14 = vector.shape_cast %13 : vector<16xf32> to vector<16x1xf32>
    %cst_9 = arith.constant 3.200000e+01 : f32
    %15 = vector.broadcast %cst_9 : f32 to vector<16x1xf32>
    %16 = arith.divf %14, %15 : vector<16x1xf32>
    %17 = vector.broadcast %9 : vector<16x1xf32> to vector<16x32xf32>
    %18 = arith.subf %3, %17 : vector<16x32xf32>
    %cst_10 = arith.constant 9.99999974E-6 : f32
    %19 = vector.broadcast %cst_10 : f32 to vector<16x1xf32>
    %20 = arith.addf %16, %19 : vector<16x1xf32>
    %21 = math.rsqrt %20 : vector<16x1xf32>
    %22 = vector.broadcast %21 : vector<16x1xf32> to vector<16x32xf32>
    %23 = arith.mulf %18, %22 : vector<16x32xf32>
    %24 = vector.broadcast %4 : vector<1x32xf32> to vector<16x32xf32>
    %25 = arith.mulf %23, %24 : vector<16x32xf32>
    %26 = vector.broadcast %5 : vector<1x32xf32> to vector<16x32xf32>
    %27 = arith.addf %25, %26 : vector<16x32xf32>
    %28 = arith.truncf %27 : vector<16x32xf32> to vector<16x32xbf16>
    %c0_11 = arith.constant 0 : index
    %c0_12 = arith.constant 0 : index
    %29 = vector.load %arg5[%c0_11, %c0_12] : memref<32x96xbf16, #tpu.memory_space<vmem>>, vector<32x96xbf16>
    %cst_13 = arith.constant dense<0.000000e+00> : vector<16x96xf32>
    %30 = tpu.matmul %28, %29, %cst_13 {dimension_numbers = #tpu.dot_dimension_numbers<[1], [0], [0], [1], [0, 0, 1, 1], [], []>} : vector<16x32xbf16>, vector<32x96xbf16>, vector<16x96xf32> -> vector<16x96xf32>
    %c0_14 = arith.constant 0 : index
    %c0_15 = arith.constant 0 : index
    %31 = vector.load %arg6[%c0_14, %c0_15] : memref<1x96xf32, #tpu.memory_space<vmem>>, vector<1x96xf32>
    %32 = vector.broadcast %31 : vector<1x96xf32> to vector<16x96xf32>
    %33 = arith.addf %30, %32 : vector<16x96xf32>
    %34 = vector.extract_strided_slice %33 {offsets = [0, 0], sizes = [16, 8], strides = [1, 1]} : vector<16x96xf32> to vector<16x8xf32>
    %35 = vector.shape_cast %34 : vector<16x8xf32> to vector<1x16x8xf32>
    %36 = vector.extract_strided_slice %33 {offsets = [0, 8], sizes = [16, 8], strides = [1, 1]} : vector<16x96xf32> to vector<16x8xf32>
    %37 = vector.shape_cast %36 : vector<16x8xf32> to vector<1x16x8xf32>
    %38 = vector.extract_strided_slice %33 {offsets = [0, 16], sizes = [16, 8], strides = [1, 1]} : vector<16x96xf32> to vector<16x8xf32>
    %39 = vector.shape_cast %38 : vector<16x8xf32> to vector<1x16x8xf32>
    %40 = vector.extract_strided_slice %33 {offsets = [0, 24], sizes = [16, 8], strides = [1, 1]} : vector<16x96xf32> to vector<16x8xf32>
    %41 = vector.shape_cast %40 : vector<16x8xf32> to vector<1x16x8xf32>
    %42 = tpu.concatenate %35, %37, %39, %41 in 0 : vector<1x16x8xf32>, vector<1x16x8xf32>, vector<1x16x8xf32>, vector<1x16x8xf32> -> vector<4x16x8xf32>
    %43 = arith.truncf %42 : vector<4x16x8xf32> to vector<4x16x8xbf16>
    %44 = vector.extract_strided_slice %33 {offsets = [0, 32], sizes = [16, 8], strides = [1, 1]} : vector<16x96xf32> to vector<16x8xf32>
    %45 = vector.shape_cast %44 : vector<16x8xf32> to vector<1x16x8xf32>
    %46 = vector.extract_strided_slice %33 {offsets = [0, 40], sizes = [16, 8], strides = [1, 1]} : vector<16x96xf32> to vector<16x8xf32>
    %47 = vector.shape_cast %46 : vector<16x8xf32> to vector<1x16x8xf32>
    %48 = vector.extract_strided_slice %33 {offsets = [0, 48], sizes = [16, 8], strides = [1, 1]} : vector<16x96xf32> to vector<16x8xf32>
    %49 = vector.shape_cast %48 : vector<16x8xf32> to vector<1x16x8xf32>
    %50 = vector.extract_strided_slice %33 {offsets = [0, 56], sizes = [16, 8], strides = [1, 1]} : vector<16x96xf32> to vector<16x8xf32>
    %51 = vector.shape_cast %50 : vector<16x8xf32> to vector<1x16x8xf32>
    %52 = tpu.concatenate %45, %47, %49, %51 in 0 : vector<1x16x8xf32>, vector<1x16x8xf32>, vector<1x16x8xf32>, vector<1x16x8xf32> -> vector<4x16x8xf32>
    %53 = arith.truncf %52 : vector<4x16x8xf32> to vector<4x16x8xbf16>
    %54 = vector.extract_strided_slice %33 {offsets = [0, 64], sizes = [16, 8], strides = [1, 1]} : vector<16x96xf32> to vector<16x8xf32>
    %55 = vector.shape_cast %54 : vector<16x8xf32> to vector<1x16x8xf32>
    %56 = vector.extract_strided_slice %33 {offsets = [0, 72], sizes = [16, 8], strides = [1, 1]} : vector<16x96xf32> to vector<16x8xf32>
    %57 = vector.shape_cast %56 : vector<16x8xf32> to vector<1x16x8xf32>
    %58 = vector.extract_strided_slice %33 {offsets = [0, 80], sizes = [16, 8], strides = [1, 1]} : vector<16x96xf32> to vector<16x8xf32>
    %59 = vector.shape_cast %58 : vector<16x8xf32> to vector<1x16x8xf32>
    %60 = vector.extract_strided_slice %33 {offsets = [0, 88], sizes = [16, 8], strides = [1, 1]} : vector<16x96xf32> to vector<16x8xf32>
    %61 = vector.shape_cast %60 : vector<16x8xf32> to vector<1x16x8xf32>
    %62 = tpu.concatenate %55, %57, %59, %61 in 0 : vector<1x16x8xf32>, vector<1x16x8xf32>, vector<1x16x8xf32>, vector<1x16x8xf32> -> vector<4x16x8xf32>
    %63 = arith.truncf %62 : vector<4x16x8xf32> to vector<4x16x8xbf16>
    "tpu.trace_start"() <{level = 10 : i32, message = "bnd,bmd->bnm"}> : () -> ()
    %cst_16 = arith.constant dense<0.000000e+00> : vector<4x16x16xf32>
    %64 = tpu.matmul %43, %53, %cst_16 {dimension_numbers = #tpu.dot_dimension_numbers<[2], [2], [1], [1], [0, 0, 0, 1, 1, 1], [0], [0]>} : vector<4x16x8xbf16>, vector<4x16x8xbf16>, vector<4x16x16xf32> -> vector<4x16x16xf32>
    "tpu.trace_stop"() : () -> ()
    %65 = vector.shape_cast %64 : vector<4x16x16xf32> to vector<4x1x16x16xf32>
    %c0_17 = arith.constant 0 : index
    %c0_18 = arith.constant 0 : index
    %c0_19 = arith.constant 0 : index
    %66 = vector.load %arg9[%c0_17, %c0_18, %c0_19] : memref<4x16x16xf32, #tpu.memory_space<vmem>>, vector<4x16x16xf32>
    %67 = vector.shape_cast %66 : vector<4x16x16xf32> to vector<4x1x16x16xf32>
    %68 = arith.addf %65, %67 : vector<4x1x16x16xf32>
    %cst_20 = arith.constant dense<0xFF800000> : vector<4x1x16xf32>
    %69 = vector.multi_reduction <maximumf>, %68, %cst_20 [3] : vector<4x1x16x16xf32> to vector<4x1x16xf32>
    %70 = vector.shape_cast %69 : vector<4x1x16xf32> to vector<4x1x16x1xf32>
    %71 = vector.broadcast %70 : vector<4x1x16x1xf32> to vector<4x1x16x16xf32>
    %72 = arith.subf %68, %71 : vector<4x1x16x16xf32>
    %73 = math.exp %72 : vector<4x1x16x16xf32>
    %cst_21 = arith.constant dense<0.000000e+00> : vector<4x1x16xf32>
    %74 = vector.multi_reduction <add>, %73, %cst_21 [3] : vector<4x1x16x16xf32> to vector<4x1x16xf32>
    %75 = vector.shape_cast %74 : vector<4x1x16xf32> to vector<4x1x16x1xf32>
    %76 = tpu.reciprocal %75 {approx = true} : vector<4x1x16x1xf32> -> vector<4x1x16x1xf32>
    %77 = vector.broadcast %76 : vector<4x1x16x1xf32> to vector<4x1x16x16xf32>
    %78 = arith.mulf %73, %77 : vector<4x1x16x16xf32>
    %79 = vector.shape_cast %78 : vector<4x1x16x16xf32> to vector<4x16x16xf32>
    %80 = arith.truncf %79 : vector<4x16x16xf32> to vector<4x16x16xbf16>
    "tpu.trace_start"() <{level = 10 : i32, message = "bnm,bmd->bnd"}> : () -> ()
    %cst_22 = arith.constant dense<0.000000e+00> : vector<4x16x8xf32>
    %81 = tpu.matmul %80, %63, %cst_22 {dimension_numbers = #tpu.dot_dimension_numbers<[2], [1], [1], [2], [0, 0, 0, 1, 1, 2], [0], [0]>} : vector<4x16x16xbf16>, vector<4x16x8xbf16>, vector<4x16x8xf32> -> vector<4x16x8xf32>
    "tpu.trace_stop"() : () -> ()
    %c0_23 = arith.constant 0 : index
    %c0_24 = arith.constant 0 : index
    %82 = vector.load %arg8[%c0_23, %c0_24] : memref<1x32xf32, #tpu.memory_space<vmem>>, vector<1x32xf32>
    %83 = vector.extract_strided_slice %81 {offsets = [0, 0, 0], sizes = [1, 16, 8], strides = [1, 1, 1]} : vector<4x16x8xf32> to vector<1x16x8xf32>
    %84 = vector.shape_cast %83 : vector<1x16x8xf32> to vector<16x8xf32>
    %85 = arith.truncf %84 : vector<16x8xf32> to vector<16x8xbf16>
    %c0_25 = arith.constant 0 : index
    %c0_26 = arith.constant 0 : index
    %c0_27 = arith.constant 0 : index
    %86 = vector.load %arg7[%c0_25, %c0_26, %c0_27] : memref<4x8x32xbf16, #tpu.memory_space<vmem>>, vector<1x8x32xbf16>
    %87 = vector.shape_cast %86 : vector<1x8x32xbf16> to vector<8x32xbf16>
    %cst_28 = arith.constant dense<0.000000e+00> : vector<16x32xf32>
    %88 = tpu.matmul %85, %87, %cst_28 {dimension_numbers = #tpu.dot_dimension_numbers<[1], [0], [0], [1], [0, 0, 1, 1], [], []>} : vector<16x8xbf16>, vector<8x32xbf16>, vector<16x32xf32> -> vector<16x32xf32>
    %89 = vector.broadcast %82 : vector<1x32xf32> to vector<16x32xf32>
    %90 = arith.addf %89, %88 : vector<16x32xf32>
    %91 = vector.extract_strided_slice %81 {offsets = [1, 0, 0], sizes = [1, 16, 8], strides = [1, 1, 1]} : vector<4x16x8xf32> to vector<1x16x8xf32>
    %92 = vector.shape_cast %91 : vector<1x16x8xf32> to vector<16x8xf32>
    %93 = arith.truncf %92 : vector<16x8xf32> to vector<16x8xbf16>
    %c1 = arith.constant 1 : index
    %c0_29 = arith.constant 0 : index
    %c0_30 = arith.constant 0 : index
    %94 = vector.load %arg7[%c1, %c0_29, %c0_30] : memref<4x8x32xbf16, #tpu.memory_space<vmem>>, vector<1x8x32xbf16>
    %95 = vector.shape_cast %94 : vector<1x8x32xbf16> to vector<8x32xbf16>
    %cst_31 = arith.constant dense<0.000000e+00> : vector<16x32xf32>
    %96 = tpu.matmul %93, %95, %cst_31 {dimension_numbers = #tpu.dot_dimension_numbers<[1], [0], [0], [1], [0, 0, 1, 1], [], []>} : vector<16x8xbf16>, vector<8x32xbf16>, vector<16x32xf32> -> vector<16x32xf32>
    %97 = arith.addf %90, %96 : vector<16x32xf32>
    %98 = vector.extract_strided_slice %81 {offsets = [2, 0, 0], sizes = [1, 16, 8], strides = [1, 1, 1]} : vector<4x16x8xf32> to vector<1x16x8xf32>
    %99 = vector.shape_cast %98 : vector<1x16x8xf32> to vector<16x8xf32>
    %100 = arith.truncf %99 : vector<16x8xf32> to vector<16x8xbf16>
    %c2 = arith.constant 2 : index
    %c0_32 = arith.constant 0 : index
    %c0_33 = arith.constant 0 : index
    %101 = vector.load %arg7[%c2, %c0_32, %c0_33] : memref<4x8x32xbf16, #tpu.memory_space<vmem>>, vector<1x8x32xbf16>
    %102 = vector.shape_cast %101 : vector<1x8x32xbf16> to vector<8x32xbf16>
    %cst_34 = arith.constant dense<0.000000e+00> : vector<16x32xf32>
    %103 = tpu.matmul %100, %102, %cst_34 {dimension_numbers = #tpu.dot_dimension_numbers<[1], [0], [0], [1], [0, 0, 1, 1], [], []>} : vector<16x8xbf16>, vector<8x32xbf16>, vector<16x32xf32> -> vector<16x32xf32>
    %104 = arith.addf %97, %103 : vector<16x32xf32>
    %105 = vector.extract_strided_slice %81 {offsets = [3, 0, 0], sizes = [1, 16, 8], strides = [1, 1, 1]} : vector<4x16x8xf32> to vector<1x16x8xf32>
    %106 = vector.shape_cast %105 : vector<1x16x8xf32> to vector<16x8xf32>
    %107 = arith.truncf %106 : vector<16x8xf32> to vector<16x8xbf16>
    %c3 = arith.constant 3 : index
    %c0_35 = arith.constant 0 : index
    %c0_36 = arith.constant 0 : index
    %108 = vector.load %arg7[%c3, %c0_35, %c0_36] : memref<4x8x32xbf16, #tpu.memory_space<vmem>>, vector<1x8x32xbf16>
    %109 = vector.shape_cast %108 : vector<1x8x32xbf16> to vector<8x32xbf16>
    %cst_37 = arith.constant dense<0.000000e+00> : vector<16x32xf32>
    %110 = tpu.matmul %107, %109, %cst_37 {dimension_numbers = #tpu.dot_dimension_numbers<[1], [0], [0], [1], [0, 0, 1, 1], [], []>} : vector<16x8xbf16>, vector<8x32xbf16>, vector<16x32xf32> -> vector<16x32xf32>
    %111 = arith.addf %104, %110 : vector<16x32xf32>
    %112 = arith.addf %3, %111 : vector<16x32xf32>
    %c0_38 = arith.constant 0 : index
    %c0_39 = arith.constant 0 : index
    %113 = vector.load %arg10[%c0_38, %c0_39] : memref<1x32xf32, #tpu.memory_space<vmem>>, vector<1x32xf32>
    %c0_40 = arith.constant 0 : index
    %c0_41 = arith.constant 0 : index
    %114 = vector.load %arg11[%c0_40, %c0_41] : memref<1x32xf32, #tpu.memory_space<vmem>>, vector<1x32xf32>
    %cst_42 = arith.constant dense<0.000000e+00> : vector<16xf32>
    %115 = vector.multi_reduction <add>, %112, %cst_42 [1] : vector<16x32xf32> to vector<16xf32>
    %116 = vector.shape_cast %115 : vector<16xf32> to vector<16x1xf32>
    %cst_43 = arith.constant 3.200000e+01 : f32
    %117 = vector.broadcast %cst_43 : f32 to vector<16x1xf32>
    %118 = arith.divf %116, %117 : vector<16x1xf32>
    %119 = vector.broadcast %118 : vector<16x1xf32> to vector<16x32xf32>
    %120 = arith.subf %112, %119 : vector<16x32xf32>
    %121 = arith.mulf %120, %120 : vector<16x32xf32>
    %cst_44 = arith.constant dense<0.000000e+00> : vector<16xf32>
    %122 = vector.multi_reduction <add>, %121, %cst_44 [1] : vector<16x32xf32> to vector<16xf32>
    %123 = vector.shape_cast %122 : vector<16xf32> to vector<16x1xf32>
    %cst_45 = arith.constant 3.200000e+01 : f32
    %124 = vector.broadcast %cst_45 : f32 to vector<16x1xf32>
    %125 = arith.divf %123, %124 : vector<16x1xf32>
    %126 = vector.broadcast %118 : vector<16x1xf32> to vector<16x32xf32>
    %127 = arith.subf %112, %126 : vector<16x32xf32>
    %cst_46 = arith.constant 9.99999974E-6 : f32
    %128 = vector.broadcast %cst_46 : f32 to vector<16x1xf32>
    %129 = arith.addf %125, %128 : vector<16x1xf32>
    %130 = math.rsqrt %129 : vector<16x1xf32>
    %131 = vector.broadcast %130 : vector<16x1xf32> to vector<16x32xf32>
    %132 = arith.mulf %127, %131 : vector<16x32xf32>
    %133 = vector.broadcast %113 : vector<1x32xf32> to vector<16x32xf32>
    %134 = arith.mulf %132, %133 : vector<16x32xf32>
    %135 = vector.broadcast %114 : vector<1x32xf32> to vector<16x32xf32>
    %136 = arith.addf %134, %135 : vector<16x32xf32>
    %137 = arith.truncf %136 : vector<16x32xf32> to vector<16x32xbf16>
    %c0_47 = arith.constant 0 : index
    %c0_48 = arith.constant 0 : index
    %138 = vector.load %arg12[%c0_47, %c0_48] : memref<32x128xbf16, #tpu.memory_space<vmem>>, vector<32x128xbf16>
    %cst_49 = arith.constant dense<0.000000e+00> : vector<16x128xf32>
    %139 = tpu.matmul %137, %138, %cst_49 {dimension_numbers = #tpu.dot_dimension_numbers<[1], [0], [0], [1], [0, 0, 1, 1], [], []>} : vector<16x32xbf16>, vector<32x128xbf16>, vector<16x128xf32> -> vector<16x128xf32>
    %c0_50 = arith.constant 0 : index
    %c0_51 = arith.constant 0 : index
    %140 = vector.load %arg13[%c0_50, %c0_51] : memref<1x128xf32, #tpu.memory_space<vmem>>, vector<1x128xf32>
    %141 = vector.broadcast %140 : vector<1x128xf32> to vector<16x128xf32>
    %142 = arith.addf %139, %141 : vector<16x128xf32>
    %cst_52 = arith.constant 5.000000e-01 : f32
    %143 = vector.broadcast %cst_52 : f32 to vector<16x128xf32>
    %144 = arith.mulf %143, %142 : vector<16x128xf32>
    %cst_53 = arith.constant 0.707106769 : f32
    %145 = vector.broadcast %cst_53 : f32 to vector<16x128xf32>
    %146 = arith.mulf %142, %145 : vector<16x128xf32>
    %cst_54 = arith.constant 0.000000e+00 : f32
    %147 = vector.broadcast %cst_54 : f32 to vector<16x128xf32>
    %148 = arith.cmpf oge, %146, %147 : vector<16x128xf32>
    %cst_55 = arith.constant 1.000000e+00 : f32
    %cst_56 = arith.constant -1.000000e+00 : f32
    %149 = vector.broadcast %cst_55 : f32 to vector<16x128xf32>
    %150 = vector.broadcast %cst_56 : f32 to vector<16x128xf32>
    %151 = arith.select %148, %149, %150 : vector<16x128xi1>, vector<16x128xf32>
    %152 = math.absf %146 : vector<16x128xf32>
    %cst_57 = arith.constant 0.327591091 : f32
    %153 = vector.broadcast %cst_57 : f32 to vector<16x128xf32>
    %154 = arith.mulf %153, %152 : vector<16x128xf32>
    %cst_58 = arith.constant 1.000000e+00 : f32
    %155 = vector.broadcast %cst_58 : f32 to vector<16x128xf32>
    %156 = arith.addf %155, %154 : vector<16x128xf32>
    %157 = tpu.reciprocal %156 {approx = true} : vector<16x128xf32> -> vector<16x128xf32>
    %cst_59 = arith.constant 1.06140542 : f32
    %158 = vector.broadcast %cst_59 : f32 to vector<16x128xf32>
    %159 = arith.mulf %158, %157 : vector<16x128xf32>
    %cst_60 = arith.constant -1.45315206 : f32
    %160 = vector.broadcast %cst_60 : f32 to vector<16x128xf32>
    %161 = arith.addf %159, %160 : vector<16x128xf32>
    %162 = arith.mulf %161, %157 : vector<16x128xf32>
    %cst_61 = arith.constant 1.42141378 : f32
    %163 = vector.broadcast %cst_61 : f32 to vector<16x128xf32>
    %164 = arith.addf %162, %163 : vector<16x128xf32>
    %165 = arith.mulf %164, %157 : vector<16x128xf32>
    %cst_62 = arith.constant -0.284496725 : f32
    %166 = vector.broadcast %cst_62 : f32 to vector<16x128xf32>
    %167 = arith.addf %165, %166 : vector<16x128xf32>
    %168 = arith.mulf %167, %157 : vector<16x128xf32>
    %cst_63 = arith.constant 0.254829586 : f32
    %169 = vector.broadcast %cst_63 : f32 to vector<16x128xf32>
    %170 = arith.addf %168, %169 : vector<16x128xf32>
    %171 = arith.mulf %170, %157 : vector<16x128xf32>
    %cst_64 = arith.constant 0.000000e+00 : f32
    %172 = vector.broadcast %cst_64 : f32 to vector<16x128xf32>
    %173 = arith.subf %172, %152 : vector<16x128xf32>
    %174 = arith.mulf %173, %152 : vector<16x128xf32>
    %175 = math.exp %174 : vector<16x128xf32>
    %176 = arith.mulf %171, %175 : vector<16x128xf32>
    %cst_65 = arith.constant 1.000000e+00 : f32
    %177 = vector.broadcast %cst_65 : f32 to vector<16x128xf32>
    %178 = arith.subf %177, %176 : vector<16x128xf32>
    %179 = arith.mulf %151, %178 : vector<16x128xf32>
    %cst_66 = arith.constant 1.000000e+00 : f32
    %180 = vector.broadcast %cst_66 : f32 to vector<16x128xf32>
    %181 = arith.addf %180, %179 : vector<16x128xf32>
    %182 = arith.mulf %144, %181 : vector<16x128xf32>
    %183 = arith.truncf %182 : vector<16x128xf32> to vector<16x128xbf16>
    %c0_67 = arith.constant 0 : index
    %c0_68 = arith.constant 0 : index
    %184 = vector.load %arg14[%c0_67, %c0_68] : memref<128x32xbf16, #tpu.memory_space<vmem>>, vector<128x32xbf16>
    %cst_69 = arith.constant dense<0.000000e+00> : vector<16x32xf32>
    %185 = tpu.matmul %183, %184, %cst_69 {dimension_numbers = #tpu.dot_dimension_numbers<[1], [0], [0], [1], [0, 0, 1, 1], [], []>} : vector<16x128xbf16>, vector<128x32xbf16>, vector<16x32xf32> -> vector<16x32xf32>
    %c0_70 = arith.constant 0 : index
    %c0_71 = arith.constant 0 : index
    %186 = vector.load %arg15[%c0_70, %c0_71] : memref<1x32xf32, #tpu.memory_space<vmem>>, vector<1x32xf32>
    %187 = vector.broadcast %186 : vector<1x32xf32> to vector<16x32xf32>
    %188 = arith.addf %185, %187 : vector<16x32xf32>
    %189 = arith.addf %112, %188 : vector<16x32xf32>
    %190 = vector.shape_cast %189 : vector<16x32xf32> to vector<1x16x32xf32>
    %191 = arith.truncf %190 : vector<1x16x32xf32> to vector<1x16x32xbf16>
    %c0_72 = arith.constant 0 : index
    %c0_73 = arith.constant 0 : index
    %c0_74 = arith.constant 0 : index
    %c0_75 = arith.constant 0 : index
    %192 = vector.load %arg16[%c0_72, %c0_73, %c0_74, %c0_75] : memref<1x1x16x32xbf16, #tpu.memory_space<vmem>>, vector<1x1x16x32xbf16>
    %193 = vector.shape_cast %192 : vector<1x1x16x32xbf16> to vector<1x16x32xbf16>
    %194 = vector.shape_cast %191 : vector<1x16x32xbf16> to vector<1x1x16x32xbf16>
    tpu.vector_store %arg16[%c0_72, %c0_73, %c0_74, %c0_75], %194 {strides = array<i32>} : memref<1x1x16x32xbf16, #tpu.memory_space<vmem>>, vector<1x1x16x32xbf16>,
    return
  }
  func.func @transform_0(%arg0: i32, %arg1: i32) -> (i32, i32, i32, i32) {
    %c0_i32 = arith.constant 0 : i32
    %c0_i32_0 = arith.constant 0 : i32
    %c0_i32_1 = arith.constant 0 : i32
    return %arg0, %arg1, %c0_i32, %c0_i32_0 : i32, i32, i32, i32
  }
  func.func @transform_1(%arg0: i32, %arg1: i32) -> (i32, i32) {
    %c0_i32 = arith.constant 0 : i32
    %c0_i32_0 = arith.constant 0 : i32
    %c0_i32_1 = arith.constant 0 : i32
    return %c0_i32, %c0_i32_0 : i32, i32
  }
  func.func @transform_2(%arg0: i32, %arg1: i32) -> (i32, i32) {
    %c0_i32 = arith.constant 0 : i32
    %c0_i32_0 = arith.constant 0 : i32
    %c0_i32_1 = arith.constant 0 : i32
    return %c0_i32, %c0_i32_0 : i32, i32
  }
  func.func @transform_3(%arg0: i32, %arg1: i32) -> (i32, i32) {
    %c0_i32 = arith.constant 0 : i32
    %c0_i32_0 = arith.constant 0 : i32
    %c0_i32_1 = arith.constant 0 : i32
    return %c0_i32, %c0_i32_0 : i32, i32
  }
  func.func @transform_4(%arg0: i32, %arg1: i32) -> (i32, i32) {
    %c0_i32 = arith.constant 0 : i32
    %c0_i32_0 = arith.constant 0 : i32
    %c0_i32_1 = arith.constant 0 : i32
    return %c0_i32, %c0_i32_0 : i32, i32
  }
  func.func @transform_5(%arg0: i32, %arg1: i32) -> (i32, i32, i32) {
    %c0_i32 = arith.constant 0 : i32
    %c0_i32_0 = arith.constant 0 : i32
    %c0_i32_1 = arith.constant 0 : i32
    %c0_i32_2 = arith.constant 0 : i32
    return %c0_i32, %c0_i32_0, %c0_i32_1 : i32, i32, i32
  }
  func.func @transform_6(%arg0: i32, %arg1: i32) -> (i32, i32) {
    %c0_i32 = arith.constant 0 : i32
    %c0_i32_0 = arith.constant 0 : i32
    %c0_i32_1 = arith.constant 0 : i32
    return %c0_i32, %c0_i32_0 : i32, i32
  }
  func.func @transform_7(%arg0: i32, %arg1: i32) -> (i32, i32, i32) {
    %c0_i32 = arith.constant 0 : i32
    %c0_i32_0 = arith.constant 0 : i32
    %c0_i32_1 = arith.constant 0 : i32
    %c0_i32_2 = arith.constant 0 : i32
    return %c0_i32, %c0_i32_0, %c0_i32_1 : i32, i32, i32
  }
  func.func @transform_8(%arg0: i32, %arg1: i32) -> (i32, i32) {
    %c0_i32 = arith.constant 0 : i32
    %c0_i32_0 = arith.constant 0 : i32
    %c0_i32_1 = arith.constant 0 : i32
    return %c0_i32, %c0_i32_0 : i32, i32
  }
  func.func @transform_9(%arg0: i32, %arg1: i32) -> (i32, i32) {
    %c0_i32 = arith.constant 0 : i32
    %c0_i32_0 = arith.constant 0 : i32
    %c0_i32_1 = arith.constant 0 : i32
    return %c0_i32, %c0_i32_0 : i32, i32
  }
  func.func @transform_10(%arg0: i32, %arg1: i32) -> (i32, i32) {
    %c0_i32 = arith.constant 0 : i32
    %c0_i32_0 = arith.constant 0 : i32
    %c0_i32_1 = arith.constant 0 : i32
    return %c0_i32, %c0_i32_0 : i32, i32
  }
  func.func @transform_11(%arg0: i32, %arg1: i32) -> (i32, i32) {
    %c0_i32 = arith.constant 0 : i32
    %c0_i32_0 = arith.constant 0 : i32
    %c0_i32_1 = arith.constant 0 : i32
    return %c0_i32, %c0_i32_0 : i32, i32
  }
  func.func @transform_12(%arg0: i32, %arg1: i32) -> (i32, i32) {
    %c0_i32 = arith.constant 0 : i32
    %c0_i32_0 = arith.constant 0 : i32
    %c0_i32_1 = arith.constant 0 : i32
    return %c0_i32, %c0_i32_0 : i32, i32
  }
  func.func @transform_13(%arg0: i32, %arg1: i32) -> (i32, i32) {
    %c0_i32 = arith.constant 0 : i32
    %c0_i32_0 = arith.constant 0 : i32
    %c0_i32_1 = arith.constant 0 : i32
    return %c0_i32, %c0_i32_0 : i32, i32
  }
  func.func @transform_14(%arg0: i32, %arg1: i32) -> (i32, i32, i32, i32) {
    %c0_i32 = arith.constant 0 : i32
    %c0_i32_0 = arith.constant 0 : i32
    %c0_i32_1 = arith.constant 0 : i32
    return %arg0, %arg1, %c0_i32, %c0_i32_0 : i32, i32, i32, i32
  }
}

module attributes {stable_mosaic.version = 11 : i64} {
  func.func @_merge_kernel(%arg0: i32, %arg1: i32, %arg2: memref<1x1x2x4x32xbf16, #tpu.memory_space<vmem>>, %arg3: memref<1x64xf32, #tpu.memory_space<vmem>>, %arg4: memref<1x64xf32, #tpu.memory_space<vmem>>, %arg5: memref<64x32xbf16, #tpu.memory_space<vmem>>, %arg6: memref<1x1x4x32xbf16, #tpu.memory_space<vmem>>) attributes {dimension_semantics = [#tpu.dimension_semantics<parallel>, #tpu.dimension_semantics<parallel>], iteration_bounds = array<i64: 2, 4>, scalar_prefetch = 0 : i64, scratch_operands = 0 : i64, tpu.core_type = #tpu.core_type<tc>, window_params = [{transform_indices = @transform_0, window_bounds = array<i64: 1, 1, 2, 4, 32>}, {pipeline_mode = #tpu.pipeline_mode<synchronous>, transform_indices = @transform_1, window_bounds = array<i64: 1, 64>}, {pipeline_mode = #tpu.pipeline_mode<synchronous>, transform_indices = @transform_2, window_bounds = array<i64: 1, 64>}, {pipeline_mode = #tpu.pipeline_mode<synchronous>, transform_indices = @transform_3, window_bounds = array<i64: 64, 32>}, {transform_indices = @transform_4, window_bounds = array<i64: 1, 1, 4, 32>}]} {
    %c0 = arith.constant 0 : index
    %c0_0 = arith.constant 0 : index
    %c0_1 = arith.constant 0 : index
    %c0_2 = arith.constant 0 : index
    %c0_3 = arith.constant 0 : index
    %0 = vector.load %arg2[%c0, %c0_0, %c0_1, %c0_2, %c0_3] : memref<1x1x2x4x32xbf16, #tpu.memory_space<vmem>>, vector<1x1x1x4x32xbf16>
    %1 = vector.shape_cast %0 : vector<1x1x1x4x32xbf16> to vector<4x32xbf16>
    %2 = arith.extf %1 : vector<4x32xbf16> to vector<4x32xf32>
    %c0_4 = arith.constant 0 : index
    %c0_5 = arith.constant 0 : index
    %c1 = arith.constant 1 : index
    %c0_6 = arith.constant 0 : index
    %c0_7 = arith.constant 0 : index
    %3 = vector.load %arg2[%c0_4, %c0_5, %c1, %c0_6, %c0_7] : memref<1x1x2x4x32xbf16, #tpu.memory_space<vmem>>, vector<1x1x1x4x32xbf16>
    %4 = vector.shape_cast %3 : vector<1x1x1x4x32xbf16> to vector<4x32xbf16>
    %5 = arith.extf %4 : vector<4x32xbf16> to vector<4x32xf32>
    %6 = tpu.concatenate %2, %5 in 1 : vector<4x32xf32>, vector<4x32xf32> -> vector<4x64xf32>
    %c0_8 = arith.constant 0 : index
    %c0_9 = arith.constant 0 : index
    %7 = vector.load %arg3[%c0_8, %c0_9] : memref<1x64xf32, #tpu.memory_space<vmem>>, vector<1x64xf32>
    %c0_10 = arith.constant 0 : index
    %c0_11 = arith.constant 0 : index
    %8 = vector.load %arg4[%c0_10, %c0_11] : memref<1x64xf32, #tpu.memory_space<vmem>>, vector<1x64xf32>
    %cst = arith.constant dense<0.000000e+00> : vector<4xf32>
    %9 = vector.multi_reduction <add>, %6, %cst [1] : vector<4x64xf32> to vector<4xf32>
    %10 = vector.shape_cast %9 : vector<4xf32> to vector<4x1xf32>
    %cst_12 = arith.constant 6.400000e+01 : f32
    %11 = vector.broadcast %cst_12 : f32 to vector<4x1xf32>
    %12 = arith.divf %10, %11 : vector<4x1xf32>
    %13 = vector.broadcast %12 : vector<4x1xf32> to vector<4x64xf32>
    %14 = arith.subf %6, %13 : vector<4x64xf32>
    %15 = arith.mulf %14, %14 : vector<4x64xf32>
    %cst_13 = arith.constant dense<0.000000e+00> : vector<4xf32>
    %16 = vector.multi_reduction <add>, %15, %cst_13 [1] : vector<4x64xf32> to vector<4xf32>
    %17 = vector.shape_cast %16 : vector<4xf32> to vector<4x1xf32>
    %cst_14 = arith.constant 6.400000e+01 : f32
    %18 = vector.broadcast %cst_14 : f32 to vector<4x1xf32>
    %19 = arith.divf %17, %18 : vector<4x1xf32>
    %20 = vector.broadcast %12 : vector<4x1xf32> to vector<4x64xf32>
    %21 = arith.subf %6, %20 : vector<4x64xf32>
    %cst_15 = arith.constant 9.99999974E-6 : f32
    %22 = vector.broadcast %cst_15 : f32 to vector<4x1xf32>
    %23 = arith.addf %19, %22 : vector<4x1xf32>
    %24 = math.rsqrt %23 : vector<4x1xf32>
    %25 = vector.broadcast %24 : vector<4x1xf32> to vector<4x64xf32>
    %26 = arith.mulf %21, %25 : vector<4x64xf32>
    %27 = vector.broadcast %7 : vector<1x64xf32> to vector<4x64xf32>
    %28 = arith.mulf %26, %27 : vector<4x64xf32>
    %29 = vector.broadcast %8 : vector<1x64xf32> to vector<4x64xf32>
    %30 = arith.addf %28, %29 : vector<4x64xf32>
    %31 = arith.truncf %30 : vector<4x64xf32> to vector<4x64xbf16>
    %c0_16 = arith.constant 0 : index
    %c0_17 = arith.constant 0 : index
    %32 = vector.load %arg5[%c0_16, %c0_17] : memref<64x32xbf16, #tpu.memory_space<vmem>>, vector<64x32xbf16>
    %cst_18 = arith.constant dense<0.000000e+00> : vector<4x32xf32>
    %33 = tpu.matmul %31, %32, %cst_18 {dimension_numbers = #tpu.dot_dimension_numbers<[1], [0], [0], [1], [0, 0, 1, 1], [], []>} : vector<4x64xbf16>, vector<64x32xbf16>, vector<4x32xf32> -> vector<4x32xf32>
    %34 = arith.truncf %33 : vector<4x32xf32> to vector<4x32xbf16>
    %c0_19 = arith.constant 0 : index
    %c0_20 = arith.constant 0 : index
    %c0_21 = arith.constant 0 : index
    %c0_22 = arith.constant 0 : index
    %35 = vector.load %arg6[%c0_19, %c0_20, %c0_21, %c0_22] : memref<1x1x4x32xbf16, #tpu.memory_space<vmem>>, vector<1x1x4x32xbf16>
    %36 = vector.shape_cast %35 : vector<1x1x4x32xbf16> to vector<4x32xbf16>
    %37 = vector.shape_cast %34 : vector<4x32xbf16> to vector<1x1x4x32xbf16>
    tpu.vector_store %arg6[%c0_19, %c0_20, %c0_21, %c0_22], %37 {strides = array<i32>} : memref<1x1x4x32xbf16, #tpu.memory_space<vmem>>, vector<1x1x4x32xbf16>,
    return
  }
  func.func @transform_0(%arg0: i32, %arg1: i32) -> (i32, i32, i32, i32, i32) {
    %c0_i32 = arith.constant 0 : i32
    %c0_i32_0 = arith.constant 0 : i32
    %c0_i32_1 = arith.constant 0 : i32
    %c0_i32_2 = arith.constant 0 : i32
    return %arg0, %arg1, %c0_i32, %c0_i32_0, %c0_i32_1 : i32, i32, i32, i32, i32
  }
  func.func @transform_1(%arg0: i32, %arg1: i32) -> (i32, i32) {
    %c0_i32 = arith.constant 0 : i32
    %c0_i32_0 = arith.constant 0 : i32
    %c0_i32_1 = arith.constant 0 : i32
    return %c0_i32, %c0_i32_0 : i32, i32
  }
  func.func @transform_2(%arg0: i32, %arg1: i32) -> (i32, i32) {
    %c0_i32 = arith.constant 0 : i32
    %c0_i32_0 = arith.constant 0 : i32
    %c0_i32_1 = arith.constant 0 : i32
    return %c0_i32, %c0_i32_0 : i32, i32
  }
  func.func @transform_3(%arg0: i32, %arg1: i32) -> (i32, i32) {
    %c0_i32 = arith.constant 0 : i32
    %c0_i32_0 = arith.constant 0 : i32
    %c0_i32_1 = arith.constant 0 : i32
    return %c0_i32, %c0_i32_0 : i32, i32
  }
  func.func @transform_4(%arg0: i32, %arg1: i32) -> (i32, i32, i32, i32) {
    %c0_i32 = arith.constant 0 : i32
    %c0_i32_0 = arith.constant 0 : i32
    %c0_i32_1 = arith.constant 0 : i32
    return %arg0, %arg1, %c0_i32, %c0_i32_0 : i32, i32, i32, i32
  }
}

module attributes {stable_mosaic.version = 11 : i64} {
  func.func @_swin_block_kernel(%arg0: i32, %arg1: i32, %arg2: memref<1x1x16x32xbf16, #tpu.memory_space<vmem>>, %arg3: memref<1x32xf32, #tpu.memory_space<vmem>>, %arg4: memref<1x32xf32, #tpu.memory_space<vmem>>, %arg5: memref<32x96xbf16, #tpu.memory_space<vmem>>, %arg6: memref<1x96xf32, #tpu.memory_space<vmem>>, %arg7: memref<4x8x32xbf16, #tpu.memory_space<vmem>>, %arg8: memref<1x32xf32, #tpu.memory_space<vmem>>, %arg9: memref<4x16x16xf32, #tpu.memory_space<vmem>>, %arg10: memref<1x32xf32, #tpu.memory_space<vmem>>, %arg11: memref<1x32xf32, #tpu.memory_space<vmem>>, %arg12: memref<32x128xbf16, #tpu.memory_space<vmem>>, %arg13: memref<1x128xf32, #tpu.memory_space<vmem>>, %arg14: memref<128x32xbf16, #tpu.memory_space<vmem>>, %arg15: memref<1x32xf32, #tpu.memory_space<vmem>>, %arg16: memref<1x32xf32, #tpu.memory_space<vmem>>, %arg17: memref<1x32xf32, #tpu.memory_space<vmem>>, %arg18: memref<1x1x16x32xf32, #tpu.memory_space<vmem>>) attributes {dimension_semantics = [#tpu.dimension_semantics<parallel>, #tpu.dimension_semantics<parallel>], iteration_bounds = array<i64: 2, 1>, scalar_prefetch = 0 : i64, scratch_operands = 0 : i64, tpu.core_type = #tpu.core_type<tc>, window_params = [{transform_indices = @transform_0, window_bounds = array<i64: 1, 1, 16, 32>}, {pipeline_mode = #tpu.pipeline_mode<synchronous>, transform_indices = @transform_1, window_bounds = array<i64: 1, 32>}, {pipeline_mode = #tpu.pipeline_mode<synchronous>, transform_indices = @transform_2, window_bounds = array<i64: 1, 32>}, {pipeline_mode = #tpu.pipeline_mode<synchronous>, transform_indices = @transform_3, window_bounds = array<i64: 32, 96>}, {pipeline_mode = #tpu.pipeline_mode<synchronous>, transform_indices = @transform_4, window_bounds = array<i64: 1, 96>}, {pipeline_mode = #tpu.pipeline_mode<synchronous>, transform_indices = @transform_5, window_bounds = array<i64: 4, 8, 32>}, {pipeline_mode = #tpu.pipeline_mode<synchronous>, transform_indices = @transform_6, window_bounds = array<i64: 1, 32>}, {pipeline_mode = #tpu.pipeline_mode<synchronous>, transform_indices = @transform_7, window_bounds = array<i64: 4, 16, 16>}, {pipeline_mode = #tpu.pipeline_mode<synchronous>, transform_indices = @transform_8, window_bounds = array<i64: 1, 32>}, {pipeline_mode = #tpu.pipeline_mode<synchronous>, transform_indices = @transform_9, window_bounds = array<i64: 1, 32>}, {pipeline_mode = #tpu.pipeline_mode<synchronous>, transform_indices = @transform_10, window_bounds = array<i64: 32, 128>}, {pipeline_mode = #tpu.pipeline_mode<synchronous>, transform_indices = @transform_11, window_bounds = array<i64: 1, 128>}, {pipeline_mode = #tpu.pipeline_mode<synchronous>, transform_indices = @transform_12, window_bounds = array<i64: 128, 32>}, {pipeline_mode = #tpu.pipeline_mode<synchronous>, transform_indices = @transform_13, window_bounds = array<i64: 1, 32>}, {pipeline_mode = #tpu.pipeline_mode<synchronous>, transform_indices = @transform_14, window_bounds = array<i64: 1, 32>}, {pipeline_mode = #tpu.pipeline_mode<synchronous>, transform_indices = @transform_15, window_bounds = array<i64: 1, 32>}, {transform_indices = @transform_16, window_bounds = array<i64: 1, 1, 16, 32>}]} {
    %c0 = arith.constant 0 : index
    %c0_0 = arith.constant 0 : index
    %c0_1 = arith.constant 0 : index
    %c0_2 = arith.constant 0 : index
    %0 = vector.load %arg2[%c0, %c0_0, %c0_1, %c0_2] : memref<1x1x16x32xbf16, #tpu.memory_space<vmem>>, vector<1x1x16x32xbf16>
    %1 = vector.shape_cast %0 : vector<1x1x16x32xbf16> to vector<1x16x32xbf16>
    %2 = arith.extf %1 : vector<1x16x32xbf16> to vector<1x16x32xf32>
    %3 = vector.shape_cast %2 : vector<1x16x32xf32> to vector<16x32xf32>
    %c0_3 = arith.constant 0 : index
    %c0_4 = arith.constant 0 : index
    %4 = vector.load %arg3[%c0_3, %c0_4] : memref<1x32xf32, #tpu.memory_space<vmem>>, vector<1x32xf32>
    %c0_5 = arith.constant 0 : index
    %c0_6 = arith.constant 0 : index
    %5 = vector.load %arg4[%c0_5, %c0_6] : memref<1x32xf32, #tpu.memory_space<vmem>>, vector<1x32xf32>
    %cst = arith.constant dense<0.000000e+00> : vector<16xf32>
    %6 = vector.multi_reduction <add>, %3, %cst [1] : vector<16x32xf32> to vector<16xf32>
    %7 = vector.shape_cast %6 : vector<16xf32> to vector<16x1xf32>
    %cst_7 = arith.constant 3.200000e+01 : f32
    %8 = vector.broadcast %cst_7 : f32 to vector<16x1xf32>
    %9 = arith.divf %7, %8 : vector<16x1xf32>
    %10 = vector.broadcast %9 : vector<16x1xf32> to vector<16x32xf32>
    %11 = arith.subf %3, %10 : vector<16x32xf32>
    %12 = arith.mulf %11, %11 : vector<16x32xf32>
    %cst_8 = arith.constant dense<0.000000e+00> : vector<16xf32>
    %13 = vector.multi_reduction <add>, %12, %cst_8 [1] : vector<16x32xf32> to vector<16xf32>
    %14 = vector.shape_cast %13 : vector<16xf32> to vector<16x1xf32>
    %cst_9 = arith.constant 3.200000e+01 : f32
    %15 = vector.broadcast %cst_9 : f32 to vector<16x1xf32>
    %16 = arith.divf %14, %15 : vector<16x1xf32>
    %17 = vector.broadcast %9 : vector<16x1xf32> to vector<16x32xf32>
    %18 = arith.subf %3, %17 : vector<16x32xf32>
    %cst_10 = arith.constant 9.99999974E-6 : f32
    %19 = vector.broadcast %cst_10 : f32 to vector<16x1xf32>
    %20 = arith.addf %16, %19 : vector<16x1xf32>
    %21 = math.rsqrt %20 : vector<16x1xf32>
    %22 = vector.broadcast %21 : vector<16x1xf32> to vector<16x32xf32>
    %23 = arith.mulf %18, %22 : vector<16x32xf32>
    %24 = vector.broadcast %4 : vector<1x32xf32> to vector<16x32xf32>
    %25 = arith.mulf %23, %24 : vector<16x32xf32>
    %26 = vector.broadcast %5 : vector<1x32xf32> to vector<16x32xf32>
    %27 = arith.addf %25, %26 : vector<16x32xf32>
    %28 = arith.truncf %27 : vector<16x32xf32> to vector<16x32xbf16>
    %c0_11 = arith.constant 0 : index
    %c0_12 = arith.constant 0 : index
    %29 = vector.load %arg5[%c0_11, %c0_12] : memref<32x96xbf16, #tpu.memory_space<vmem>>, vector<32x96xbf16>
    %cst_13 = arith.constant dense<0.000000e+00> : vector<16x96xf32>
    %30 = tpu.matmul %28, %29, %cst_13 {dimension_numbers = #tpu.dot_dimension_numbers<[1], [0], [0], [1], [0, 0, 1, 1], [], []>} : vector<16x32xbf16>, vector<32x96xbf16>, vector<16x96xf32> -> vector<16x96xf32>
    %c0_14 = arith.constant 0 : index
    %c0_15 = arith.constant 0 : index
    %31 = vector.load %arg6[%c0_14, %c0_15] : memref<1x96xf32, #tpu.memory_space<vmem>>, vector<1x96xf32>
    %32 = vector.broadcast %31 : vector<1x96xf32> to vector<16x96xf32>
    %33 = arith.addf %30, %32 : vector<16x96xf32>
    %34 = vector.extract_strided_slice %33 {offsets = [0, 0], sizes = [16, 8], strides = [1, 1]} : vector<16x96xf32> to vector<16x8xf32>
    %35 = vector.shape_cast %34 : vector<16x8xf32> to vector<1x16x8xf32>
    %36 = vector.extract_strided_slice %33 {offsets = [0, 8], sizes = [16, 8], strides = [1, 1]} : vector<16x96xf32> to vector<16x8xf32>
    %37 = vector.shape_cast %36 : vector<16x8xf32> to vector<1x16x8xf32>
    %38 = vector.extract_strided_slice %33 {offsets = [0, 16], sizes = [16, 8], strides = [1, 1]} : vector<16x96xf32> to vector<16x8xf32>
    %39 = vector.shape_cast %38 : vector<16x8xf32> to vector<1x16x8xf32>
    %40 = vector.extract_strided_slice %33 {offsets = [0, 24], sizes = [16, 8], strides = [1, 1]} : vector<16x96xf32> to vector<16x8xf32>
    %41 = vector.shape_cast %40 : vector<16x8xf32> to vector<1x16x8xf32>
    %42 = tpu.concatenate %35, %37, %39, %41 in 0 : vector<1x16x8xf32>, vector<1x16x8xf32>, vector<1x16x8xf32>, vector<1x16x8xf32> -> vector<4x16x8xf32>
    %43 = arith.truncf %42 : vector<4x16x8xf32> to vector<4x16x8xbf16>
    %44 = vector.extract_strided_slice %33 {offsets = [0, 32], sizes = [16, 8], strides = [1, 1]} : vector<16x96xf32> to vector<16x8xf32>
    %45 = vector.shape_cast %44 : vector<16x8xf32> to vector<1x16x8xf32>
    %46 = vector.extract_strided_slice %33 {offsets = [0, 40], sizes = [16, 8], strides = [1, 1]} : vector<16x96xf32> to vector<16x8xf32>
    %47 = vector.shape_cast %46 : vector<16x8xf32> to vector<1x16x8xf32>
    %48 = vector.extract_strided_slice %33 {offsets = [0, 48], sizes = [16, 8], strides = [1, 1]} : vector<16x96xf32> to vector<16x8xf32>
    %49 = vector.shape_cast %48 : vector<16x8xf32> to vector<1x16x8xf32>
    %50 = vector.extract_strided_slice %33 {offsets = [0, 56], sizes = [16, 8], strides = [1, 1]} : vector<16x96xf32> to vector<16x8xf32>
    %51 = vector.shape_cast %50 : vector<16x8xf32> to vector<1x16x8xf32>
    %52 = tpu.concatenate %45, %47, %49, %51 in 0 : vector<1x16x8xf32>, vector<1x16x8xf32>, vector<1x16x8xf32>, vector<1x16x8xf32> -> vector<4x16x8xf32>
    %53 = arith.truncf %52 : vector<4x16x8xf32> to vector<4x16x8xbf16>
    %54 = vector.extract_strided_slice %33 {offsets = [0, 64], sizes = [16, 8], strides = [1, 1]} : vector<16x96xf32> to vector<16x8xf32>
    %55 = vector.shape_cast %54 : vector<16x8xf32> to vector<1x16x8xf32>
    %56 = vector.extract_strided_slice %33 {offsets = [0, 72], sizes = [16, 8], strides = [1, 1]} : vector<16x96xf32> to vector<16x8xf32>
    %57 = vector.shape_cast %56 : vector<16x8xf32> to vector<1x16x8xf32>
    %58 = vector.extract_strided_slice %33 {offsets = [0, 80], sizes = [16, 8], strides = [1, 1]} : vector<16x96xf32> to vector<16x8xf32>
    %59 = vector.shape_cast %58 : vector<16x8xf32> to vector<1x16x8xf32>
    %60 = vector.extract_strided_slice %33 {offsets = [0, 88], sizes = [16, 8], strides = [1, 1]} : vector<16x96xf32> to vector<16x8xf32>
    %61 = vector.shape_cast %60 : vector<16x8xf32> to vector<1x16x8xf32>
    %62 = tpu.concatenate %55, %57, %59, %61 in 0 : vector<1x16x8xf32>, vector<1x16x8xf32>, vector<1x16x8xf32>, vector<1x16x8xf32> -> vector<4x16x8xf32>
    %63 = arith.truncf %62 : vector<4x16x8xf32> to vector<4x16x8xbf16>
    "tpu.trace_start"() <{level = 10 : i32, message = "bnd,bmd->bnm"}> : () -> ()
    %cst_16 = arith.constant dense<0.000000e+00> : vector<4x16x16xf32>
    %64 = tpu.matmul %43, %53, %cst_16 {dimension_numbers = #tpu.dot_dimension_numbers<[2], [2], [1], [1], [0, 0, 0, 1, 1, 1], [0], [0]>} : vector<4x16x8xbf16>, vector<4x16x8xbf16>, vector<4x16x16xf32> -> vector<4x16x16xf32>
    "tpu.trace_stop"() : () -> ()
    %65 = vector.shape_cast %64 : vector<4x16x16xf32> to vector<4x1x16x16xf32>
    %c0_17 = arith.constant 0 : index
    %c0_18 = arith.constant 0 : index
    %c0_19 = arith.constant 0 : index
    %66 = vector.load %arg9[%c0_17, %c0_18, %c0_19] : memref<4x16x16xf32, #tpu.memory_space<vmem>>, vector<4x16x16xf32>
    %67 = vector.shape_cast %66 : vector<4x16x16xf32> to vector<4x1x16x16xf32>
    %68 = arith.addf %65, %67 : vector<4x1x16x16xf32>
    %cst_20 = arith.constant dense<0xFF800000> : vector<4x1x16xf32>
    %69 = vector.multi_reduction <maximumf>, %68, %cst_20 [3] : vector<4x1x16x16xf32> to vector<4x1x16xf32>
    %70 = vector.shape_cast %69 : vector<4x1x16xf32> to vector<4x1x16x1xf32>
    %71 = vector.broadcast %70 : vector<4x1x16x1xf32> to vector<4x1x16x16xf32>
    %72 = arith.subf %68, %71 : vector<4x1x16x16xf32>
    %73 = math.exp %72 : vector<4x1x16x16xf32>
    %cst_21 = arith.constant dense<0.000000e+00> : vector<4x1x16xf32>
    %74 = vector.multi_reduction <add>, %73, %cst_21 [3] : vector<4x1x16x16xf32> to vector<4x1x16xf32>
    %75 = vector.shape_cast %74 : vector<4x1x16xf32> to vector<4x1x16x1xf32>
    %76 = tpu.reciprocal %75 {approx = true} : vector<4x1x16x1xf32> -> vector<4x1x16x1xf32>
    %77 = vector.broadcast %76 : vector<4x1x16x1xf32> to vector<4x1x16x16xf32>
    %78 = arith.mulf %73, %77 : vector<4x1x16x16xf32>
    %79 = vector.shape_cast %78 : vector<4x1x16x16xf32> to vector<4x16x16xf32>
    %80 = arith.truncf %79 : vector<4x16x16xf32> to vector<4x16x16xbf16>
    "tpu.trace_start"() <{level = 10 : i32, message = "bnm,bmd->bnd"}> : () -> ()
    %cst_22 = arith.constant dense<0.000000e+00> : vector<4x16x8xf32>
    %81 = tpu.matmul %80, %63, %cst_22 {dimension_numbers = #tpu.dot_dimension_numbers<[2], [1], [1], [2], [0, 0, 0, 1, 1, 2], [0], [0]>} : vector<4x16x16xbf16>, vector<4x16x8xbf16>, vector<4x16x8xf32> -> vector<4x16x8xf32>
    "tpu.trace_stop"() : () -> ()
    %c0_23 = arith.constant 0 : index
    %c0_24 = arith.constant 0 : index
    %82 = vector.load %arg8[%c0_23, %c0_24] : memref<1x32xf32, #tpu.memory_space<vmem>>, vector<1x32xf32>
    %83 = vector.extract_strided_slice %81 {offsets = [0, 0, 0], sizes = [1, 16, 8], strides = [1, 1, 1]} : vector<4x16x8xf32> to vector<1x16x8xf32>
    %84 = vector.shape_cast %83 : vector<1x16x8xf32> to vector<16x8xf32>
    %85 = arith.truncf %84 : vector<16x8xf32> to vector<16x8xbf16>
    %c0_25 = arith.constant 0 : index
    %c0_26 = arith.constant 0 : index
    %c0_27 = arith.constant 0 : index
    %86 = vector.load %arg7[%c0_25, %c0_26, %c0_27] : memref<4x8x32xbf16, #tpu.memory_space<vmem>>, vector<1x8x32xbf16>
    %87 = vector.shape_cast %86 : vector<1x8x32xbf16> to vector<8x32xbf16>
    %cst_28 = arith.constant dense<0.000000e+00> : vector<16x32xf32>
    %88 = tpu.matmul %85, %87, %cst_28 {dimension_numbers = #tpu.dot_dimension_numbers<[1], [0], [0], [1], [0, 0, 1, 1], [], []>} : vector<16x8xbf16>, vector<8x32xbf16>, vector<16x32xf32> -> vector<16x32xf32>
    %89 = vector.broadcast %82 : vector<1x32xf32> to vector<16x32xf32>
    %90 = arith.addf %89, %88 : vector<16x32xf32>
    %91 = vector.extract_strided_slice %81 {offsets = [1, 0, 0], sizes = [1, 16, 8], strides = [1, 1, 1]} : vector<4x16x8xf32> to vector<1x16x8xf32>
    %92 = vector.shape_cast %91 : vector<1x16x8xf32> to vector<16x8xf32>
    %93 = arith.truncf %92 : vector<16x8xf32> to vector<16x8xbf16>
    %c1 = arith.constant 1 : index
    %c0_29 = arith.constant 0 : index
    %c0_30 = arith.constant 0 : index
    %94 = vector.load %arg7[%c1, %c0_29, %c0_30] : memref<4x8x32xbf16, #tpu.memory_space<vmem>>, vector<1x8x32xbf16>
    %95 = vector.shape_cast %94 : vector<1x8x32xbf16> to vector<8x32xbf16>
    %cst_31 = arith.constant dense<0.000000e+00> : vector<16x32xf32>
    %96 = tpu.matmul %93, %95, %cst_31 {dimension_numbers = #tpu.dot_dimension_numbers<[1], [0], [0], [1], [0, 0, 1, 1], [], []>} : vector<16x8xbf16>, vector<8x32xbf16>, vector<16x32xf32> -> vector<16x32xf32>
    %97 = arith.addf %90, %96 : vector<16x32xf32>
    %98 = vector.extract_strided_slice %81 {offsets = [2, 0, 0], sizes = [1, 16, 8], strides = [1, 1, 1]} : vector<4x16x8xf32> to vector<1x16x8xf32>
    %99 = vector.shape_cast %98 : vector<1x16x8xf32> to vector<16x8xf32>
    %100 = arith.truncf %99 : vector<16x8xf32> to vector<16x8xbf16>
    %c2 = arith.constant 2 : index
    %c0_32 = arith.constant 0 : index
    %c0_33 = arith.constant 0 : index
    %101 = vector.load %arg7[%c2, %c0_32, %c0_33] : memref<4x8x32xbf16, #tpu.memory_space<vmem>>, vector<1x8x32xbf16>
    %102 = vector.shape_cast %101 : vector<1x8x32xbf16> to vector<8x32xbf16>
    %cst_34 = arith.constant dense<0.000000e+00> : vector<16x32xf32>
    %103 = tpu.matmul %100, %102, %cst_34 {dimension_numbers = #tpu.dot_dimension_numbers<[1], [0], [0], [1], [0, 0, 1, 1], [], []>} : vector<16x8xbf16>, vector<8x32xbf16>, vector<16x32xf32> -> vector<16x32xf32>
    %104 = arith.addf %97, %103 : vector<16x32xf32>
    %105 = vector.extract_strided_slice %81 {offsets = [3, 0, 0], sizes = [1, 16, 8], strides = [1, 1, 1]} : vector<4x16x8xf32> to vector<1x16x8xf32>
    %106 = vector.shape_cast %105 : vector<1x16x8xf32> to vector<16x8xf32>
    %107 = arith.truncf %106 : vector<16x8xf32> to vector<16x8xbf16>
    %c3 = arith.constant 3 : index
    %c0_35 = arith.constant 0 : index
    %c0_36 = arith.constant 0 : index
    %108 = vector.load %arg7[%c3, %c0_35, %c0_36] : memref<4x8x32xbf16, #tpu.memory_space<vmem>>, vector<1x8x32xbf16>
    %109 = vector.shape_cast %108 : vector<1x8x32xbf16> to vector<8x32xbf16>
    %cst_37 = arith.constant dense<0.000000e+00> : vector<16x32xf32>
    %110 = tpu.matmul %107, %109, %cst_37 {dimension_numbers = #tpu.dot_dimension_numbers<[1], [0], [0], [1], [0, 0, 1, 1], [], []>} : vector<16x8xbf16>, vector<8x32xbf16>, vector<16x32xf32> -> vector<16x32xf32>
    %111 = arith.addf %104, %110 : vector<16x32xf32>
    %112 = arith.addf %3, %111 : vector<16x32xf32>
    %c0_38 = arith.constant 0 : index
    %c0_39 = arith.constant 0 : index
    %113 = vector.load %arg10[%c0_38, %c0_39] : memref<1x32xf32, #tpu.memory_space<vmem>>, vector<1x32xf32>
    %c0_40 = arith.constant 0 : index
    %c0_41 = arith.constant 0 : index
    %114 = vector.load %arg11[%c0_40, %c0_41] : memref<1x32xf32, #tpu.memory_space<vmem>>, vector<1x32xf32>
    %cst_42 = arith.constant dense<0.000000e+00> : vector<16xf32>
    %115 = vector.multi_reduction <add>, %112, %cst_42 [1] : vector<16x32xf32> to vector<16xf32>
    %116 = vector.shape_cast %115 : vector<16xf32> to vector<16x1xf32>
    %cst_43 = arith.constant 3.200000e+01 : f32
    %117 = vector.broadcast %cst_43 : f32 to vector<16x1xf32>
    %118 = arith.divf %116, %117 : vector<16x1xf32>
    %119 = vector.broadcast %118 : vector<16x1xf32> to vector<16x32xf32>
    %120 = arith.subf %112, %119 : vector<16x32xf32>
    %121 = arith.mulf %120, %120 : vector<16x32xf32>
    %cst_44 = arith.constant dense<0.000000e+00> : vector<16xf32>
    %122 = vector.multi_reduction <add>, %121, %cst_44 [1] : vector<16x32xf32> to vector<16xf32>
    %123 = vector.shape_cast %122 : vector<16xf32> to vector<16x1xf32>
    %cst_45 = arith.constant 3.200000e+01 : f32
    %124 = vector.broadcast %cst_45 : f32 to vector<16x1xf32>
    %125 = arith.divf %123, %124 : vector<16x1xf32>
    %126 = vector.broadcast %118 : vector<16x1xf32> to vector<16x32xf32>
    %127 = arith.subf %112, %126 : vector<16x32xf32>
    %cst_46 = arith.constant 9.99999974E-6 : f32
    %128 = vector.broadcast %cst_46 : f32 to vector<16x1xf32>
    %129 = arith.addf %125, %128 : vector<16x1xf32>
    %130 = math.rsqrt %129 : vector<16x1xf32>
    %131 = vector.broadcast %130 : vector<16x1xf32> to vector<16x32xf32>
    %132 = arith.mulf %127, %131 : vector<16x32xf32>
    %133 = vector.broadcast %113 : vector<1x32xf32> to vector<16x32xf32>
    %134 = arith.mulf %132, %133 : vector<16x32xf32>
    %135 = vector.broadcast %114 : vector<1x32xf32> to vector<16x32xf32>
    %136 = arith.addf %134, %135 : vector<16x32xf32>
    %137 = arith.truncf %136 : vector<16x32xf32> to vector<16x32xbf16>
    %c0_47 = arith.constant 0 : index
    %c0_48 = arith.constant 0 : index
    %138 = vector.load %arg12[%c0_47, %c0_48] : memref<32x128xbf16, #tpu.memory_space<vmem>>, vector<32x128xbf16>
    %cst_49 = arith.constant dense<0.000000e+00> : vector<16x128xf32>
    %139 = tpu.matmul %137, %138, %cst_49 {dimension_numbers = #tpu.dot_dimension_numbers<[1], [0], [0], [1], [0, 0, 1, 1], [], []>} : vector<16x32xbf16>, vector<32x128xbf16>, vector<16x128xf32> -> vector<16x128xf32>
    %c0_50 = arith.constant 0 : index
    %c0_51 = arith.constant 0 : index
    %140 = vector.load %arg13[%c0_50, %c0_51] : memref<1x128xf32, #tpu.memory_space<vmem>>, vector<1x128xf32>
    %141 = vector.broadcast %140 : vector<1x128xf32> to vector<16x128xf32>
    %142 = arith.addf %139, %141 : vector<16x128xf32>
    %cst_52 = arith.constant 5.000000e-01 : f32
    %143 = vector.broadcast %cst_52 : f32 to vector<16x128xf32>
    %144 = arith.mulf %143, %142 : vector<16x128xf32>
    %cst_53 = arith.constant 0.707106769 : f32
    %145 = vector.broadcast %cst_53 : f32 to vector<16x128xf32>
    %146 = arith.mulf %142, %145 : vector<16x128xf32>
    %cst_54 = arith.constant 0.000000e+00 : f32
    %147 = vector.broadcast %cst_54 : f32 to vector<16x128xf32>
    %148 = arith.cmpf oge, %146, %147 : vector<16x128xf32>
    %cst_55 = arith.constant 1.000000e+00 : f32
    %cst_56 = arith.constant -1.000000e+00 : f32
    %149 = vector.broadcast %cst_55 : f32 to vector<16x128xf32>
    %150 = vector.broadcast %cst_56 : f32 to vector<16x128xf32>
    %151 = arith.select %148, %149, %150 : vector<16x128xi1>, vector<16x128xf32>
    %152 = math.absf %146 : vector<16x128xf32>
    %cst_57 = arith.constant 0.327591091 : f32
    %153 = vector.broadcast %cst_57 : f32 to vector<16x128xf32>
    %154 = arith.mulf %153, %152 : vector<16x128xf32>
    %cst_58 = arith.constant 1.000000e+00 : f32
    %155 = vector.broadcast %cst_58 : f32 to vector<16x128xf32>
    %156 = arith.addf %155, %154 : vector<16x128xf32>
    %157 = tpu.reciprocal %156 {approx = true} : vector<16x128xf32> -> vector<16x128xf32>
    %cst_59 = arith.constant 1.06140542 : f32
    %158 = vector.broadcast %cst_59 : f32 to vector<16x128xf32>
    %159 = arith.mulf %158, %157 : vector<16x128xf32>
    %cst_60 = arith.constant -1.45315206 : f32
    %160 = vector.broadcast %cst_60 : f32 to vector<16x128xf32>
    %161 = arith.addf %159, %160 : vector<16x128xf32>
    %162 = arith.mulf %161, %157 : vector<16x128xf32>
    %cst_61 = arith.constant 1.42141378 : f32
    %163 = vector.broadcast %cst_61 : f32 to vector<16x128xf32>
    %164 = arith.addf %162, %163 : vector<16x128xf32>
    %165 = arith.mulf %164, %157 : vector<16x128xf32>
    %cst_62 = arith.constant -0.284496725 : f32
    %166 = vector.broadcast %cst_62 : f32 to vector<16x128xf32>
    %167 = arith.addf %165, %166 : vector<16x128xf32>
    %168 = arith.mulf %167, %157 : vector<16x128xf32>
    %cst_63 = arith.constant 0.254829586 : f32
    %169 = vector.broadcast %cst_63 : f32 to vector<16x128xf32>
    %170 = arith.addf %168, %169 : vector<16x128xf32>
    %171 = arith.mulf %170, %157 : vector<16x128xf32>
    %cst_64 = arith.constant 0.000000e+00 : f32
    %172 = vector.broadcast %cst_64 : f32 to vector<16x128xf32>
    %173 = arith.subf %172, %152 : vector<16x128xf32>
    %174 = arith.mulf %173, %152 : vector<16x128xf32>
    %175 = math.exp %174 : vector<16x128xf32>
    %176 = arith.mulf %171, %175 : vector<16x128xf32>
    %cst_65 = arith.constant 1.000000e+00 : f32
    %177 = vector.broadcast %cst_65 : f32 to vector<16x128xf32>
    %178 = arith.subf %177, %176 : vector<16x128xf32>
    %179 = arith.mulf %151, %178 : vector<16x128xf32>
    %cst_66 = arith.constant 1.000000e+00 : f32
    %180 = vector.broadcast %cst_66 : f32 to vector<16x128xf32>
    %181 = arith.addf %180, %179 : vector<16x128xf32>
    %182 = arith.mulf %144, %181 : vector<16x128xf32>
    %183 = arith.truncf %182 : vector<16x128xf32> to vector<16x128xbf16>
    %c0_67 = arith.constant 0 : index
    %c0_68 = arith.constant 0 : index
    %184 = vector.load %arg14[%c0_67, %c0_68] : memref<128x32xbf16, #tpu.memory_space<vmem>>, vector<128x32xbf16>
    %cst_69 = arith.constant dense<0.000000e+00> : vector<16x32xf32>
    %185 = tpu.matmul %183, %184, %cst_69 {dimension_numbers = #tpu.dot_dimension_numbers<[1], [0], [0], [1], [0, 0, 1, 1], [], []>} : vector<16x128xbf16>, vector<128x32xbf16>, vector<16x32xf32> -> vector<16x32xf32>
    %c0_70 = arith.constant 0 : index
    %c0_71 = arith.constant 0 : index
    %186 = vector.load %arg15[%c0_70, %c0_71] : memref<1x32xf32, #tpu.memory_space<vmem>>, vector<1x32xf32>
    %187 = vector.broadcast %186 : vector<1x32xf32> to vector<16x32xf32>
    %188 = arith.addf %185, %187 : vector<16x32xf32>
    %189 = arith.addf %112, %188 : vector<16x32xf32>
    %c0_72 = arith.constant 0 : index
    %c0_73 = arith.constant 0 : index
    %190 = vector.load %arg16[%c0_72, %c0_73] : memref<1x32xf32, #tpu.memory_space<vmem>>, vector<1x32xf32>
    %c0_74 = arith.constant 0 : index
    %c0_75 = arith.constant 0 : index
    %191 = vector.load %arg17[%c0_74, %c0_75] : memref<1x32xf32, #tpu.memory_space<vmem>>, vector<1x32xf32>
    %cst_76 = arith.constant dense<0.000000e+00> : vector<16xf32>
    %192 = vector.multi_reduction <add>, %189, %cst_76 [1] : vector<16x32xf32> to vector<16xf32>
    %193 = vector.shape_cast %192 : vector<16xf32> to vector<16x1xf32>
    %cst_77 = arith.constant 3.200000e+01 : f32
    %194 = vector.broadcast %cst_77 : f32 to vector<16x1xf32>
    %195 = arith.divf %193, %194 : vector<16x1xf32>
    %196 = vector.broadcast %195 : vector<16x1xf32> to vector<16x32xf32>
    %197 = arith.subf %189, %196 : vector<16x32xf32>
    %198 = arith.mulf %197, %197 : vector<16x32xf32>
    %cst_78 = arith.constant dense<0.000000e+00> : vector<16xf32>
    %199 = vector.multi_reduction <add>, %198, %cst_78 [1] : vector<16x32xf32> to vector<16xf32>
    %200 = vector.shape_cast %199 : vector<16xf32> to vector<16x1xf32>
    %cst_79 = arith.constant 3.200000e+01 : f32
    %201 = vector.broadcast %cst_79 : f32 to vector<16x1xf32>
    %202 = arith.divf %200, %201 : vector<16x1xf32>
    %203 = vector.broadcast %195 : vector<16x1xf32> to vector<16x32xf32>
    %204 = arith.subf %189, %203 : vector<16x32xf32>
    %cst_80 = arith.constant 9.99999974E-6 : f32
    %205 = vector.broadcast %cst_80 : f32 to vector<16x1xf32>
    %206 = arith.addf %202, %205 : vector<16x1xf32>
    %207 = math.rsqrt %206 : vector<16x1xf32>
    %208 = vector.broadcast %207 : vector<16x1xf32> to vector<16x32xf32>
    %209 = arith.mulf %204, %208 : vector<16x32xf32>
    %210 = vector.broadcast %190 : vector<1x32xf32> to vector<16x32xf32>
    %211 = arith.mulf %209, %210 : vector<16x32xf32>
    %212 = vector.broadcast %191 : vector<1x32xf32> to vector<16x32xf32>
    %213 = arith.addf %211, %212 : vector<16x32xf32>
    %214 = vector.shape_cast %213 : vector<16x32xf32> to vector<1x16x32xf32>
    %c0_81 = arith.constant 0 : index
    %c0_82 = arith.constant 0 : index
    %c0_83 = arith.constant 0 : index
    %c0_84 = arith.constant 0 : index
    %215 = vector.load %arg18[%c0_81, %c0_82, %c0_83, %c0_84] : memref<1x1x16x32xf32, #tpu.memory_space<vmem>>, vector<1x1x16x32xf32>
    %216 = vector.shape_cast %215 : vector<1x1x16x32xf32> to vector<1x16x32xf32>
    %217 = vector.shape_cast %214 : vector<1x16x32xf32> to vector<1x1x16x32xf32>
    tpu.vector_store %arg18[%c0_81, %c0_82, %c0_83, %c0_84], %217 {strides = array<i32>} : memref<1x1x16x32xf32, #tpu.memory_space<vmem>>, vector<1x1x16x32xf32>,
    return
  }
  func.func @transform_0(%arg0: i32, %arg1: i32) -> (i32, i32, i32, i32) {
    %c0_i32 = arith.constant 0 : i32
    %c0_i32_0 = arith.constant 0 : i32
    %c0_i32_1 = arith.constant 0 : i32
    return %arg0, %arg1, %c0_i32, %c0_i32_0 : i32, i32, i32, i32
  }
  func.func @transform_1(%arg0: i32, %arg1: i32) -> (i32, i32) {
    %c0_i32 = arith.constant 0 : i32
    %c0_i32_0 = arith.constant 0 : i32
    %c0_i32_1 = arith.constant 0 : i32
    return %c0_i32, %c0_i32_0 : i32, i32
  }
  func.func @transform_2(%arg0: i32, %arg1: i32) -> (i32, i32) {
    %c0_i32 = arith.constant 0 : i32
    %c0_i32_0 = arith.constant 0 : i32
    %c0_i32_1 = arith.constant 0 : i32
    return %c0_i32, %c0_i32_0 : i32, i32
  }
  func.func @transform_3(%arg0: i32, %arg1: i32) -> (i32, i32) {
    %c0_i32 = arith.constant 0 : i32
    %c0_i32_0 = arith.constant 0 : i32
    %c0_i32_1 = arith.constant 0 : i32
    return %c0_i32, %c0_i32_0 : i32, i32
  }
  func.func @transform_4(%arg0: i32, %arg1: i32) -> (i32, i32) {
    %c0_i32 = arith.constant 0 : i32
    %c0_i32_0 = arith.constant 0 : i32
    %c0_i32_1 = arith.constant 0 : i32
    return %c0_i32, %c0_i32_0 : i32, i32
  }
  func.func @transform_5(%arg0: i32, %arg1: i32) -> (i32, i32, i32) {
    %c0_i32 = arith.constant 0 : i32
    %c0_i32_0 = arith.constant 0 : i32
    %c0_i32_1 = arith.constant 0 : i32
    %c0_i32_2 = arith.constant 0 : i32
    return %c0_i32, %c0_i32_0, %c0_i32_1 : i32, i32, i32
  }
  func.func @transform_6(%arg0: i32, %arg1: i32) -> (i32, i32) {
    %c0_i32 = arith.constant 0 : i32
    %c0_i32_0 = arith.constant 0 : i32
    %c0_i32_1 = arith.constant 0 : i32
    return %c0_i32, %c0_i32_0 : i32, i32
  }
  func.func @transform_7(%arg0: i32, %arg1: i32) -> (i32, i32, i32) {
    %c0_i32 = arith.constant 0 : i32
    %c0_i32_0 = arith.constant 0 : i32
    %c0_i32_1 = arith.constant 0 : i32
    %c0_i32_2 = arith.constant 0 : i32
    return %c0_i32, %c0_i32_0, %c0_i32_1 : i32, i32, i32
  }
  func.func @transform_8(%arg0: i32, %arg1: i32) -> (i32, i32) {
    %c0_i32 = arith.constant 0 : i32
    %c0_i32_0 = arith.constant 0 : i32
    %c0_i32_1 = arith.constant 0 : i32
    return %c0_i32, %c0_i32_0 : i32, i32
  }
  func.func @transform_9(%arg0: i32, %arg1: i32) -> (i32, i32) {
    %c0_i32 = arith.constant 0 : i32
    %c0_i32_0 = arith.constant 0 : i32
    %c0_i32_1 = arith.constant 0 : i32
    return %c0_i32, %c0_i32_0 : i32, i32
  }
  func.func @transform_10(%arg0: i32, %arg1: i32) -> (i32, i32) {
    %c0_i32 = arith.constant 0 : i32
    %c0_i32_0 = arith.constant 0 : i32
    %c0_i32_1 = arith.constant 0 : i32
    return %c0_i32, %c0_i32_0 : i32, i32
  }
  func.func @transform_11(%arg0: i32, %arg1: i32) -> (i32, i32) {
    %c0_i32 = arith.constant 0 : i32
    %c0_i32_0 = arith.constant 0 : i32
    %c0_i32_1 = arith.constant 0 : i32
    return %c0_i32, %c0_i32_0 : i32, i32
  }
  func.func @transform_12(%arg0: i32, %arg1: i32) -> (i32, i32) {
    %c0_i32 = arith.constant 0 : i32
    %c0_i32_0 = arith.constant 0 : i32
    %c0_i32_1 = arith.constant 0 : i32
    return %c0_i32, %c0_i32_0 : i32, i32
  }
  func.func @transform_13(%arg0: i32, %arg1: i32) -> (i32, i32) {
    %c0_i32 = arith.constant 0 : i32
    %c0_i32_0 = arith.constant 0 : i32
    %c0_i32_1 = arith.constant 0 : i32
    return %c0_i32, %c0_i32_0 : i32, i32
  }
  func.func @transform_14(%arg0: i32, %arg1: i32) -> (i32, i32) {
    %c0_i32 = arith.constant 0 : i32
    %c0_i32_0 = arith.constant 0 : i32
    %c0_i32_1 = arith.constant 0 : i32
    return %c0_i32, %c0_i32_0 : i32, i32
  }
  func.func @transform_15(%arg0: i32, %arg1: i32) -> (i32, i32) {
    %c0_i32 = arith.constant 0 : i32
    %c0_i32_0 = arith.constant 0 : i32
    %c0_i32_1 = arith.constant 0 : i32
    return %c0_i32, %c0_i32_0 : i32, i32
  }
  func.func @transform_16(%arg0: i32, %arg1: i32) -> (i32, i32, i32, i32) {
    %c0_i32 = arith.constant 0 : i32
    %c0_i32_0 = arith.constant 0 : i32
    %c0_i32_1 = arith.constant 0 : i32
    return %arg0, %arg1, %c0_i32, %c0_i32_0 : i32, i32, i32, i32
  }
}

</mosaic_0001>

<llo_original>
// kernel: swin_forward.6
$region0: #{swin_forward.6}
  #allocation0 [shape = 'u32[]', space=smem, size = 0x4, offset = 0x4, fixed_abs, tag = 'smem constant byte address 0x4 - core index']
  #allocation1 [shape = 'u32[144,128]{1,0:T(1,128)}', space=vmem, size = 0x12000, scoped, tag = 'internal scratch']
  %s0 = inlined_call_operand.vmem [shape: bf16[128,16], index: 0, kind: input, shape index: {}]
  %s1 = inlined_call_operand.vmem [shape: bf16[16,16], index: 1, kind: input, shape index: {}]
  %s2 = inlined_call_operand.vmem [shape: f32[1,16], index: 2, kind: input, shape index: {}, may-alias: {2,4}]
  %s3 = inlined_call_operand.vmem [shape: f32[1,16], index: 3, kind: input, shape index: {}]
  %s4 = inlined_call_operand.vmem [shape: f32[1,16], index: 4, kind: input, shape index: {}, may-alias: {2,4}]
  %s5 = inlined_call_operand.vmem [shape: bf16[128,16], index: 5, kind: output, shape index: {}]
  %s6 = sld [smem:[#allocation0]]
  $region30: #{swin_forward.6} parent=0
    _
  %s8 = ssub.s32 1, %s6
  %s9 = scalar_select 0, %s8, %s6
  // Predicated region
  $region2: #{swin_forward.6} parent=0 // pred_check
    _
  $region3: #{swin_forward.6} parent=0 // pred_check_branch
    %11 = sbr.rel (0) target = $region5
  $region4: #{swin_forward.6} parent=0 // pred_region
    _
  $region5: #{swin_forward.6} parent=0 // pred_fallthru
    _
  // Predicated region
  $region6: #{swin_forward.6} parent=0 // pred_check
    _
  $region7: #{swin_forward.6} parent=0 // pred_check_branch
    %13 = sbr.rel (0) target = $region9
  $region8: #{swin_forward.6} parent=0 // pred_region
    _
  $region9: #{swin_forward.6} parent=0 // pred_fallthru
    _
  // Predicated region
  $region10: #{swin_forward.6} parent=0 // pred_check
    _
  $region11: #{swin_forward.6} parent=0 // pred_check_branch
    %15 = sbr.rel (0) target = $region13
  $region12: #{swin_forward.6} parent=0 // pred_region
    _
  $region13: #{swin_forward.6} parent=0 // pred_fallthru
    _
  // Predicated region
  $region14: #{swin_forward.6} parent=0 // pred_check
    _
  $region15: #{swin_forward.6} parent=0 // pred_check_branch
    %17 = sbr.rel (0) target = $region17
  $region16: #{swin_forward.6} parent=0 // pred_region
    _
  $region17: #{swin_forward.6} parent=0 // pred_fallthru
    _
  // Predicated region
  $region18: #{swin_forward.6} parent=0 // pred_check
    _
  $region19: #{swin_forward.6} parent=0 // pred_check_branch
    %19 = sbr.rel (0) target = $region21
  $region20: #{swin_forward.6} parent=0 // pred_region
    _
  $region21: #{swin_forward.6} parent=0 // pred_fallthru
    _
  %v21 = vld [vmem:[%s0] sm:$0xf]
  %v22 = vld [vmem:[%s0 + $0x4] sm:$0xf]
  %v23 = vld [vmem:[%s0 + $0x8] sm:$0xf]
  %v24 = vld [vmem:[%s0 + $0xc] sm:$0xf]
  %v25 = vld [vmem:[%s0 + $0x10] sm:$0xf]
  %v26 = vld [vmem:[%s0 + $0x14] sm:$0xf]
  %v27 = vld [vmem:[%s0 + $0x18] sm:$0xf]
  %v28 = vld [vmem:[%s0 + $0x1c] sm:$0xf]
  %v29 = vld [vmem:[%s0 + $0x20] sm:$0xf]
  %v30 = vld [vmem:[%s0 + $0x24] sm:$0xf]
  %v31 = vld [vmem:[%s0 + $0x28] sm:$0xf]
  %v32 = vld [vmem:[%s0 + $0x2c] sm:$0xf]
  %v33 = vld [vmem:[%s0 + $0x30] sm:$0xf]
  %v34 = vld [vmem:[%s0 + $0x34] sm:$0xf]
  %v35 = vld [vmem:[%s0 + $0x38] sm:$0xf]
  %v36 = vld [vmem:[%s0 + $0x3c] sm:$0xf]
  %v37 = vld [vmem:[%s1] sm:$0xf]
  %v38 = vld [vmem:[%s1 + $0x4] sm:$0xf]
  %v39 = vld [vmem:[%s2] sm:$0x1]
  %v41 = vlaneseq
  %v42 = vshrl.u32 %v41, 7
  %v43 = vsub.s32 0, %v42
  %v44 = vrot.slane %v39, %v43
  %v62 = vunpack.c.l.b16 %v21
  %v63 = vunpack.c.l.b16 %v22
  %v64 = vunpack.c.l.b16 %v23
  %v65 = vunpack.c.l.b16 %v24
  %v66 = vunpack.c.l.b16 %v25
  %v67 = vunpack.c.l.b16 %v26
  %v68 = vunpack.c.l.b16 %v27
  %v69 = vunpack.c.l.b16 %v28
  %v70 = vunpack.c.l.b16 %v29
  %v71 = vunpack.c.l.b16 %v30
  %v72 = vunpack.c.l.b16 %v31
  %v73 = vunpack.c.l.b16 %v32
  %v74 = vunpack.c.l.b16 %v33
  %v75 = vunpack.c.l.b16 %v34
  %v76 = vunpack.c.l.b16 %v35
  %v77 = vunpack.c.l.b16 %v36
  %v78 = vpack.c.b16 %v63, %v62
  %v79 = vpack.c.b16 %v65, %v64
  %v80 = vpack.c.b16 %v67, %v66
  %v81 = vpack.c.b16 %v69, %v68
  %v82 = vpack.c.b16 %v71, %v70
  %v83 = vpack.c.b16 %v73, %v72
  %v84 = vpack.c.b16 %v75, %v74
  %v85 = vpack.c.b16 %v77, %v76
  %v88 = vunpack.c.l.b16 %v37
  %v89 = vunpack.c.l.b16 %v38
  %v90 = vpack.c.b16 %v89, %v88
  %vm92 = vcmask 130048
  %v94 = vsel %vm92, %v78, 0
  %v97 = vsel %vm92, %v79, 0
  %v100 = vsel %vm92, %v80, 0
  %v103 = vsel %vm92, %v81, 0
  %v106 = vsel %vm92, %v82, 0
  %v109 = vsel %vm92, %v83, 0
  %v112 = vsel %vm92, %v84, 0
  %v115 = vsel %vm92, %v85, 0
  %117 = vmatprep.subr.bf16.mxu0 0
  %118 = vmatpush1.bf16.msra.mxu0 %v90
  %119 = vmatprep.subr.bf16.mxu0 0
  %120 = vmatpush1.bf16.msra.mxu0 0
  %121 = vmatprep.subr.bf16.mxu0 0
  %122 = vmatpush1.bf16.msra.mxu0 0
  %123 = vmatprep.subr.bf16.mxu0 0
  %124 = vmatpush1.bf16.msra.mxu0 0
  %125 = vmatprep.subr.bf16.mxu0 0
  %126 = vmatpush1.bf16.msra.mxu0 0
  %127 = vmatprep.subr.bf16.mxu0 0
  %128 = vmatpush1.bf16.msra.mxu0 0
  %129 = vmatprep.subr.bf16.mxu0 0
  %130 = vmatpush1.bf16.msra.mxu0 0
  %131 = vmatprep.subr.bf16.mxu0 0
  %132 = vmatpush1.bf16.msra.mxu0 0
  %133 = vmatprep.subr.bf16.mxu0 0
  %134 = vmatpush1.bf16.msra.mxu0 0
  %135 = vmatprep.subr.bf16.mxu0 0
  %136 = vmatpush1.bf16.msra.mxu0 0
  %137 = vmatprep.subr.bf16.mxu0 0
  %138 = vmatpush1.bf16.msra.mxu0 0
  %139 = vmatprep.subr.bf16.mxu0 0
  %140 = vmatpush1.bf16.msra.mxu0 0
  %141 = vmatprep.subr.bf16.mxu0 0
  %142 = vmatpush1.bf16.msra.mxu0 0
  %143 = vmatprep.subr.bf16.mxu0 0
  %144 = vmatpush1.bf16.msra.mxu0 0
  %145 = vmatprep.subr.bf16.mxu0 0
  %146 = vmatpush1.bf16.msra.mxu0 0
  %147 = vmatprep.subr.bf16.mxu0 0
  %148 = vmatpush1.bf16.msra.mxu0 0
  %149 = vmatprep.mubr.bf16.mxu0 0
  %150 = vmatmul.mubr.bf16.gmra.mrb[0].mxu0 %v94
  %v151 = vpop.f32.mrb[0].mxu0
  %v152 = vadd.f32 %v44, %v151
  %v153 = vpop.f32.mrb[0].mxu0
  %v154 = vpop.f32.mrb[0].mxu0
  %v155 = vadd.f32 %v44, %v154
  %v156 = vpop.f32.mrb[0].mxu0
  %157 = vmatprep.mubr.bf16.mxu0 0
  %158 = vmatmul.mubr.bf16.gmra.mrb[0].mxu0 %v97
  %v159 = vpop.f32.mrb[0].mxu0
  %v160 = vadd.f32 %v44, %v159
  %v161 = vpop.f32.mrb[0].mxu0
  %v162 = vpop.f32.mrb[0].mxu0
  %v163 = vadd.f32 %v44, %v162
  %v164 = vpop.f32.mrb[0].mxu0
  %165 = vmatprep.mubr.bf16.mxu0 0
  %166 = vmatmul.mubr.bf16.gmra.mrb[0].mxu0 %v100
  %v167 = vpop.f32.mrb[0].mxu0
  %v168 = vadd.f32 %v44, %v167
  %v169 = vpop.f32.mrb[0].mxu0
  %v170 = vpop.f32.mrb[0].mxu0
  %v171 = vadd.f32 %v44, %v170
  %v172 = vpop.f32.mrb[0].mxu0
  %173 = vmatprep.mubr.bf16.mxu0 0
  %174 = vmatmul.mubr.bf16.gmra.mrb[0].mxu0 %v103
  %v175 = vpop.f32.mrb[0].mxu0
  %v176 = vadd.f32 %v44, %v175
  %v177 = vpop.f32.mrb[0].mxu0
  %v178 = vpop.f32.mrb[0].mxu0
  %v179 = vadd.f32 %v44, %v178
  %v180 = vpop.f32.mrb[0].mxu0
  %181 = vmatprep.mubr.bf16.mxu0 0
  %182 = vmatmul.mubr.bf16.gmra.mrb[0].mxu0 %v106
  %v183 = vpop.f32.mrb[0].mxu0
  %v184 = vadd.f32 %v44, %v183
  %v185 = vpop.f32.mrb[0].mxu0
  %v186 = vpop.f32.mrb[0].mxu0
  %v187 = vadd.f32 %v44, %v186
  %v188 = vpop.f32.mrb[0].mxu0
  %189 = vmatprep.mubr.bf16.mxu0 0
  %190 = vmatmul.mubr.bf16.gmra.mrb[0].mxu0 %v109
  %v191 = vpop.f32.mrb[0].mxu0
  %v192 = vadd.f32 %v44, %v191
  %v193 = vpop.f32.mrb[0].mxu0
  %v194 = vpop.f32.mrb[0].mxu0
  %v195 = vadd.f32 %v44, %v194
  %v196 = vpop.f32.mrb[0].mxu0
  %197 = vmatprep.mubr.bf16.mxu0 0
  %198 = vmatmul.mubr.bf16.gmra.mrb[0].mxu0 %v112
  %v199 = vpop.f32.mrb[0].mxu0
  %v200 = vadd.f32 %v44, %v199
  %v201 = vpop.f32.mrb[0].mxu0
  %v202 = vpop.f32.mrb[0].mxu0
  %v203 = vadd.f32 %v44, %v202
  %v204 = vpop.f32.mrb[0].mxu0
  %205 = vmatprep.mubr.bf16.mxu0 0
  %206 = vmatmul.mubr.bf16.gmra.mrb[0].mxu0 %v115
  %v207 = vpop.f32.mrb[0].mxu0
  %v208 = vadd.f32 %v44, %v207
  %v209 = vpop.f32.mrb[0].mxu0
  %v210 = vpop.f32.mrb[0].mxu0
  %v211 = vadd.f32 %v44, %v210
  %v212 = vpop.f32.mrb[0].mxu0
  %213 = vdwg.mxu0
  %v214 = vld [vmem:[%s3] sm:$0x1]
  %v215 = vld [vmem:[%s4] sm:$0x1]
  %v216 = vsel %vm92, %v152, 0.0
  %217 = vadd.xlane.f32.xlu0 %v216
  %v218 = vpop.xlane.xlu0 %217
  %v219 = vsel %vm92, %v155, 0.0
  %220 = vadd.xlane.f32.xlu0 %v219
  %v221 = vpop.xlane.xlu0 %220
  %v222 = vsel %vm92, %v160, 0.0
  %223 = vadd.xlane.f32.xlu0 %v222
  %v224 = vpop.xlane.xlu0 %223
  %v225 = vsel %vm92, %v163, 0.0
  %226 = vadd.xlane.f32.xlu0 %v225
  %v227 = vpop.xlane.xlu0 %226
  %v228 = vsel %vm92, %v168, 0.0
  %229 = vadd.xlane.f32.xlu0 %v228
  %v230 = vpop.xlane.xlu0 %229
  %v231 = vsel %vm92, %v171, 0.0
  %232 = vadd.xlane.f32.xlu0 %v231
  %v233 = vpop.xlane.xlu0 %232
  %v234 = vsel %vm92, %v176, 0.0
  %235 = vadd.xlane.f32.xlu0 %v234
  %v236 = vpop.xlane.xlu0 %235
  %v237 = vsel %vm92, %v179, 0.0
  %238 = vadd.xlane.f32.xlu0 %v237
  %v239 = vpop.xlane.xlu0 %238
  %v240 = vsel %vm92, %v184, 0.0
  %241 = vadd.xlane.f32.xlu0 %v240
  %v242 = vpop.xlane.xlu0 %241
  %v243 = vsel %vm92, %v187, 0.0
  %244 = vadd.xlane.f32.xlu0 %v243
  %v245 = vpop.xlane.xlu0 %244
  %v246 = vsel %vm92, %v192, 0.0
  %247 = vadd.xlane.f32.xlu0 %v246
  %v248 = vpop.xlane.xlu0 %247
  %v249 = vsel %vm92, %v195, 0.0
  %250 = vadd.xlane.f32.xlu0 %v249
  %v251 = vpop.xlane.xlu0 %250
  %v252 = vsel %vm92, %v200, 0.0
  %253 = vadd.xlane.f32.xlu0 %v252
  %v254 = vpop.xlane.xlu0 %253
  %v255 = vsel %vm92, %v203, 0.0
  %256 = vadd.xlane.f32.xlu0 %v255
  %v257 = vpop.xlane.xlu0 %256
  %v258 = vsel %vm92, %v208, 0.0
  %259 = vadd.xlane.f32.xlu0 %v258
  %v260 = vpop.xlane.xlu0 %259
  %v261 = vsel %vm92, %v211, 0.0
  %262 = vadd.xlane.f32.xlu0 %v261
  %v263 = vpop.xlane.xlu0 %262
  %v264 = vrcp.pop 16.0
  %v265 = vmul.f32 %v218, %v264
  %v266 = vmul.f32 %v221, %v264
  %v267 = vmul.f32 %v224, %v264
  %v268 = vmul.f32 %v227, %v264
  %v269 = vmul.f32 %v230, %v264
  %v270 = vmul.f32 %v233, %v264
  %v271 = vmul.f32 %v236, %v264
  %v272 = vmul.f32 %v239, %v264
  %v273 = vmul.f32 %v242, %v264
  %v274 = vmul.f32 %v245, %v264
  %v275 = vmul.f32 %v248, %v264
  %v276 = vmul.f32 %v251, %v264
  %v277 = vmul.f32 %v254, %v264
  %v278 = vmul.f32 %v257, %v264
  %v279 = vmul.f32 %v260, %v264
  %v280 = vmul.f32 %v263, %v264
  %v281 = vsub.f32 %v152, %v265
  %v282 = vsub.f32 %v155, %v266
  %v283 = vsub.f32 %v160, %v267
  %v284 = vsub.f32 %v163, %v268
  %v285 = vsub.f32 %v168, %v269
  %v286 = vsub.f32 %v171, %v270
  %v287 = vsub.f32 %v176, %v271
  %v288 = vsub.f32 %v179, %v272
  %v289 = vsub.f32 %v184, %v273
  %v290 = vsub.f32 %v187, %v274
  %v291 = vsub.f32 %v192, %v275
  %v292 = vsub.f32 %v195, %v276
  %v293 = vsub.f32 %v200, %v277
  %v294 = vsub.f32 %v203, %v278
  %v295 = vsub.f32 %v208, %v279
  %v296 = vsub.f32 %v211, %v280
  %v297 = vmul.f32 %v281, %v281
  %v298 = vmul.f32 %v282, %v282
  %v299 = vmul.f32 %v283, %v283
  %v300 = vmul.f32 %v284, %v284
  %v301 = vmul.f32 %v285, %v285
  %v302 = vmul.f32 %v286, %v286
  %v303 = vmul.f32 %v287, %v287
  %v304 = vmul.f32 %v288, %v288
  %v305 = vmul.f32 %v289, %v289
  %v306 = vmul.f32 %v290, %v290
  %v307 = vmul.f32 %v291, %v291
  %v308 = vmul.f32 %v292, %v292
  %v309 = vmul.f32 %v293, %v293
  %v310 = vmul.f32 %v294, %v294
  %v311 = vmul.f32 %v295, %v295
  %v312 = vmul.f32 %v296, %v296
  %v313 = vsel %vm92, %v297, 0.0
  %314 = vadd.xlane.f32.xlu0 %v313
  %v315 = vpop.xlane.xlu0 %314
  %v316 = vsel %vm92, %v298, 0.0
  %317 = vadd.xlane.f32.xlu0 %v316
  %v318 = vpop.xlane.xlu0 %317
  %v319 = vsel %vm92, %v299, 0.0
  %320 = vadd.xlane.f32.xlu0 %v319
  %v321 = vpop.xlane.xlu0 %320
  %v322 = vsel %vm92, %v300, 0.0
  %323 = vadd.xlane.f32.xlu0 %v322
  %v324 = vpop.xlane.xlu0 %323
  %v325 = vsel %vm92, %v301, 0.0
  %326 = vadd.xlane.f32.xlu0 %v325
  %v327 = vpop.xlane.xlu0 %326
  %v328 = vsel %vm92, %v302, 0.0
  %329 = vadd.xlane.f32.xlu0 %v328
  %v330 = vpop.xlane.xlu0 %329
  %v331 = vsel %vm92, %v303, 0.0
  %332 = vadd.xlane.f32.xlu0 %v331
  %v333 = vpop.xlane.xlu0 %332
  %v334 = vsel %vm92, %v304, 0.0
  %335 = vadd.xlane.f32.xlu0 %v334
  %v336 = vpop.xlane.xlu0 %335
  %v337 = vsel %vm92, %v305, 0.0
  %338 = vadd.xlane.f32.xlu0 %v337
  %v339 = vpop.xlane.xlu0 %338
  %v340 = vsel %vm92, %v306, 0.0
  %341 = vadd.xlane.f32.xlu0 %v340
  %v342 = vpop.xlane.xlu0 %341
  %v343 = vsel %vm92, %v307, 0.0
  %344 = vadd.xlane.f32.xlu0 %v343
  %v345 = vpop.xlane.xlu0 %344
  %v346 = vsel %vm92, %v308, 0.0
  %347 = vadd.xlane.f32.xlu0 %v346
  %v348 = vpop.xlane.xlu0 %347
  %v349 = vsel %vm92, %v309, 0.0
  %350 = vadd.xlane.f32.xlu0 %v349
  %v351 = vpop.xlane.xlu0 %350
  %v352 = vsel %vm92, %v310, 0.0
  %353 = vadd.xlane.f32.xlu0 %v352
  %v354 = vpop.xlane.xlu0 %353
  %v355 = vsel %vm92, %v311, 0.0
  %356 = vadd.xlane.f32.xlu0 %v355
  %v357 = vpop.xlane.xlu0 %356
  %v358 = vsel %vm92, %v312, 0.0
  %359 = vadd.xlane.f32.xlu0 %v358
  %v360 = vpop.xlane.xlu0 %359
  %v361 = vmul.f32 %v315, %v264
  %v362 = vmul.f32 %v318, %v264
  %v363 = vmul.f32 %v321, %v264
  %v364 = vmul.f32 %v324, %v264
  %v365 = vmul.f32 %v327, %v264
  %v366 = vmul.f32 %v330, %v264
  %v367 = vmul.f32 %v333, %v264
  %v368 = vmul.f32 %v336, %v264
  %v369 = vmul.f32 %v339, %v264
  %v370 = vmul.f32 %v342, %v264
  %v371 = vmul.f32 %v345, %v264
  %v372 = vmul.f32 %v348, %v264
  %v373 = vmul.f32 %v351, %v264
  %v374 = vmul.f32 %v354, %v264
  %v375 = vmul.f32 %v357, %v264
  %v376 = vmul.f32 %v360, %v264
  %v377 = vadd.f32 %v361, 1e-05
  %v378 = vadd.f32 %v362, 1e-05
  %v379 = vadd.f32 %v363, 1e-05
  %v380 = vadd.f32 %v364, 1e-05
  %v381 = vadd.f32 %v365, 1e-05
  %v382 = vadd.f32 %v366, 1e-05
  %v383 = vadd.f32 %v367, 1e-05
  %v384 = vadd.f32 %v368, 1e-05
  %v385 = vadd.f32 %v369, 1e-05
  %v386 = vadd.f32 %v370, 1e-05
  %v387 = vadd.f32 %v371, 1e-05
  %v388 = vadd.f32 %v372, 1e-05
  %v389 = vadd.f32 %v373, 1e-05
  %v390 = vadd.f32 %v374, 1e-05
  %v391 = vadd.f32 %v375, 1e-05
  %v392 = vadd.f32 %v376, 1e-05
  %v393 = vrsqrt.pop %v377
  %v394 = vrsqrt.pop %v378
  %v395 = vrsqrt.pop %v379
  %v396 = vrsqrt.pop %v380
  %v397 = vrsqrt.pop %v381
  %v398 = vrsqrt.pop %v382
  %v399 = vrsqrt.pop %v383
  %v400 = vrsqrt.pop %v384
  %v401 = vrsqrt.pop %v385
  %v402 = vrsqrt.pop %v386
  %v403 = vrsqrt.pop %v387
  %v404 = vrsqrt.pop %v388
  %v405 = vrsqrt.pop %v389
  %v406 = vrsqrt.pop %v390
  %v407 = vrsqrt.pop %v391
  %v408 = vrsqrt.pop %v392
  %v409 = vmul.f32 %v281, %v393
  %v410 = vmul.f32 %v282, %v394
  %v411 = vmul.f32 %v283, %v395
  %v412 = vmul.f32 %v284, %v396
  %v413 = vmul.f32 %v285, %v397
  %v414 = vmul.f32 %v286, %v398
  %v415 = vmul.f32 %v287, %v399
  %v416 = vmul.f32 %v288, %v400
  %v417 = vmul.f32 %v289, %v401
  %v418 = vmul.f32 %v290, %v402
  %v419 = vmul.f32 %v291, %v403
  %v420 = vmul.f32 %v292, %v404
  %v421 = vmul.f32 %v293, %v405
  %v422 = vmul.f32 %v294, %v406
  %v423 = vmul.f32 %v295, %v407
  %v424 = vmul.f32 %v296, %v408
  %v426 = vlaneseq
  %v427 = vshrl.u32 %v426, 7
  %v428 = vsub.s32 0, %v427
  %v429 = vrot.slane %v214, %v428
  %v431 = vmul.f32 %v409, %v429
  %v432 = vmul.f32 %v410, %v429
  %v433 = vmul.f32 %v411, %v429
  %v434 = vmul.f32 %v412, %v429
  %v435 = vmul.f32 %v413, %v429
  %v436 = vmul.f32 %v414, %v429
  %v437 = vmul.f32 %v415, %v429
  %v438 = vmul.f32 %v416, %v429
  %v439 = vmul.f32 %v417, %v429
  %v440 = vmul.f32 %v418, %v429
  %v441 = vmul.f32 %v419, %v429
  %v442 = vmul.f32 %v420, %v429
  %v443 = vmul.f32 %v421, %v429
  %v444 = vmul.f32 %v422, %v429
  %v445 = vmul.f32 %v423, %v429
  %v446 = vmul.f32 %v424, %v429
  %v448 = vlaneseq
  %v449 = vshrl.u32 %v448, 7
  %v450 = vsub.s32 0, %v449
  %v451 = vrot.slane %v215, %v450
  %v453 = vadd.f32 %v431, %v451
  %v454 = vadd.f32 %v432, %v451
  %v455 = vadd.f32 %v433, %v451
  %v456 = vadd.f32 %v434, %v451
  %v457 = vadd.f32 %v435, %v451
  %v458 = vadd.f32 %v436, %v451
  %v459 = vadd.f32 %v437, %v451
  %v460 = vadd.f32 %v438, %v451
  %v461 = vadd.f32 %v439, %v451
  %v462 = vadd.f32 %v440, %v451
  %v463 = vadd.f32 %v441, %v451
  %v464 = vadd.f32 %v442, %v451
  %v465 = vadd.f32 %v443, %v451
  %v466 = vadd.f32 %v444, %v451
  %v467 = vadd.f32 %v445, %v451
  %v468 = vadd.f32 %v446, %v451
  %v469 = vpack.c.bf16 %v454, %v453
  %v470 = vpack.c.bf16 %v456, %v455
  %v471 = vpack.c.bf16 %v458, %v457
  %v472 = vpack.c.bf16 %v460, %v459
  %v473 = vpack.c.bf16 %v462, %v461
  %v474 = vpack.c.bf16 %v464, %v463
  %v475 = vpack.c.bf16 %v466, %v465
  %v476 = vpack.c.bf16 %v468, %v467
  %v485 = vunpack.c.l.b16 %v469
  %v486 = vunpack.c.h.b16 %v469
  %v487 = vunpack.c.l.b16 %v470
  %v488 = vunpack.c.h.b16 %v470
  %v489 = vunpack.c.l.b16 %v471
  %v490 = vunpack.c.h.b16 %v471
  %v491 = vunpack.c.l.b16 %v472
  %v492 = vunpack.c.h.b16 %v472
  %v493 = vunpack.c.l.b16 %v473
  %v494 = vunpack.c.h.b16 %v473
  %v495 = vunpack.c.l.b16 %v474
  %v496 = vunpack.c.h.b16 %v474
  %v497 = vunpack.c.l.b16 %v475
  %v498 = vunpack.c.h.b16 %v475
  %v499 = vunpack.c.l.b16 %v476
  %v500 = vunpack.c.h.b16 %v476
  %v501 = vpack.c.b16 %v485, %v485
  %v502 = vpack.c.b16 %v486, %v486
  %v503 = vpack.c.b16 %v487, %v487
  %v504 = vpack.c.b16 %v488, %v488
  %v505 = vpack.c.b16 %v489, %v489
  %v506 = vpack.c.b16 %v490, %v490
  %v507 = vpack.c.b16 %v491, %v491
  %v508 = vpack.c.b16 %v492, %v492
  %v509 = vpack.c.b16 %v493, %v493
  %v510 = vpack.c.b16 %v494, %v494
  %v511 = vpack.c.b16 %v495, %v495
  %v512 = vpack.c.b16 %v496, %v496
  %v513 = vpack.c.b16 %v497, %v497
  %v514 = vpack.c.b16 %v498, %v498
  %v515 = vpack.c.b16 %v499, %v499
  %v516 = vpack.c.b16 %v500, %v500
  %vm533 = vcmask 125952
  %534 = vst.msk [vmem:[%s5] sm:$0xf] %vm533, %v501
  %535 = vst.msk [vmem:[%s5 + $0x4] sm:$0xf] %vm533, %v502
  %536 = vst.msk [vmem:[%s5 + $0x8] sm:$0xf] %vm533, %v503
  %537 = vst.msk [vmem:[%s5 + $0xc] sm:$0xf] %vm533, %v504
  %538 = vst.msk [vmem:[%s5 + $0x10] sm:$0xf] %vm533, %v505
  %539 = vst.msk [vmem:[%s5 + $0x14] sm:$0xf] %vm533, %v506
  %540 = vst.msk [vmem:[%s5 + $0x18] sm:$0xf] %vm533, %v507
  %541 = vst.msk [vmem:[%s5 + $0x1c] sm:$0xf] %vm533, %v508
  %542 = vst.msk [vmem:[%s5 + $0x20] sm:$0xf] %vm533, %v509
  %543 = vst.msk [vmem:[%s5 + $0x24] sm:$0xf] %vm533, %v510
  %544 = vst.msk [vmem:[%s5 + $0x28] sm:$0xf] %vm533, %v511
  %545 = vst.msk [vmem:[%s5 + $0x2c] sm:$0xf] %vm533, %v512
  %546 = vst.msk [vmem:[%s5 + $0x30] sm:$0xf] %vm533, %v513
  %547 = vst.msk [vmem:[%s5 + $0x34] sm:$0xf] %vm533, %v514
  %548 = vst.msk [vmem:[%s5 + $0x38] sm:$0xf] %vm533, %v515
  %549 = vst.msk [vmem:[%s5 + $0x3c] sm:$0xf] %vm533, %v516
  // Predicated region
  $region22: #{swin_forward.6} parent=0 // pred_check
    _
  $region23: #{swin_forward.6} parent=0 // pred_check_branch
    %551 = sbr.rel (0) target = $region25
  $region24: #{swin_forward.6} parent=0 // pred_region
    _
  $region25: #{swin_forward.6} parent=0 // pred_fallthru
    _
  // Predicated region
  $region26: #{swin_forward.6} parent=0 // pred_check
    _
  $region27: #{swin_forward.6} parent=0 // pred_check_branch
    %553 = sbr.rel (0) target = $region29
  $region28: #{swin_forward.6} parent=0 // pred_region
    _
  $region29: #{swin_forward.6} parent=0 // pred_fallthru
    _

// kernel: swin_forward.7
$region0: #{swin_forward.7}
  #allocation0 [shape = 'u32[]', space=smem, size = 0x4, offset = 0x4, fixed_abs, tag = 'smem constant byte address 0x4 - core index']
  #allocation1 [shape = 'u32[144,128]{1,0:T(1,128)}', space=vmem, size = 0x12000, scoped, tag = 'internal scratch']
  %s0 = inlined_call_operand.vmem [shape: bf16[2,4,16,16], index: 0, kind: input, shape index: {}]
  %s1 = inlined_call_operand.vmem [shape: f32[1,16], index: 1, kind: input, shape index: {}, may-alias: {1,8}]
  %s2 = inlined_call_operand.vmem [shape: f32[1,16], index: 2, kind: input, shape index: {}, may-alias: {2,6,9,13}]
  %s3 = inlined_call_operand.vmem [shape: bf16[16,48], index: 3, kind: input, shape index: {}]
  %s4 = inlined_call_operand.vmem [shape: f32[1,48], index: 4, kind: input, shape index: {}]
  %s5 = inlined_call_operand.vmem [shape: bf16[2,8,16], index: 5, kind: input, shape index: {}]
  %s6 = inlined_call_operand.vmem [shape: f32[1,16], index: 6, kind: input, shape index: {}, may-alias: {2,6,9,13}]
  %s7 = inlined_call_operand.vmem [shape: f32[2,16,16], index: 7, kind: input, shape index: {}]
  %s8 = inlined_call_operand.vmem [shape: f32[1,16], index: 8, kind: input, shape index: {}, may-alias: {1,8}]
  %s9 = inlined_call_operand.vmem [shape: f32[1,16], index: 9, kind: input, shape index: {}, may-alias: {2,6,9,13}]
  %s10 = inlined_call_operand.vmem [shape: bf16[16,64], index: 10, kind: input, shape index: {}]
  %s11 = inlined_call_operand.vmem [shape: f32[1,64], index: 11, kind: input, shape index: {}]
  %s12 = inlined_call_operand.vmem [shape: bf16[64,16], index: 12, kind: input, shape index: {}]
  %s13 = inlined_call_operand.vmem [shape: f32[1,16], index: 13, kind: input, shape index: {}, may-alias: {2,6,9,13}]
  %s14 = inlined_call_operand.vmem [shape: bf16[2,4,16,16], index: 14, kind: output, shape index: {}]
  %s15 = sld [smem:[#allocation0]]
  $region89: #{swin_forward.7} parent=0
    _
  %s17 = ssub.s32 1, %s15
  %s18 = scalar_select 0, %s17, %s15
  loop: start=0, step=1, limit=6
  $region2: #{swin_forward.7} parent=0 // loop_pre_header
    _
  $region3: #{swin_forward.7} parent=0 // loop_header
    %s20 = sphi 0, %s24
    %p21 = scmp.ge.s32.totalorder %s20, 6
    %s27 = sphi 0, %s39
    %s28 = sphi 0, %s35
    %s29 = sphi 0, %s27
    %s30 = sphi 0, %s28
    %s31 = sphi 0, %s29
    %s32 = sphi 0, %s30
    %s44 = sphi 0, %s46
    %s47 = sphi 0, %s44
    %s48 = sphi 0, %s47
    %s64 = sphi 0, %s48
    %s68 = sphi 0, %s68
    %s70 = sphi 0, %s68
    %s71 = sphi 0, %s70
    %s85 = sphi 0, %s71
    %s89 = sphi 0, %s89
    %s91 = sphi 0, %s89
    %s92 = sphi 0, %s91
    %s106 = sphi 0, %s92
    %s110 = sphi 0, %s110
    %s112 = sphi 0, %s110
    %s113 = sphi 0, %s112
    %s127 = sphi 0, %s113
    %s131 = sphi 0, %s131
    %s133 = sphi 0, %s131
    %s134 = sphi 0, %s133
    %s148 = sphi 0, %s134
    %s152 = sphi 0, %s152
    %s154 = sphi 0, %s152
    %s155 = sphi 0, %s154
    %s169 = sphi 0, %s155
    %s173 = sphi 0, %s173
    %s175 = sphi 0, %s173
    %s176 = sphi 0, %s175
    %s190 = sphi 0, %s176
    %s194 = sphi 0, %s194
    %s196 = sphi 0, %s194
    %s197 = sphi 0, %s196
    %s211 = sphi 0, %s197
    %s215 = sphi 0, %s215
    %s217 = sphi 0, %s215
    %s218 = sphi 0, %s217
    %s232 = sphi 0, %s218
    %s236 = sphi 0, %s236
    %s238 = sphi 0, %s236
    %s239 = sphi 0, %s238
    %s253 = sphi 0, %s239
    %s257 = sphi 0, %s257
    %s259 = sphi 0, %s257
    %s260 = sphi 0, %s259
    %s274 = sphi 0, %s260
    %s278 = sphi 0, %s278
    %s280 = sphi 0, %s278
    %s281 = sphi 0, %s280
    %s295 = sphi 0, %s281
    %s299 = sphi 0, %s299
    %s301 = sphi 0, %s299
    %s302 = sphi 0, %s301
    %s316 = sphi 0, %s302
    %s320 = sphi 0, %s320
    %s322 = sphi 0, %s320
    %s323 = sphi 0, %s322
    %s337 = sphi 0, %s323
    %s345 = sphi 0, %s347
    %s348 = sphi 0, %s345
    %s349 = sphi 0, %s348
    %s365 = sphi 0, %s349
  $region4: #{swin_forward.7} parent=0 // loop_header_branch
    %23 = sbr.rel (%p21) target = $region8
  $region5: #{swin_forward.7} parent=0 // loop_body
    %s25 = ssub.s32 %s20, 1
    %s26 = ssub.s32 %s20, 2
    %s33 = sadd.s32 1, %s28
    %p34 = scmp.ge.s32.totalorder %s33, 2
    %s35 = scalar_select %p34, 0, %s33
    %s36 = sadd.s32 1, %s27
    %s37 = scalar_select %p34, %s36, %s27
    %p38 = scmp.ge.s32.totalorder %s37, 2
    %s39 = scalar_select %p38, 0, %s37
    %s40 = ssub.s32 %s27, %s39
    %s41 = ssub.s32 %s28, %s35
    %s42 = sor.u32 %s40, %s41
    %p43 = scmp.eq.s32.totalorder %s42, 0
    %s45 = sadd.s32 %s44, 1
    %s46 = scalar_select %p43, %s44, %s45
    %p49 = pneg %p43
    %p50 = scmp.eq.s32.totalorder %s20, 3
    %p51 = por %p49, %p50
    %p52 = scmp.ne.s32.totalorder %s44, %s47
    %p53 = scmp.eq.s32.totalorder %s20, 0
    %p54 = por %p52, %p53
    %p55 = scmp.ne.s32.totalorder %s44, %s47
    %p56 = scmp.eq.s32.totalorder %s25, 3
    %p57 = por %p55, %p56
    %p58 = scmp.ne.s32.totalorder %s47, %s48
    %p59 = scmp.eq.s32.totalorder %s25, 0
    %p60 = por %p58, %p59
    %p61 = scmp.ne.s32.totalorder %s47, %s48
    %p62 = scmp.eq.s32.totalorder %s26, 3
    %p63 = por %p61, %p62
    %p65 = scmp.ne.s32.totalorder %s48, %s64
    %p66 = scmp.eq.s32.totalorder %s26, 0
    %p67 = por %p65, %p66
    %s69 = sadd.s32 %s68, 1
    %p72 = scmp.eq.s32.totalorder %s20, 3
    %p73 = scmp.ne.s32.totalorder %s68, %s70
    %p74 = scmp.eq.s32.totalorder %s20, 0
    %p75 = por %p73, %p74
    %p76 = scmp.ne.s32.totalorder %s68, %s70
    %p77 = scmp.eq.s32.totalorder %s25, 3
    %p78 = por %p76, %p77
    %p79 = scmp.ne.s32.totalorder %s70, %s71
    %p80 = scmp.eq.s32.totalorder %s25, 0
    %p81 = por %p79, %p80
    %p82 = scmp.ne.s32.totalorder %s70, %s71
    %p83 = scmp.eq.s32.totalorder %s26, 3
    %p84 = por %p82, %p83
    %p86 = scmp.ne.s32.totalorder %s71, %s85
    %p87 = scmp.eq.s32.totalorder %s26, 0
    %p88 = por %p86, %p87
    %s90 = sadd.s32 %s89, 1
    %p93 = scmp.eq.s32.totalorder %s20, 3
    %p94 = scmp.ne.s32.totalorder %s89, %s91
    %p95 = scmp.eq.s32.totalorder %s20, 0
    %p96 = por %p94, %p95
    %p97 = scmp.ne.s32.totalorder %s89, %s91
    %p98 = scmp.eq.s32.totalorder %s25, 3
    %p99 = por %p97, %p98
    %p100 = scmp.ne.s32.totalorder %s91, %s92
    %p101 = scmp.eq.s32.totalorder %s25, 0
    %p102 = por %p100, %p101
    %p103 = scmp.ne.s32.totalorder %s91, %s92
    %p104 = scmp.eq.s32.totalorder %s26, 3
    %p105 = por %p103, %p104
    %p107 = scmp.ne.s32.totalorder %s92, %s106
    %p108 = scmp.eq.s32.totalorder %s26, 0
    %p109 = por %p107, %p108
    %s111 = sadd.s32 %s110, 1
    %p114 = scmp.eq.s32.totalorder %s20, 3
    %p115 = scmp.ne.s32.totalorder %s110, %s112
    %p116 = scmp.eq.s32.totalorder %s20, 0
    %p117 = por %p115, %p116
    %p118 = scmp.ne.s32.totalorder %s110, %s112
    %p119 = scmp.eq.s32.totalorder %s25, 3
    %p120 = por %p118, %p119
    %p121 = scmp.ne.s32.totalorder %s112, %s113
    %p122 = scmp.eq.s32.totalorder %s25, 0
    %p123 = por %p121, %p122
    %p124 = scmp.ne.s32.totalorder %s112, %s113
    %p125 = scmp.eq.s32.totalorder %s26, 3
    %p126 = por %p124, %p125
    %p128 = scmp.ne.s32.totalorder %s113, %s127
    %p129 = scmp.eq.s32.totalorder %s26, 0
    %p130 = por %p128, %p129
    %s132 = sadd.s32 %s131, 1
    %p135 = scmp.eq.s32.totalorder %s20, 3
    %p136 = scmp.ne.s32.totalorder %s131, %s133
    %p137 = scmp.eq.s32.totalorder %s20, 0
    %p138 = por %p136, %p137
    %p139 = scmp.ne.s32.totalorder %s131, %s133
    %p140 = scmp.eq.s32.totalorder %s25, 3
    %p141 = por %p139, %p140
    %p142 = scmp.ne.s32.totalorder %s133, %s134
    %p143 = scmp.eq.s32.totalorder %s25, 0
    %p144 = por %p142, %p143
    %p145 = scmp.ne.s32.totalorder %s133, %s134
    %p146 = scmp.eq.s32.totalorder %s26, 3
    %p147 = por %p145, %p146
    %p149 = scmp.ne.s32.totalorder %s134, %s148
    %p150 = scmp.eq.s32.totalorder %s26, 0
    %p151 = por %p149, %p150
    %s153 = sadd.s32 %s152, 1
    %p156 = scmp.eq.s32.totalorder %s20, 3
    %p157 = scmp.ne.s32.totalorder %s152, %s154
    %p158 = scmp.eq.s32.totalorder %s20, 0
    %p159 = por %p157, %p158
    %p160 = scmp.ne.s32.totalorder %s152, %s154
    %p161 = scmp.eq.s32.totalorder %s25, 3
    %p162 = por %p160, %p161
    %p163 = scmp.ne.s32.totalorder %s154, %s155
    %p164 = scmp.eq.s32.totalorder %s25, 0
    %p165 = por %p163, %p164
    %p166 = scmp.ne.s32.totalorder %s154, %s155
    %p167 = scmp.eq.s32.totalorder %s26, 3
    %p168 = por %p166, %p167
    %p170 = scmp.ne.s32.totalorder %s155, %s169
    %p171 = scmp.eq.s32.totalorder %s26, 0
    %p172 = por %p170, %p171
    %s174 = sadd.s32 %s173, 1
    %p177 = scmp.eq.s32.totalorder %s20, 3
    %p178 = scmp.ne.s32.totalorder %s173, %s175
    %p179 = scmp.eq.s32.totalorder %s20, 0
    %p180 = por %p178, %p179
    %p181 = scmp.ne.s32.totalorder %s173, %s175
    %p182 = scmp.eq.s32.totalorder %s25, 3
    %p183 = por %p181, %p182
    %p184 = scmp.ne.s32.totalorder %s175, %s176
    %p185 = scmp.eq.s32.totalorder %s25, 0
    %p186 = por %p184, %p185
    %p187 = scmp.ne.s32.totalorder %s175, %s176
    %p188 = scmp.eq.s32.totalorder %s26, 3
    %p189 = por %p187, %p188
    %p191 = scmp.ne.s32.totalorder %s176, %s190
    %p192 = scmp.eq.s32.totalorder %s26, 0
    %p193 = por %p191, %p192
    %s195 = sadd.s32 %s194, 1
    %p198 = scmp.eq.s32.totalorder %s20, 3
    %p199 = scmp.ne.s32.totalorder %s194, %s196
    %p200 = scmp.eq.s32.totalorder %s20, 0
    %p201 = por %p199, %p200
    %p202 = scmp.ne.s32.totalorder %s194, %s196
    %p203 = scmp.eq.s32.totalorder %s25, 3
    %p204 = por %p202, %p203
    %p205 = scmp.ne.s32.totalorder %s196, %s197
    %p206 = scmp.eq.s32.totalorder %s25, 0
    %p207 = por %p205, %p206
    %p208 = scmp.ne.s32.totalorder %s196, %s197
    %p209 = scmp.eq.s32.totalorder %s26, 3
    %p210 = por %p208, %p209
    %p212 = scmp.ne.s32.totalorder %s197, %s211
    %p213 = scmp.eq.s32.totalorder %s26, 0
    %p214 = por %p212, %p213
    %s216 = sadd.s32 %s215, 1
    %p219 = scmp.eq.s32.totalorder %s20, 3
    %p220 = scmp.ne.s32.totalorder %s215, %s217
    %p221 = scmp.eq.s32.totalorder %s20, 0
    %p222 = por %p220, %p221
    %p223 = scmp.ne.s32.totalorder %s215, %s217
    %p224 = scmp.eq.s32.totalorder %s25, 3
    %p225 = por %p223, %p224
    %p226 = scmp.ne.s32.totalorder %s217, %s218
    %p227 = scmp.eq.s32.totalorder %s25, 0
    %p228 = por %p226, %p227
    %p229 = scmp.ne.s32.totalorder %s217, %s218
    %p230 = scmp.eq.s32.totalorder %s26, 3
    %p231 = por %p229, %p230
    %p233 = scmp.ne.s32.totalorder %s218, %s232
    %p234 = scmp.eq.s32.totalorder %s26, 0
    %p235 = por %p233, %p234
    %s237 = sadd.s32 %s236, 1
    %p240 = scmp.eq.s32.totalorder %s20, 3
    %p241 = scmp.ne.s32.totalorder %s236, %s238
    %p242 = scmp.eq.s32.totalorder %s20, 0
    %p243 = por %p241, %p242
    %p244 = scmp.ne.s32.totalorder %s236, %s238
    %p245 = scmp.eq.s32.totalorder %s25, 3
    %p246 = por %p244, %p245
    %p247 = scmp.ne.s32.totalorder %s238, %s239
    %p248 = scmp.eq.s32.totalorder %s25, 0
    %p249 = por %p247, %p248
    %p250 = scmp.ne.s32.totalorder %s238, %s239
    %p251 = scmp.eq.s32.totalorder %s26, 3
    %p252 = por %p250, %p251
    %p254 = scmp.ne.s32.totalorder %s239, %s253
    %p255 = scmp.eq.s32.totalorder %s26, 0
    %p256 = por %p254, %p255
    %s258 = sadd.s32 %s257, 1
    %p261 = scmp.eq.s32.totalorder %s20, 3
    %p262 = scmp.ne.s32.totalorder %s257, %s259
    %p263 = scmp.eq.s32.totalorder %s20, 0
    %p264 = por %p262, %p263
    %p265 = scmp.ne.s32.totalorder %s257, %s259
    %p266 = scmp.eq.s32.totalorder %s25, 3
    %p267 = por %p265, %p266
    %p268 = scmp.ne.s32.totalorder %s259, %s260
    %p269 = scmp.eq.s32.totalorder %s25, 0
    %p270 = por %p268, %p269
    %p271 = scmp.ne.s32.totalorder %s259, %s260
    %p272 = scmp.eq.s32.totalorder %s26, 3
    %p273 = por %p271, %p272
    %p275 = scmp.ne.s32.totalorder %s260, %s274
    %p276 = scmp.eq.s32.totalorder %s26, 0
    %p277 = por %p275, %p276
    %s279 = sadd.s32 %s278, 1
    %p282 = scmp.eq.s32.totalorder %s20, 3
    %p283 = scmp.ne.s32.totalorder %s278, %s280
    %p284 = scmp.eq.s32.totalorder %s20, 0
    %p285 = por %p283, %p284
    %p286 = scmp.ne.s32.totalorder %s278, %s280
    %p287 = scmp.eq.s32.totalorder %s25, 3
    %p288 = por %p286, %p287
    %p289 = scmp.ne.s32.totalorder %s280, %s281
    %p290 = scmp.eq.s32.totalorder %s25, 0
    %p291 = por %p289, %p290
    %p292 = scmp.ne.s32.totalorder %s280, %s281
    %p293 = scmp.eq.s32.totalorder %s26, 3
    %p294 = por %p292, %p293
    %p296 = scmp.ne.s32.totalorder %s281, %s295
    %p297 = scmp.eq.s32.totalorder %s26, 0
    %p298 = por %p296, %p297
    %s300 = sadd.s32 %s299, 1
    %p303 = scmp.eq.s32.totalorder %s20, 3
    %p304 = scmp.ne.s32.totalorder %s299, %s301
    %p305 = scmp.eq.s32.totalorder %s20, 0
    %p306 = por %p304, %p305
    %p307 = scmp.ne.s32.totalorder %s299, %s301
    %p308 = scmp.eq.s32.totalorder %s25, 3
    %p309 = por %p307, %p308
    %p310 = scmp.ne.s32.totalorder %s301, %s302
    %p311 = scmp.eq.s32.totalorder %s25, 0
    %p312 = por %p310, %p311
    %p313 = scmp.ne.s32.totalorder %s301, %s302
    %p314 = scmp.eq.s32.totalorder %s26, 3
    %p315 = por %p313, %p314
    %p317 = scmp.ne.s32.totalorder %s302, %s316
    %p318 = scmp.eq.s32.totalorder %s26, 0
    %p319 = por %p317, %p318
    %s321 = sadd.s32 %s320, 1
    %p324 = scmp.eq.s32.totalorder %s20, 3
    %p325 = scmp.ne.s32.totalorder %s320, %s322
    %p326 = scmp.eq.s32.totalorder %s20, 0
    %p327 = por %p325, %p326
    %p328 = scmp.ne.s32.totalorder %s320, %s322
    %p329 = scmp.eq.s32.totalorder %s25, 3
    %p330 = por %p328, %p329
    %p331 = scmp.ne.s32.totalorder %s322, %s323
    %p332 = scmp.eq.s32.totalorder %s25, 0
    %p333 = por %p331, %p332
    %p334 = scmp.ne.s32.totalorder %s322, %s323
    %p335 = scmp.eq.s32.totalorder %s26, 3
    %p336 = por %p334, %p335
    %p338 = scmp.ne.s32.totalorder %s323, %s337
    %p339 = scmp.eq.s32.totalorder %s26, 0
    %p340 = por %p338, %p339
    %s341 = ssub.s32 %s27, %s39
    %s342 = ssub.s32 %s28, %s35
    %s343 = sor.u32 %s341, %s342
    %p344 = scmp.eq.s32.totalorder %s343, 0
    %s346 = sadd.s32 %s345, 1
    %s347 = scalar_select %p344, %s345, %s346
    %p350 = pneg %p344
    %p351 = scmp.eq.s32.totalorder %s20, 3
    %p352 = por %p350, %p351
    %p353 = scmp.ne.s32.totalorder %s345, %s348
    %p354 = scmp.eq.s32.totalorder %s20, 0
    %p355 = por %p353, %p354
    %p356 = scmp.ne.s32.totalorder %s345, %s348
    %p357 = scmp.eq.s32.totalorder %s25, 3
    %p358 = por %p356, %p357
    %p359 = scmp.ne.s32.totalorder %s348, %s349
    %p360 = scmp.eq.s32.totalorder %s25, 0
    %p361 = por %p359, %p360
    %p362 = scmp.ne.s32.totalorder %s348, %s349
    %p363 = scmp.eq.s32.totalorder %s26, 3
    %p364 = por %p362, %p363
    %p366 = scmp.ne.s32.totalorder %s349, %s365
    %p367 = scmp.eq.s32.totalorder %s26, 0
    %p368 = por %p366, %p367
    %p369 = scmp.le.s32.totalorder 1, %s20
    %p370 = scmp.lt.s32.totalorder %s20, 5
    %p371 = pnand %p369, %p370
    %p372 = pneg %p371
    // Predicated region
    $region9: #{swin_forward.7} parent=5 // pred_check
      _
    $region10: #{swin_forward.7} parent=5 // pred_check_branch
      %374 = sbr.rel (%p371) target = $region12
    $region11: #{swin_forward.7} parent=5 // pred_region
      %s375 = ssub.s32 %s20, 1
      // Predicated region
      $region13: #{swin_forward.7} parent=11 // pred_check
        %p376 = pneg %p81
      $region14: #{swin_forward.7} parent=11 // pred_check_branch
        %378 = sbr.rel (%p376) target = $region16
      $region15: #{swin_forward.7} parent=11 // pred_region
        _
      $region16: #{swin_forward.7} parent=11 // pred_fallthru
        _
      // Predicated region
      $region17: #{swin_forward.7} parent=11 // pred_check
        %p379 = pneg %p102
      $region18: #{swin_forward.7} parent=11 // pred_check_branch
        %381 = sbr.rel (%p379) target = $region20
      $region19: #{swin_forward.7} parent=11 // pred_region
        _
      $region20: #{swin_forward.7} parent=11 // pred_fallthru
        _
      // Predicated region
      $region21: #{swin_forward.7} parent=11 // pred_check
        %p382 = pneg %p123
      $region22: #{swin_forward.7} parent=11 // pred_check_branch
        %384 = sbr.rel (%p382) target = $region24
      $region23: #{swin_forward.7} parent=11 // pred_region
        _
      $region24: #{swin_forward.7} parent=11 // pred_fallthru
        _
      // Predicated region
      $region25: #{swin_forward.7} parent=11 // pred_check
        %p385 = pneg %p144
      $region26: #{swin_forward.7} parent=11 // pred_check_branch
        %387 = sbr.rel (%p385) target = $region28
      $region27: #{swin_forward.7} parent=11 // pred_region
        _
      $region28: #{swin_forward.7} parent=11 // pred_fallthru
        _
      // Predicated region
      $region29: #{swin_forward.7} parent=11 // pred_check
        %p388 = pneg %p165
      $region30: #{swin_forward.7} parent=11 // pred_check_branch
        %390 = sbr.rel (%p388) target = $region32
      $region31: #{swin_forward.7} parent=11 // pred_region
        _
      $region32: #{swin_forward.7} parent=11 // pred_fallthru
        _
      // Predicated region
      $region33: #{swin_forward.7} parent=11 // pred_check
        %p391 = pneg %p186
      $region34: #{swin_forward.7} parent=11 // pred_check_branch
        %393 = sbr.rel (%p391) target = $region36
      $region35: #{swin_forward.7} parent=11 // pred_region
        _
      $region36: #{swin_forward.7} parent=11 // pred_fallthru
        _
      // Predicated region
      $region37: #{swin_forward.7} parent=11 // pred_check
        %p394 = pneg %p207
      $region38: #{swin_forward.7} parent=11 // pred_check_branch
        %396 = sbr.rel (%p394) target = $region40
      $region39: #{swin_forward.7} parent=11 // pred_region
        _
      $region40: #{swin_forward.7} parent=11 // pred_fallthru
        _
      // Predicated region
      $region41: #{swin_forward.7} parent=11 // pred_check
        %p397 = pneg %p228
      $region42: #{swin_forward.7} parent=11 // pred_check_branch
        %399 = sbr.rel (%p397) target = $region44
      $region43: #{swin_forward.7} parent=11 // pred_region
        _
      $region44: #{swin_forward.7} parent=11 // pred_fallthru
        _
      // Predicated region
      $region45: #{swin_forward.7} parent=11 // pred_check
        %p400 = pneg %p249
      $region46: #{swin_forward.7} parent=11 // pred_check_branch
        %402 = sbr.rel (%p400) target = $region48
      $region47: #{swin_forward.7} parent=11 // pred_region
        _
      $region48: #{swin_forward.7} parent=11 // pred_fallthru
        _
      // Predicated region
      $region49: #{swin_forward.7} parent=11 // pred_check
        %p403 = pneg %p270
      $region50: #{swin_forward.7} parent=11 // pred_check_branch
        %405 = sbr.rel (%p403) target = $region52
      $region51: #{swin_forward.7} parent=11 // pred_region
        _
      $region52: #{swin_forward.7} parent=11 // pred_fallthru
        _
      // Predicated region
      $region53: #{swin_forward.7} parent=11 // pred_check
        %p406 = pneg %p291
      $region54: #{swin_forward.7} parent=11 // pred_check_branch
        %408 = sbr.rel (%p406) target = $region56
      $region55: #{swin_forward.7} parent=11 // pred_region
        _
      $region56: #{swin_forward.7} parent=11 // pred_fallthru
        _
      // Predicated region
      $region57: #{swin_forward.7} parent=11 // pred_check
        %p409 = pneg %p312
      $region58: #{swin_forward.7} parent=11 // pred_check_branch
        %411 = sbr.rel (%p409) target = $region60
      $region59: #{swin_forward.7} parent=11 // pred_region
        _
      $region60: #{swin_forward.7} parent=11 // pred_fallthru
        _
      // Predicated region
      $region61: #{swin_forward.7} parent=11 // pred_check
        %p412 = pneg %p333
      $region62: #{swin_forward.7} parent=11 // pred_check_branch
        %414 = sbr.rel (%p412) target = $region64
      $region63: #{swin_forward.7} parent=11 // pred_region
        _
      $region64: #{swin_forward.7} parent=11 // pred_fallthru
        _
    $region12: #{swin_forward.7} parent=5 // pred_fallthru
      _
    %p415 = scmp.lt.s32.totalorder %s20, 4
    // Predicated region
    $region65: #{swin_forward.7} parent=5 // pred_check
      %p416 = pneg %p415
    $region66: #{swin_forward.7} parent=5 // pred_check_branch
      %418 = sbr.rel (%p416) target = $region68
    $region67: #{swin_forward.7} parent=5 // pred_region
      // Predicated region
      $region69: #{swin_forward.7} parent=67 // pred_check
        %p419 = pneg %p54
      $region70: #{swin_forward.7} parent=67 // pred_check_branch
        %421 = sbr.rel (%p419) target = $region72
      $region71: #{swin_forward.7} parent=67 // pred_region
        %s422 = smul.u32 2, %s28
        %p423 = scmp.lt.s32.totalorder %s27, 1
        %s424 = scalar_select %p423, %s27, 1
        %p425 = scmp.lt.s32.totalorder %s422, 3
        %s426 = scalar_select %p425, %s422, 3
        %s427 = smul.addr %s426, 2
        %s428 = smul.addr %s424, 8
        %s429 = sadd.s32 %s427, %s428
        %s430 = smul.addr %s429, 4
        %s431 = scalar_lea.vmem %s0, %s430
        %s432 = smul.u32 2, %s28
      $region72: #{swin_forward.7} parent=67 // pred_fallthru
        _
    $region68: #{swin_forward.7} parent=5 // pred_fallthru
      _
    %p433 = scmp.le.s32.totalorder 1, %s20
    %p434 = scmp.lt.s32.totalorder %s20, 5
    %p435 = pnand %p433, %p434
    %p436 = pneg %p435
    // Predicated region
    $region73: #{swin_forward.7} parent=5 // pred_check
      _
    $region74: #{swin_forward.7} parent=5 // pred_check_branch
      %438 = sbr.rel (%p435) target = $region76
    $region75: #{swin_forward.7} parent=5 // pred_region
      %s439 = ssub.s32 %s20, 1
      %s440 = smul.u32 2, %s30
      %p441 = scmp.lt.s32.totalorder %s29, 1
      %s442 = scalar_select %p441, %s29, 1
      %p443 = scmp.lt.s32.totalorder %s440, 3
      %s444 = scalar_select %p443, %s440, 3
      %s445 = smul.addr %s444, 2
      %s446 = smul.addr %s442, 8
      %s447 = sadd.s32 %s445, %s446
      %s448 = smul.addr %s447, 4
      %s449 = scalar_lea.vmem %s0, %s448
      %p450 = pneg %p60
      %p451 = pneg %p57
      %p452 = pneg %p81
      %p453 = pneg %p78
      %p454 = pneg %p102
      %p455 = pneg %p99
      %p456 = pneg %p123
      %p457 = pneg %p120
      %p458 = pneg %p144
      %p459 = pneg %p141
      %p460 = pneg %p165
      %p461 = pneg %p162
      %p462 = pneg %p186
      %p463 = pneg %p183
      %p464 = pneg %p207
      %p465 = pneg %p204
      %p466 = pneg %p228
      %p467 = pneg %p225
      %p468 = pneg %p249
      %p469 = pneg %p246
      %p470 = pneg %p270
      %p471 = pneg %p267
      %p472 = pneg %p291
      %p473 = pneg %p288
      %p474 = pneg %p312
      %p475 = pneg %p309
      %p476 = pneg %p333
      %p477 = pneg %p330
      %p478 = pneg %p361
      %p479 = pneg %p358
      %s480 = smul.u32 2, %s30
      %p481 = scmp.lt.s32.totalorder %s29, 1
      %s482 = scalar_select %p481, %s29, 1
      %p483 = scmp.lt.s32.totalorder %s480, 3
      %s484 = scalar_select %p483, %s480, 3
      %s485 = smul.addr %s484, 2
      %s486 = smul.addr %s482, 8
      %s487 = sadd.s32 %s485, %s486
      %s488 = smul.addr %s487, 4
      %s489 = scalar_lea.vmem %s14, %s488
      %s490 = smul.u32 2, %s30
      %p491 = scmp.lt.s32.totalorder %s29, 1
      %s492 = scalar_select %p491, %s29, 1
      %p493 = scmp.lt.s32.totalorder %s490, 3
      %s494 = scalar_select %p493, %s490, 3
      %s495 = smul.addr %s494, 2
      %s496 = smul.addr %s492, 8
      %s497 = sadd.s32 %s495, %s496
      %s498 = smul.addr %s497, 4
      %s499 = scalar_lea.vmem %s0, %s498
      %s500 = smul.u32 2, %s30
      %s501 = smul.u32 2, %s30
      %p502 = scmp.lt.s32.totalorder %s29, 1
      %s503 = scalar_select %p502, %s29, 1
      %p504 = scmp.lt.s32.totalorder %s501, 3
      %s505 = scalar_select %p504, %s501, 3
      %s506 = smul.addr %s505, 2
      %s507 = smul.addr %s503, 8
      %s508 = sadd.s32 %s506, %s507
      %s509 = smul.addr %s508, 4
      %s510 = scalar_lea.vmem %s14, %s509
      %s511 = smul.u32 2, %s30
      %v513 = vld [vmem:[%s499] sm:$0xf]
      %v514 = vld [vmem:[%s499 + $0x4] sm:$0xf]
      %v515 = vld [vmem:[%s499 + $0x8] sm:$0xf]
      %v516 = vld [vmem:[%s499 + $0xc] sm:$0xf]
      %v517 = vunpack.c.l.bf16 %v513
      %v518 = vunpack.c.l.bf16 %v514
      %v519 = vunpack.c.l.bf16 %v515
      %v520 = vunpack.c.l.bf16 %v516
      %v521 = vld [vmem:[%s1] sm:$0x1]
      %v522 = vld [vmem:[%s2] sm:$0x1]
      %vm523 = vcmask 130048
      %v524 = vsel %vm523, %v517, 0.0
      %525 = vadd.xlane.f32.xlu0 %v524
      %v526 = vpop.xlane.xlu0 %525
      %v527 = vsel %vm523, %v518, 0.0
      %528 = vadd.xlane.f32.xlu0 %v527
      %v529 = vpop.xlane.xlu0 %528
      %v530 = vsel %vm523, %v519, 0.0
      %531 = vadd.xlane.f32.xlu0 %v530
      %v532 = vpop.xlane.xlu0 %531
      %v533 = vsel %vm523, %v520, 0.0
      %534 = vadd.xlane.f32.xlu0 %v533
      %v535 = vpop.xlane.xlu0 %534
      %v536 = vrcp.pop 16.0
      %v537 = vmul.f32 %v526, %v536
      %v538 = vmul.f32 %v529, %v536
      %v539 = vmul.f32 %v532, %v536
      %v540 = vmul.f32 %v535, %v536
      %v541 = vsub.f32 %v517, %v537
      %v542 = vsub.f32 %v518, %v538
      %v543 = vsub.f32 %v519, %v539
      %v544 = vsub.f32 %v520, %v540
      %v545 = vmul.f32 %v541, %v541
      %v546 = vmul.f32 %v542, %v542
      %v547 = vmul.f32 %v543, %v543
      %v548 = vmul.f32 %v544, %v544
      %v549 = vsel %vm523, %v545, 0.0
      %550 = vadd.xlane.f32.xlu0 %v549
      %v551 = vpop.xlane.xlu0 %550
      %v552 = vsel %vm523, %v546, 0.0
      %553 = vadd.xlane.f32.xlu0 %v552
      %v554 = vpop.xlane.xlu0 %553
      %v555 = vsel %vm523, %v547, 0.0
      %556 = vadd.xlane.f32.xlu0 %v555
      %v557 = vpop.xlane.xlu0 %556
      %v558 = vsel %vm523, %v548, 0.0
      %559 = vadd.xlane.f32.xlu0 %v558
      %v560 = vpop.xlane.xlu0 %559
      %v561 = vmul.f32 %v551, %v536
      %v562 = vmul.f32 %v554, %v536
      %v563 = vmul.f32 %v557, %v536
      %v564 = vmul.f32 %v560, %v536
      %v565 = vadd.f32 %v561, 1e-05
      %v566 = vadd.f32 %v562, 1e-05
      %v567 = vadd.f32 %v563, 1e-05
      %v568 = vadd.f32 %v564, 1e-05
      %v569 = vrsqrt.pop %v565
      %v570 = vrsqrt.pop %v566
      %v571 = vrsqrt.pop %v567
      %v572 = vrsqrt.pop %v568
      %v573 = vmul.f32 %v541, %v569
      %v574 = vmul.f32 %v542, %v570
      %v575 = vmul.f32 %v543, %v571
      %v576 = vmul.f32 %v544, %v572
      %v578 = vlaneseq
      %v579 = vshrl.u32 %v578, 7
      %v580 = vsub.s32 0, %v579
      %v581 = vrot.slane %v521, %v580
      %v583 = vmul.f32 %v573, %v581
      %v584 = vmul.f32 %v574, %v581
      %v585 = vmul.f32 %v575, %v581
      %v586 = vmul.f32 %v576, %v581
      %v588 = vlaneseq
      %v589 = vshrl.u32 %v588, 7
      %v590 = vsub.s32 0, %v589
      %v591 = vrot.slane %v522, %v590
      %v593 = vadd.f32 %v583, %v591
      %v594 = vadd.f32 %v584, %v591
      %v595 = vadd.f32 %v585, %v591
      %v596 = vadd.f32 %v586, %v591
      %v597 = vpack.c.bf16 %v594, %v593
      %v598 = vpack.c.bf16 %v596, %v595
      %v599 = vld [vmem:[%s3] sm:$0xf]
      %v600 = vld [vmem:[%s3 + $0x4] sm:$0xf]
      %v601 = vld [vmem:[%s4] sm:$0x1]
      %v603 = vlaneseq
      %v604 = vshrl.u32 %v603, 7
      %v605 = vsub.s32 0, %v604
      %v606 = vrot.slane %v601, %v605
      %v610 = vunpack.c.l.b16 %v599
      %v611 = vunpack.c.l.b16 %v600
      %v612 = vpack.c.b16 %v611, %v610
      %v615 = vsel %vm523, %v597, 0
      %v618 = vsel %vm523, %v598, 0
      %620 = vmatprep.subr.bf16.mxu0 0
      %621 = vmatpush1.bf16.msra.mxu0 %v612
      %622 = vmatprep.subr.bf16.mxu0 0
      %623 = vmatpush1.bf16.msra.mxu0 0
      %624 = vmatprep.subr.bf16.mxu0 0
      %625 = vmatpush1.bf16.msra.mxu0 0
      %626 = vmatprep.subr.bf16.mxu0 0
      %627 = vmatpush1.bf16.msra.mxu0 0
      %628 = vmatprep.subr.bf16.mxu0 0
      %629 = vmatpush1.bf16.msra.mxu0 0
      %630 = vmatprep.subr.bf16.mxu0 0
      %631 = vmatpush1.bf16.msra.mxu0 0
      %632 = vmatprep.subr.bf16.mxu0 0
      %633 = vmatpush1.bf16.msra.mxu0 0
      %634 = vmatprep.subr.bf16.mxu0 0
      %635 = vmatpush1.bf16.msra.mxu0 0
      %636 = vmatprep.subr.bf16.mxu0 0
      %637 = vmatpush1.bf16.msra.mxu0 0
      %638 = vmatprep.subr.bf16.mxu0 0
      %639 = vmatpush1.bf16.msra.mxu0 0
      %640 = vmatprep.subr.bf16.mxu0 0
      %641 = vmatpush1.bf16.msra.mxu0 0
      %642 = vmatprep.subr.bf16.mxu0 0
      %643 = vmatpush1.bf16.msra.mxu0 0
      %644 = vmatprep.subr.bf16.mxu0 0
      %645 = vmatpush1.bf16.msra.mxu0 0
      %646 = vmatprep.subr.bf16.mxu0 0
      %647 = vmatpush1.bf16.msra.mxu0 0
      %648 = vmatprep.subr.bf16.mxu0 0
      %649 = vmatpush1.bf16.msra.mxu0 0
      %650 = vmatprep.subr.bf16.mxu0 0
      %651 = vmatpush1.bf16.msra.mxu0 0
      %652 = vmatprep.mubr.bf16.mxu0 0
      %653 = vmatmul.mubr.bf16.gmra.mrb[0].mxu0 %v615
      %v654 = vpop.f32.mrb[0].mxu0
      %v655 = vadd.f32 %v606, %v654
      %v656 = vpop.f32.mrb[0].mxu0
      %v657 = vpop.f32.mrb[0].mxu0
      %v658 = vadd.f32 %v606, %v657
      %v659 = vpop.f32.mrb[0].mxu0
      %660 = vmatprep.mubr.bf16.mxu0 0
      %661 = vmatmul.mubr.bf16.gmra.mrb[0].mxu0 %v618
      %v662 = vpop.f32.mrb[0].mxu0
      %v663 = vadd.f32 %v606, %v662
      %v664 = vpop.f32.mrb[0].mxu0
      %v665 = vpop.f32.mrb[0].mxu0
      %v666 = vadd.f32 %v606, %v665
      %v667 = vpop.f32.mrb[0].mxu0
      %668 = vdwg.mxu0
      %673 = vrot.lane.b32.xlu0 %v655, 120
      %v674 = vpop.permute.xlu0 %673
      %675 = vrot.lane.b32.xlu0 %v658, 120
      %v676 = vpop.permute.xlu0 %675
      %677 = vrot.lane.b32.xlu0 %v663, 120
      %v678 = vpop.permute.xlu0 %677
      %679 = vrot.lane.b32.xlu0 %v666, 120
      %v680 = vpop.permute.xlu0 %679
      %v685 = vpack.c.bf16 %v658, %v655
      %v686 = vpack.c.bf16 %v666, %v663
      %v687 = vpack.c.bf16 %v676, %v674
      %v688 = vpack.c.bf16 %v680, %v678
      %690 = vrot.lane.b32.xlu0 %v685, 112
      %v691 = vpop.permute.xlu0 %690
      %vm692 = vcmask 64512
      %v694 = vsel %vm692, %v685, 0
      %v697 = vsel %vm692, %v691, 0
      %699 = vmatprep.subr.bf16.mxu0 0
      %700 = vmatpush1.bf16.xpose.msra.mxu0 %v697
      %701 = vmatprep.subr.bf16.mxu0 0
      %702 = vmatpush1.bf16.xpose.msra.mxu0 0
      %703 = vmatprep.subr.bf16.mxu0 0
      %704 = vmatpush1.bf16.xpose.msra.mxu0 0
      %705 = vmatprep.subr.bf16.mxu0 0
      %706 = vmatpush1.bf16.xpose.msra.mxu0 0
      %707 = vmatprep.subr.bf16.mxu0 0
      %708 = vmatpush1.bf16.xpose.msra.mxu0 0
      %709 = vmatprep.subr.bf16.mxu0 0
      %710 = vmatpush1.bf16.xpose.msra.mxu0 0
      %711 = vmatprep.subr.bf16.mxu0 0
      %712 = vmatpush1.bf16.xpose.msra.mxu0 0
      %713 = vmatprep.subr.bf16.mxu0 0
      %714 = vmatpush1.bf16.xpose.msra.mxu0 0
      %715 = vmatprep.subr.bf16.mxu0 0
      %716 = vmatpush1.bf16.xpose.msra.mxu0 0
      %717 = vmatprep.subr.bf16.mxu0 0
      %718 = vmatpush1.bf16.xpose.msra.mxu0 0
      %719 = vmatprep.subr.bf16.mxu0 0
      %720 = vmatpush1.bf16.xpose.msra.mxu0 0
      %721 = vmatprep.subr.bf16.mxu0 0
      %722 = vmatpush1.bf16.xpose.msra.mxu0 0
      %723 = vmatprep.subr.bf16.mxu0 0
      %724 = vmatpush1.bf16.xpose.msra.mxu0 0
      %725 = vmatprep.subr.bf16.mxu0 0
      %726 = vmatpush1.bf16.xpose.msra.mxu0 0
      %727 = vmatprep.subr.bf16.mxu0 0
      %728 = vmatpush1.bf16.xpose.msra.mxu0 0
      %729 = vmatprep.subr.bf16.mxu0 0
      %730 = vmatpush1.bf16.xpose.msra.mxu0 0
      %731 = vmatprep.mubr.bf16.mxu0 0
      %732 = vmatmul.mubr.bf16.gmra.mrb[0].mxu0 %v694
      %v733 = vpop.f32.mrb[0].mxu0
      %v734 = vadd.f32 0.0, %v733
      %v735 = vpop.f32.mrb[0].mxu0
      %v736 = vpop.f32.mrb[0].mxu0
      %v737 = vadd.f32 0.0, %v736
      %v738 = vpop.f32.mrb[0].mxu0
      %739 = vdwg.mxu0
      %741 = vrot.lane.b32.xlu0 %v686, 112
      %v742 = vpop.permute.xlu0 %741
      %v744 = vsel %vm692, %v686, 0
      %v747 = vsel %vm692, %v742, 0
      %749 = vmatprep.subr.bf16.mxu0 0
      %750 = vmatpush1.bf16.xpose.msra.mxu0 %v747
      %751 = vmatprep.subr.bf16.mxu0 0
      %752 = vmatpush1.bf16.xpose.msra.mxu0 0
      %753 = vmatprep.subr.bf16.mxu0 0
      %754 = vmatpush1.bf16.xpose.msra.mxu0 0
      %755 = vmatprep.subr.bf16.mxu0 0
      %756 = vmatpush1.bf16.xpose.msra.mxu0 0
      %757 = vmatprep.subr.bf16.mxu0 0
      %758 = vmatpush1.bf16.xpose.msra.mxu0 0
      %759 = vmatprep.subr.bf16.mxu0 0
      %760 = vmatpush1.bf16.xpose.msra.mxu0 0
      %761 = vmatprep.subr.bf16.mxu0 0
      %762 = vmatpush1.bf16.xpose.msra.mxu0 0
      %763 = vmatprep.subr.bf16.mxu0 0
      %764 = vmatpush1.bf16.xpose.msra.mxu0 0
      %765 = vmatprep.subr.bf16.mxu0 0
      %766 = vmatpush1.bf16.xpose.msra.mxu0 0
      %767 = vmatprep.subr.bf16.mxu0 0
      %768 = vmatpush1.bf16.xpose.msra.mxu0 0
      %769 = vmatprep.subr.bf16.mxu0 0
      %770 = vmatpush1.bf16.xpose.msra.mxu0 0
      %771 = vmatprep.subr.bf16.mxu0 0
      %772 = vmatpush1.bf16.xpose.msra.mxu0 0
      %773 = vmatprep.subr.bf16.mxu0 0
      %774 = vmatpush1.bf16.xpose.msra.mxu0 0
      %775 = vmatprep.subr.bf16.mxu0 0
      %776 = vmatpush1.bf16.xpose.msra.mxu0 0
      %777 = vmatprep.subr.bf16.mxu0 0
      %778 = vmatpush1.bf16.xpose.msra.mxu0 0
      %779 = vmatprep.subr.bf16.mxu0 0
      %780 = vmatpush1.bf16.xpose.msra.mxu0 0
      %781 = vmatprep.mubr.bf16.mxu0 0
      %782 = vmatmul.mubr.bf16.gmra.mrb[0].mxu0 %v744
      %v783 = vpop.f32.mrb[0].mxu0
      %v784 = vadd.f32 0.0, %v783
      %v785 = vpop.f32.mrb[0].mxu0
      %v786 = vpop.f32.mrb[0].mxu0
      %v787 = vadd.f32 0.0, %v786
      %v788 = vpop.f32.mrb[0].mxu0
      %789 = vdwg.mxu0
      %791 = vrot.lane.b32.xlu0 %v687, 112
      %v792 = vpop.permute.xlu0 %791
      %v794 = vsel %vm692, %v687, 0
      %v797 = vsel %vm692, %v792, 0
      %799 = vmatprep.subr.bf16.mxu0 0
      %800 = vmatpush1.bf16.xpose.msra.mxu0 %v797
      %801 = vmatprep.subr.bf16.mxu0 0
      %802 = vmatpush1.bf16.xpose.msra.mxu0 0
      %803 = vmatprep.subr.bf16.mxu0 0
      %804 = vmatpush1.bf16.xpose.msra.mxu0 0
      %805 = vmatprep.subr.bf16.mxu0 0
      %806 = vmatpush1.bf16.xpose.msra.mxu0 0
      %807 = vmatprep.subr.bf16.mxu0 0
      %808 = vmatpush1.bf16.xpose.msra.mxu0 0
      %809 = vmatprep.subr.bf16.mxu0 0
      %810 = vmatpush1.bf16.xpose.msra.mxu0 0
      %811 = vmatprep.subr.bf16.mxu0 0
      %812 = vmatpush1.bf16.xpose.msra.mxu0 0
      %813 = vmatprep.subr.bf16.mxu0 0
      %814 = vmatpush1.bf16.xpose.msra.mxu0 0
      %815 = vmatprep.subr.bf16.mxu0 0
      %816 = vmatpush1.bf16.xpose.msra.mxu0 0
      %817 = vmatprep.subr.bf16.mxu0 0
      %818 = vmatpush1.bf16.xpose.msra.mxu0 0
      %819 = vmatprep.subr.bf16.mxu0 0
      %820 = vmatpush1.bf16.xpose.msra.mxu0 0
      %821 = vmatprep.subr.bf16.mxu0 0
      %822 = vmatpush1.bf16.xpose.msra.mxu0 0
      %823 = vmatprep.subr.bf16.mxu0 0
      %824 = vmatpush1.bf16.xpose.msra.mxu0 0
      %825 = vmatprep.subr.bf16.mxu0 0
      %826 = vmatpush1.bf16.xpose.msra.mxu0 0
      %827 = vmatprep.subr.bf16.mxu0 0
      %828 = vmatpush1.bf16.xpose.msra.mxu0 0
      %829 = vmatprep.subr.bf16.mxu0 0
      %830 = vmatpush1.bf16.xpose.msra.mxu0 0
      %831 = vmatprep.mubr.bf16.mxu0 0
      %832 = vmatmul.mubr.bf16.gmra.mrb[0].mxu0 %v794
      %v833 = vpop.f32.mrb[0].mxu0
      %v834 = vadd.f32 0.0, %v833
      %v835 = vpop.f32.mrb[0].mxu0
      %v836 = vpop.f32.mrb[0].mxu0
      %v837 = vadd.f32 0.0, %v836
      %v838 = vpop.f32.mrb[0].mxu0
      %839 = vdwg.mxu0
      %841 = vrot.lane.b32.xlu0 %v688, 112
      %v842 = vpop.permute.xlu0 %841
      %v844 = vsel %vm692, %v688, 0
      %v847 = vsel %vm692, %v842, 0
      %849 = vmatprep.subr.bf16.mxu0 0
      %850 = vmatpush1.bf16.xpose.msra.mxu0 %v847
      %851 = vmatprep.subr.bf16.mxu0 0
      %852 = vmatpush1.bf16.xpose.msra.mxu0 0
      %853 = vmatprep.subr.bf16.mxu0 0
      %854 = vmatpush1.bf16.xpose.msra.mxu0 0
      %855 = vmatprep.subr.bf16.mxu0 0
      %856 = vmatpush1.bf16.xpose.msra.mxu0 0
      %857 = vmatprep.subr.bf16.mxu0 0
      %858 = vmatpush1.bf16.xpose.msra.mxu0 0
      %859 = vmatprep.subr.bf16.mxu0 0
      %860 = vmatpush1.bf16.xpose.msra.mxu0 0
      %861 = vmatprep.subr.bf16.mxu0 0
      %862 = vmatpush1.bf16.xpose.msra.mxu0 0
      %863 = vmatprep.subr.bf16.mxu0 0
      %864 = vmatpush1.bf16.xpose.msra.mxu0 0
      %865 = vmatprep.subr.bf16.mxu0 0
      %866 = vmatpush1.bf16.xpose.msra.mxu0 0
      %867 = vmatprep.subr.bf16.mxu0 0
      %868 = vmatpush1.bf16.xpose.msra.mxu0 0
      %869 = vmatprep.subr.bf16.mxu0 0
      %870 = vmatpush1.bf16.xpose.msra.mxu0 0
      %871 = vmatprep.subr.bf16.mxu0 0
      %872 = vmatpush1.bf16.xpose.msra.mxu0 0
      %873 = vmatprep.subr.bf16.mxu0 0
      %874 = vmatpush1.bf16.xpose.msra.mxu0 0
      %875 = vmatprep.subr.bf16.mxu0 0
      %876 = vmatpush1.bf16.xpose.msra.mxu0 0
      %877 = vmatprep.subr.bf16.mxu0 0
      %878 = vmatpush1.bf16.xpose.msra.mxu0 0
      %879 = vmatprep.subr.bf16.mxu0 0
      %880 = vmatpush1.bf16.xpose.msra.mxu0 0
      %881 = vmatprep.mubr.bf16.mxu0 0
      %882 = vmatmul.mubr.bf16.gmra.mrb[0].mxu0 %v844
      %v883 = vpop.f32.mrb[0].mxu0
      %v884 = vadd.f32 0.0, %v883
      %v885 = vpop.f32.mrb[0].mxu0
      %v886 = vpop.f32.mrb[0].mxu0
      %v887 = vadd.f32 0.0, %v886
      %v888 = vpop.f32.mrb[0].mxu0
      %889 = vdwg.mxu0
      %v890 = vld [vmem:[%s7] sm:$0xff]
      %v891 = vld [vmem:[%s7 + $0x8] sm:$0xff]
      %v892 = vld [vmem:[%s7 + $0x10] sm:$0xff]
      %v893 = vld [vmem:[%s7 + $0x18] sm:$0xff]
      %v894 = vadd.f32 %v734, %v890
      %v895 = vadd.f32 %v737, %v891
      %v896 = vadd.f32 %v784, %v890
      %v897 = vadd.f32 %v787, %v891
      %v898 = vadd.f32 %v834, %v892
      %v899 = vadd.f32 %v837, %v893
      %v900 = vadd.f32 %v884, %v892
      %v901 = vadd.f32 %v887, %v893
      %v902 = vsel %vm523, %v894, -inf
      %903 = vmax.xlane.f32.xlu0 %v902
      %v904 = vpop.xlane.xlu0 %903
      %v905 = vsel %vm523, %v895, -inf
      %906 = vmax.xlane.f32.xlu0 %v905
      %v907 = vpop.xlane.xlu0 %906
      %v908 = vsel %vm523, %v896, -inf
      %909 = vmax.xlane.f32.xlu0 %v908
      %v910 = vpop.xlane.xlu0 %909
      %v911 = vsel %vm523, %v897, -inf
      %912 = vmax.xlane.f32.xlu0 %v911
      %v913 = vpop.xlane.xlu0 %912
      %v914 = vsel %vm523, %v898, -inf
      %915 = vmax.xlane.f32.xlu0 %v914
      %v916 = vpop.xlane.xlu0 %915
      %v917 = vsel %vm523, %v899, -inf
      %918 = vmax.xlane.f32.xlu0 %v917
      %v919 = vpop.xlane.xlu0 %918
      %v920 = vsel %vm523, %v900, -inf
      %921 = vmax.xlane.f32.xlu0 %v920
      %v922 = vpop.xlane.xlu0 %921
      %v923 = vsel %vm523, %v901, -inf
      %924 = vmax.xlane.f32.xlu0 %v923
      %v925 = vpop.xlane.xlu0 %924
      %v926 = vsub.f32 %v894, %v904
      %v927 = vsub.f32 %v895, %v907
      %v928 = vsub.f32 %v896, %v910
      %v929 = vsub.f32 %v897, %v913
      %v930 = vsub.f32 %v898, %v916
      %v931 = vsub.f32 %v899, %v919
      %v932 = vsub.f32 %v900, %v922
      %v933 = vsub.f32 %v901, %v925
      %v934 = vmul.f32 %v926, 1.442695
      %v935 = vpow.pop %v934
      %v936 = vmul.f32 %v927, 1.442695
      %v937 = vpow.pop %v936
      %v938 = vmul.f32 %v928, 1.442695
      %v939 = vpow.pop %v938
      %v940 = vmul.f32 %v929, 1.442695
      %v941 = vpow.pop %v940
      %v942 = vmul.f32 %v930, 1.442695
      %v943 = vpow.pop %v942
      %v944 = vmul.f32 %v931, 1.442695
      %v945 = vpow.pop %v944
      %v946 = vmul.f32 %v932, 1.442695
      %v947 = vpow.pop %v946
      %v948 = vmul.f32 %v933, 1.442695
      %v949 = vpow.pop %v948
      %v950 = vsel %vm523, %v935, 0.0
      %951 = vadd.xlane.f32.xlu0 %v950
      %v952 = vpop.xlane.xlu0 %951
      %v953 = vsel %vm523, %v937, 0.0
      %954 = vadd.xlane.f32.xlu0 %v953
      %v955 = vpop.xlane.xlu0 %954
      %v956 = vsel %vm523, %v939, 0.0
      %957 = vadd.xlane.f32.xlu0 %v956
      %v958 = vpop.xlane.xlu0 %957
      %v959 = vsel %vm523, %v941, 0.0
      %960 = vadd.xlane.f32.xlu0 %v959
      %v961 = vpop.xlane.xlu0 %960
      %v962 = vsel %vm523, %v943, 0.0
      %963 = vadd.xlane.f32.xlu0 %v962
      %v964 = vpop.xlane.xlu0 %963
      %v965 = vsel %vm523, %v945, 0.0
      %966 = vadd.xlane.f32.xlu0 %v965
      %v967 = vpop.xlane.xlu0 %966
      %v968 = vsel %vm523, %v947, 0.0
      %969 = vadd.xlane.f32.xlu0 %v968
      %v970 = vpop.xlane.xlu0 %969
      %v971 = vsel %vm523, %v949, 0.0
      %972 = vadd.xlane.f32.xlu0 %v971
      %v973 = vpop.xlane.xlu0 %972
      %v974 = vrcp.pop %v952
      %v975 = vrcp.pop %v955
      %v976 = vrcp.pop %v958
      %v977 = vrcp.pop %v961
      %v978 = vrcp.pop %v964
      %v979 = vrcp.pop %v967
      %v980 = vrcp.pop %v970
      %v981 = vrcp.pop %v973
      %v982 = vmul.f32 %v935, %v974
      %v983 = vmul.f32 %v937, %v975
      %v984 = vmul.f32 %v939, %v976
      %v985 = vmul.f32 %v941, %v977
      %v986 = vmul.f32 %v943, %v978
      %v987 = vmul.f32 %v945, %v979
      %v988 = vmul.f32 %v947, %v980
      %v989 = vmul.f32 %v949, %v981
      %v990 = vpack.c.bf16 %v983, %v982
      %v991 = vpack.c.bf16 %v985, %v984
      %v992 = vpack.c.bf16 %v987, %v986
      %v993 = vpack.c.bf16 %v989, %v988
      %994 = vrot.lane.b32.xlu0 %v685, 96
      %v995 = vpop.permute.xlu0 %994
      %v998 = vsel %vm523, %v990, 0
      %1000 = vmatprep.subr.bf16.mxu0 0
      %1001 = vmatpush1.bf16.msra.mxu0 %v995
      %1002 = vmatprep.subr.bf16.mxu0 0
      %1003 = vmatpush1.bf16.msra.mxu0 0
      %1004 = vmatprep.subr.bf16.mxu0 0
      %1005 = vmatpush1.bf16.msra.mxu0 0
      %1006 = vmatprep.subr.bf16.mxu0 0
      %1007 = vmatpush1.bf16.msra.mxu0 0
      %1008 = vmatprep.subr.bf16.mxu0 0
      %1009 = vmatpush1.bf16.msra.mxu0 0
      %1010 = vmatprep.subr.bf16.mxu0 0
      %1011 = vmatpush1.bf16.msra.mxu0 0
      %1012 = vmatprep.subr.bf16.mxu0 0
      %1013 = vmatpush1.bf16.msra.mxu0 0
      %1014 = vmatprep.subr.bf16.mxu0 0
      %1015 = vmatpush1.bf16.msra.mxu0 0
      %1016 = vmatprep.subr.bf16.mxu0 0
      %1017 = vmatpush1.bf16.msra.mxu0 0
      %1018 = vmatprep.subr.bf16.mxu0 0
      %1019 = vmatpush1.bf16.msra.mxu0 0
      %1020 = vmatprep.subr.bf16.mxu0 0
      %1021 = vmatpush1.bf16.msra.mxu0 0
      %1022 = vmatprep.subr.bf16.mxu0 0
      %1023 = vmatpush1.bf16.msra.mxu0 0
      %1024 = vmatprep.subr.bf16.mxu0 0
      %1025 = vmatpush1.bf16.msra.mxu0 0
      %1026 = vmatprep.subr.bf16.mxu0 0
      %1027 = vmatpush1.bf16.msra.mxu0 0
      %1028 = vmatprep.subr.bf16.mxu0 0
      %1029 = vmatpush1.bf16.msra.mxu0 0
      %1030 = vmatprep.subr.bf16.mxu0 0
      %1031 = vmatpush1.bf16.msra.mxu0 0
      %1032 = vmatprep.mubr.bf16.mxu0 0
      %1033 = vmatmul.mubr.bf16.gmra.mrb[0].mxu0 %v998
      %v1034 = vpop.f32.mrb[0].mxu0
      %v1035 = vadd.f32 0.0, %v1034
      %v1036 = vpop.f32.mrb[0].mxu0
      %v1037 = vpop.f32.mrb[0].mxu0
      %v1038 = vadd.f32 0.0, %v1037
      %v1039 = vpop.f32.mrb[0].mxu0
      %1040 = vdwg.mxu0
      %1041 = vrot.lane.b32.xlu0 %v686, 96
      %v1042 = vpop.permute.xlu0 %1041
      %v1045 = vsel %vm523, %v991, 0
      %1047 = vmatprep.subr.bf16.mxu0 0
      %1048 = vmatpush1.bf16.msra.mxu0 %v1042
      %1049 = vmatprep.subr.bf16.mxu0 0
      %1050 = vmatpush1.bf16.msra.mxu0 0
      %1051 = vmatprep.subr.bf16.mxu0 0
      %1052 = vmatpush1.bf16.msra.mxu0 0
      %1053 = vmatprep.subr.bf16.mxu0 0
      %1054 = vmatpush1.bf16.msra.mxu0 0
      %1055 = vmatprep.subr.bf16.mxu0 0
      %1056 = vmatpush1.bf16.msra.mxu0 0
      %1057 = vmatprep.subr.bf16.mxu0 0
      %1058 = vmatpush1.bf16.msra.mxu0 0
      %1059 = vmatprep.subr.bf16.mxu0 0
      %1060 = vmatpush1.bf16.msra.mxu0 0
      %1061 = vmatprep.subr.bf16.mxu0 0
      %1062 = vmatpush1.bf16.msra.mxu0 0
      %1063 = vmatprep.subr.bf16.mxu0 0
      %1064 = vmatpush1.bf16.msra.mxu0 0
      %1065 = vmatprep.subr.bf16.mxu0 0
      %1066 = vmatpush1.bf16.msra.mxu0 0
      %1067 = vmatprep.subr.bf16.mxu0 0
      %1068 = vmatpush1.bf16.msra.mxu0 0
      %1069 = vmatprep.subr.bf16.mxu0 0
      %1070 = vmatpush1.bf16.msra.mxu0 0
      %1071 = vmatprep.subr.bf16.mxu0 0
      %1072 = vmatpush1.bf16.msra.mxu0 0
      %1073 = vmatprep.subr.bf16.mxu0 0
      %1074 = vmatpush1.bf16.msra.mxu0 0
      %1075 = vmatprep.subr.bf16.mxu0 0
      %1076 = vmatpush1.bf16.msra.mxu0 0
      %1077 = vmatprep.subr.bf16.mxu0 0
      %1078 = vmatpush1.bf16.msra.mxu0 0
      %1079 = vmatprep.mubr.bf16.mxu0 0
      %1080 = vmatmul.mubr.bf16.gmra.mrb[0].mxu0 %v1045
      %v1081 = vpop.f32.mrb[0].mxu0
      %v1082 = vadd.f32 0.0, %v1081
      %v1083 = vpop.f32.mrb[0].mxu0
      %v1084 = vpop.f32.mrb[0].mxu0
      %v1085 = vadd.f32 0.0, %v1084
      %v1086 = vpop.f32.mrb[0].mxu0
      %1087 = vdwg.mxu0
      %1088 = vrot.lane.b32.xlu0 %v687, 96
      %v1089 = vpop.permute.xlu0 %1088
      %v1092 = vsel %vm523, %v992, 0
      %1094 = vmatprep.subr.bf16.mxu0 0
      %1095 = vmatpush1.bf16.msra.mxu0 %v1089
      %1096 = vmatprep.subr.bf16.mxu0 0
      %1097 = vmatpush1.bf16.msra.mxu0 0
      %1098 = vmatprep.subr.bf16.mxu0 0
      %1099 = vmatpush1.bf16.msra.mxu0 0
      %1100 = vmatprep.subr.bf16.mxu0 0
      %1101 = vmatpush1.bf16.msra.mxu0 0
      %1102 = vmatprep.subr.bf16.mxu0 0
      %1103 = vmatpush1.bf16.msra.mxu0 0
      %1104 = vmatprep.subr.bf16.mxu0 0
      %1105 = vmatpush1.bf16.msra.mxu0 0
      %1106 = vmatprep.subr.bf16.mxu0 0
      %1107 = vmatpush1.bf16.msra.mxu0 0
      %1108 = vmatprep.subr.bf16.mxu0 0
      %1109 = vmatpush1.bf16.msra.mxu0 0
      %1110 = vmatprep.subr.bf16.mxu0 0
      %1111 = vmatpush1.bf16.msra.mxu0 0
      %1112 = vmatprep.subr.bf16.mxu0 0
      %1113 = vmatpush1.bf16.msra.mxu0 0
      %1114 = vmatprep.subr.bf16.mxu0 0
      %1115 = vmatpush1.bf16.msra.mxu0 0
      %1116 = vmatprep.subr.bf16.mxu0 0
      %1117 = vmatpush1.bf16.msra.mxu0 0
      %1118 = vmatprep.subr.bf16.mxu0 0
      %1119 = vmatpush1.bf16.msra.mxu0 0
      %1120 = vmatprep.subr.bf16.mxu0 0
      %1121 = vmatpush1.bf16.msra.mxu0 0
      %1122 = vmatprep.subr.bf16.mxu0 0
      %1123 = vmatpush1.bf16.msra.mxu0 0
      %1124 = vmatprep.subr.bf16.mxu0 0
      %1125 = vmatpush1.bf16.msra.mxu0 0
      %1126 = vmatprep.mubr.bf16.mxu0 0
      %1127 = vmatmul.mubr.bf16.gmra.mrb[0].mxu0 %v1092
      %v1128 = vpop.f32.mrb[0].mxu0
      %v1129 = vadd.f32 0.0, %v1128
      %v1130 = vpop.f32.mrb[0].mxu0
      %v1131 = vpop.f32.mrb[0].mxu0
      %v1132 = vadd.f32 0.0, %v1131
      %v1133 = vpop.f32.mrb[0].mxu0
      %1134 = vdwg.mxu0
      %1135 = vrot.lane.b32.xlu0 %v688, 96
      %v1136 = vpop.permute.xlu0 %1135
      %v1139 = vsel %vm523, %v993, 0
      %1141 = vmatprep.subr.bf16.mxu0 0
      %1142 = vmatpush1.bf16.msra.mxu0 %v1136
      %1143 = vmatprep.subr.bf16.mxu0 0
      %1144 = vmatpush1.bf16.msra.mxu0 0
      %1145 = vmatprep.subr.bf16.mxu0 0
      %1146 = vmatpush1.bf16.msra.mxu0 0
      %1147 = vmatprep.subr.bf16.mxu0 0
      %1148 = vmatpush1.bf16.msra.mxu0 0
      %1149 = vmatprep.subr.bf16.mxu0 0
      %1150 = vmatpush1.bf16.msra.mxu0 0
      %1151 = vmatprep.subr.bf16.mxu0 0
      %1152 = vmatpush1.bf16.msra.mxu0 0
      %1153 = vmatprep.subr.bf16.mxu0 0
      %1154 = vmatpush1.bf16.msra.mxu0 0
      %1155 = vmatprep.subr.bf16.mxu0 0
      %1156 = vmatpush1.bf16.msra.mxu0 0
      %1157 = vmatprep.subr.bf16.mxu0 0
      %1158 = vmatpush1.bf16.msra.mxu0 0
      %1159 = vmatprep.subr.bf16.mxu0 0
      %1160 = vmatpush1.bf16.msra.mxu0 0
      %1161 = vmatprep.subr.bf16.mxu0 0
      %1162 = vmatpush1.bf16.msra.mxu0 0
      %1163 = vmatprep.subr.bf16.mxu0 0
      %1164 = vmatpush1.bf16.msra.mxu0 0
      %1165 = vmatprep.subr.bf16.mxu0 0
      %1166 = vmatpush1.bf16.msra.mxu0 0
      %1167 = vmatprep.subr.bf16.mxu0 0
      %1168 = vmatpush1.bf16.msra.mxu0 0
      %1169 = vmatprep.subr.bf16.mxu0 0
      %1170 = vmatpush1.bf16.msra.mxu0 0
      %1171 = vmatprep.subr.bf16.mxu0 0
      %1172 = vmatpush1.bf16.msra.mxu0 0
      %1173 = vmatprep.mubr.bf16.mxu0 0
      %1174 = vmatmul.mubr.bf16.gmra.mrb[0].mxu0 %v1139
      %v1175 = vpop.f32.mrb[0].mxu0
      %v1176 = vadd.f32 0.0, %v1175
      %v1177 = vpop.f32.mrb[0].mxu0
      %v1178 = vpop.f32.mrb[0].mxu0
      %v1179 = vadd.f32 0.0, %v1178
      %v1180 = vpop.f32.mrb[0].mxu0
      %1181 = vdwg.mxu0
      %v1182 = vld [vmem:[%s6] sm:$0x1]
      %v1183 = vpack.c.bf16 %v1038, %v1035
      %v1184 = vpack.c.bf16 %v1085, %v1082
      %v1185 = vld [vmem:[%s5] sm:$0xf]
      %v1187 = vsel %vm692, %v1183, 0
      %v1190 = vsel %vm692, %v1184, 0
      %vm1192 = vcmask 1043456
      %v1194 = vsel %vm1192, %v1185, 0
      %1196 = vmatprep.subr.bf16.mxu0 0
      %1197 = vmatpush1.bf16.msra.mxu0 %v1194
      %1198 = vmatprep.subr.bf16.mxu0 0
      %1199 = vmatpush1.bf16.msra.mxu0 0
      %1200 = vmatprep.subr.bf16.mxu0 0
      %1201 = vmatpush1.bf16.msra.mxu0 0
      %1202 = vmatprep.subr.bf16.mxu0 0
      %1203 = vmatpush1.bf16.msra.mxu0 0
      %1204 = vmatprep.subr.bf16.mxu0 0
      %1205 = vmatpush1.bf16.msra.mxu0 0
      %1206 = vmatprep.subr.bf16.mxu0 0
      %1207 = vmatpush1.bf16.msra.mxu0 0
      %1208 = vmatprep.subr.bf16.mxu0 0
      %1209 = vmatpush1.bf16.msra.mxu0 0
      %1210 = vmatprep.subr.bf16.mxu0 0
      %1211 = vmatpush1.bf16.msra.mxu0 0
      %1212 = vmatprep.subr.bf16.mxu0 0
      %1213 = vmatpush1.bf16.msra.mxu0 0
      %1214 = vmatprep.subr.bf16.mxu0 0
      %1215 = vmatpush1.bf16.msra.mxu0 0
      %1216 = vmatprep.subr.bf16.mxu0 0
      %1217 = vmatpush1.bf16.msra.mxu0 0
      %1218 = vmatprep.subr.bf16.mxu0 0
      %1219 = vmatpush1.bf16.msra.mxu0 0
      %1220 = vmatprep.subr.bf16.mxu0 0
      %1221 = vmatpush1.bf16.msra.mxu0 0
      %1222 = vmatprep.subr.bf16.mxu0 0
      %1223 = vmatpush1.bf16.msra.mxu0 0
      %1224 = vmatprep.subr.bf16.mxu0 0
      %1225 = vmatpush1.bf16.msra.mxu0 0
      %1226 = vmatprep.subr.bf16.mxu0 0
      %1227 = vmatpush1.bf16.msra.mxu0 0
      %1228 = vmatprep.mubr.bf16.mxu0 0
      %1229 = vmatmul.mubr.bf16.gmra.mrb[0].mxu0 %v1187
      %v1230 = vpop.f32.mrb[0].mxu0
      %v1231 = vadd.f32 0.0, %v1230
      %v1232 = vpop.f32.mrb[0].mxu0
      %v1233 = vpop.f32.mrb[0].mxu0
      %v1234 = vadd.f32 0.0, %v1233
      %v1235 = vpop.f32.mrb[0].mxu0
      %1236 = vmatprep.mubr.bf16.mxu0 0
      %1237 = vmatmul.mubr.bf16.gmra.mrb[0].mxu0 %v1190
      %v1238 = vpop.f32.mrb[0].mxu0
      %v1239 = vadd.f32 0.0, %v1238
      %v1240 = vpop.f32.mrb[0].mxu0
      %v1241 = vpop.f32.mrb[0].mxu0
      %v1242 = vadd.f32 0.0, %v1241
      %v1243 = vpop.f32.mrb[0].mxu0
      %1244 = vdwg.mxu0
      %v1246 = vlaneseq
      %v1247 = vshrl.u32 %v1246, 7
      %v1248 = vsub.s32 0, %v1247
      %v1249 = vrot.slane %v1182, %v1248
      %v1251 = vadd.f32 %v1249, %v1231
      %v1252 = vadd.f32 %v1249, %v1234
      %v1253 = vadd.f32 %v1249, %v1239
      %v1254 = vadd.f32 %v1249, %v1242
      %v1255 = vpack.c.bf16 %v1132, %v1129
      %v1256 = vpack.c.bf16 %v1179, %v1176
      %s1257 = scalar_lea.vmem %s5, 4
      %v1258 = vld [vmem:[%s1257] sm:$0xf]
      %v1260 = vsel %vm692, %v1255, 0
      %v1263 = vsel %vm692, %v1256, 0
      %v1266 = vsel %vm1192, %v1258, 0
      %1268 = vmatprep.subr.bf16.mxu0 0
      %1269 = vmatpush1.bf16.msra.mxu0 %v1266
      %1270 = vmatprep.subr.bf16.mxu0 0
      %1271 = vmatpush1.bf16.msra.mxu0 0
      %1272 = vmatprep.subr.bf16.mxu0 0
      %1273 = vmatpush1.bf16.msra.mxu0 0
      %1274 = vmatprep.subr.bf16.mxu0 0
      %1275 = vmatpush1.bf16.msra.mxu0 0
      %1276 = vmatprep.subr.bf16.mxu0 0
      %1277 = vmatpush1.bf16.msra.mxu0 0
      %1278 = vmatprep.subr.bf16.mxu0 0
      %1279 = vmatpush1.bf16.msra.mxu0 0
      %1280 = vmatprep.subr.bf16.mxu0 0
      %1281 = vmatpush1.bf16.msra.mxu0 0
      %1282 = vmatprep.subr.bf16.mxu0 0
      %1283 = vmatpush1.bf16.msra.mxu0 0
      %1284 = vmatprep.subr.bf16.mxu0 0
      %1285 = vmatpush1.bf16.msra.mxu0 0
      %1286 = vmatprep.subr.bf16.mxu0 0
      %1287 = vmatpush1.bf16.msra.mxu0 0
      %1288 = vmatprep.subr.bf16.mxu0 0
      %1289 = vmatpush1.bf16.msra.mxu0 0
      %1290 = vmatprep.subr.bf16.mxu0 0
      %1291 = vmatpush1.bf16.msra.mxu0 0
      %1292 = vmatprep.subr.bf16.mxu0 0
      %1293 = vmatpush1.bf16.msra.mxu0 0
      %1294 = vmatprep.subr.bf16.mxu0 0
      %1295 = vmatpush1.bf16.msra.mxu0 0
      %1296 = vmatprep.subr.bf16.mxu0 0
      %1297 = vmatpush1.bf16.msra.mxu0 0
      %1298 = vmatprep.subr.bf16.mxu0 0
      %1299 = vmatpush1.bf16.msra.mxu0 0
      %1300 = vmatprep.mubr.bf16.mxu0 0
      %1301 = vmatmul.mubr.bf16.gmra.mrb[0].mxu0 %v1260
      %v1302 = vpop.f32.mrb[0].mxu0
      %v1303 = vadd.f32 0.0, %v1302
      %v1304 = vpop.f32.mrb[0].mxu0
      %v1305 = vpop.f32.mrb[0].mxu0
      %v1306 = vadd.f32 0.0, %v1305
      %v1307 = vpop.f32.mrb[0].mxu0
      %1308 = vmatprep.mubr.bf16.mxu0 0
      %1309 = vmatmul.mubr.bf16.gmra.mrb[0].mxu0 %v1263
      %v1310 = vpop.f32.mrb[0].mxu0
      %v1311 = vadd.f32 0.0, %v1310
      %v1312 = vpop.f32.mrb[0].mxu0
      %v1313 = vpop.f32.mrb[0].mxu0
      %v1314 = vadd.f32 0.0, %v1313
      %v1315 = vpop.f32.mrb[0].mxu0
      %1316 = vdwg.mxu0
      %v1317 = vadd.f32 %v1251, %v1303
      %v1318 = vadd.f32 %v1252, %v1306
      %v1319 = vadd.f32 %v1253, %v1311
      %v1320 = vadd.f32 %v1254, %v1314
      %v1321 = vadd.f32 %v517, %v1317
      %v1322 = vadd.f32 %v518, %v1318
      %v1323 = vadd.f32 %v519, %v1319
      %v1324 = vadd.f32 %v520, %v1320
      %v1325 = vld [vmem:[%s8] sm:$0x1]
      %v1326 = vld [vmem:[%s9] sm:$0x1]
      %v1327 = vsel %vm523, %v1321, 0.0
      %1328 = vadd.xlane.f32.xlu0 %v1327
      %v1329 = vpop.xlane.xlu0 %1328
      %v1330 = vsel %vm523, %v1322, 0.0
      %1331 = vadd.xlane.f32.xlu0 %v1330
      %v1332 = vpop.xlane.xlu0 %1331
      %v1333 = vsel %vm523, %v1323, 0.0
      %1334 = vadd.xlane.f32.xlu0 %v1333
      %v1335 = vpop.xlane.xlu0 %1334
      %v1336 = vsel %vm523, %v1324, 0.0
      %1337 = vadd.xlane.f32.xlu0 %v1336
      %v1338 = vpop.xlane.xlu0 %1337
      %v1339 = vmul.f32 %v1329, %v536
      %v1340 = vmul.f32 %v1332, %v536
      %v1341 = vmul.f32 %v1335, %v536
      %v1342 = vmul.f32 %v1338, %v536
      %v1343 = vsub.f32 %v1321, %v1339
      %v1344 = vsub.f32 %v1322, %v1340
      %v1345 = vsub.f32 %v1323, %v1341
      %v1346 = vsub.f32 %v1324, %v1342
      %v1347 = vmul.f32 %v1343, %v1343
      %v1348 = vmul.f32 %v1344, %v1344
      %v1349 = vmul.f32 %v1345, %v1345
      %v1350 = vmul.f32 %v1346, %v1346
      %v1351 = vsel %vm523, %v1347, 0.0
      %1352 = vadd.xlane.f32.xlu0 %v1351
      %v1353 = vpop.xlane.xlu0 %1352
      %v1354 = vsel %vm523, %v1348, 0.0
      %1355 = vadd.xlane.f32.xlu0 %v1354
      %v1356 = vpop.xlane.xlu0 %1355
      %v1357 = vsel %vm523, %v1349, 0.0
      %1358 = vadd.xlane.f32.xlu0 %v1357
      %v1359 = vpop.xlane.xlu0 %1358
      %v1360 = vsel %vm523, %v1350, 0.0
      %1361 = vadd.xlane.f32.xlu0 %v1360
      %v1362 = vpop.xlane.xlu0 %1361
      %v1363 = vmul.f32 %v1353, %v536
      %v1364 = vmul.f32 %v1356, %v536
      %v1365 = vmul.f32 %v1359, %v536
      %v1366 = vmul.f32 %v1362, %v536
      %v1367 = vadd.f32 %v1363, 1e-05
      %v1368 = vadd.f32 %v1364, 1e-05
      %v1369 = vadd.f32 %v1365, 1e-05
      %v1370 = vadd.f32 %v1366, 1e-05
      %v1371 = vrsqrt.pop %v1367
      %v1372 = vrsqrt.pop %v1368
      %v1373 = vrsqrt.pop %v1369
      %v1374 = vrsqrt.pop %v1370
      %v1375 = vmul.f32 %v1343, %v1371
      %v1376 = vmul.f32 %v1344, %v1372
      %v1377 = vmul.f32 %v1345, %v1373
      %v1378 = vmul.f32 %v1346, %v1374
      %v1380 = vlaneseq
      %v1381 = vshrl.u32 %v1380, 7
      %v1382 = vsub.s32 0, %v1381
      %v1383 = vrot.slane %v1325, %v1382
      %v1385 = vmul.f32 %v1375, %v1383
      %v1386 = vmul.f32 %v1376, %v1383
      %v1387 = vmul.f32 %v1377, %v1383
      %v1388 = vmul.f32 %v1378, %v1383
      %v1390 = vlaneseq
      %v1391 = vshrl.u32 %v1390, 7
      %v1392 = vsub.s32 0, %v1391
      %v1393 = vrot.slane %v1326, %v1392
      %v1395 = vadd.f32 %v1385, %v1393
      %v1396 = vadd.f32 %v1386, %v1393
      %v1397 = vadd.f32 %v1387, %v1393
      %v1398 = vadd.f32 %v1388, %v1393
      %v1399 = vpack.c.bf16 %v1396, %v1395
      %v1400 = vpack.c.bf16 %v1398, %v1397
      %v1401 = vld [vmem:[%s10] sm:$0xf]
      %v1402 = vld [vmem:[%s10 + $0x4] sm:$0xf]
      %v1403 = vld [vmem:[%s11] sm:$0x1]
      %v1405 = vlaneseq
      %v1406 = vshrl.u32 %v1405, 7
      %v1407 = vsub.s32 0, %v1406
      %v1408 = vrot.slane %v1403, %v1407
      %v1412 = vunpack.c.l.b16 %v1401
      %v1413 = vunpack.c.l.b16 %v1402
      %v1414 = vpack.c.b16 %v1413, %v1412
      %v1417 = vsel %vm523, %v1399, 0
      %v1420 = vsel %vm523, %v1400, 0
      %1422 = vmatprep.subr.bf16.mxu0 0
      %1423 = vmatpush1.bf16.msra.mxu0 %v1414
      %1424 = vmatprep.subr.bf16.mxu0 0
      %1425 = vmatpush1.bf16.msra.mxu0 0
      %1426 = vmatprep.subr.bf16.mxu0 0
      %1427 = vmatpush1.bf16.msra.mxu0 0
      %1428 = vmatprep.subr.bf16.mxu0 0
      %1429 = vmatpush1.bf16.msra.mxu0 0
      %1430 = vmatprep.subr.bf16.mxu0 0
      %1431 = vmatpush1.bf16.msra.mxu0 0
      %1432 = vmatprep.subr.bf16.mxu0 0
      %1433 = vmatpush1.bf16.msra.mxu0 0
      %1434 = vmatprep.subr.bf16.mxu0 0
      %1435 = vmatpush1.bf16.msra.mxu0 0
      %1436 = vmatprep.subr.bf16.mxu0 0
      %1437 = vmatpush1.bf16.msra.mxu0 0
      %1438 = vmatprep.subr.bf16.mxu0 0
      %1439 = vmatpush1.bf16.msra.mxu0 0
      %1440 = vmatprep.subr.bf16.mxu0 0
      %1441 = vmatpush1.bf16.msra.mxu0 0
      %1442 = vmatprep.subr.bf16.mxu0 0
      %1443 = vmatpush1.bf16.msra.mxu0 0
      %1444 = vmatprep.subr.bf16.mxu0 0
      %1445 = vmatpush1.bf16.msra.mxu0 0
      %1446 = vmatprep.subr.bf16.mxu0 0
      %1447 = vmatpush1.bf16.msra.mxu0 0
      %1448 = vmatprep.subr.bf16.mxu0 0
      %1449 = vmatpush1.bf16.msra.mxu0 0
      %1450 = vmatprep.subr.bf16.mxu0 0
      %1451 = vmatpush1.bf16.msra.mxu0 0
      %1452 = vmatprep.subr.bf16.mxu0 0
      %1453 = vmatpush1.bf16.msra.mxu0 0
      %1454 = vmatprep.mubr.bf16.mxu0 0
      %1455 = vmatmul.mubr.bf16.gmra.mrb[0].mxu0 %v1417
      %v1456 = vpop.f32.mrb[0].mxu0
      %v1457 = vadd.f32 %v1408, %v1456
      %v1458 = vpop.f32.mrb[0].mxu0
      %v1459 = vpop.f32.mrb[0].mxu0
      %v1460 = vadd.f32 %v1408, %v1459
      %v1461 = vpop.f32.mrb[0].mxu0
      %1462 = vmatprep.mubr.bf16.mxu0 0
      %1463 = vmatmul.mubr.bf16.gmra.mrb[0].mxu0 %v1420
      %v1464 = vpop.f32.mrb[0].mxu0
      %v1465 = vadd.f32 %v1408, %v1464
      %v1466 = vpop.f32.mrb[0].mxu0
      %v1467 = vpop.f32.mrb[0].mxu0
      %v1468 = vadd.f32 %v1408, %v1467
      %v1469 = vpop.f32.mrb[0].mxu0
      %1470 = vdwg.mxu0
      %v1471 = vmul.f32 %v1457, 0.5
      %v1472 = vmul.f32 %v1460, 0.5
      %v1473 = vmul.f32 %v1465, 0.5
      %v1474 = vmul.f32 %v1468, 0.5
      %v1475 = vmul.f32 %v1457, 0.70710677
      %v1476 = vmul.f32 %v1460, 0.70710677
      %v1477 = vmul.f32 %v1465, 0.70710677
      %v1478 = vmul.f32 %v1468, 0.70710677
      %vm1479 = vcmp.ge.f32.partialorder %v1475, 0.0
      %vm1480 = vcmp.ge.f32.partialorder %v1476, 0.0
      %vm1481 = vcmp.ge.f32.partialorder %v1477, 0.0
      %vm1482 = vcmp.ge.f32.partialorder %v1478, 0.0
      %v1483 = vsel %vm1479, 1.0, -1.0
      %v1484 = vsel %vm1480, 1.0, -1.0
      %v1485 = vsel %vm1481, 1.0, -1.0
      %v1486 = vsel %vm1482, 1.0, -1.0
      %v1487 = vand.u32 2147483647, %v1475
      %v1488 = vand.u32 2147483647, %v1476
      %v1489 = vand.u32 2147483647, %v1477
      %v1490 = vand.u32 2147483647, %v1478
      %v1491 = vmul.f32 %v1487, 0.3275911
      %v1492 = vmul.f32 %v1488, 0.3275911
      %v1493 = vmul.f32 %v1489, 0.3275911
      %v1494 = vmul.f32 %v1490, 0.3275911
      %v1495 = vadd.f32 %v1491, 1.0
      %v1496 = vadd.f32 %v1492, 1.0
      %v1497 = vadd.f32 %v1493, 1.0
      %v1498 = vadd.f32 %v1494, 1.0
      %v1499 = vrcp.pop %v1495
      %v1500 = vrcp.pop %v1496
      %v1501 = vrcp.pop %v1497
      %v1502 = vrcp.pop %v1498
      %v1503 = vmul.f32 %v1499, 1.0614054
      %v1504 = vmul.f32 %v1500, 1.0614054
      %v1505 = vmul.f32 %v1501, 1.0614054
      %v1506 = vmul.f32 %v1502, 1.0614054
      %v1507 = vadd.f32 %v1503, -1.4531521
      %v1508 = vadd.f32 %v1504, -1.4531521
      %v1509 = vadd.f32 %v1505, -1.4531521
      %v1510 = vadd.f32 %v1506, -1.4531521
      %v1511 = vmul.f32 %v1507, %v1499
      %v1512 = vmul.f32 %v1508, %v1500
      %v1513 = vmul.f32 %v1509, %v1501
      %v1514 = vmul.f32 %v1510, %v1502
      %v1515 = vadd.f32 %v1511, 1.4214138
      %v1516 = vadd.f32 %v1512, 1.4214138
      %v1517 = vadd.f32 %v1513, 1.4214138
      %v1518 = vadd.f32 %v1514, 1.4214138
      %v1519 = vmul.f32 %v1515, %v1499
      %v1520 = vmul.f32 %v1516, %v1500
      %v1521 = vmul.f32 %v1517, %v1501
      %v1522 = vmul.f32 %v1518, %v1502
      %v1523 = vadd.f32 %v1519, -0.28449672
      %v1524 = vadd.f32 %v1520, -0.28449672
      %v1525 = vadd.f32 %v1521, -0.28449672
      %v1526 = vadd.f32 %v1522, -0.28449672
      %v1527 = vmul.f32 %v1523, %v1499
      %v1528 = vmul.f32 %v1524, %v1500
      %v1529 = vmul.f32 %v1525, %v1501
      %v1530 = vmul.f32 %v1526, %v1502
      %v1531 = vadd.f32 %v1527, 0.2548296
      %v1532 = vadd.f32 %v1528, 0.2548296
      %v1533 = vadd.f32 %v1529, 0.2548296
      %v1534 = vadd.f32 %v1530, 0.2548296
      %v1535 = vmul.f32 %v1531, %v1499
      %v1536 = vmul.f32 %v1532, %v1500
      %v1537 = vmul.f32 %v1533, %v1501
      %v1538 = vmul.f32 %v1534, %v1502
      %v1539 = vsub.f32 0.0, %v1487
      %v1540 = vsub.f32 0.0, %v1488
      %v1541 = vsub.f32 0.0, %v1489
      %v1542 = vsub.f32 0.0, %v1490
      %v1543 = vmul.f32 %v1539, %v1487
      %v1544 = vmul.f32 %v1540, %v1488
      %v1545 = vmul.f32 %v1541, %v1489
      %v1546 = vmul.f32 %v1542, %v1490
      %v1547 = vmul.f32 %v1543, 1.442695
      %v1548 = vpow.pop %v1547
      %v1549 = vmul.f32 %v1544, 1.442695
      %v1550 = vpow.pop %v1549
      %v1551 = vmul.f32 %v1545, 1.442695
      %v1552 = vpow.pop %v1551
      %v1553 = vmul.f32 %v1546, 1.442695
      %v1554 = vpow.pop %v1553
      %v1555 = vmul.f32 %v1535, %v1548
      %v1556 = vmul.f32 %v1536, %v1550
      %v1557 = vmul.f32 %v1537, %v1552
      %v1558 = vmul.f32 %v1538, %v1554
      %v1559 = vsub.f32 1.0, %v1555
      %v1560 = vsub.f32 1.0, %v1556
      %v1561 = vsub.f32 1.0, %v1557
      %v1562 = vsub.f32 1.0, %v1558
      %v1563 = vmul.f32 %v1483, %v1559
      %v1564 = vmul.f32 %v1484, %v1560
      %v1565 = vmul.f32 %v1485, %v1561
      %v1566 = vmul.f32 %v1486, %v1562
      %v1567 = vadd.f32 %v1563, 1.0
      %v1568 = vadd.f32 %v1564, 1.0
      %v1569 = vadd.f32 %v1565, 1.0
      %v1570 = vadd.f32 %v1566, 1.0
      %v1571 = vmul.f32 %v1471, %v1567
      %v1572 = vmul.f32 %v1472, %v1568
      %v1573 = vmul.f32 %v1473, %v1569
      %v1574 = vmul.f32 %v1474, %v1570
      %v1575 = vpack.c.bf16 %v1572, %v1571
      %v1576 = vpack.c.bf16 %v1574, %v1573
      %v1577 = vld [vmem:[%s12] sm:$0xf]
      %v1578 = vld [vmem:[%s12 + $0x4] sm:$0xf]
      %v1579 = vld [vmem:[%s12 + $0x8] sm:$0xf]
      %v1580 = vld [vmem:[%s12 + $0xc] sm:$0xf]
      %v1581 = vld [vmem:[%s12 + $0x10] sm:$0xf]
      %v1582 = vld [vmem:[%s12 + $0x14] sm:$0xf]
      %v1583 = vld [vmem:[%s12 + $0x18] sm:$0xf]
      %v1584 = vld [vmem:[%s12 + $0x1c] sm:$0xf]
      %v1585 = vld [vmem:[%s13] sm:$0x1]
      %v1587 = vlaneseq
      %v1588 = vshrl.u32 %v1587, 7
      %v1589 = vsub.s32 0, %v1588
      %v1590 = vrot.slane %v1585, %v1589
      %v1600 = vunpack.c.l.b16 %v1577
      %v1601 = vunpack.c.l.b16 %v1578
      %v1602 = vunpack.c.l.b16 %v1579
      %v1603 = vunpack.c.l.b16 %v1580
      %v1604 = vunpack.c.l.b16 %v1581
      %v1605 = vunpack.c.l.b16 %v1582
      %v1606 = vunpack.c.l.b16 %v1583
      %v1607 = vunpack.c.l.b16 %v1584
      %v1608 = vpack.c.b16 %v1601, %v1600
      %v1609 = vpack.c.b16 %v1603, %v1602
      %v1610 = vpack.c.b16 %v1605, %v1604
      %v1611 = vpack.c.b16 %v1607, %v1606
      %vm1616 = vcmask 523264
      %v1618 = vsel %vm1616, %v1575, 0
      %v1621 = vsel %vm1616, %v1576, 0
      %1623 = vmatprep.subr.bf16.mxu0 0
      %1624 = vmatpush1.bf16.msra.mxu0 %v1608
      %1625 = vmatprep.subr.bf16.mxu0 0
      %1626 = vmatpush1.bf16.msra.mxu0 %v1609
      %1627 = vmatprep.subr.bf16.mxu0 0
      %1628 = vmatpush1.bf16.msra.mxu0 %v1610
      %1629 = vmatprep.subr.bf16.mxu0 0
      %1630 = vmatpush1.bf16.msra.mxu0 %v1611
      %1631 = vmatprep.subr.bf16.mxu0 0
      %1632 = vmatpush1.bf16.msra.mxu0 0
      %1633 = vmatprep.subr.bf16.mxu0 0
      %1634 = vmatpush1.bf16.msra.mxu0 0
      %1635 = vmatprep.subr.bf16.mxu0 0
      %1636 = vmatpush1.bf16.msra.mxu0 0
      %1637 = vmatprep.subr.bf16.mxu0 0
      %1638 = vmatpush1.bf16.msra.mxu0 0
      %1639 = vmatprep.subr.bf16.mxu0 0
      %1640 = vmatpush1.bf16.msra.mxu0 0
      %1641 = vmatprep.subr.bf16.mxu0 0
      %1642 = vmatpush1.bf16.msra.mxu0 0
      %1643 = vmatprep.subr.bf16.mxu0 0
      %1644 = vmatpush1.bf16.msra.mxu0 0
      %1645 = vmatprep.subr.bf16.mxu0 0
      %1646 = vmatpush1.bf16.msra.mxu0 0
      %1647 = vmatprep.subr.bf16.mxu0 0
      %1648 = vmatpush1.bf16.msra.mxu0 0
      %1649 = vmatprep.subr.bf16.mxu0 0
      %1650 = vmatpush1.bf16.msra.mxu0 0
      %1651 = vmatprep.subr.bf16.mxu0 0
      %1652 = vmatpush1.bf16.msra.mxu0 0
      %1653 = vmatprep.subr.bf16.mxu0 0
      %1654 = vmatpush1.bf16.msra.mxu0 0
      %1655 = vmatprep.mubr.bf16.mxu0 0
      %1656 = vmatmul.mubr.bf16.gmra.mrb[0].mxu0 %v1618
      %v1657 = vpop.f32.mrb[0].mxu0
      %v1658 = vadd.f32 %v1590, %v1657
      %v1659 = vpop.f32.mrb[0].mxu0
      %v1660 = vpop.f32.mrb[0].mxu0
      %v1661 = vadd.f32 %v1590, %v1660
      %v1662 = vpop.f32.mrb[0].mxu0
      %1663 = vmatprep.mubr.bf16.mxu0 0
      %1664 = vmatmul.mubr.bf16.gmra.mrb[0].mxu0 %v1621
      %v1665 = vpop.f32.mrb[0].mxu0
      %v1666 = vadd.f32 %v1590, %v1665
      %v1667 = vpop.f32.mrb[0].mxu0
      %v1668 = vpop.f32.mrb[0].mxu0
      %v1669 = vadd.f32 %v1590, %v1668
      %v1670 = vpop.f32.mrb[0].mxu0
      %1671 = vdwg.mxu0
      %v1672 = vadd.f32 %v1321, %v1658
      %v1673 = vadd.f32 %v1322, %v1661
      %v1674 = vadd.f32 %v1323, %v1666
      %v1675 = vadd.f32 %v1324, %v1669
      %v1676 = vpack.c.bf16 %v1673, %v1672
      %v1677 = vpack.c.bf16 %v1675, %v1674
      %v1680 = vunpack.c.l.b16 %v1676
      %v1681 = vunpack.c.h.b16 %v1676
      %v1682 = vunpack.c.l.b16 %v1677
      %v1683 = vunpack.c.h.b16 %v1677
      %v1684 = vpack.c.b16 %v1680, %v1680
      %v1685 = vpack.c.b16 %v1681, %v1681
      %v1686 = vpack.c.b16 %v1682, %v1682
      %v1687 = vpack.c.b16 %v1683, %v1683
      %vm1692 = vcmask 125952
      %1693 = vst.msk [vmem:[%s510] sm:$0xf] %vm1692, %v1684
      %1694 = vst.msk [vmem:[%s510 + $0x4] sm:$0xf] %vm1692, %v1685
      %1695 = vst.msk [vmem:[%s510 + $0x8] sm:$0xf] %vm1692, %v1686
      %1696 = vst.msk [vmem:[%s510 + $0xc] sm:$0xf] %vm1692, %v1687
      %s1697 = smul.u32 2, %s30
      %p1698 = scmp.lt.s32.totalorder %s29, 1
      %s1699 = scalar_select %p1698, %s29, 1
      %p1700 = scmp.lt.s32.totalorder %s1697, 3
      %s1701 = scalar_select %p1700, %s1697, 3
      %s1702 = smul.addr %s1701, 2
      %s1703 = smul.addr %s1699, 8
      %s1704 = sadd.s32 %s1702, %s1703
      %s1705 = smul.addr %s1704, 4
      %s1706 = scalar_lea.vmem %s14, %s1705
      // Predicated region
      $region77: #{swin_forward.7} parent=75 // pred_check
        %p1707 = pneg %p358
      $region78: #{swin_forward.7} parent=75 // pred_check_branch
        %1709 = sbr.rel (%p1707) target = $region80
      $region79: #{swin_forward.7} parent=75 // pred_region
        %s1710 = smul.u32 2, %s30
      $region80: #{swin_forward.7} parent=75 // pred_fallthru
        _
    $region76: #{swin_forward.7} parent=5 // pred_fallthru
      _
    %p1711 = scmp.le.s32.totalorder 2, %s20
    // Predicated region
    $region81: #{swin_forward.7} parent=5 // pred_check
      %p1712 = pneg %p1711
    $region82: #{swin_forward.7} parent=5 // pred_check_branch
      %1714 = sbr.rel (%p1712) target = $region84
    $region83: #{swin_forward.7} parent=5 // pred_region
      %s1715 = ssub.s32 %s20, 2
      // Predicated region
      $region85: #{swin_forward.7} parent=83 // pred_check
        %p1716 = pneg %p364
      $region86: #{swin_forward.7} parent=83 // pred_check_branch
        %1718 = sbr.rel (%p1716) target = $region88
      $region87: #{swin_forward.7} parent=83 // pred_region
        %s1719 = smul.u32 2, %s32
        %p1720 = scmp.lt.s32.totalorder %s31, 1
        %s1721 = scalar_select %p1720, %s31, 1
        %p1722 = scmp.lt.s32.totalorder %s1719, 3
        %s1723 = scalar_select %p1722, %s1719, 3
        %s1724 = smul.addr %s1723, 2
        %s1725 = smul.addr %s1721, 8
        %s1726 = sadd.s32 %s1724, %s1725
        %s1727 = smul.addr %s1726, 4
        %s1728 = scalar_lea.vmem %s14, %s1727
      $region88: #{swin_forward.7} parent=83 // pred_fallthru
        _
    $region84: #{swin_forward.7} parent=5 // pred_fallthru
      _
  $region6: #{swin_forward.7} parent=0 // loop_footer
    %s24 = sadd.s32 1, %s20
  $region7: #{swin_forward.7} parent=0 // loop_footer_branch
    %19 = sbr.rel target = $region3
  $region8: #{swin_forward.7} parent=0 // loop_exit
    _

// kernel: swin_forward.8
$region0: #{swin_forward.8}
  #allocation0 [shape = 'u32[]', space=smem, size = 0x4, offset = 0x4, fixed_abs, tag = 'smem constant byte address 0x4 - core index']
  #allocation1 [shape = 'u32[144,128]{1,0:T(1,128)}', space=vmem, size = 0x12000, scoped, tag = 'internal scratch']
  %s0 = inlined_call_operand.vmem [shape: bf16[2,4,16,16], index: 0, kind: input, shape index: {}]
  %s1 = inlined_call_operand.vmem [shape: f32[1,16], index: 1, kind: input, shape index: {}, may-alias: {1,9}]
  %s2 = inlined_call_operand.vmem [shape: f32[1,16], index: 2, kind: input, shape index: {}, may-alias: {2,6,10,14}]
  %s3 = inlined_call_operand.vmem [shape: bf16[16,48], index: 3, kind: input, shape index: {}]
  %s4 = inlined_call_operand.vmem [shape: f32[1,48], index: 4, kind: input, shape index: {}]
  %s5 = inlined_call_operand.vmem [shape: bf16[2,8,16], index: 5, kind: input, shape index: {}]
  %s6 = inlined_call_operand.vmem [shape: f32[1,16], index: 6, kind: input, shape index: {}, may-alias: {2,6,10,14}]
  %s7 = inlined_call_operand.vmem [shape: f32[2,16,16], index: 7, kind: input, shape index: {}]
  %s8 = inlined_call_operand.vmem [shape: f32[4,16,16], index: 8, kind: input, shape index: {}]
  %s9 = inlined_call_operand.vmem [shape: f32[1,16], index: 9, kind: input, shape index: {}, may-alias: {1,9}]
  %s10 = inlined_call_operand.vmem [shape: f32[1,16], index: 10, kind: input, shape index: {}, may-alias: {2,6,10,14}]
  %s11 = inlined_call_operand.vmem [shape: bf16[16,64], index: 11, kind: input, shape index: {}]
  %s12 = inlined_call_operand.vmem [shape: f32[1,64], index: 12, kind: input, shape index: {}]
  %s13 = inlined_call_operand.vmem [shape: bf16[64,16], index: 13, kind: input, shape index: {}]
  %s14 = inlined_call_operand.vmem [shape: f32[1,16], index: 14, kind: input, shape index: {}, may-alias: {2,6,10,14}]
  %s15 = inlined_call_operand.vmem [shape: bf16[2,4,16,16], index: 15, kind: output, shape index: {}]
  %s16 = sld [smem:[#allocation0]]
  $region93: #{swin_forward.8} parent=0
    _
  %s18 = ssub.s32 1, %s16
  %s19 = scalar_select 0, %s18, %s16
  loop: start=0, step=1, limit=6
  $region2: #{swin_forward.8} parent=0 // loop_pre_header
    _
  $region3: #{swin_forward.8} parent=0 // loop_header
    %s21 = sphi 0, %s25
    %p22 = scmp.ge.s32.totalorder %s21, 6
    %s28 = sphi 0, %s40
    %s29 = sphi 0, %s36
    %s30 = sphi 0, %s28
    %s31 = sphi 0, %s29
    %s32 = sphi 0, %s30
    %s33 = sphi 0, %s31
    %s45 = sphi 0, %s47
    %s48 = sphi 0, %s45
    %s49 = sphi 0, %s48
    %s65 = sphi 0, %s49
    %s69 = sphi 0, %s69
    %s71 = sphi 0, %s69
    %s72 = sphi 0, %s71
    %s86 = sphi 0, %s72
    %s90 = sphi 0, %s90
    %s92 = sphi 0, %s90
    %s93 = sphi 0, %s92
    %s107 = sphi 0, %s93
    %s111 = sphi 0, %s111
    %s113 = sphi 0, %s111
    %s114 = sphi 0, %s113
    %s128 = sphi 0, %s114
    %s132 = sphi 0, %s132
    %s134 = sphi 0, %s132
    %s135 = sphi 0, %s134
    %s149 = sphi 0, %s135
    %s153 = sphi 0, %s153
    %s155 = sphi 0, %s153
    %s156 = sphi 0, %s155
    %s170 = sphi 0, %s156
    %s174 = sphi 0, %s174
    %s176 = sphi 0, %s174
    %s177 = sphi 0, %s176
    %s191 = sphi 0, %s177
    %s195 = sphi 0, %s195
    %s197 = sphi 0, %s195
    %s198 = sphi 0, %s197
    %s212 = sphi 0, %s198
    %s218 = sphi 0, %s220
    %s221 = sphi 0, %s218
    %s222 = sphi 0, %s221
    %s238 = sphi 0, %s222
    %s242 = sphi 0, %s242
    %s244 = sphi 0, %s242
    %s245 = sphi 0, %s244
    %s259 = sphi 0, %s245
    %s263 = sphi 0, %s263
    %s265 = sphi 0, %s263
    %s266 = sphi 0, %s265
    %s280 = sphi 0, %s266
    %s284 = sphi 0, %s284
    %s286 = sphi 0, %s284
    %s287 = sphi 0, %s286
    %s301 = sphi 0, %s287
    %s305 = sphi 0, %s305
    %s307 = sphi 0, %s305
    %s308 = sphi 0, %s307
    %s322 = sphi 0, %s308
    %s326 = sphi 0, %s326
    %s328 = sphi 0, %s326
    %s329 = sphi 0, %s328
    %s343 = sphi 0, %s329
    %s347 = sphi 0, %s347
    %s349 = sphi 0, %s347
    %s350 = sphi 0, %s349
    %s364 = sphi 0, %s350
    %s372 = sphi 0, %s374
    %s375 = sphi 0, %s372
    %s376 = sphi 0, %s375
    %s392 = sphi 0, %s376
  $region4: #{swin_forward.8} parent=0 // loop_header_branch
    %24 = sbr.rel (%p22) target = $region8
  $region5: #{swin_forward.8} parent=0 // loop_body
    %s26 = ssub.s32 %s21, 1
    %s27 = ssub.s32 %s21, 2
    %s34 = sadd.s32 1, %s29
    %p35 = scmp.ge.s32.totalorder %s34, 2
    %s36 = scalar_select %p35, 0, %s34
    %s37 = sadd.s32 1, %s28
    %s38 = scalar_select %p35, %s37, %s28
    %p39 = scmp.ge.s32.totalorder %s38, 2
    %s40 = scalar_select %p39, 0, %s38
    %s41 = ssub.s32 %s28, %s40
    %s42 = ssub.s32 %s29, %s36
    %s43 = sor.u32 %s41, %s42
    %p44 = scmp.eq.s32.totalorder %s43, 0
    %s46 = sadd.s32 %s45, 1
    %s47 = scalar_select %p44, %s45, %s46
    %p50 = pneg %p44
    %p51 = scmp.eq.s32.totalorder %s21, 3
    %p52 = por %p50, %p51
    %p53 = scmp.ne.s32.totalorder %s45, %s48
    %p54 = scmp.eq.s32.totalorder %s21, 0
    %p55 = por %p53, %p54
    %p56 = scmp.ne.s32.totalorder %s45, %s48
    %p57 = scmp.eq.s32.totalorder %s26, 3
    %p58 = por %p56, %p57
    %p59 = scmp.ne.s32.totalorder %s48, %s49
    %p60 = scmp.eq.s32.totalorder %s26, 0
    %p61 = por %p59, %p60
    %p62 = scmp.ne.s32.totalorder %s48, %s49
    %p63 = scmp.eq.s32.totalorder %s27, 3
    %p64 = por %p62, %p63
    %p66 = scmp.ne.s32.totalorder %s49, %s65
    %p67 = scmp.eq.s32.totalorder %s27, 0
    %p68 = por %p66, %p67
    %s70 = sadd.s32 %s69, 1
    %p73 = scmp.eq.s32.totalorder %s21, 3
    %p74 = scmp.ne.s32.totalorder %s69, %s71
    %p75 = scmp.eq.s32.totalorder %s21, 0
    %p76 = por %p74, %p75
    %p77 = scmp.ne.s32.totalorder %s69, %s71
    %p78 = scmp.eq.s32.totalorder %s26, 3
    %p79 = por %p77, %p78
    %p80 = scmp.ne.s32.totalorder %s71, %s72
    %p81 = scmp.eq.s32.totalorder %s26, 0
    %p82 = por %p80, %p81
    %p83 = scmp.ne.s32.totalorder %s71, %s72
    %p84 = scmp.eq.s32.totalorder %s27, 3
    %p85 = por %p83, %p84
    %p87 = scmp.ne.s32.totalorder %s72, %s86
    %p88 = scmp.eq.s32.totalorder %s27, 0
    %p89 = por %p87, %p88
    %s91 = sadd.s32 %s90, 1
    %p94 = scmp.eq.s32.totalorder %s21, 3
    %p95 = scmp.ne.s32.totalorder %s90, %s92
    %p96 = scmp.eq.s32.totalorder %s21, 0
    %p97 = por %p95, %p96
    %p98 = scmp.ne.s32.totalorder %s90, %s92
    %p99 = scmp.eq.s32.totalorder %s26, 3
    %p100 = por %p98, %p99
    %p101 = scmp.ne.s32.totalorder %s92, %s93
    %p102 = scmp.eq.s32.totalorder %s26, 0
    %p103 = por %p101, %p102
    %p104 = scmp.ne.s32.totalorder %s92, %s93
    %p105 = scmp.eq.s32.totalorder %s27, 3
    %p106 = por %p104, %p105
    %p108 = scmp.ne.s32.totalorder %s93, %s107
    %p109 = scmp.eq.s32.totalorder %s27, 0
    %p110 = por %p108, %p109
    %s112 = sadd.s32 %s111, 1
    %p115 = scmp.eq.s32.totalorder %s21, 3
    %p116 = scmp.ne.s32.totalorder %s111, %s113
    %p117 = scmp.eq.s32.totalorder %s21, 0
    %p118 = por %p116, %p117
    %p119 = scmp.ne.s32.totalorder %s111, %s113
    %p120 = scmp.eq.s32.totalorder %s26, 3
    %p121 = por %p119, %p120
    %p122 = scmp.ne.s32.totalorder %s113, %s114
    %p123 = scmp.eq.s32.totalorder %s26, 0
    %p124 = por %p122, %p123
    %p125 = scmp.ne.s32.totalorder %s113, %s114
    %p126 = scmp.eq.s32.totalorder %s27, 3
    %p127 = por %p125, %p126
    %p129 = scmp.ne.s32.totalorder %s114, %s128
    %p130 = scmp.eq.s32.totalorder %s27, 0
    %p131 = por %p129, %p130
    %s133 = sadd.s32 %s132, 1
    %p136 = scmp.eq.s32.totalorder %s21, 3
    %p137 = scmp.ne.s32.totalorder %s132, %s134
    %p138 = scmp.eq.s32.totalorder %s21, 0
    %p139 = por %p137, %p138
    %p140 = scmp.ne.s32.totalorder %s132, %s134
    %p141 = scmp.eq.s32.totalorder %s26, 3
    %p142 = por %p140, %p141
    %p143 = scmp.ne.s32.totalorder %s134, %s135
    %p144 = scmp.eq.s32.totalorder %s26, 0
    %p145 = por %p143, %p144
    %p146 = scmp.ne.s32.totalorder %s134, %s135
    %p147 = scmp.eq.s32.totalorder %s27, 3
    %p148 = por %p146, %p147
    %p150 = scmp.ne.s32.totalorder %s135, %s149
    %p151 = scmp.eq.s32.totalorder %s27, 0
    %p152 = por %p150, %p151
    %s154 = sadd.s32 %s153, 1
    %p157 = scmp.eq.s32.totalorder %s21, 3
    %p158 = scmp.ne.s32.totalorder %s153, %s155
    %p159 = scmp.eq.s32.totalorder %s21, 0
    %p160 = por %p158, %p159
    %p161 = scmp.ne.s32.totalorder %s153, %s155
    %p162 = scmp.eq.s32.totalorder %s26, 3
    %p163 = por %p161, %p162
    %p164 = scmp.ne.s32.totalorder %s155, %s156
    %p165 = scmp.eq.s32.totalorder %s26, 0
    %p166 = por %p164, %p165
    %p167 = scmp.ne.s32.totalorder %s155, %s156
    %p168 = scmp.eq.s32.totalorder %s27, 3
    %p169 = por %p167, %p168
    %p171 = scmp.ne.s32.totalorder %s156, %s170
    %p172 = scmp.eq.s32.totalorder %s27, 0
    %p173 = por %p171, %p172
    %s175 = sadd.s32 %s174, 1
    %p178 = scmp.eq.s32.totalorder %s21, 3
    %p179 = scmp.ne.s32.totalorder %s174, %s176
    %p180 = scmp.eq.s32.totalorder %s21, 0
    %p181 = por %p179, %p180
    %p182 = scmp.ne.s32.totalorder %s174, %s176
    %p183 = scmp.eq.s32.totalorder %s26, 3
    %p184 = por %p182, %p183
    %p185 = scmp.ne.s32.totalorder %s176, %s177
    %p186 = scmp.eq.s32.totalorder %s26, 0
    %p187 = por %p185, %p186
    %p188 = scmp.ne.s32.totalorder %s176, %s177
    %p189 = scmp.eq.s32.totalorder %s27, 3
    %p190 = por %p188, %p189
    %p192 = scmp.ne.s32.totalorder %s177, %s191
    %p193 = scmp.eq.s32.totalorder %s27, 0
    %p194 = por %p192, %p193
    %s196 = sadd.s32 %s195, 1
    %p199 = scmp.eq.s32.totalorder %s21, 3
    %p200 = scmp.ne.s32.totalorder %s195, %s197
    %p201 = scmp.eq.s32.totalorder %s21, 0
    %p202 = por %p200, %p201
    %p203 = scmp.ne.s32.totalorder %s195, %s197
    %p204 = scmp.eq.s32.totalorder %s26, 3
    %p205 = por %p203, %p204
    %p206 = scmp.ne.s32.totalorder %s197, %s198
    %p207 = scmp.eq.s32.totalorder %s26, 0
    %p208 = por %p206, %p207
    %p209 = scmp.ne.s32.totalorder %s197, %s198
    %p210 = scmp.eq.s32.totalorder %s27, 3
    %p211 = por %p209, %p210
    %p213 = scmp.ne.s32.totalorder %s198, %s212
    %p214 = scmp.eq.s32.totalorder %s27, 0
    %p215 = por %p213, %p214
    %s216 = ssub.s32 %s29, %s36
    %p217 = scmp.eq.s32.totalorder %s216, 0
    %s219 = sadd.s32 %s218, 1
    %s220 = scalar_select %p217, %s218, %s219
    %p223 = pneg %p217
    %p224 = scmp.eq.s32.totalorder %s21, 3
    %p225 = por %p223, %p224
    %p226 = scmp.ne.s32.totalorder %s218, %s221
    %p227 = scmp.eq.s32.totalorder %s21, 0
    %p228 = por %p226, %p227
    %p229 = scmp.ne.s32.totalorder %s218, %s221
    %p230 = scmp.eq.s32.totalorder %s26, 3
    %p231 = por %p229, %p230
    %p232 = scmp.ne.s32.totalorder %s221, %s222
    %p233 = scmp.eq.s32.totalorder %s26, 0
    %p234 = por %p232, %p233
    %p235 = scmp.ne.s32.totalorder %s221, %s222
    %p236 = scmp.eq.s32.totalorder %s27, 3
    %p237 = por %p235, %p236
    %p239 = scmp.ne.s32.totalorder %s222, %s238
    %p240 = scmp.eq.s32.totalorder %s27, 0
    %p241 = por %p239, %p240
    %s243 = sadd.s32 %s242, 1
    %p246 = scmp.eq.s32.totalorder %s21, 3
    %p247 = scmp.ne.s32.totalorder %s242, %s244
    %p248 = scmp.eq.s32.totalorder %s21, 0
    %p249 = por %p247, %p248
    %p250 = scmp.ne.s32.totalorder %s242, %s244
    %p251 = scmp.eq.s32.totalorder %s26, 3
    %p252 = por %p250, %p251
    %p253 = scmp.ne.s32.totalorder %s244, %s245
    %p254 = scmp.eq.s32.totalorder %s26, 0
    %p255 = por %p253, %p254
    %p256 = scmp.ne.s32.totalorder %s244, %s245
    %p257 = scmp.eq.s32.totalorder %s27, 3
    %p258 = por %p256, %p257
    %p260 = scmp.ne.s32.totalorder %s245, %s259
    %p261 = scmp.eq.s32.totalorder %s27, 0
    %p262 = por %p260, %p261
    %s264 = sadd.s32 %s263, 1
    %p267 = scmp.eq.s32.totalorder %s21, 3
    %p268 = scmp.ne.s32.totalorder %s263, %s265
    %p269 = scmp.eq.s32.totalorder %s21, 0
    %p270 = por %p268, %p269
    %p271 = scmp.ne.s32.totalorder %s263, %s265
    %p272 = scmp.eq.s32.totalorder %s26, 3
    %p273 = por %p271, %p272
    %p274 = scmp.ne.s32.totalorder %s265, %s266
    %p275 = scmp.eq.s32.totalorder %s26, 0
    %p276 = por %p274, %p275
    %p277 = scmp.ne.s32.totalorder %s265, %s266
    %p278 = scmp.eq.s32.totalorder %s27, 3
    %p279 = por %p277, %p278
    %p281 = scmp.ne.s32.totalorder %s266, %s280
    %p282 = scmp.eq.s32.totalorder %s27, 0
    %p283 = por %p281, %p282
    %s285 = sadd.s32 %s284, 1
    %p288 = scmp.eq.s32.totalorder %s21, 3
    %p289 = scmp.ne.s32.totalorder %s284, %s286
    %p290 = scmp.eq.s32.totalorder %s21, 0
    %p291 = por %p289, %p290
    %p292 = scmp.ne.s32.totalorder %s284, %s286
    %p293 = scmp.eq.s32.totalorder %s26, 3
    %p294 = por %p292, %p293
    %p295 = scmp.ne.s32.totalorder %s286, %s287
    %p296 = scmp.eq.s32.totalorder %s26, 0
    %p297 = por %p295, %p296
    %p298 = scmp.ne.s32.totalorder %s286, %s287
    %p299 = scmp.eq.s32.totalorder %s27, 3
    %p300 = por %p298, %p299
    %p302 = scmp.ne.s32.totalorder %s287, %s301
    %p303 = scmp.eq.s32.totalorder %s27, 0
    %p304 = por %p302, %p303
    %s306 = sadd.s32 %s305, 1
    %p309 = scmp.eq.s32.totalorder %s21, 3
    %p310 = scmp.ne.s32.totalorder %s305, %s307
    %p311 = scmp.eq.s32.totalorder %s21, 0
    %p312 = por %p310, %p311
    %p313 = scmp.ne.s32.totalorder %s305, %s307
    %p314 = scmp.eq.s32.totalorder %s26, 3
    %p315 = por %p313, %p314
    %p316 = scmp.ne.s32.totalorder %s307, %s308
    %p317 = scmp.eq.s32.totalorder %s26, 0
    %p318 = por %p316, %p317
    %p319 = scmp.ne.s32.totalorder %s307, %s308
    %p320 = scmp.eq.s32.totalorder %s27, 3
    %p321 = por %p319, %p320
    %p323 = scmp.ne.s32.totalorder %s308, %s322
    %p324 = scmp.eq.s32.totalorder %s27, 0
    %p325 = por %p323, %p324
    %s327 = sadd.s32 %s326, 1
    %p330 = scmp.eq.s32.totalorder %s21, 3
    %p331 = scmp.ne.s32.totalorder %s326, %s328
    %p332 = scmp.eq.s32.totalorder %s21, 0
    %p333 = por %p331, %p332
    %p334 = scmp.ne.s32.totalorder %s326, %s328
    %p335 = scmp.eq.s32.totalorder %s26, 3
    %p336 = por %p334, %p335
    %p337 = scmp.ne.s32.totalorder %s328, %s329
    %p338 = scmp.eq.s32.totalorder %s26, 0
    %p339 = por %p337, %p338
    %p340 = scmp.ne.s32.totalorder %s328, %s329
    %p341 = scmp.eq.s32.totalorder %s27, 3
    %p342 = por %p340, %p341
    %p344 = scmp.ne.s32.totalorder %s329, %s343
    %p345 = scmp.eq.s32.totalorder %s27, 0
    %p346 = por %p344, %p345
    %s348 = sadd.s32 %s347, 1
    %p351 = scmp.eq.s32.totalorder %s21, 3
    %p352 = scmp.ne.s32.totalorder %s347, %s349
    %p353 = scmp.eq.s32.totalorder %s21, 0
    %p354 = por %p352, %p353
    %p355 = scmp.ne.s32.totalorder %s347, %s349
    %p356 = scmp.eq.s32.totalorder %s26, 3
    %p357 = por %p355, %p356
    %p358 = scmp.ne.s32.totalorder %s349, %s350
    %p359 = scmp.eq.s32.totalorder %s26, 0
    %p360 = por %p358, %p359
    %p361 = scmp.ne.s32.totalorder %s349, %s350
    %p362 = scmp.eq.s32.totalorder %s27, 3
    %p363 = por %p361, %p362
    %p365 = scmp.ne.s32.totalorder %s350, %s364
    %p366 = scmp.eq.s32.totalorder %s27, 0
    %p367 = por %p365, %p366
    %s368 = ssub.s32 %s28, %s40
    %s369 = ssub.s32 %s29, %s36
    %s370 = sor.u32 %s368, %s369
    %p371 = scmp.eq.s32.totalorder %s370, 0
    %s373 = sadd.s32 %s372, 1
    %s374 = scalar_select %p371, %s372, %s373
    %p377 = pneg %p371
    %p378 = scmp.eq.s32.totalorder %s21, 3
    %p379 = por %p377, %p378
    %p380 = scmp.ne.s32.totalorder %s372, %s375
    %p381 = scmp.eq.s32.totalorder %s21, 0
    %p382 = por %p380, %p381
    %p383 = scmp.ne.s32.totalorder %s372, %s375
    %p384 = scmp.eq.s32.totalorder %s26, 3
    %p385 = por %p383, %p384
    %p386 = scmp.ne.s32.totalorder %s375, %s376
    %p387 = scmp.eq.s32.totalorder %s26, 0
    %p388 = por %p386, %p387
    %p389 = scmp.ne.s32.totalorder %s375, %s376
    %p390 = scmp.eq.s32.totalorder %s27, 3
    %p391 = por %p389, %p390
    %p393 = scmp.ne.s32.totalorder %s376, %s392
    %p394 = scmp.eq.s32.totalorder %s27, 0
    %p395 = por %p393, %p394
    %p396 = scmp.le.s32.totalorder 1, %s21
    %p397 = scmp.lt.s32.totalorder %s21, 5
    %p398 = pnand %p396, %p397
    %p399 = pneg %p398
    // Predicated region
    $region9: #{swin_forward.8} parent=5 // pred_check
      _
    $region10: #{swin_forward.8} parent=5 // pred_check_branch
      %401 = sbr.rel (%p398) target = $region12
    $region11: #{swin_forward.8} parent=5 // pred_region
      %s402 = ssub.s32 %s21, 1
      // Predicated region
      $region13: #{swin_forward.8} parent=11 // pred_check
        %p403 = pneg %p82
      $region14: #{swin_forward.8} parent=11 // pred_check_branch
        %405 = sbr.rel (%p403) target = $region16
      $region15: #{swin_forward.8} parent=11 // pred_region
        _
      $region16: #{swin_forward.8} parent=11 // pred_fallthru
        _
      // Predicated region
      $region17: #{swin_forward.8} parent=11 // pred_check
        %p406 = pneg %p103
      $region18: #{swin_forward.8} parent=11 // pred_check_branch
        %408 = sbr.rel (%p406) target = $region20
      $region19: #{swin_forward.8} parent=11 // pred_region
        _
      $region20: #{swin_forward.8} parent=11 // pred_fallthru
        _
      // Predicated region
      $region21: #{swin_forward.8} parent=11 // pred_check
        %p409 = pneg %p124
      $region22: #{swin_forward.8} parent=11 // pred_check_branch
        %411 = sbr.rel (%p409) target = $region24
      $region23: #{swin_forward.8} parent=11 // pred_region
        _
      $region24: #{swin_forward.8} parent=11 // pred_fallthru
        _
      // Predicated region
      $region25: #{swin_forward.8} parent=11 // pred_check
        %p412 = pneg %p145
      $region26: #{swin_forward.8} parent=11 // pred_check_branch
        %414 = sbr.rel (%p412) target = $region28
      $region27: #{swin_forward.8} parent=11 // pred_region
        _
      $region28: #{swin_forward.8} parent=11 // pred_fallthru
        _
      // Predicated region
      $region29: #{swin_forward.8} parent=11 // pred_check
        %p415 = pneg %p166
      $region30: #{swin_forward.8} parent=11 // pred_check_branch
        %417 = sbr.rel (%p415) target = $region32
      $region31: #{swin_forward.8} parent=11 // pred_region
        _
      $region32: #{swin_forward.8} parent=11 // pred_fallthru
        _
      // Predicated region
      $region33: #{swin_forward.8} parent=11 // pred_check
        %p418 = pneg %p187
      $region34: #{swin_forward.8} parent=11 // pred_check_branch
        %420 = sbr.rel (%p418) target = $region36
      $region35: #{swin_forward.8} parent=11 // pred_region
        _
      $region36: #{swin_forward.8} parent=11 // pred_fallthru
        _
      // Predicated region
      $region37: #{swin_forward.8} parent=11 // pred_check
        %p421 = pneg %p208
      $region38: #{swin_forward.8} parent=11 // pred_check_branch
        %423 = sbr.rel (%p421) target = $region40
      $region39: #{swin_forward.8} parent=11 // pred_region
        _
      $region40: #{swin_forward.8} parent=11 // pred_fallthru
        _
      // Predicated region
      $region41: #{swin_forward.8} parent=11 // pred_check
        %p424 = pneg %p255
      $region42: #{swin_forward.8} parent=11 // pred_check_branch
        %426 = sbr.rel (%p424) target = $region44
      $region43: #{swin_forward.8} parent=11 // pred_region
        _
      $region44: #{swin_forward.8} parent=11 // pred_fallthru
        _
      // Predicated region
      $region45: #{swin_forward.8} parent=11 // pred_check
        %p427 = pneg %p276
      $region46: #{swin_forward.8} parent=11 // pred_check_branch
        %429 = sbr.rel (%p427) target = $region48
      $region47: #{swin_forward.8} parent=11 // pred_region
        _
      $region48: #{swin_forward.8} parent=11 // pred_fallthru
        _
      // Predicated region
      $region49: #{swin_forward.8} parent=11 // pred_check
        %p430 = pneg %p297
      $region50: #{swin_forward.8} parent=11 // pred_check_branch
        %432 = sbr.rel (%p430) target = $region52
      $region51: #{swin_forward.8} parent=11 // pred_region
        _
      $region52: #{swin_forward.8} parent=11 // pred_fallthru
        _
      // Predicated region
      $region53: #{swin_forward.8} parent=11 // pred_check
        %p433 = pneg %p318
      $region54: #{swin_forward.8} parent=11 // pred_check_branch
        %435 = sbr.rel (%p433) target = $region56
      $region55: #{swin_forward.8} parent=11 // pred_region
        _
      $region56: #{swin_forward.8} parent=11 // pred_fallthru
        _
      // Predicated region
      $region57: #{swin_forward.8} parent=11 // pred_check
        %p436 = pneg %p339
      $region58: #{swin_forward.8} parent=11 // pred_check_branch
        %438 = sbr.rel (%p436) target = $region60
      $region59: #{swin_forward.8} parent=11 // pred_region
        _
      $region60: #{swin_forward.8} parent=11 // pred_fallthru
        _
      // Predicated region
      $region61: #{swin_forward.8} parent=11 // pred_check
        %p439 = pneg %p360
      $region62: #{swin_forward.8} parent=11 // pred_check_branch
        %441 = sbr.rel (%p439) target = $region64
      $region63: #{swin_forward.8} parent=11 // pred_region
        _
      $region64: #{swin_forward.8} parent=11 // pred_fallthru
        _
    $region12: #{swin_forward.8} parent=5 // pred_fallthru
      _
    %p442 = scmp.lt.s32.totalorder %s21, 4
    // Predicated region
    $region65: #{swin_forward.8} parent=5 // pred_check
      %p443 = pneg %p442
    $region66: #{swin_forward.8} parent=5 // pred_check_branch
      %445 = sbr.rel (%p443) target = $region68
    $region67: #{swin_forward.8} parent=5 // pred_region
      // Predicated region
      $region69: #{swin_forward.8} parent=67 // pred_check
        %p446 = pneg %p55
      $region70: #{swin_forward.8} parent=67 // pred_check_branch
        %448 = sbr.rel (%p446) target = $region72
      $region71: #{swin_forward.8} parent=67 // pred_region
        %s449 = smul.u32 2, %s29
        %p450 = scmp.lt.s32.totalorder %s28, 1
        %s451 = scalar_select %p450, %s28, 1
        %p452 = scmp.lt.s32.totalorder %s449, 3
        %s453 = scalar_select %p452, %s449, 3
        %s454 = smul.addr %s453, 2
        %s455 = smul.addr %s451, 8
        %s456 = sadd.s32 %s454, %s455
        %s457 = smul.addr %s456, 4
        %s458 = scalar_lea.vmem %s0, %s457
        %s459 = smul.u32 2, %s29
      $region72: #{swin_forward.8} parent=67 // pred_fallthru
        _
      // Predicated region
      $region73: #{swin_forward.8} parent=67 // pred_check
        %p460 = pneg %p228
      $region74: #{swin_forward.8} parent=67 // pred_check_branch
        %462 = sbr.rel (%p460) target = $region76
      $region75: #{swin_forward.8} parent=67 // pred_region
        %s463 = smul.u32 2, %s29
        %p464 = scmp.lt.s32.totalorder %s463, 3
        %s465 = scalar_select %p464, %s463, 3
        %s466 = smul.addr %s465, 2
        %s467 = smul.addr %s466, 8
        %s468 = scalar_lea.vmem %s8, %s467
        %s469 = smul.u32 2, %s29
      $region76: #{swin_forward.8} parent=67 // pred_fallthru
        _
    $region68: #{swin_forward.8} parent=5 // pred_fallthru
      _
    %p470 = scmp.le.s32.totalorder 1, %s21
    %p471 = scmp.lt.s32.totalorder %s21, 5
    %p472 = pnand %p470, %p471
    %p473 = pneg %p472
    // Predicated region
    $region77: #{swin_forward.8} parent=5 // pred_check
      _
    $region78: #{swin_forward.8} parent=5 // pred_check_branch
      %475 = sbr.rel (%p472) target = $region80
    $region79: #{swin_forward.8} parent=5 // pred_region
      %s476 = ssub.s32 %s21, 1
      %s477 = smul.u32 2, %s31
      %p478 = scmp.lt.s32.totalorder %s30, 1
      %s479 = scalar_select %p478, %s30, 1
      %p480 = scmp.lt.s32.totalorder %s477, 3
      %s481 = scalar_select %p480, %s477, 3
      %s482 = smul.addr %s481, 2
      %s483 = smul.addr %s479, 8
      %s484 = sadd.s32 %s482, %s483
      %s485 = smul.addr %s484, 4
      %s486 = scalar_lea.vmem %s0, %s485
      %p487 = pneg %p61
      %p488 = pneg %p58
      %p489 = pneg %p82
      %p490 = pneg %p79
      %p491 = pneg %p103
      %p492 = pneg %p100
      %p493 = pneg %p124
      %p494 = pneg %p121
      %p495 = pneg %p145
      %p496 = pneg %p142
      %p497 = pneg %p166
      %p498 = pneg %p163
      %p499 = pneg %p187
      %p500 = pneg %p184
      %p501 = pneg %p208
      %p502 = pneg %p205
      %s503 = smul.u32 2, %s31
      %p504 = scmp.lt.s32.totalorder %s503, 3
      %s505 = scalar_select %p504, %s503, 3
      %s506 = smul.addr %s505, 2
      %s507 = smul.addr %s506, 8
      %s508 = scalar_lea.vmem %s8, %s507
      %p509 = pneg %p234
      %p510 = pneg %p231
      %p511 = pneg %p255
      %p512 = pneg %p252
      %p513 = pneg %p276
      %p514 = pneg %p273
      %p515 = pneg %p297
      %p516 = pneg %p294
      %p517 = pneg %p318
      %p518 = pneg %p315
      %p519 = pneg %p339
      %p520 = pneg %p336
      %p521 = pneg %p360
      %p522 = pneg %p357
      %p523 = pneg %p388
      %p524 = pneg %p385
      %s525 = smul.u32 2, %s31
      %p526 = scmp.lt.s32.totalorder %s30, 1
      %s527 = scalar_select %p526, %s30, 1
      %p528 = scmp.lt.s32.totalorder %s525, 3
      %s529 = scalar_select %p528, %s525, 3
      %s530 = smul.addr %s529, 2
      %s531 = smul.addr %s527, 8
      %s532 = sadd.s32 %s530, %s531
      %s533 = smul.addr %s532, 4
      %s534 = scalar_lea.vmem %s15, %s533
      %s535 = smul.u32 2, %s31
      %p536 = scmp.lt.s32.totalorder %s30, 1
      %s537 = scalar_select %p536, %s30, 1
      %p538 = scmp.lt.s32.totalorder %s535, 3
      %s539 = scalar_select %p538, %s535, 3
      %s540 = smul.addr %s539, 2
      %s541 = smul.addr %s537, 8
      %s542 = sadd.s32 %s540, %s541
      %s543 = smul.addr %s542, 4
      %s544 = scalar_lea.vmem %s0, %s543
      %s545 = smul.u32 2, %s31
      %s546 = smul.u32 2, %s31
      %p547 = scmp.lt.s32.totalorder %s546, 3
      %s548 = scalar_select %p547, %s546, 3
      %s549 = smul.addr %s548, 2
      %s550 = smul.addr %s549, 8
      %s551 = scalar_lea.vmem %s8, %s550
      %s552 = smul.u32 2, %s31
      %s553 = smul.u32 2, %s31
      %p554 = scmp.lt.s32.totalorder %s30, 1
      %s555 = scalar_select %p554, %s30, 1
      %p556 = scmp.lt.s32.totalorder %s553, 3
      %s557 = scalar_select %p556, %s553, 3
      %s558 = smul.addr %s557, 2
      %s559 = smul.addr %s555, 8
      %s560 = sadd.s32 %s558, %s559
      %s561 = smul.addr %s560, 4
      %s562 = scalar_lea.vmem %s15, %s561
      %s563 = smul.u32 2, %s31
      %v565 = vld [vmem:[%s544] sm:$0xf]
      %v566 = vld [vmem:[%s544 + $0x4] sm:$0xf]
      %v567 = vld [vmem:[%s544 + $0x8] sm:$0xf]
      %v568 = vld [vmem:[%s544 + $0xc] sm:$0xf]
      %v569 = vunpack.c.l.bf16 %v565
      %v570 = vunpack.c.l.bf16 %v566
      %v571 = vunpack.c.l.bf16 %v567
      %v572 = vunpack.c.l.bf16 %v568
      %v573 = vld [vmem:[%s1] sm:$0x1]
      %v574 = vld [vmem:[%s2] sm:$0x1]
      %vm575 = vcmask 130048
      %v576 = vsel %vm575, %v569, 0.0
      %577 = vadd.xlane.f32.xlu0 %v576
      %v578 = vpop.xlane.xlu0 %577
      %v579 = vsel %vm575, %v570, 0.0
      %580 = vadd.xlane.f32.xlu0 %v579
      %v581 = vpop.xlane.xlu0 %580
      %v582 = vsel %vm575, %v571, 0.0
      %583 = vadd.xlane.f32.xlu0 %v582
      %v584 = vpop.xlane.xlu0 %583
      %v585 = vsel %vm575, %v572, 0.0
      %586 = vadd.xlane.f32.xlu0 %v585
      %v587 = vpop.xlane.xlu0 %586
      %v588 = vrcp.pop 16.0
      %v589 = vmul.f32 %v578, %v588
      %v590 = vmul.f32 %v581, %v588
      %v591 = vmul.f32 %v584, %v588
      %v592 = vmul.f32 %v587, %v588
      %v593 = vsub.f32 %v569, %v589
      %v594 = vsub.f32 %v570, %v590
      %v595 = vsub.f32 %v571, %v591
      %v596 = vsub.f32 %v572, %v592
      %v597 = vmul.f32 %v593, %v593
      %v598 = vmul.f32 %v594, %v594
      %v599 = vmul.f32 %v595, %v595
      %v600 = vmul.f32 %v596, %v596
      %v601 = vsel %vm575, %v597, 0.0
      %602 = vadd.xlane.f32.xlu0 %v601
      %v603 = vpop.xlane.xlu0 %602
      %v604 = vsel %vm575, %v598, 0.0
      %605 = vadd.xlane.f32.xlu0 %v604
      %v606 = vpop.xlane.xlu0 %605
      %v607 = vsel %vm575, %v599, 0.0
      %608 = vadd.xlane.f32.xlu0 %v607
      %v609 = vpop.xlane.xlu0 %608
      %v610 = vsel %vm575, %v600, 0.0
      %611 = vadd.xlane.f32.xlu0 %v610
      %v612 = vpop.xlane.xlu0 %611
      %v613 = vmul.f32 %v603, %v588
      %v614 = vmul.f32 %v606, %v588
      %v615 = vmul.f32 %v609, %v588
      %v616 = vmul.f32 %v612, %v588
      %v617 = vadd.f32 %v613, 1e-05
      %v618 = vadd.f32 %v614, 1e-05
      %v619 = vadd.f32 %v615, 1e-05
      %v620 = vadd.f32 %v616, 1e-05
      %v621 = vrsqrt.pop %v617
      %v622 = vrsqrt.pop %v618
      %v623 = vrsqrt.pop %v619
      %v624 = vrsqrt.pop %v620
      %v625 = vmul.f32 %v593, %v621
      %v626 = vmul.f32 %v594, %v622
      %v627 = vmul.f32 %v595, %v623
      %v628 = vmul.f32 %v596, %v624
      %v630 = vlaneseq
      %v631 = vshrl.u32 %v630, 7
      %v632 = vsub.s32 0, %v631
      %v633 = vrot.slane %v573, %v632
      %v635 = vmul.f32 %v625, %v633
      %v636 = vmul.f32 %v626, %v633
      %v637 = vmul.f32 %v627, %v633
      %v638 = vmul.f32 %v628, %v633
      %v640 = vlaneseq
      %v641 = vshrl.u32 %v640, 7
      %v642 = vsub.s32 0, %v641
      %v643 = vrot.slane %v574, %v642
      %v645 = vadd.f32 %v635, %v643
      %v646 = vadd.f32 %v636, %v643
      %v647 = vadd.f32 %v637, %v643
      %v648 = vadd.f32 %v638, %v643
      %v649 = vpack.c.bf16 %v646, %v645
      %v650 = vpack.c.bf16 %v648, %v647
      %v651 = vld [vmem:[%s3] sm:$0xf]
      %v652 = vld [vmem:[%s3 + $0x4] sm:$0xf]
      %v653 = vld [vmem:[%s4] sm:$0x1]
      %v655 = vlaneseq
      %v656 = vshrl.u32 %v655, 7
      %v657 = vsub.s32 0, %v656
      %v658 = vrot.slane %v653, %v657
      %v662 = vunpack.c.l.b16 %v651
      %v663 = vunpack.c.l.b16 %v652
      %v664 = vpack.c.b16 %v663, %v662
      %v667 = vsel %vm575, %v649, 0
      %v670 = vsel %vm575, %v650, 0
      %672 = vmatprep.subr.bf16.mxu0 0
      %673 = vmatpush1.bf16.msra.mxu0 %v664
      %674 = vmatprep.subr.bf16.mxu0 0
      %675 = vmatpush1.bf16.msra.mxu0 0
      %676 = vmatprep.subr.bf16.mxu0 0
      %677 = vmatpush1.bf16.msra.mxu0 0
      %678 = vmatprep.subr.bf16.mxu0 0
      %679 = vmatpush1.bf16.msra.mxu0 0
      %680 = vmatprep.subr.bf16.mxu0 0
      %681 = vmatpush1.bf16.msra.mxu0 0
      %682 = vmatprep.subr.bf16.mxu0 0
      %683 = vmatpush1.bf16.msra.mxu0 0
      %684 = vmatprep.subr.bf16.mxu0 0
      %685 = vmatpush1.bf16.msra.mxu0 0
      %686 = vmatprep.subr.bf16.mxu0 0
      %687 = vmatpush1.bf16.msra.mxu0 0
      %688 = vmatprep.subr.bf16.mxu0 0
      %689 = vmatpush1.bf16.msra.mxu0 0
      %690 = vmatprep.subr.bf16.mxu0 0
      %691 = vmatpush1.bf16.msra.mxu0 0
      %692 = vmatprep.subr.bf16.mxu0 0
      %693 = vmatpush1.bf16.msra.mxu0 0
      %694 = vmatprep.subr.bf16.mxu0 0
      %695 = vmatpush1.bf16.msra.mxu0 0
      %696 = vmatprep.subr.bf16.mxu0 0
      %697 = vmatpush1.bf16.msra.mxu0 0
      %698 = vmatprep.subr.bf16.mxu0 0
      %699 = vmatpush1.bf16.msra.mxu0 0
      %700 = vmatprep.subr.bf16.mxu0 0
      %701 = vmatpush1.bf16.msra.mxu0 0
      %702 = vmatprep.subr.bf16.mxu0 0
      %703 = vmatpush1.bf16.msra.mxu0 0
      %704 = vmatprep.mubr.bf16.mxu0 0
      %705 = vmatmul.mubr.bf16.gmra.mrb[0].mxu0 %v667
      %v706 = vpop.f32.mrb[0].mxu0
      %v707 = vadd.f32 %v658, %v706
      %v708 = vpop.f32.mrb[0].mxu0
      %v709 = vpop.f32.mrb[0].mxu0
      %v710 = vadd.f32 %v658, %v709
      %v711 = vpop.f32.mrb[0].mxu0
      %712 = vmatprep.mubr.bf16.mxu0 0
      %713 = vmatmul.mubr.bf16.gmra.mrb[0].mxu0 %v670
      %v714 = vpop.f32.mrb[0].mxu0
      %v715 = vadd.f32 %v658, %v714
      %v716 = vpop.f32.mrb[0].mxu0
      %v717 = vpop.f32.mrb[0].mxu0
      %v718 = vadd.f32 %v658, %v717
      %v719 = vpop.f32.mrb[0].mxu0
      %720 = vdwg.mxu0
      %725 = vrot.lane.b32.xlu0 %v707, 120
      %v726 = vpop.permute.xlu0 %725
      %727 = vrot.lane.b32.xlu0 %v710, 120
      %v728 = vpop.permute.xlu0 %727
      %729 = vrot.lane.b32.xlu0 %v715, 120
      %v730 = vpop.permute.xlu0 %729
      %731 = vrot.lane.b32.xlu0 %v718, 120
      %v732 = vpop.permute.xlu0 %731
      %v737 = vpack.c.bf16 %v710, %v707
      %v738 = vpack.c.bf16 %v718, %v715
      %v739 = vpack.c.bf16 %v728, %v726
      %v740 = vpack.c.bf16 %v732, %v730
      %742 = vrot.lane.b32.xlu0 %v737, 112
      %v743 = vpop.permute.xlu0 %742
      %vm744 = vcmask 64512
      %v746 = vsel %vm744, %v737, 0
      %v749 = vsel %vm744, %v743, 0
      %751 = vmatprep.subr.bf16.mxu0 0
      %752 = vmatpush1.bf16.xpose.msra.mxu0 %v749
      %753 = vmatprep.subr.bf16.mxu0 0
      %754 = vmatpush1.bf16.xpose.msra.mxu0 0
      %755 = vmatprep.subr.bf16.mxu0 0
      %756 = vmatpush1.bf16.xpose.msra.mxu0 0
      %757 = vmatprep.subr.bf16.mxu0 0
      %758 = vmatpush1.bf16.xpose.msra.mxu0 0
      %759 = vmatprep.subr.bf16.mxu0 0
      %760 = vmatpush1.bf16.xpose.msra.mxu0 0
      %761 = vmatprep.subr.bf16.mxu0 0
      %762 = vmatpush1.bf16.xpose.msra.mxu0 0
      %763 = vmatprep.subr.bf16.mxu0 0
      %764 = vmatpush1.bf16.xpose.msra.mxu0 0
      %765 = vmatprep.subr.bf16.mxu0 0
      %766 = vmatpush1.bf16.xpose.msra.mxu0 0
      %767 = vmatprep.subr.bf16.mxu0 0
      %768 = vmatpush1.bf16.xpose.msra.mxu0 0
      %769 = vmatprep.subr.bf16.mxu0 0
      %770 = vmatpush1.bf16.xpose.msra.mxu0 0
      %771 = vmatprep.subr.bf16.mxu0 0
      %772 = vmatpush1.bf16.xpose.msra.mxu0 0
      %773 = vmatprep.subr.bf16.mxu0 0
      %774 = vmatpush1.bf16.xpose.msra.mxu0 0
      %775 = vmatprep.subr.bf16.mxu0 0
      %776 = vmatpush1.bf16.xpose.msra.mxu0 0
      %777 = vmatprep.subr.bf16.mxu0 0
      %778 = vmatpush1.bf16.xpose.msra.mxu0 0
      %779 = vmatprep.subr.bf16.mxu0 0
      %780 = vmatpush1.bf16.xpose.msra.mxu0 0
      %781 = vmatprep.subr.bf16.mxu0 0
      %782 = vmatpush1.bf16.xpose.msra.mxu0 0
      %783 = vmatprep.mubr.bf16.mxu0 0
      %784 = vmatmul.mubr.bf16.gmra.mrb[0].mxu0 %v746
      %v785 = vpop.f32.mrb[0].mxu0
      %v786 = vadd.f32 0.0, %v785
      %v787 = vpop.f32.mrb[0].mxu0
      %v788 = vpop.f32.mrb[0].mxu0
      %v789 = vadd.f32 0.0, %v788
      %v790 = vpop.f32.mrb[0].mxu0
      %791 = vdwg.mxu0
      %793 = vrot.lane.b32.xlu0 %v738, 112
      %v794 = vpop.permute.xlu0 %793
      %v796 = vsel %vm744, %v738, 0
      %v799 = vsel %vm744, %v794, 0
      %801 = vmatprep.subr.bf16.mxu0 0
      %802 = vmatpush1.bf16.xpose.msra.mxu0 %v799
      %803 = vmatprep.subr.bf16.mxu0 0
      %804 = vmatpush1.bf16.xpose.msra.mxu0 0
      %805 = vmatprep.subr.bf16.mxu0 0
      %806 = vmatpush1.bf16.xpose.msra.mxu0 0
      %807 = vmatprep.subr.bf16.mxu0 0
      %808 = vmatpush1.bf16.xpose.msra.mxu0 0
      %809 = vmatprep.subr.bf16.mxu0 0
      %810 = vmatpush1.bf16.xpose.msra.mxu0 0
      %811 = vmatprep.subr.bf16.mxu0 0
      %812 = vmatpush1.bf16.xpose.msra.mxu0 0
      %813 = vmatprep.subr.bf16.mxu0 0
      %814 = vmatpush1.bf16.xpose.msra.mxu0 0
      %815 = vmatprep.subr.bf16.mxu0 0
      %816 = vmatpush1.bf16.xpose.msra.mxu0 0
      %817 = vmatprep.subr.bf16.mxu0 0
      %818 = vmatpush1.bf16.xpose.msra.mxu0 0
      %819 = vmatprep.subr.bf16.mxu0 0
      %820 = vmatpush1.bf16.xpose.msra.mxu0 0
      %821 = vmatprep.subr.bf16.mxu0 0
      %822 = vmatpush1.bf16.xpose.msra.mxu0 0
      %823 = vmatprep.subr.bf16.mxu0 0
      %824 = vmatpush1.bf16.xpose.msra.mxu0 0
      %825 = vmatprep.subr.bf16.mxu0 0
      %826 = vmatpush1.bf16.xpose.msra.mxu0 0
      %827 = vmatprep.subr.bf16.mxu0 0
      %828 = vmatpush1.bf16.xpose.msra.mxu0 0
      %829 = vmatprep.subr.bf16.mxu0 0
      %830 = vmatpush1.bf16.xpose.msra.mxu0 0
      %831 = vmatprep.subr.bf16.mxu0 0
      %832 = vmatpush1.bf16.xpose.msra.mxu0 0
      %833 = vmatprep.mubr.bf16.mxu0 0
      %834 = vmatmul.mubr.bf16.gmra.mrb[0].mxu0 %v796
      %v835 = vpop.f32.mrb[0].mxu0
      %v836 = vadd.f32 0.0, %v835
      %v837 = vpop.f32.mrb[0].mxu0
      %v838 = vpop.f32.mrb[0].mxu0
      %v839 = vadd.f32 0.0, %v838
      %v840 = vpop.f32.mrb[0].mxu0
      %841 = vdwg.mxu0
      %843 = vrot.lane.b32.xlu0 %v739, 112
      %v844 = vpop.permute.xlu0 %843
      %v846 = vsel %vm744, %v739, 0
      %v849 = vsel %vm744, %v844, 0
      %851 = vmatprep.subr.bf16.mxu0 0
      %852 = vmatpush1.bf16.xpose.msra.mxu0 %v849
      %853 = vmatprep.subr.bf16.mxu0 0
      %854 = vmatpush1.bf16.xpose.msra.mxu0 0
      %855 = vmatprep.subr.bf16.mxu0 0
      %856 = vmatpush1.bf16.xpose.msra.mxu0 0
      %857 = vmatprep.subr.bf16.mxu0 0
      %858 = vmatpush1.bf16.xpose.msra.mxu0 0
      %859 = vmatprep.subr.bf16.mxu0 0
      %860 = vmatpush1.bf16.xpose.msra.mxu0 0
      %861 = vmatprep.subr.bf16.mxu0 0
      %862 = vmatpush1.bf16.xpose.msra.mxu0 0
      %863 = vmatprep.subr.bf16.mxu0 0
      %864 = vmatpush1.bf16.xpose.msra.mxu0 0
      %865 = vmatprep.subr.bf16.mxu0 0
      %866 = vmatpush1.bf16.xpose.msra.mxu0 0
      %867 = vmatprep.subr.bf16.mxu0 0
      %868 = vmatpush1.bf16.xpose.msra.mxu0 0
      %869 = vmatprep.subr.bf16.mxu0 0
      %870 = vmatpush1.bf16.xpose.msra.mxu0 0
      %871 = vmatprep.subr.bf16.mxu0 0
      %872 = vmatpush1.bf16.xpose.msra.mxu0 0
      %873 = vmatprep.subr.bf16.mxu0 0
      %874 = vmatpush1.bf16.xpose.msra.mxu0 0
      %875 = vmatprep.subr.bf16.mxu0 0
      %876 = vmatpush1.bf16.xpose.msra.mxu0 0
      %877 = vmatprep.subr.bf16.mxu0 0
      %878 = vmatpush1.bf16.xpose.msra.mxu0 0
      %879 = vmatprep.subr.bf16.mxu0 0
      %880 = vmatpush1.bf16.xpose.msra.mxu0 0
      %881 = vmatprep.subr.bf16.mxu0 0
      %882 = vmatpush1.bf16.xpose.msra.mxu0 0
      %883 = vmatprep.mubr.bf16.mxu0 0
      %884 = vmatmul.mubr.bf16.gmra.mrb[0].mxu0 %v846
      %v885 = vpop.f32.mrb[0].mxu0
      %v886 = vadd.f32 0.0, %v885
      %v887 = vpop.f32.mrb[0].mxu0
      %v888 = vpop.f32.mrb[0].mxu0
      %v889 = vadd.f32 0.0, %v888
      %v890 = vpop.f32.mrb[0].mxu0
      %891 = vdwg.mxu0
      %893 = vrot.lane.b32.xlu0 %v740, 112
      %v894 = vpop.permute.xlu0 %893
      %v896 = vsel %vm744, %v740, 0
      %v899 = vsel %vm744, %v894, 0
      %901 = vmatprep.subr.bf16.mxu0 0
      %902 = vmatpush1.bf16.xpose.msra.mxu0 %v899
      %903 = vmatprep.subr.bf16.mxu0 0
      %904 = vmatpush1.bf16.xpose.msra.mxu0 0
      %905 = vmatprep.subr.bf16.mxu0 0
      %906 = vmatpush1.bf16.xpose.msra.mxu0 0
      %907 = vmatprep.subr.bf16.mxu0 0
      %908 = vmatpush1.bf16.xpose.msra.mxu0 0
      %909 = vmatprep.subr.bf16.mxu0 0
      %910 = vmatpush1.bf16.xpose.msra.mxu0 0
      %911 = vmatprep.subr.bf16.mxu0 0
      %912 = vmatpush1.bf16.xpose.msra.mxu0 0
      %913 = vmatprep.subr.bf16.mxu0 0
      %914 = vmatpush1.bf16.xpose.msra.mxu0 0
      %915 = vmatprep.subr.bf16.mxu0 0
      %916 = vmatpush1.bf16.xpose.msra.mxu0 0
      %917 = vmatprep.subr.bf16.mxu0 0
      %918 = vmatpush1.bf16.xpose.msra.mxu0 0
      %919 = vmatprep.subr.bf16.mxu0 0
      %920 = vmatpush1.bf16.xpose.msra.mxu0 0
      %921 = vmatprep.subr.bf16.mxu0 0
      %922 = vmatpush1.bf16.xpose.msra.mxu0 0
      %923 = vmatprep.subr.bf16.mxu0 0
      %924 = vmatpush1.bf16.xpose.msra.mxu0 0
      %925 = vmatprep.subr.bf16.mxu0 0
      %926 = vmatpush1.bf16.xpose.msra.mxu0 0
      %927 = vmatprep.subr.bf16.mxu0 0
      %928 = vmatpush1.bf16.xpose.msra.mxu0 0
      %929 = vmatprep.subr.bf16.mxu0 0
      %930 = vmatpush1.bf16.xpose.msra.mxu0 0
      %931 = vmatprep.subr.bf16.mxu0 0
      %932 = vmatpush1.bf16.xpose.msra.mxu0 0
      %933 = vmatprep.mubr.bf16.mxu0 0
      %934 = vmatmul.mubr.bf16.gmra.mrb[0].mxu0 %v896
      %v935 = vpop.f32.mrb[0].mxu0
      %v936 = vadd.f32 0.0, %v935
      %v937 = vpop.f32.mrb[0].mxu0
      %v938 = vpop.f32.mrb[0].mxu0
      %v939 = vadd.f32 0.0, %v938
      %v940 = vpop.f32.mrb[0].mxu0
      %941 = vdwg.mxu0
      %v942 = vld [vmem:[%s7] sm:$0xff]
      %v943 = vld [vmem:[%s7 + $0x8] sm:$0xff]
      %v944 = vld [vmem:[%s7 + $0x10] sm:$0xff]
      %v945 = vld [vmem:[%s7 + $0x18] sm:$0xff]
      %v946 = vadd.f32 %v786, %v942
      %v947 = vadd.f32 %v789, %v943
      %v948 = vadd.f32 %v836, %v942
      %v949 = vadd.f32 %v839, %v943
      %v950 = vadd.f32 %v886, %v944
      %v951 = vadd.f32 %v889, %v945
      %v952 = vadd.f32 %v936, %v944
      %v953 = vadd.f32 %v939, %v945
      %v954 = vld [vmem:[%s551] sm:$0xff]
      %v955 = vld [vmem:[%s551 + $0x8] sm:$0xff]
      %v956 = vld [vmem:[%s551 + $0x10] sm:$0xff]
      %v957 = vld [vmem:[%s551 + $0x18] sm:$0xff]
      %v958 = vadd.f32 %v946, %v954
      %v959 = vadd.f32 %v947, %v955
      %v960 = vadd.f32 %v948, %v956
      %v961 = vadd.f32 %v949, %v957
      %v962 = vadd.f32 %v950, %v954
      %v963 = vadd.f32 %v951, %v955
      %v964 = vadd.f32 %v952, %v956
      %v965 = vadd.f32 %v953, %v957
      %v966 = vsel %vm575, %v958, -inf
      %967 = vmax.xlane.f32.xlu0 %v966
      %v968 = vpop.xlane.xlu0 %967
      %v969 = vsel %vm575, %v959, -inf
      %970 = vmax.xlane.f32.xlu0 %v969
      %v971 = vpop.xlane.xlu0 %970
      %v972 = vsel %vm575, %v960, -inf
      %973 = vmax.xlane.f32.xlu0 %v972
      %v974 = vpop.xlane.xlu0 %973
      %v975 = vsel %vm575, %v961, -inf
      %976 = vmax.xlane.f32.xlu0 %v975
      %v977 = vpop.xlane.xlu0 %976
      %v978 = vsel %vm575, %v962, -inf
      %979 = vmax.xlane.f32.xlu0 %v978
      %v980 = vpop.xlane.xlu0 %979
      %v981 = vsel %vm575, %v963, -inf
      %982 = vmax.xlane.f32.xlu0 %v981
      %v983 = vpop.xlane.xlu0 %982
      %v984 = vsel %vm575, %v964, -inf
      %985 = vmax.xlane.f32.xlu0 %v984
      %v986 = vpop.xlane.xlu0 %985
      %v987 = vsel %vm575, %v965, -inf
      %988 = vmax.xlane.f32.xlu0 %v987
      %v989 = vpop.xlane.xlu0 %988
      %v990 = vsub.f32 %v958, %v968
      %v991 = vsub.f32 %v959, %v971
      %v992 = vsub.f32 %v960, %v974
      %v993 = vsub.f32 %v961, %v977
      %v994 = vsub.f32 %v962, %v980
      %v995 = vsub.f32 %v963, %v983
      %v996 = vsub.f32 %v964, %v986
      %v997 = vsub.f32 %v965, %v989
      %v998 = vmul.f32 %v990, 1.442695
      %v999 = vpow.pop %v998
      %v1000 = vmul.f32 %v991, 1.442695
      %v1001 = vpow.pop %v1000
      %v1002 = vmul.f32 %v992, 1.442695
      %v1003 = vpow.pop %v1002
      %v1004 = vmul.f32 %v993, 1.442695
      %v1005 = vpow.pop %v1004
      %v1006 = vmul.f32 %v994, 1.442695
      %v1007 = vpow.pop %v1006
      %v1008 = vmul.f32 %v995, 1.442695
      %v1009 = vpow.pop %v1008
      %v1010 = vmul.f32 %v996, 1.442695
      %v1011 = vpow.pop %v1010
      %v1012 = vmul.f32 %v997, 1.442695
      %v1013 = vpow.pop %v1012
      %v1014 = vsel %vm575, %v999, 0.0
      %1015 = vadd.xlane.f32.xlu0 %v1014
      %v1016 = vpop.xlane.xlu0 %1015
      %v1017 = vsel %vm575, %v1001, 0.0
      %1018 = vadd.xlane.f32.xlu0 %v1017
      %v1019 = vpop.xlane.xlu0 %1018
      %v1020 = vsel %vm575, %v1003, 0.0
      %1021 = vadd.xlane.f32.xlu0 %v1020
      %v1022 = vpop.xlane.xlu0 %1021
      %v1023 = vsel %vm575, %v1005, 0.0
      %1024 = vadd.xlane.f32.xlu0 %v1023
      %v1025 = vpop.xlane.xlu0 %1024
      %v1026 = vsel %vm575, %v1007, 0.0
      %1027 = vadd.xlane.f32.xlu0 %v1026
      %v1028 = vpop.xlane.xlu0 %1027
      %v1029 = vsel %vm575, %v1009, 0.0
      %1030 = vadd.xlane.f32.xlu0 %v1029
      %v1031 = vpop.xlane.xlu0 %1030
      %v1032 = vsel %vm575, %v1011, 0.0
      %1033 = vadd.xlane.f32.xlu0 %v1032
      %v1034 = vpop.xlane.xlu0 %1033
      %v1035 = vsel %vm575, %v1013, 0.0
      %1036 = vadd.xlane.f32.xlu0 %v1035
      %v1037 = vpop.xlane.xlu0 %1036
      %v1038 = vrcp.pop %v1016
      %v1039 = vrcp.pop %v1019
      %v1040 = vrcp.pop %v1022
      %v1041 = vrcp.pop %v1025
      %v1042 = vrcp.pop %v1028
      %v1043 = vrcp.pop %v1031
      %v1044 = vrcp.pop %v1034
      %v1045 = vrcp.pop %v1037
      %v1046 = vmul.f32 %v999, %v1038
      %v1047 = vmul.f32 %v1001, %v1039
      %v1048 = vmul.f32 %v1003, %v1040
      %v1049 = vmul.f32 %v1005, %v1041
      %v1050 = vmul.f32 %v1007, %v1042
      %v1051 = vmul.f32 %v1009, %v1043
      %v1052 = vmul.f32 %v1011, %v1044
      %v1053 = vmul.f32 %v1013, %v1045
      %v1054 = vpack.c.bf16 %v1047, %v1046
      %v1055 = vpack.c.bf16 %v1049, %v1048
      %v1056 = vpack.c.bf16 %v1051, %v1050
      %v1057 = vpack.c.bf16 %v1053, %v1052
      %1058 = vrot.lane.b32.xlu0 %v737, 96
      %v1059 = vpop.permute.xlu0 %1058
      %v1062 = vsel %vm575, %v1054, 0
      %1064 = vmatprep.subr.bf16.mxu0 0
      %1065 = vmatpush1.bf16.msra.mxu0 %v1059
      %1066 = vmatprep.subr.bf16.mxu0 0
      %1067 = vmatpush1.bf16.msra.mxu0 0
      %1068 = vmatprep.subr.bf16.mxu0 0
      %1069 = vmatpush1.bf16.msra.mxu0 0
      %1070 = vmatprep.subr.bf16.mxu0 0
      %1071 = vmatpush1.bf16.msra.mxu0 0
      %1072 = vmatprep.subr.bf16.mxu0 0
      %1073 = vmatpush1.bf16.msra.mxu0 0
      %1074 = vmatprep.subr.bf16.mxu0 0
      %1075 = vmatpush1.bf16.msra.mxu0 0
      %1076 = vmatprep.subr.bf16.mxu0 0
      %1077 = vmatpush1.bf16.msra.mxu0 0
      %1078 = vmatprep.subr.bf16.mxu0 0
      %1079 = vmatpush1.bf16.msra.mxu0 0
      %1080 = vmatprep.subr.bf16.mxu0 0
      %1081 = vmatpush1.bf16.msra.mxu0 0
      %1082 = vmatprep.subr.bf16.mxu0 0
      %1083 = vmatpush1.bf16.msra.mxu0 0
      %1084 = vmatprep.subr.bf16.mxu0 0
      %1085 = vmatpush1.bf16.msra.mxu0 0
      %1086 = vmatprep.subr.bf16.mxu0 0
      %1087 = vmatpush1.bf16.msra.mxu0 0
      %1088 = vmatprep.subr.bf16.mxu0 0
      %1089 = vmatpush1.bf16.msra.mxu0 0
      %1090 = vmatprep.subr.bf16.mxu0 0
      %1091 = vmatpush1.bf16.msra.mxu0 0
      %1092 = vmatprep.subr.bf16.mxu0 0
      %1093 = vmatpush1.bf16.msra.mxu0 0
      %1094 = vmatprep.subr.bf16.mxu0 0
      %1095 = vmatpush1.bf16.msra.mxu0 0
      %1096 = vmatprep.mubr.bf16.mxu0 0
      %1097 = vmatmul.mubr.bf16.gmra.mrb[0].mxu0 %v1062
      %v1098 = vpop.f32.mrb[0].mxu0
      %v1099 = vadd.f32 0.0, %v1098
      %v1100 = vpop.f32.mrb[0].mxu0
      %v1101 = vpop.f32.mrb[0].mxu0
      %v1102 = vadd.f32 0.0, %v1101
      %v1103 = vpop.f32.mrb[0].mxu0
      %1104 = vdwg.mxu0
      %1105 = vrot.lane.b32.xlu0 %v738, 96
      %v1106 = vpop.permute.xlu0 %1105
      %v1109 = vsel %vm575, %v1055, 0
      %1111 = vmatprep.subr.bf16.mxu0 0
      %1112 = vmatpush1.bf16.msra.mxu0 %v1106
      %1113 = vmatprep.subr.bf16.mxu0 0
      %1114 = vmatpush1.bf16.msra.mxu0 0
      %1115 = vmatprep.subr.bf16.mxu0 0
      %1116 = vmatpush1.bf16.msra.mxu0 0
      %1117 = vmatprep.subr.bf16.mxu0 0
      %1118 = vmatpush1.bf16.msra.mxu0 0
      %1119 = vmatprep.subr.bf16.mxu0 0
      %1120 = vmatpush1.bf16.msra.mxu0 0
      %1121 = vmatprep.subr.bf16.mxu0 0
      %1122 = vmatpush1.bf16.msra.mxu0 0
      %1123 = vmatprep.subr.bf16.mxu0 0
      %1124 = vmatpush1.bf16.msra.mxu0 0
      %1125 = vmatprep.subr.bf16.mxu0 0
      %1126 = vmatpush1.bf16.msra.mxu0 0
      %1127 = vmatprep.subr.bf16.mxu0 0
      %1128 = vmatpush1.bf16.msra.mxu0 0
      %1129 = vmatprep.subr.bf16.mxu0 0
      %1130 = vmatpush1.bf16.msra.mxu0 0
      %1131 = vmatprep.subr.bf16.mxu0 0
      %1132 = vmatpush1.bf16.msra.mxu0 0
      %1133 = vmatprep.subr.bf16.mxu0 0
      %1134 = vmatpush1.bf16.msra.mxu0 0
      %1135 = vmatprep.subr.bf16.mxu0 0
      %1136 = vmatpush1.bf16.msra.mxu0 0
      %1137 = vmatprep.subr.bf16.mxu0 0
      %1138 = vmatpush1.bf16.msra.mxu0 0
      %1139 = vmatprep.subr.bf16.mxu0 0
      %1140 = vmatpush1.bf16.msra.mxu0 0
      %1141 = vmatprep.subr.bf16.mxu0 0
      %1142 = vmatpush1.bf16.msra.mxu0 0
      %1143 = vmatprep.mubr.bf16.mxu0 0
      %1144 = vmatmul.mubr.bf16.gmra.mrb[0].mxu0 %v1109
      %v1145 = vpop.f32.mrb[0].mxu0
      %v1146 = vadd.f32 0.0, %v1145
      %v1147 = vpop.f32.mrb[0].mxu0
      %v1148 = vpop.f32.mrb[0].mxu0
      %v1149 = vadd.f32 0.0, %v1148
      %v1150 = vpop.f32.mrb[0].mxu0
      %1151 = vdwg.mxu0
      %1152 = vrot.lane.b32.xlu0 %v739, 96
      %v1153 = vpop.permute.xlu0 %1152
      %v1156 = vsel %vm575, %v1056, 0
      %1158 = vmatprep.subr.bf16.mxu0 0
      %1159 = vmatpush1.bf16.msra.mxu0 %v1153
      %1160 = vmatprep.subr.bf16.mxu0 0
      %1161 = vmatpush1.bf16.msra.mxu0 0
      %1162 = vmatprep.subr.bf16.mxu0 0
      %1163 = vmatpush1.bf16.msra.mxu0 0
      %1164 = vmatprep.subr.bf16.mxu0 0
      %1165 = vmatpush1.bf16.msra.mxu0 0
      %1166 = vmatprep.subr.bf16.mxu0 0
      %1167 = vmatpush1.bf16.msra.mxu0 0
      %1168 = vmatprep.subr.bf16.mxu0 0
      %1169 = vmatpush1.bf16.msra.mxu0 0
      %1170 = vmatprep.subr.bf16.mxu0 0
      %1171 = vmatpush1.bf16.msra.mxu0 0
      %1172 = vmatprep.subr.bf16.mxu0 0
      %1173 = vmatpush1.bf16.msra.mxu0 0
      %1174 = vmatprep.subr.bf16.mxu0 0
      %1175 = vmatpush1.bf16.msra.mxu0 0
      %1176 = vmatprep.subr.bf16.mxu0 0
      %1177 = vmatpush1.bf16.msra.mxu0 0
      %1178 = vmatprep.subr.bf16.mxu0 0
      %1179 = vmatpush1.bf16.msra.mxu0 0
      %1180 = vmatprep.subr.bf16.mxu0 0
      %1181 = vmatpush1.bf16.msra.mxu0 0
      %1182 = vmatprep.subr.bf16.mxu0 0
      %1183 = vmatpush1.bf16.msra.mxu0 0
      %1184 = vmatprep.subr.bf16.mxu0 0
      %1185 = vmatpush1.bf16.msra.mxu0 0
      %1186 = vmatprep.subr.bf16.mxu0 0
      %1187 = vmatpush1.bf16.msra.mxu0 0
      %1188 = vmatprep.subr.bf16.mxu0 0
      %1189 = vmatpush1.bf16.msra.mxu0 0
      %1190 = vmatprep.mubr.bf16.mxu0 0
      %1191 = vmatmul.mubr.bf16.gmra.mrb[0].mxu0 %v1156
      %v1192 = vpop.f32.mrb[0].mxu0
      %v1193 = vadd.f32 0.0, %v1192
      %v1194 = vpop.f32.mrb[0].mxu0
      %v1195 = vpop.f32.mrb[0].mxu0
      %v1196 = vadd.f32 0.0, %v1195
      %v1197 = vpop.f32.mrb[0].mxu0
      %1198 = vdwg.mxu0
      %1199 = vrot.lane.b32.xlu0 %v740, 96
      %v1200 = vpop.permute.xlu0 %1199
      %v1203 = vsel %vm575, %v1057, 0
      %1205 = vmatprep.subr.bf16.mxu0 0
      %1206 = vmatpush1.bf16.msra.mxu0 %v1200
      %1207 = vmatprep.subr.bf16.mxu0 0
      %1208 = vmatpush1.bf16.msra.mxu0 0
      %1209 = vmatprep.subr.bf16.mxu0 0
      %1210 = vmatpush1.bf16.msra.mxu0 0
      %1211 = vmatprep.subr.bf16.mxu0 0
      %1212 = vmatpush1.bf16.msra.mxu0 0
      %1213 = vmatprep.subr.bf16.mxu0 0
      %1214 = vmatpush1.bf16.msra.mxu0 0
      %1215 = vmatprep.subr.bf16.mxu0 0
      %1216 = vmatpush1.bf16.msra.mxu0 0
      %1217 = vmatprep.subr.bf16.mxu0 0
      %1218 = vmatpush1.bf16.msra.mxu0 0
      %1219 = vmatprep.subr.bf16.mxu0 0
      %1220 = vmatpush1.bf16.msra.mxu0 0
      %1221 = vmatprep.subr.bf16.mxu0 0
      %1222 = vmatpush1.bf16.msra.mxu0 0
      %1223 = vmatprep.subr.bf16.mxu0 0
      %1224 = vmatpush1.bf16.msra.mxu0 0
      %1225 = vmatprep.subr.bf16.mxu0 0
      %1226 = vmatpush1.bf16.msra.mxu0 0
      %1227 = vmatprep.subr.bf16.mxu0 0
      %1228 = vmatpush1.bf16.msra.mxu0 0
      %1229 = vmatprep.subr.bf16.mxu0 0
      %1230 = vmatpush1.bf16.msra.mxu0 0
      %1231 = vmatprep.subr.bf16.mxu0 0
      %1232 = vmatpush1.bf16.msra.mxu0 0
      %1233 = vmatprep.subr.bf16.mxu0 0
      %1234 = vmatpush1.bf16.msra.mxu0 0
      %1235 = vmatprep.subr.bf16.mxu0 0
      %1236 = vmatpush1.bf16.msra.mxu0 0
      %1237 = vmatprep.mubr.bf16.mxu0 0
      %1238 = vmatmul.mubr.bf16.gmra.mrb[0].mxu0 %v1203
      %v1239 = vpop.f32.mrb[0].mxu0
      %v1240 = vadd.f32 0.0, %v1239
      %v1241 = vpop.f32.mrb[0].mxu0
      %v1242 = vpop.f32.mrb[0].mxu0
      %v1243 = vadd.f32 0.0, %v1242
      %v1244 = vpop.f32.mrb[0].mxu0
      %1245 = vdwg.mxu0
      %v1246 = vld [vmem:[%s6] sm:$0x1]
      %v1247 = vpack.c.bf16 %v1102, %v1099
      %v1248 = vpack.c.bf16 %v1149, %v1146
      %v1249 = vld [vmem:[%s5] sm:$0xf]
      %v1251 = vsel %vm744, %v1247, 0
      %v1254 = vsel %vm744, %v1248, 0
      %vm1256 = vcmask 1043456
      %v1258 = vsel %vm1256, %v1249, 0
      %1260 = vmatprep.subr.bf16.mxu0 0
      %1261 = vmatpush1.bf16.msra.mxu0 %v1258
      %1262 = vmatprep.subr.bf16.mxu0 0
      %1263 = vmatpush1.bf16.msra.mxu0 0
      %1264 = vmatprep.subr.bf16.mxu0 0
      %1265 = vmatpush1.bf16.msra.mxu0 0
      %1266 = vmatprep.subr.bf16.mxu0 0
      %1267 = vmatpush1.bf16.msra.mxu0 0
      %1268 = vmatprep.subr.bf16.mxu0 0
      %1269 = vmatpush1.bf16.msra.mxu0 0
      %1270 = vmatprep.subr.bf16.mxu0 0
      %1271 = vmatpush1.bf16.msra.mxu0 0
      %1272 = vmatprep.subr.bf16.mxu0 0
      %1273 = vmatpush1.bf16.msra.mxu0 0
      %1274 = vmatprep.subr.bf16.mxu0 0
      %1275 = vmatpush1.bf16.msra.mxu0 0
      %1276 = vmatprep.subr.bf16.mxu0 0
      %1277 = vmatpush1.bf16.msra.mxu0 0
      %1278 = vmatprep.subr.bf16.mxu0 0
      %1279 = vmatpush1.bf16.msra.mxu0 0
      %1280 = vmatprep.subr.bf16.mxu0 0
      %1281 = vmatpush1.bf16.msra.mxu0 0
      %1282 = vmatprep.subr.bf16.mxu0 0
      %1283 = vmatpush1.bf16.msra.mxu0 0
      %1284 = vmatprep.subr.bf16.mxu0 0
      %1285 = vmatpush1.bf16.msra.mxu0 0
      %1286 = vmatprep.subr.bf16.mxu0 0
      %1287 = vmatpush1.bf16.msra.mxu0 0
      %1288 = vmatprep.subr.bf16.mxu0 0
      %1289 = vmatpush1.bf16.msra.mxu0 0
      %1290 = vmatprep.subr.bf16.mxu0 0
      %1291 = vmatpush1.bf16.msra.mxu0 0
      %1292 = vmatprep.mubr.bf16.mxu0 0
      %1293 = vmatmul.mubr.bf16.gmra.mrb[0].mxu0 %v1251
      %v1294 = vpop.f32.mrb[0].mxu0
      %v1295 = vadd.f32 0.0, %v1294
      %v1296 = vpop.f32.mrb[0].mxu0
      %v1297 = vpop.f32.mrb[0].mxu0
      %v1298 = vadd.f32 0.0, %v1297
      %v1299 = vpop.f32.mrb[0].mxu0
      %1300 = vmatprep.mubr.bf16.mxu0 0
      %1301 = vmatmul.mubr.bf16.gmra.mrb[0].mxu0 %v1254
      %v1302 = vpop.f32.mrb[0].mxu0
      %v1303 = vadd.f32 0.0, %v1302
      %v1304 = vpop.f32.mrb[0].mxu0
      %v1305 = vpop.f32.mrb[0].mxu0
      %v1306 = vadd.f32 0.0, %v1305
      %v1307 = vpop.f32.mrb[0].mxu0
      %1308 = vdwg.mxu0
      %v1310 = vlaneseq
      %v1311 = vshrl.u32 %v1310, 7
      %v1312 = vsub.s32 0, %v1311
      %v1313 = vrot.slane %v1246, %v1312
      %v1315 = vadd.f32 %v1313, %v1295
      %v1316 = vadd.f32 %v1313, %v1298
      %v1317 = vadd.f32 %v1313, %v1303
      %v1318 = vadd.f32 %v1313, %v1306
      %v1319 = vpack.c.bf16 %v1196, %v1193
      %v1320 = vpack.c.bf16 %v1243, %v1240
      %s1321 = scalar_lea.vmem %s5, 4
      %v1322 = vld [vmem:[%s1321] sm:$0xf]
      %v1324 = vsel %vm744, %v1319, 0
      %v1327 = vsel %vm744, %v1320, 0
      %v1330 = vsel %vm1256, %v1322, 0
      %1332 = vmatprep.subr.bf16.mxu0 0
      %1333 = vmatpush1.bf16.msra.mxu0 %v1330
      %1334 = vmatprep.subr.bf16.mxu0 0
      %1335 = vmatpush1.bf16.msra.mxu0 0
      %1336 = vmatprep.subr.bf16.mxu0 0
      %1337 = vmatpush1.bf16.msra.mxu0 0
      %1338 = vmatprep.subr.bf16.mxu0 0
      %1339 = vmatpush1.bf16.msra.mxu0 0
      %1340 = vmatprep.subr.bf16.mxu0 0
      %1341 = vmatpush1.bf16.msra.mxu0 0
      %1342 = vmatprep.subr.bf16.mxu0 0
      %1343 = vmatpush1.bf16.msra.mxu0 0
      %1344 = vmatprep.subr.bf16.mxu0 0
      %1345 = vmatpush1.bf16.msra.mxu0 0
      %1346 = vmatprep.subr.bf16.mxu0 0
      %1347 = vmatpush1.bf16.msra.mxu0 0
      %1348 = vmatprep.subr.bf16.mxu0 0
      %1349 = vmatpush1.bf16.msra.mxu0 0
      %1350 = vmatprep.subr.bf16.mxu0 0
      %1351 = vmatpush1.bf16.msra.mxu0 0
      %1352 = vmatprep.subr.bf16.mxu0 0
      %1353 = vmatpush1.bf16.msra.mxu0 0
      %1354 = vmatprep.subr.bf16.mxu0 0
      %1355 = vmatpush1.bf16.msra.mxu0 0
      %1356 = vmatprep.subr.bf16.mxu0 0
      %1357 = vmatpush1.bf16.msra.mxu0 0
      %1358 = vmatprep.subr.bf16.mxu0 0
      %1359 = vmatpush1.bf16.msra.mxu0 0
      %1360 = vmatprep.subr.bf16.mxu0 0
      %1361 = vmatpush1.bf16.msra.mxu0 0
      %1362 = vmatprep.subr.bf16.mxu0 0
      %1363 = vmatpush1.bf16.msra.mxu0 0
      %1364 = vmatprep.mubr.bf16.mxu0 0
      %1365 = vmatmul.mubr.bf16.gmra.mrb[0].mxu0 %v1324
      %v1366 = vpop.f32.mrb[0].mxu0
      %v1367 = vadd.f32 0.0, %v1366
      %v1368 = vpop.f32.mrb[0].mxu0
      %v1369 = vpop.f32.mrb[0].mxu0
      %v1370 = vadd.f32 0.0, %v1369
      %v1371 = vpop.f32.mrb[0].mxu0
      %1372 = vmatprep.mubr.bf16.mxu0 0
      %1373 = vmatmul.mubr.bf16.gmra.mrb[0].mxu0 %v1327
      %v1374 = vpop.f32.mrb[0].mxu0
      %v1375 = vadd.f32 0.0, %v1374
      %v1376 = vpop.f32.mrb[0].mxu0
      %v1377 = vpop.f32.mrb[0].mxu0
      %v1378 = vadd.f32 0.0, %v1377
      %v1379 = vpop.f32.mrb[0].mxu0
      %1380 = vdwg.mxu0
      %v1381 = vadd.f32 %v1315, %v1367
      %v1382 = vadd.f32 %v1316, %v1370
      %v1383 = vadd.f32 %v1317, %v1375
      %v1384 = vadd.f32 %v1318, %v1378
      %v1385 = vadd.f32 %v569, %v1381
      %v1386 = vadd.f32 %v570, %v1382
      %v1387 = vadd.f32 %v571, %v1383
      %v1388 = vadd.f32 %v572, %v1384
      %v1389 = vld [vmem:[%s9] sm:$0x1]
      %v1390 = vld [vmem:[%s10] sm:$0x1]
      %v1391 = vsel %vm575, %v1385, 0.0
      %1392 = vadd.xlane.f32.xlu0 %v1391
      %v1393 = vpop.xlane.xlu0 %1392
      %v1394 = vsel %vm575, %v1386, 0.0
      %1395 = vadd.xlane.f32.xlu0 %v1394
      %v1396 = vpop.xlane.xlu0 %1395
      %v1397 = vsel %vm575, %v1387, 0.0
      %1398 = vadd.xlane.f32.xlu0 %v1397
      %v1399 = vpop.xlane.xlu0 %1398
      %v1400 = vsel %vm575, %v1388, 0.0
      %1401 = vadd.xlane.f32.xlu0 %v1400
      %v1402 = vpop.xlane.xlu0 %1401
      %v1403 = vmul.f32 %v1393, %v588
      %v1404 = vmul.f32 %v1396, %v588
      %v1405 = vmul.f32 %v1399, %v588
      %v1406 = vmul.f32 %v1402, %v588
      %v1407 = vsub.f32 %v1385, %v1403
      %v1408 = vsub.f32 %v1386, %v1404
      %v1409 = vsub.f32 %v1387, %v1405
      %v1410 = vsub.f32 %v1388, %v1406
      %v1411 = vmul.f32 %v1407, %v1407
      %v1412 = vmul.f32 %v1408, %v1408
      %v1413 = vmul.f32 %v1409, %v1409
      %v1414 = vmul.f32 %v1410, %v1410
      %v1415 = vsel %vm575, %v1411, 0.0
      %1416 = vadd.xlane.f32.xlu0 %v1415
      %v1417 = vpop.xlane.xlu0 %1416
      %v1418 = vsel %vm575, %v1412, 0.0
      %1419 = vadd.xlane.f32.xlu0 %v1418
      %v1420 = vpop.xlane.xlu0 %1419
      %v1421 = vsel %vm575, %v1413, 0.0
      %1422 = vadd.xlane.f32.xlu0 %v1421
      %v1423 = vpop.xlane.xlu0 %1422
      %v1424 = vsel %vm575, %v1414, 0.0
      %1425 = vadd.xlane.f32.xlu0 %v1424
      %v1426 = vpop.xlane.xlu0 %1425
      %v1427 = vmul.f32 %v1417, %v588
      %v1428 = vmul.f32 %v1420, %v588
      %v1429 = vmul.f32 %v1423, %v588
      %v1430 = vmul.f32 %v1426, %v588
      %v1431 = vadd.f32 %v1427, 1e-05
      %v1432 = vadd.f32 %v1428, 1e-05
      %v1433 = vadd.f32 %v1429, 1e-05
      %v1434 = vadd.f32 %v1430, 1e-05
      %v1435 = vrsqrt.pop %v1431
      %v1436 = vrsqrt.pop %v1432
      %v1437 = vrsqrt.pop %v1433
      %v1438 = vrsqrt.pop %v1434
      %v1439 = vmul.f32 %v1407, %v1435
      %v1440 = vmul.f32 %v1408, %v1436
      %v1441 = vmul.f32 %v1409, %v1437
      %v1442 = vmul.f32 %v1410, %v1438
      %v1444 = vlaneseq
      %v1445 = vshrl.u32 %v1444, 7
      %v1446 = vsub.s32 0, %v1445
      %v1447 = vrot.slane %v1389, %v1446
      %v1449 = vmul.f32 %v1439, %v1447
      %v1450 = vmul.f32 %v1440, %v1447
      %v1451 = vmul.f32 %v1441, %v1447
      %v1452 = vmul.f32 %v1442, %v1447
      %v1454 = vlaneseq
      %v1455 = vshrl.u32 %v1454, 7
      %v1456 = vsub.s32 0, %v1455
      %v1457 = vrot.slane %v1390, %v1456
      %v1459 = vadd.f32 %v1449, %v1457
      %v1460 = vadd.f32 %v1450, %v1457
      %v1461 = vadd.f32 %v1451, %v1457
      %v1462 = vadd.f32 %v1452, %v1457
      %v1463 = vpack.c.bf16 %v1460, %v1459
      %v1464 = vpack.c.bf16 %v1462, %v1461
      %v1465 = vld [vmem:[%s11] sm:$0xf]
      %v1466 = vld [vmem:[%s11 + $0x4] sm:$0xf]
      %v1467 = vld [vmem:[%s12] sm:$0x1]
      %v1469 = vlaneseq
      %v1470 = vshrl.u32 %v1469, 7
      %v1471 = vsub.s32 0, %v1470
      %v1472 = vrot.slane %v1467, %v1471
      %v1476 = vunpack.c.l.b16 %v1465
      %v1477 = vunpack.c.l.b16 %v1466
      %v1478 = vpack.c.b16 %v1477, %v1476
      %v1481 = vsel %vm575, %v1463, 0
      %v1484 = vsel %vm575, %v1464, 0
      %1486 = vmatprep.subr.bf16.mxu0 0
      %1487 = vmatpush1.bf16.msra.mxu0 %v1478
      %1488 = vmatprep.subr.bf16.mxu0 0
      %1489 = vmatpush1.bf16.msra.mxu0 0
      %1490 = vmatprep.subr.bf16.mxu0 0
      %1491 = vmatpush1.bf16.msra.mxu0 0
      %1492 = vmatprep.subr.bf16.mxu0 0
      %1493 = vmatpush1.bf16.msra.mxu0 0
      %1494 = vmatprep.subr.bf16.mxu0 0
      %1495 = vmatpush1.bf16.msra.mxu0 0
      %1496 = vmatprep.subr.bf16.mxu0 0
      %1497 = vmatpush1.bf16.msra.mxu0 0
      %1498 = vmatprep.subr.bf16.mxu0 0
      %1499 = vmatpush1.bf16.msra.mxu0 0
      %1500 = vmatprep.subr.bf16.mxu0 0
      %1501 = vmatpush1.bf16.msra.mxu0 0
      %1502 = vmatprep.subr.bf16.mxu0 0
      %1503 = vmatpush1.bf16.msra.mxu0 0
      %1504 = vmatprep.subr.bf16.mxu0 0
      %1505 = vmatpush1.bf16.msra.mxu0 0
      %1506 = vmatprep.subr.bf16.mxu0 0
      %1507 = vmatpush1.bf16.msra.mxu0 0
      %1508 = vmatprep.subr.bf16.mxu0 0
      %1509 = vmatpush1.bf16.msra.mxu0 0
      %1510 = vmatprep.subr.bf16.mxu0 0
      %1511 = vmatpush1.bf16.msra.mxu0 0
      %1512 = vmatprep.subr.bf16.mxu0 0
      %1513 = vmatpush1.bf16.msra.mxu0 0
      %1514 = vmatprep.subr.bf16.mxu0 0
      %1515 = vmatpush1.bf16.msra.mxu0 0
      %1516 = vmatprep.subr.bf16.mxu0 0
      %1517 = vmatpush1.bf16.msra.mxu0 0
      %1518 = vmatprep.mubr.bf16.mxu0 0
      %1519 = vmatmul.mubr.bf16.gmra.mrb[0].mxu0 %v1481
      %v1520 = vpop.f32.mrb[0].mxu0
      %v1521 = vadd.f32 %v1472, %v1520
      %v1522 = vpop.f32.mrb[0].mxu0
      %v1523 = vpop.f32.mrb[0].mxu0
      %v1524 = vadd.f32 %v1472, %v1523
      %v1525 = vpop.f32.mrb[0].mxu0
      %1526 = vmatprep.mubr.bf16.mxu0 0
      %1527 = vmatmul.mubr.bf16.gmra.mrb[0].mxu0 %v1484
      %v1528 = vpop.f32.mrb[0].mxu0
      %v1529 = vadd.f32 %v1472, %v1528
      %v1530 = vpop.f32.mrb[0].mxu0
      %v1531 = vpop.f32.mrb[0].mxu0
      %v1532 = vadd.f32 %v1472, %v1531
      %v1533 = vpop.f32.mrb[0].mxu0
      %1534 = vdwg.mxu0
      %v1535 = vmul.f32 %v1521, 0.5
      %v1536 = vmul.f32 %v1524, 0.5
      %v1537 = vmul.f32 %v1529, 0.5
      %v1538 = vmul.f32 %v1532, 0.5
      %v1539 = vmul.f32 %v1521, 0.70710677
      %v1540 = vmul.f32 %v1524, 0.70710677
      %v1541 = vmul.f32 %v1529, 0.70710677
      %v1542 = vmul.f32 %v1532, 0.70710677
      %vm1543 = vcmp.ge.f32.partialorder %v1539, 0.0
      %vm1544 = vcmp.ge.f32.partialorder %v1540, 0.0
      %vm1545 = vcmp.ge.f32.partialorder %v1541, 0.0
      %vm1546 = vcmp.ge.f32.partialorder %v1542, 0.0
      %v1547 = vsel %vm1543, 1.0, -1.0
      %v1548 = vsel %vm1544, 1.0, -1.0
      %v1549 = vsel %vm1545, 1.0, -1.0
      %v1550 = vsel %vm1546, 1.0, -1.0
      %v1551 = vand.u32 2147483647, %v1539
      %v1552 = vand.u32 2147483647, %v1540
      %v1553 = vand.u32 2147483647, %v1541
      %v1554 = vand.u32 2147483647, %v1542
      %v1555 = vmul.f32 %v1551, 0.3275911
      %v1556 = vmul.f32 %v1552, 0.3275911
      %v1557 = vmul.f32 %v1553, 0.3275911
      %v1558 = vmul.f32 %v1554, 0.3275911
      %v1559 = vadd.f32 %v1555, 1.0
      %v1560 = vadd.f32 %v1556, 1.0
      %v1561 = vadd.f32 %v1557, 1.0
      %v1562 = vadd.f32 %v1558, 1.0
      %v1563 = vrcp.pop %v1559
      %v1564 = vrcp.pop %v1560
      %v1565 = vrcp.pop %v1561
      %v1566 = vrcp.pop %v1562
      %v1567 = vmul.f32 %v1563, 1.0614054
      %v1568 = vmul.f32 %v1564, 1.0614054
      %v1569 = vmul.f32 %v1565, 1.0614054
      %v1570 = vmul.f32 %v1566, 1.0614054
      %v1571 = vadd.f32 %v1567, -1.4531521
      %v1572 = vadd.f32 %v1568, -1.4531521
      %v1573 = vadd.f32 %v1569, -1.4531521
      %v1574 = vadd.f32 %v1570, -1.4531521
      %v1575 = vmul.f32 %v1571, %v1563
      %v1576 = vmul.f32 %v1572, %v1564
      %v1577 = vmul.f32 %v1573, %v1565
      %v1578 = vmul.f32 %v1574, %v1566
      %v1579 = vadd.f32 %v1575, 1.4214138
      %v1580 = vadd.f32 %v1576, 1.4214138
      %v1581 = vadd.f32 %v1577, 1.4214138
      %v1582 = vadd.f32 %v1578, 1.4214138
      %v1583 = vmul.f32 %v1579, %v1563
      %v1584 = vmul.f32 %v1580, %v1564
      %v1585 = vmul.f32 %v1581, %v1565
      %v1586 = vmul.f32 %v1582, %v1566
      %v1587 = vadd.f32 %v1583, -0.28449672
      %v1588 = vadd.f32 %v1584, -0.28449672
      %v1589 = vadd.f32 %v1585, -0.28449672
      %v1590 = vadd.f32 %v1586, -0.28449672
      %v1591 = vmul.f32 %v1587, %v1563
      %v1592 = vmul.f32 %v1588, %v1564
      %v1593 = vmul.f32 %v1589, %v1565
      %v1594 = vmul.f32 %v1590, %v1566
      %v1595 = vadd.f32 %v1591, 0.2548296
      %v1596 = vadd.f32 %v1592, 0.2548296
      %v1597 = vadd.f32 %v1593, 0.2548296
      %v1598 = vadd.f32 %v1594, 0.2548296
      %v1599 = vmul.f32 %v1595, %v1563
      %v1600 = vmul.f32 %v1596, %v1564
      %v1601 = vmul.f32 %v1597, %v1565
      %v1602 = vmul.f32 %v1598, %v1566
      %v1603 = vsub.f32 0.0, %v1551
      %v1604 = vsub.f32 0.0, %v1552
      %v1605 = vsub.f32 0.0, %v1553
      %v1606 = vsub.f32 0.0, %v1554
      %v1607 = vmul.f32 %v1603, %v1551
      %v1608 = vmul.f32 %v1604, %v1552
      %v1609 = vmul.f32 %v1605, %v1553
      %v1610 = vmul.f32 %v1606, %v1554
      %v1611 = vmul.f32 %v1607, 1.442695
      %v1612 = vpow.pop %v1611
      %v1613 = vmul.f32 %v1608, 1.442695
      %v1614 = vpow.pop %v1613
      %v1615 = vmul.f32 %v1609, 1.442695
      %v1616 = vpow.pop %v1615
      %v1617 = vmul.f32 %v1610, 1.442695
      %v1618 = vpow.pop %v1617
      %v1619 = vmul.f32 %v1599, %v1612
      %v1620 = vmul.f32 %v1600, %v1614
      %v1621 = vmul.f32 %v1601, %v1616
      %v1622 = vmul.f32 %v1602, %v1618
      %v1623 = vsub.f32 1.0, %v1619
      %v1624 = vsub.f32 1.0, %v1620
      %v1625 = vsub.f32 1.0, %v1621
      %v1626 = vsub.f32 1.0, %v1622
      %v1627 = vmul.f32 %v1547, %v1623
      %v1628 = vmul.f32 %v1548, %v1624
      %v1629 = vmul.f32 %v1549, %v1625
      %v1630 = vmul.f32 %v1550, %v1626
      %v1631 = vadd.f32 %v1627, 1.0
      %v1632 = vadd.f32 %v1628, 1.0
      %v1633 = vadd.f32 %v1629, 1.0
      %v1634 = vadd.f32 %v1630, 1.0
      %v1635 = vmul.f32 %v1535, %v1631
      %v1636 = vmul.f32 %v1536, %v1632
      %v1637 = vmul.f32 %v1537, %v1633
      %v1638 = vmul.f32 %v1538, %v1634
      %v1639 = vpack.c.bf16 %v1636, %v1635
      %v1640 = vpack.c.bf16 %v1638, %v1637
      %v1641 = vld [vmem:[%s13] sm:$0xf]
      %v1642 = vld [vmem:[%s13 + $0x4] sm:$0xf]
      %v1643 = vld [vmem:[%s13 + $0x8] sm:$0xf]
      %v1644 = vld [vmem:[%s13 + $0xc] sm:$0xf]
      %v1645 = vld [vmem:[%s13 + $0x10] sm:$0xf]
      %v1646 = vld [vmem:[%s13 + $0x14] sm:$0xf]
      %v1647 = vld [vmem:[%s13 + $0x18] sm:$0xf]
      %v1648 = vld [vmem:[%s13 + $0x1c] sm:$0xf]
      %v1649 = vld [vmem:[%s14] sm:$0x1]
      %v1651 = vlaneseq
      %v1652 = vshrl.u32 %v1651, 7
      %v1653 = vsub.s32 0, %v1652
      %v1654 = vrot.slane %v1649, %v1653
      %v1664 = vunpack.c.l.b16 %v1641
      %v1665 = vunpack.c.l.b16 %v1642
      %v1666 = vunpack.c.l.b16 %v1643
      %v1667 = vunpack.c.l.b16 %v1644
      %v1668 = vunpack.c.l.b16 %v1645
      %v1669 = vunpack.c.l.b16 %v1646
      %v1670 = vunpack.c.l.b16 %v1647
      %v1671 = vunpack.c.l.b16 %v1648
      %v1672 = vpack.c.b16 %v1665, %v1664
      %v1673 = vpack.c.b16 %v1667, %v1666
      %v1674 = vpack.c.b16 %v1669, %v1668
      %v1675 = vpack.c.b16 %v1671, %v1670
      %vm1680 = vcmask 523264
      %v1682 = vsel %vm1680, %v1639, 0
      %v1685 = vsel %vm1680, %v1640, 0
      %1687 = vmatprep.subr.bf16.mxu0 0
      %1688 = vmatpush1.bf16.msra.mxu0 %v1672
      %1689 = vmatprep.subr.bf16.mxu0 0
      %1690 = vmatpush1.bf16.msra.mxu0 %v1673
      %1691 = vmatprep.subr.bf16.mxu0 0
      %1692 = vmatpush1.bf16.msra.mxu0 %v1674
      %1693 = vmatprep.subr.bf16.mxu0 0
      %1694 = vmatpush1.bf16.msra.mxu0 %v1675
      %1695 = vmatprep.subr.bf16.mxu0 0
      %1696 = vmatpush1.bf16.msra.mxu0 0
      %1697 = vmatprep.subr.bf16.mxu0 0
      %1698 = vmatpush1.bf16.msra.mxu0 0
      %1699 = vmatprep.subr.bf16.mxu0 0
      %1700 = vmatpush1.bf16.msra.mxu0 0
      %1701 = vmatprep.subr.bf16.mxu0 0
      %1702 = vmatpush1.bf16.msra.mxu0 0
      %1703 = vmatprep.subr.bf16.mxu0 0
      %1704 = vmatpush1.bf16.msra.mxu0 0
      %1705 = vmatprep.subr.bf16.mxu0 0
      %1706 = vmatpush1.bf16.msra.mxu0 0
      %1707 = vmatprep.subr.bf16.mxu0 0
      %1708 = vmatpush1.bf16.msra.mxu0 0
      %1709 = vmatprep.subr.bf16.mxu0 0
      %1710 = vmatpush1.bf16.msra.mxu0 0
      %1711 = vmatprep.subr.bf16.mxu0 0
      %1712 = vmatpush1.bf16.msra.mxu0 0
      %1713 = vmatprep.subr.bf16.mxu0 0
      %1714 = vmatpush1.bf16.msra.mxu0 0
      %1715 = vmatprep.subr.bf16.mxu0 0
      %1716 = vmatpush1.bf16.msra.mxu0 0
      %1717 = vmatprep.subr.bf16.mxu0 0
      %1718 = vmatpush1.bf16.msra.mxu0 0
      %1719 = vmatprep.mubr.bf16.mxu0 0
      %1720 = vmatmul.mubr.bf16.gmra.mrb[0].mxu0 %v1682
      %v1721 = vpop.f32.mrb[0].mxu0
      %v1722 = vadd.f32 %v1654, %v1721
      %v1723 = vpop.f32.mrb[0].mxu0
      %v1724 = vpop.f32.mrb[0].mxu0
      %v1725 = vadd.f32 %v1654, %v1724
      %v1726 = vpop.f32.mrb[0].mxu0
      %1727 = vmatprep.mubr.bf16.mxu0 0
      %1728 = vmatmul.mubr.bf16.gmra.mrb[0].mxu0 %v1685
      %v1729 = vpop.f32.mrb[0].mxu0
      %v1730 = vadd.f32 %v1654, %v1729
      %v1731 = vpop.f32.mrb[0].mxu0
      %v1732 = vpop.f32.mrb[0].mxu0
      %v1733 = vadd.f32 %v1654, %v1732
      %v1734 = vpop.f32.mrb[0].mxu0
      %1735 = vdwg.mxu0
      %v1736 = vadd.f32 %v1385, %v1722
      %v1737 = vadd.f32 %v1386, %v1725
      %v1738 = vadd.f32 %v1387, %v1730
      %v1739 = vadd.f32 %v1388, %v1733
      %v1740 = vpack.c.bf16 %v1737, %v1736
      %v1741 = vpack.c.bf16 %v1739, %v1738
      %v1744 = vunpack.c.l.b16 %v1740
      %v1745 = vunpack.c.h.b16 %v1740
      %v1746 = vunpack.c.l.b16 %v1741
      %v1747 = vunpack.c.h.b16 %v1741
      %v1748 = vpack.c.b16 %v1744, %v1744
      %v1749 = vpack.c.b16 %v1745, %v1745
      %v1750 = vpack.c.b16 %v1746, %v1746
      %v1751 = vpack.c.b16 %v1747, %v1747
      %vm1756 = vcmask 125952
      %1757 = vst.msk [vmem:[%s562] sm:$0xf] %vm1756, %v1748
      %1758 = vst.msk [vmem:[%s562 + $0x4] sm:$0xf] %vm1756, %v1749
      %1759 = vst.msk [vmem:[%s562 + $0x8] sm:$0xf] %vm1756, %v1750
      %1760 = vst.msk [vmem:[%s562 + $0xc] sm:$0xf] %vm1756, %v1751
      %s1761 = smul.u32 2, %s31
      %p1762 = scmp.lt.s32.totalorder %s30, 1
      %s1763 = scalar_select %p1762, %s30, 1
      %p1764 = scmp.lt.s32.totalorder %s1761, 3
      %s1765 = scalar_select %p1764, %s1761, 3
      %s1766 = smul.addr %s1765, 2
      %s1767 = smul.addr %s1763, 8
      %s1768 = sadd.s32 %s1766, %s1767
      %s1769 = smul.addr %s1768, 4
      %s1770 = scalar_lea.vmem %s15, %s1769
      // Predicated region
      $region81: #{swin_forward.8} parent=79 // pred_check
        %p1771 = pneg %p385
      $region82: #{swin_forward.8} parent=79 // pred_check_branch
        %1773 = sbr.rel (%p1771) target = $region84
      $region83: #{swin_forward.8} parent=79 // pred_region
        %s1774 = smul.u32 2, %s31
      $region84: #{swin_forward.8} parent=79 // pred_fallthru
        _
    $region80: #{swin_forward.8} parent=5 // pred_fallthru
      _
    %p1775 = scmp.le.s32.totalorder 2, %s21
    // Predicated region
    $region85: #{swin_forward.8} parent=5 // pred_check
      %p1776 = pneg %p1775
    $region86: #{swin_forward.8} parent=5 // pred_check_branch
      %1778 = sbr.rel (%p1776) target = $region88
    $region87: #{swin_forward.8} parent=5 // pred_region
      %s1779 = ssub.s32 %s21, 2
      // Predicated region
      $region89: #{swin_forward.8} parent=87 // pred_check
        %p1780 = pneg %p391
      $region90: #{swin_forward.8} parent=87 // pred_check_branch
        %1782 = sbr.rel (%p1780) target = $region92
      $region91: #{swin_forward.8} parent=87 // pred_region
        %s1783 = smul.u32 2, %s33
        %p1784 = scmp.lt.s32.totalorder %s32, 1
        %s1785 = scalar_select %p1784, %s32, 1
        %p1786 = scmp.lt.s32.totalorder %s1783, 3
        %s1787 = scalar_select %p1786, %s1783, 3
        %s1788 = smul.addr %s1787, 2
        %s1789 = smul.addr %s1785, 8
        %s1790 = sadd.s32 %s1788, %s1789
        %s1791 = smul.addr %s1790, 4
        %s1792 = scalar_lea.vmem %s15, %s1791
      $region92: #{swin_forward.8} parent=87 // pred_fallthru
        _
    $region88: #{swin_forward.8} parent=5 // pred_fallthru
      _
  $region6: #{swin_forward.8} parent=0 // loop_footer
    %s25 = sadd.s32 1, %s21
  $region7: #{swin_forward.8} parent=0 // loop_footer_branch
    %20 = sbr.rel target = $region3
  $region8: #{swin_forward.8} parent=0 // loop_exit
    _

// kernel: swin_forward.9
$region0: #{swin_forward.9}
  #allocation0 [shape = 'u32[]', space=smem, size = 0x4, offset = 0x4, fixed_abs, tag = 'smem constant byte address 0x4 - core index']
  #allocation1 [shape = 'u32[144,128]{1,0:T(1,128)}', space=vmem, size = 0x12000, scoped, tag = 'internal scratch']
  %s0 = inlined_call_operand.vmem [shape: bf16[2,4,2,4,32], index: 0, kind: input, shape index: {}]
  %s1 = inlined_call_operand.vmem [shape: f32[1,64], index: 1, kind: input, shape index: {}]
  %s2 = inlined_call_operand.vmem [shape: f32[1,64], index: 2, kind: input, shape index: {}]
  %s3 = inlined_call_operand.vmem [shape: bf16[64,32], index: 3, kind: input, shape index: {}]
  %s4 = inlined_call_operand.vmem [shape: bf16[2,4,4,32], index: 4, kind: output, shape index: {}]
  %s5 = sld [smem:[#allocation0]]
  $region49: #{swin_forward.9} parent=0
    _
  %s7 = ssub.s32 1, %s5
  %s8 = scalar_select 0, %s7, %s5
  loop: start=0, step=1, limit=10
  $region2: #{swin_forward.9} parent=0 // loop_pre_header
    _
  $region3: #{swin_forward.9} parent=0 // loop_header
    %s10 = sphi 0, %s14
    %p11 = scmp.ge.s32.totalorder %s10, 10
    %s17 = sphi 0, %s29
    %s18 = sphi 0, %s25
    %s19 = sphi 0, %s17
    %s20 = sphi 0, %s18
    %s21 = sphi 0, %s19
    %s22 = sphi 0, %s20
    %s34 = sphi 0, %s36
    %s37 = sphi 0, %s34
    %s38 = sphi 0, %s37
    %s54 = sphi 0, %s38
    %s58 = sphi 0, %s58
    %s60 = sphi 0, %s58
    %s61 = sphi 0, %s60
    %s75 = sphi 0, %s61
    %s79 = sphi 0, %s79
    %s81 = sphi 0, %s79
    %s82 = sphi 0, %s81
    %s96 = sphi 0, %s82
    %s100 = sphi 0, %s100
    %s102 = sphi 0, %s100
    %s103 = sphi 0, %s102
    %s117 = sphi 0, %s103
    %s125 = sphi 0, %s127
    %s128 = sphi 0, %s125
    %s129 = sphi 0, %s128
    %s145 = sphi 0, %s129
  $region4: #{swin_forward.9} parent=0 // loop_header_branch
    %13 = sbr.rel (%p11) target = $region8
  $region5: #{swin_forward.9} parent=0 // loop_body
    %s15 = ssub.s32 %s10, 1
    %s16 = ssub.s32 %s10, 2
    %s23 = sadd.s32 1, %s18
    %p24 = scmp.ge.s32.totalorder %s23, 4
    %s25 = scalar_select %p24, 0, %s23
    %s26 = sadd.s32 1, %s17
    %s27 = scalar_select %p24, %s26, %s17
    %p28 = scmp.ge.s32.totalorder %s27, 2
    %s29 = scalar_select %p28, 0, %s27
    %s30 = ssub.s32 %s17, %s29
    %s31 = ssub.s32 %s18, %s25
    %s32 = sor.u32 %s30, %s31
    %p33 = scmp.eq.s32.totalorder %s32, 0
    %s35 = sadd.s32 %s34, 1
    %s36 = scalar_select %p33, %s34, %s35
    %p39 = pneg %p33
    %p40 = scmp.eq.s32.totalorder %s10, 7
    %p41 = por %p39, %p40
    %p42 = scmp.ne.s32.totalorder %s34, %s37
    %p43 = scmp.eq.s32.totalorder %s10, 0
    %p44 = por %p42, %p43
    %p45 = scmp.ne.s32.totalorder %s34, %s37
    %p46 = scmp.eq.s32.totalorder %s15, 7
    %p47 = por %p45, %p46
    %p48 = scmp.ne.s32.totalorder %s37, %s38
    %p49 = scmp.eq.s32.totalorder %s15, 0
    %p50 = por %p48, %p49
    %p51 = scmp.ne.s32.totalorder %s37, %s38
    %p52 = scmp.eq.s32.totalorder %s16, 7
    %p53 = por %p51, %p52
    %p55 = scmp.ne.s32.totalorder %s38, %s54
    %p56 = scmp.eq.s32.totalorder %s16, 0
    %p57 = por %p55, %p56
    %s59 = sadd.s32 %s58, 1
    %p62 = scmp.eq.s32.totalorder %s10, 7
    %p63 = scmp.ne.s32.totalorder %s58, %s60
    %p64 = scmp.eq.s32.totalorder %s10, 0
    %p65 = por %p63, %p64
    %p66 = scmp.ne.s32.totalorder %s58, %s60
    %p67 = scmp.eq.s32.totalorder %s15, 7
    %p68 = por %p66, %p67
    %p69 = scmp.ne.s32.totalorder %s60, %s61
    %p70 = scmp.eq.s32.totalorder %s15, 0
    %p71 = por %p69, %p70
    %p72 = scmp.ne.s32.totalorder %s60, %s61
    %p73 = scmp.eq.s32.totalorder %s16, 7
    %p74 = por %p72, %p73
    %p76 = scmp.ne.s32.totalorder %s61, %s75
    %p77 = scmp.eq.s32.totalorder %s16, 0
    %p78 = por %p76, %p77
    %s80 = sadd.s32 %s79, 1
    %p83 = scmp.eq.s32.totalorder %s10, 7
    %p84 = scmp.ne.s32.totalorder %s79, %s81
    %p85 = scmp.eq.s32.totalorder %s10, 0
    %p86 = por %p84, %p85
    %p87 = scmp.ne.s32.totalorder %s79, %s81
    %p88 = scmp.eq.s32.totalorder %s15, 7
    %p89 = por %p87, %p88
    %p90 = scmp.ne.s32.totalorder %s81, %s82
    %p91 = scmp.eq.s32.totalorder %s15, 0
    %p92 = por %p90, %p91
    %p93 = scmp.ne.s32.totalorder %s81, %s82
    %p94 = scmp.eq.s32.totalorder %s16, 7
    %p95 = por %p93, %p94
    %p97 = scmp.ne.s32.totalorder %s82, %s96
    %p98 = scmp.eq.s32.totalorder %s16, 0
    %p99 = por %p97, %p98
    %s101 = sadd.s32 %s100, 1
    %p104 = scmp.eq.s32.totalorder %s10, 7
    %p105 = scmp.ne.s32.totalorder %s100, %s102
    %p106 = scmp.eq.s32.totalorder %s10, 0
    %p107 = por %p105, %p106
    %p108 = scmp.ne.s32.totalorder %s100, %s102
    %p109 = scmp.eq.s32.totalorder %s15, 7
    %p110 = por %p108, %p109
    %p111 = scmp.ne.s32.totalorder %s102, %s103
    %p112 = scmp.eq.s32.totalorder %s15, 0
    %p113 = por %p111, %p112
    %p114 = scmp.ne.s32.totalorder %s102, %s103
    %p115 = scmp.eq.s32.totalorder %s16, 7
    %p116 = por %p114, %p115
    %p118 = scmp.ne.s32.totalorder %s103, %s117
    %p119 = scmp.eq.s32.totalorder %s16, 0
    %p120 = por %p118, %p119
    %s121 = ssub.s32 %s17, %s29
    %s122 = ssub.s32 %s18, %s25
    %s123 = sor.u32 %s121, %s122
    %p124 = scmp.eq.s32.totalorder %s123, 0
    %s126 = sadd.s32 %s125, 1
    %s127 = scalar_select %p124, %s125, %s126
    %p130 = pneg %p124
    %p131 = scmp.eq.s32.totalorder %s10, 7
    %p132 = por %p130, %p131
    %p133 = scmp.ne.s32.totalorder %s125, %s128
    %p134 = scmp.eq.s32.totalorder %s10, 0
    %p135 = por %p133, %p134
    %p136 = scmp.ne.s32.totalorder %s125, %s128
    %p137 = scmp.eq.s32.totalorder %s15, 7
    %p138 = por %p136, %p137
    %p139 = scmp.ne.s32.totalorder %s128, %s129
    %p140 = scmp.eq.s32.totalorder %s15, 0
    %p141 = por %p139, %p140
    %p142 = scmp.ne.s32.totalorder %s128, %s129
    %p143 = scmp.eq.s32.totalorder %s16, 7
    %p144 = por %p142, %p143
    %p146 = scmp.ne.s32.totalorder %s129, %s145
    %p147 = scmp.eq.s32.totalorder %s16, 0
    %p148 = por %p146, %p147
    %p149 = scmp.le.s32.totalorder 1, %s10
    %p150 = scmp.lt.s32.totalorder %s10, 9
    %p151 = pnand %p149, %p150
    %p152 = pneg %p151
    // Predicated region
    $region9: #{swin_forward.9} parent=5 // pred_check
      _
    $region10: #{swin_forward.9} parent=5 // pred_check_branch
      %154 = sbr.rel (%p151) target = $region12
    $region11: #{swin_forward.9} parent=5 // pred_region
      %s155 = ssub.s32 %s10, 1
      // Predicated region
      $region13: #{swin_forward.9} parent=11 // pred_check
        %p156 = pneg %p71
      $region14: #{swin_forward.9} parent=11 // pred_check_branch
        %158 = sbr.rel (%p156) target = $region16
      $region15: #{swin_forward.9} parent=11 // pred_region
        _
      $region16: #{swin_forward.9} parent=11 // pred_fallthru
        _
      // Predicated region
      $region17: #{swin_forward.9} parent=11 // pred_check
        %p159 = pneg %p92
      $region18: #{swin_forward.9} parent=11 // pred_check_branch
        %161 = sbr.rel (%p159) target = $region20
      $region19: #{swin_forward.9} parent=11 // pred_region
        _
      $region20: #{swin_forward.9} parent=11 // pred_fallthru
        _
      // Predicated region
      $region21: #{swin_forward.9} parent=11 // pred_check
        %p162 = pneg %p113
      $region22: #{swin_forward.9} parent=11 // pred_check_branch
        %164 = sbr.rel (%p162) target = $region24
      $region23: #{swin_forward.9} parent=11 // pred_region
        _
      $region24: #{swin_forward.9} parent=11 // pred_fallthru
        _
    $region12: #{swin_forward.9} parent=5 // pred_fallthru
      _
    %p165 = scmp.lt.s32.totalorder %s10, 8
    // Predicated region
    $region25: #{swin_forward.9} parent=5 // pred_check
      %p166 = pneg %p165
    $region26: #{swin_forward.9} parent=5 // pred_check_branch
      %168 = sbr.rel (%p166) target = $region28
    $region27: #{swin_forward.9} parent=5 // pred_region
      // Predicated region
      $region29: #{swin_forward.9} parent=27 // pred_check
        %p169 = pneg %p44
      $region30: #{swin_forward.9} parent=27 // pred_check_branch
        %171 = sbr.rel (%p169) target = $region32
      $region31: #{swin_forward.9} parent=27 // pred_region
        %p172 = scmp.lt.s32.totalorder %s17, 1
        %s173 = scalar_select %p172, %s17, 1
        %p174 = scmp.lt.s32.totalorder %s18, 3
        %s175 = scalar_select %p174, %s18, 3
        %s176 = smul.addr %s175, 2
        %s177 = smul.addr %s173, 8
        %s178 = sadd.s32 %s176, %s177
        %s179 = smul.addr %s178, 2
        %s180 = scalar_lea.vmem %s0, %s179
      $region32: #{swin_forward.9} parent=27 // pred_fallthru
        _
    $region28: #{swin_forward.9} parent=5 // pred_fallthru
      _
    %p181 = scmp.le.s32.totalorder 1, %s10
    %p182 = scmp.lt.s32.totalorder %s10, 9
    %p183 = pnand %p181, %p182
    %p184 = pneg %p183
    // Predicated region
    $region33: #{swin_forward.9} parent=5 // pred_check
      _
    $region34: #{swin_forward.9} parent=5 // pred_check_branch
      %186 = sbr.rel (%p183) target = $region36
    $region35: #{swin_forward.9} parent=5 // pred_region
      %s187 = ssub.s32 %s10, 1
      %p188 = scmp.lt.s32.totalorder %s19, 1
      %s189 = scalar_select %p188, %s19, 1
      %p190 = scmp.lt.s32.totalorder %s20, 3
      %s191 = scalar_select %p190, %s20, 3
      %s192 = smul.addr %s191, 2
      %s193 = smul.addr %s189, 8
      %s194 = sadd.s32 %s192, %s193
      %s195 = smul.addr %s194, 2
      %s196 = scalar_lea.vmem %s0, %s195
      %p197 = pneg %p50
      %p198 = pneg %p47
      %p199 = pneg %p71
      %p200 = pneg %p68
      %p201 = pneg %p92
      %p202 = pneg %p89
      %p203 = pneg %p113
      %p204 = pneg %p110
      %p205 = pneg %p141
      %p206 = pneg %p138
      %p207 = scmp.lt.s32.totalorder %s19, 1
      %s208 = scalar_select %p207, %s19, 1
      %p209 = scmp.lt.s32.totalorder %s20, 3
      %s210 = scalar_select %p209, %s20, 3
      %s211 = smul.addr %s208, 4
      %s212 = sadd.s32 %s210, %s211
      %s213 = smul.addr %s212, 2
      %s214 = scalar_lea.vmem %s4, %s213
      %p215 = scmp.lt.s32.totalorder %s19, 1
      %s216 = scalar_select %p215, %s19, 1
      %p217 = scmp.lt.s32.totalorder %s20, 3
      %s218 = scalar_select %p217, %s20, 3
      %s219 = smul.addr %s218, 2
      %s220 = smul.addr %s216, 8
      %s221 = sadd.s32 %s219, %s220
      %s222 = smul.addr %s221, 2
      %s223 = scalar_lea.vmem %s0, %s222
      %p224 = scmp.lt.s32.totalorder %s19, 1
      %s225 = scalar_select %p224, %s19, 1
      %p226 = scmp.lt.s32.totalorder %s20, 3
      %s227 = scalar_select %p226, %s20, 3
      %s228 = smul.addr %s225, 4
      %s229 = sadd.s32 %s227, %s228
      %s230 = smul.addr %s229, 2
      %s231 = scalar_lea.vmem %s4, %s230
      %v233 = vld [vmem:[%s223] sm:$0x3]
      %v234 = vunpack.c.l.bf16 %v233
      %s235 = scalar_lea.vmem %s223, 2
      %v236 = vld [vmem:[%s235] sm:$0x3]
      %v237 = vunpack.c.l.bf16 %v236
      %239 = vrot.lane.b32.xlu0 %v237, 32
      %v240 = vpop.permute.xlu0 %239
      %vm242 = vcmask 261120
      %v243 = vsel %vm242, %v234, %v240
      %v244 = vld [vmem:[%s1] sm:$0x1]
      %v245 = vld [vmem:[%s2] sm:$0x1]
      %vm246 = vcmask 519168
      %v247 = vsel %vm246, %v243, 0.0
      %248 = vadd.xlane.f32.xlu0 %v247
      %v249 = vpop.xlane.xlu0 %248
      %v250 = vrcp.pop 64.0
      %v251 = vmul.f32 %v249, %v250
      %v252 = vsub.f32 %v243, %v251
      %v253 = vmul.f32 %v252, %v252
      %v254 = vsel %vm246, %v253, 0.0
      %255 = vadd.xlane.f32.xlu0 %v254
      %v256 = vpop.xlane.xlu0 %255
      %v257 = vmul.f32 %v256, %v250
      %v258 = vadd.f32 %v257, 1e-05
      %v259 = vrsqrt.pop %v258
      %v260 = vmul.f32 %v252, %v259
      %v262 = vlaneseq
      %v263 = vshrl.u32 %v262, 7
      %v264 = vsub.s32 0, %v263
      %v265 = vrot.slane %v244, %v264
      %v267 = vmul.f32 %v260, %v265
      %v269 = vlaneseq
      %v270 = vshrl.u32 %v269, 7
      %v271 = vsub.s32 0, %v270
      %v272 = vrot.slane %v245, %v271
      %v274 = vadd.f32 %v267, %v272
      %v275 = vpack.c.bf16 %v274, %v274
      %v276 = vld [vmem:[%s3] sm:$0xf]
      %v277 = vld [vmem:[%s3 + $0x4] sm:$0xf]
      %v278 = vld [vmem:[%s3 + $0x8] sm:$0xf]
      %v279 = vld [vmem:[%s3 + $0xc] sm:$0xf]
      %v280 = vld [vmem:[%s3 + $0x10] sm:$0xf]
      %v281 = vld [vmem:[%s3 + $0x14] sm:$0xf]
      %v282 = vld [vmem:[%s3 + $0x18] sm:$0xf]
      %v283 = vld [vmem:[%s3 + $0x1c] sm:$0xf]
      %v292 = vunpack.c.l.b16 %v276
      %v293 = vunpack.c.l.b16 %v277
      %v294 = vunpack.c.l.b16 %v278
      %v295 = vunpack.c.l.b16 %v279
      %v296 = vunpack.c.l.b16 %v280
      %v297 = vunpack.c.l.b16 %v281
      %v298 = vunpack.c.l.b16 %v282
      %v299 = vunpack.c.l.b16 %v283
      %v300 = vpack.c.b16 %v293, %v292
      %v301 = vpack.c.b16 %v295, %v294
      %v302 = vpack.c.b16 %v297, %v296
      %v303 = vpack.c.b16 %v299, %v298
      %vm308 = vcmask 523264
      %v310 = vsel %vm308, %v275, 0
      %312 = vmatprep.subr.bf16.mxu0 0
      %313 = vmatpush1.bf16.msra.mxu0 %v300
      %314 = vmatprep.subr.bf16.mxu0 0
      %315 = vmatpush1.bf16.msra.mxu0 %v301
      %316 = vmatprep.subr.bf16.mxu0 0
      %317 = vmatpush1.bf16.msra.mxu0 %v302
      %318 = vmatprep.subr.bf16.mxu0 0
      %319 = vmatpush1.bf16.msra.mxu0 %v303
      %320 = vmatprep.subr.bf16.mxu0 0
      %321 = vmatpush1.bf16.msra.mxu0 0
      %322 = vmatprep.subr.bf16.mxu0 0
      %323 = vmatpush1.bf16.msra.mxu0 0
      %324 = vmatprep.subr.bf16.mxu0 0
      %325 = vmatpush1.bf16.msra.mxu0 0
      %326 = vmatprep.subr.bf16.mxu0 0
      %327 = vmatpush1.bf16.msra.mxu0 0
      %328 = vmatprep.subr.bf16.mxu0 0
      %329 = vmatpush1.bf16.msra.mxu0 0
      %330 = vmatprep.subr.bf16.mxu0 0
      %331 = vmatpush1.bf16.msra.mxu0 0
      %332 = vmatprep.subr.bf16.mxu0 0
      %333 = vmatpush1.bf16.msra.mxu0 0
      %334 = vmatprep.subr.bf16.mxu0 0
      %335 = vmatpush1.bf16.msra.mxu0 0
      %336 = vmatprep.subr.bf16.mxu0 0
      %337 = vmatpush1.bf16.msra.mxu0 0
      %338 = vmatprep.subr.bf16.mxu0 0
      %339 = vmatpush1.bf16.msra.mxu0 0
      %340 = vmatprep.subr.bf16.mxu0 0
      %341 = vmatpush1.bf16.msra.mxu0 0
      %342 = vmatprep.subr.bf16.mxu0 0
      %343 = vmatpush1.bf16.msra.mxu0 0
      %344 = vmatprep.mubr.bf16.mxu0 0
      %345 = vmatmul.mubr.bf16.gmra.mrb[0].mxu0 %v310
      %v346 = vpop.f32.mrb[0].mxu0
      %v347 = vadd.f32 0.0, %v346
      %v348 = vpop.f32.mrb[0].mxu0
      %v349 = vpop.f32.mrb[0].mxu0
      %v350 = vpop.f32.mrb[0].mxu0
      %351 = vdwg.mxu0
      %v352 = vpack.c.bf16 %v347, %v347
      %vm353 = vcmask 254976
      %354 = vst.msk [vmem:[%s231] sm:$0x3] %vm353, %v352
      %p355 = scmp.lt.s32.totalorder %s19, 1
      %s356 = scalar_select %p355, %s19, 1
      %p357 = scmp.lt.s32.totalorder %s20, 3
      %s358 = scalar_select %p357, %s20, 3
      %s359 = smul.addr %s356, 4
      %s360 = sadd.s32 %s358, %s359
      %s361 = smul.addr %s360, 2
      %s362 = scalar_lea.vmem %s4, %s361
      // Predicated region
      $region37: #{swin_forward.9} parent=35 // pred_check
        %p363 = pneg %p138
      $region38: #{swin_forward.9} parent=35 // pred_check_branch
        %365 = sbr.rel (%p363) target = $region40
      $region39: #{swin_forward.9} parent=35 // pred_region
        _
      $region40: #{swin_forward.9} parent=35 // pred_fallthru
        _
    $region36: #{swin_forward.9} parent=5 // pred_fallthru
      _
    %p366 = scmp.le.s32.totalorder 2, %s10
    // Predicated region
    $region41: #{swin_forward.9} parent=5 // pred_check
      %p367 = pneg %p366
    $region42: #{swin_forward.9} parent=5 // pred_check_branch
      %369 = sbr.rel (%p367) target = $region44
    $region43: #{swin_forward.9} parent=5 // pred_region
      %s370 = ssub.s32 %s10, 2
      // Predicated region
      $region45: #{swin_forward.9} parent=43 // pred_check
        %p371 = pneg %p144
      $region46: #{swin_forward.9} parent=43 // pred_check_branch
        %373 = sbr.rel (%p371) target = $region48
      $region47: #{swin_forward.9} parent=43 // pred_region
        %p374 = scmp.lt.s32.totalorder %s21, 1
        %s375 = scalar_select %p374, %s21, 1
        %p376 = scmp.lt.s32.totalorder %s22, 3
        %s377 = scalar_select %p376, %s22, 3
        %s378 = smul.addr %s375, 4
        %s379 = sadd.s32 %s377, %s378
        %s380 = smul.addr %s379, 2
        %s381 = scalar_lea.vmem %s4, %s380
      $region48: #{swin_forward.9} parent=43 // pred_fallthru
        _
    $region44: #{swin_forward.9} parent=5 // pred_fallthru
      _
  $region6: #{swin_forward.9} parent=0 // loop_footer
    %s14 = sadd.s32 1, %s10
  $region7: #{swin_forward.9} parent=0 // loop_footer_branch
    %9 = sbr.rel target = $region3
  $region8: #{swin_forward.9} parent=0 // loop_exit
    _

// kernel: swin_forward.10
$region0: #{swin_forward.10}
  #allocation0 [shape = 'u32[]', space=smem, size = 0x4, offset = 0x4, fixed_abs, tag = 'smem constant byte address 0x4 - core index']
  #allocation1 [shape = 'u32[144,128]{1,0:T(1,128)}', space=vmem, size = 0x12000, scoped, tag = 'internal scratch']
  %s0 = inlined_call_operand.vmem [shape: bf16[2,1,16,32], index: 0, kind: input, shape index: {}]
  %s1 = inlined_call_operand.vmem [shape: f32[1,32], index: 1, kind: input, shape index: {}, may-alias: {1,8}]
  %s2 = inlined_call_operand.vmem [shape: f32[1,32], index: 2, kind: input, shape index: {}, may-alias: {2,6,9,13}]
  %s3 = inlined_call_operand.vmem [shape: bf16[32,96], index: 3, kind: input, shape index: {}]
  %s4 = inlined_call_operand.vmem [shape: f32[1,96], index: 4, kind: input, shape index: {}]
  %s5 = inlined_call_operand.vmem [shape: bf16[4,8,32], index: 5, kind: input, shape index: {}]
  %s6 = inlined_call_operand.vmem [shape: f32[1,32], index: 6, kind: input, shape index: {}, may-alias: {2,6,9,13}]
  %s7 = inlined_call_operand.vmem [shape: f32[4,16,16], index: 7, kind: input, shape index: {}]
  %s8 = inlined_call_operand.vmem [shape: f32[1,32], index: 8, kind: input, shape index: {}, may-alias: {1,8}]
  %s9 = inlined_call_operand.vmem [shape: f32[1,32], index: 9, kind: input, shape index: {}, may-alias: {2,6,9,13}]
  %s10 = inlined_call_operand.vmem [shape: bf16[32,128], index: 10, kind: input, shape index: {}]
  %s11 = inlined_call_operand.vmem [shape: f32[1,128], index: 11, kind: input, shape index: {}]
  %s12 = inlined_call_operand.vmem [shape: bf16[128,32], index: 12, kind: input, shape index: {}]
  %s13 = inlined_call_operand.vmem [shape: f32[1,32], index: 13, kind: input, shape index: {}, may-alias: {2,6,9,13}]
  %s14 = inlined_call_operand.vmem [shape: bf16[2,1,16,32], index: 14, kind: output, shape index: {}]
  %s15 = sld [smem:[#allocation0]]
  $region89: #{swin_forward.10} parent=0
    _
  %s17 = ssub.s32 1, %s15
  %s18 = scalar_select 0, %s17, %s15
  loop: start=0, step=1, limit=4
  $region2: #{swin_forward.10} parent=0 // loop_pre_header
    _
  $region3: #{swin_forward.10} parent=0 // loop_header
    %s20 = sphi 0, %s24
    %p21 = scmp.ge.s32.totalorder %s20, 4
    %s27 = sphi 0, %s39
    %s28 = sphi 0, %s35
    %s29 = sphi 0, %s27
    %s30 = sphi 0, %s28
    %s31 = sphi 0, %s29
    %s32 = sphi 0, %s30
    %s44 = sphi 0, %s46
    %s47 = sphi 0, %s44
    %s48 = sphi 0, %s47
    %s64 = sphi 0, %s48
    %s68 = sphi 0, %s68
    %s70 = sphi 0, %s68
    %s71 = sphi 0, %s70
    %s85 = sphi 0, %s71
    %s89 = sphi 0, %s89
    %s91 = sphi 0, %s89
    %s92 = sphi 0, %s91
    %s106 = sphi 0, %s92
    %s110 = sphi 0, %s110
    %s112 = sphi 0, %s110
    %s113 = sphi 0, %s112
    %s127 = sphi 0, %s113
    %s131 = sphi 0, %s131
    %s133 = sphi 0, %s131
    %s134 = sphi 0, %s133
    %s148 = sphi 0, %s134
    %s152 = sphi 0, %s152
    %s154 = sphi 0, %s152
    %s155 = sphi 0, %s154
    %s169 = sphi 0, %s155
    %s173 = sphi 0, %s173
    %s175 = sphi 0, %s173
    %s176 = sphi 0, %s175
    %s190 = sphi 0, %s176
    %s194 = sphi 0, %s194
    %s196 = sphi 0, %s194
    %s197 = sphi 0, %s196
    %s211 = sphi 0, %s197
    %s215 = sphi 0, %s215
    %s217 = sphi 0, %s215
    %s218 = sphi 0, %s217
    %s232 = sphi 0, %s218
    %s236 = sphi 0, %s236
    %s238 = sphi 0, %s236
    %s239 = sphi 0, %s238
    %s253 = sphi 0, %s239
    %s257 = sphi 0, %s257
    %s259 = sphi 0, %s257
    %s260 = sphi 0, %s259
    %s274 = sphi 0, %s260
    %s278 = sphi 0, %s278
    %s280 = sphi 0, %s278
    %s281 = sphi 0, %s280
    %s295 = sphi 0, %s281
    %s299 = sphi 0, %s299
    %s301 = sphi 0, %s299
    %s302 = sphi 0, %s301
    %s316 = sphi 0, %s302
    %s320 = sphi 0, %s320
    %s322 = sphi 0, %s320
    %s323 = sphi 0, %s322
    %s337 = sphi 0, %s323
    %s345 = sphi 0, %s347
    %s348 = sphi 0, %s345
    %s349 = sphi 0, %s348
    %s365 = sphi 0, %s349
  $region4: #{swin_forward.10} parent=0 // loop_header_branch
    %23 = sbr.rel (%p21) target = $region8
  $region5: #{swin_forward.10} parent=0 // loop_body
    %s25 = ssub.s32 %s20, 1
    %s26 = ssub.s32 %s20, 2
    %s33 = sadd.s32 1, %s28
    %p34 = scmp.ge.s32.totalorder %s33, 1
    %s35 = scalar_select %p34, 0, %s33
    %s36 = sadd.s32 1, %s27
    %s37 = scalar_select %p34, %s36, %s27
    %p38 = scmp.ge.s32.totalorder %s37, 2
    %s39 = scalar_select %p38, 0, %s37
    %s40 = ssub.s32 %s27, %s39
    %s41 = ssub.s32 %s28, %s35
    %s42 = sor.u32 %s40, %s41
    %p43 = scmp.eq.s32.totalorder %s42, 0
    %s45 = sadd.s32 %s44, 1
    %s46 = scalar_select %p43, %s44, %s45
    %p49 = pneg %p43
    %p50 = scmp.eq.s32.totalorder %s20, 1
    %p51 = por %p49, %p50
    %p52 = scmp.ne.s32.totalorder %s44, %s47
    %p53 = scmp.eq.s32.totalorder %s20, 0
    %p54 = por %p52, %p53
    %p55 = scmp.ne.s32.totalorder %s44, %s47
    %p56 = scmp.eq.s32.totalorder %s25, 1
    %p57 = por %p55, %p56
    %p58 = scmp.ne.s32.totalorder %s47, %s48
    %p59 = scmp.eq.s32.totalorder %s25, 0
    %p60 = por %p58, %p59
    %p61 = scmp.ne.s32.totalorder %s47, %s48
    %p62 = scmp.eq.s32.totalorder %s26, 1
    %p63 = por %p61, %p62
    %p65 = scmp.ne.s32.totalorder %s48, %s64
    %p66 = scmp.eq.s32.totalorder %s26, 0
    %p67 = por %p65, %p66
    %s69 = sadd.s32 %s68, 1
    %p72 = scmp.eq.s32.totalorder %s20, 1
    %p73 = scmp.ne.s32.totalorder %s68, %s70
    %p74 = scmp.eq.s32.totalorder %s20, 0
    %p75 = por %p73, %p74
    %p76 = scmp.ne.s32.totalorder %s68, %s70
    %p77 = scmp.eq.s32.totalorder %s25, 1
    %p78 = por %p76, %p77
    %p79 = scmp.ne.s32.totalorder %s70, %s71
    %p80 = scmp.eq.s32.totalorder %s25, 0
    %p81 = por %p79, %p80
    %p82 = scmp.ne.s32.totalorder %s70, %s71
    %p83 = scmp.eq.s32.totalorder %s26, 1
    %p84 = por %p82, %p83
    %p86 = scmp.ne.s32.totalorder %s71, %s85
    %p87 = scmp.eq.s32.totalorder %s26, 0
    %p88 = por %p86, %p87
    %s90 = sadd.s32 %s89, 1
    %p93 = scmp.eq.s32.totalorder %s20, 1
    %p94 = scmp.ne.s32.totalorder %s89, %s91
    %p95 = scmp.eq.s32.totalorder %s20, 0
    %p96 = por %p94, %p95
    %p97 = scmp.ne.s32.totalorder %s89, %s91
    %p98 = scmp.eq.s32.totalorder %s25, 1
    %p99 = por %p97, %p98
    %p100 = scmp.ne.s32.totalorder %s91, %s92
    %p101 = scmp.eq.s32.totalorder %s25, 0
    %p102 = por %p100, %p101
    %p103 = scmp.ne.s32.totalorder %s91, %s92
    %p104 = scmp.eq.s32.totalorder %s26, 1
    %p105 = por %p103, %p104
    %p107 = scmp.ne.s32.totalorder %s92, %s106
    %p108 = scmp.eq.s32.totalorder %s26, 0
    %p109 = por %p107, %p108
    %s111 = sadd.s32 %s110, 1
    %p114 = scmp.eq.s32.totalorder %s20, 1
    %p115 = scmp.ne.s32.totalorder %s110, %s112
    %p116 = scmp.eq.s32.totalorder %s20, 0
    %p117 = por %p115, %p116
    %p118 = scmp.ne.s32.totalorder %s110, %s112
    %p119 = scmp.eq.s32.totalorder %s25, 1
    %p120 = por %p118, %p119
    %p121 = scmp.ne.s32.totalorder %s112, %s113
    %p122 = scmp.eq.s32.totalorder %s25, 0
    %p123 = por %p121, %p122
    %p124 = scmp.ne.s32.totalorder %s112, %s113
    %p125 = scmp.eq.s32.totalorder %s26, 1
    %p126 = por %p124, %p125
    %p128 = scmp.ne.s32.totalorder %s113, %s127
    %p129 = scmp.eq.s32.totalorder %s26, 0
    %p130 = por %p128, %p129
    %s132 = sadd.s32 %s131, 1
    %p135 = scmp.eq.s32.totalorder %s20, 1
    %p136 = scmp.ne.s32.totalorder %s131, %s133
    %p137 = scmp.eq.s32.totalorder %s20, 0
    %p138 = por %p136, %p137
    %p139 = scmp.ne.s32.totalorder %s131, %s133
    %p140 = scmp.eq.s32.totalorder %s25, 1
    %p141 = por %p139, %p140
    %p142 = scmp.ne.s32.totalorder %s133, %s134
    %p143 = scmp.eq.s32.totalorder %s25, 0
    %p144 = por %p142, %p143
    %p145 = scmp.ne.s32.totalorder %s133, %s134
    %p146 = scmp.eq.s32.totalorder %s26, 1
    %p147 = por %p145, %p146
    %p149 = scmp.ne.s32.totalorder %s134, %s148
    %p150 = scmp.eq.s32.totalorder %s26, 0
    %p151 = por %p149, %p150
    %s153 = sadd.s32 %s152, 1
    %p156 = scmp.eq.s32.totalorder %s20, 1
    %p157 = scmp.ne.s32.totalorder %s152, %s154
    %p158 = scmp.eq.s32.totalorder %s20, 0
    %p159 = por %p157, %p158
    %p160 = scmp.ne.s32.totalorder %s152, %s154
    %p161 = scmp.eq.s32.totalorder %s25, 1
    %p162 = por %p160, %p161
    %p163 = scmp.ne.s32.totalorder %s154, %s155
    %p164 = scmp.eq.s32.totalorder %s25, 0
    %p165 = por %p163, %p164
    %p166 = scmp.ne.s32.totalorder %s154, %s155
    %p167 = scmp.eq.s32.totalorder %s26, 1
    %p168 = por %p166, %p167
    %p170 = scmp.ne.s32.totalorder %s155, %s169
    %p171 = scmp.eq.s32.totalorder %s26, 0
    %p172 = por %p170, %p171
    %s174 = sadd.s32 %s173, 1
    %p177 = scmp.eq.s32.totalorder %s20, 1
    %p178 = scmp.ne.s32.totalorder %s173, %s175
    %p179 = scmp.eq.s32.totalorder %s20, 0
    %p180 = por %p178, %p179
    %p181 = scmp.ne.s32.totalorder %s173, %s175
    %p182 = scmp.eq.s32.totalorder %s25, 1
    %p183 = por %p181, %p182
    %p184 = scmp.ne.s32.totalorder %s175, %s176
    %p185 = scmp.eq.s32.totalorder %s25, 0
    %p186 = por %p184, %p185
    %p187 = scmp.ne.s32.totalorder %s175, %s176
    %p188 = scmp.eq.s32.totalorder %s26, 1
    %p189 = por %p187, %p188
    %p191 = scmp.ne.s32.totalorder %s176, %s190
    %p192 = scmp.eq.s32.totalorder %s26, 0
    %p193 = por %p191, %p192
    %s195 = sadd.s32 %s194, 1
    %p198 = scmp.eq.s32.totalorder %s20, 1
    %p199 = scmp.ne.s32.totalorder %s194, %s196
    %p200 = scmp.eq.s32.totalorder %s20, 0
    %p201 = por %p199, %p200
    %p202 = scmp.ne.s32.totalorder %s194, %s196
    %p203 = scmp.eq.s32.totalorder %s25, 1
    %p204 = por %p202, %p203
    %p205 = scmp.ne.s32.totalorder %s196, %s197
    %p206 = scmp.eq.s32.totalorder %s25, 0
    %p207 = por %p205, %p206
    %p208 = scmp.ne.s32.totalorder %s196, %s197
    %p209 = scmp.eq.s32.totalorder %s26, 1
    %p210 = por %p208, %p209
    %p212 = scmp.ne.s32.totalorder %s197, %s211
    %p213 = scmp.eq.s32.totalorder %s26, 0
    %p214 = por %p212, %p213
    %s216 = sadd.s32 %s215, 1
    %p219 = scmp.eq.s32.totalorder %s20, 1
    %p220 = scmp.ne.s32.totalorder %s215, %s217
    %p221 = scmp.eq.s32.totalorder %s20, 0
    %p222 = por %p220, %p221
    %p223 = scmp.ne.s32.totalorder %s215, %s217
    %p224 = scmp.eq.s32.totalorder %s25, 1
    %p225 = por %p223, %p224
    %p226 = scmp.ne.s32.totalorder %s217, %s218
    %p227 = scmp.eq.s32.totalorder %s25, 0
    %p228 = por %p226, %p227
    %p229 = scmp.ne.s32.totalorder %s217, %s218
    %p230 = scmp.eq.s32.totalorder %s26, 1
    %p231 = por %p229, %p230
    %p233 = scmp.ne.s32.totalorder %s218, %s232
    %p234 = scmp.eq.s32.totalorder %s26, 0
    %p235 = por %p233, %p234
    %s237 = sadd.s32 %s236, 1
    %p240 = scmp.eq.s32.totalorder %s20, 1
    %p241 = scmp.ne.s32.totalorder %s236, %s238
    %p242 = scmp.eq.s32.totalorder %s20, 0
    %p243 = por %p241, %p242
    %p244 = scmp.ne.s32.totalorder %s236, %s238
    %p245 = scmp.eq.s32.totalorder %s25, 1
    %p246 = por %p244, %p245
    %p247 = scmp.ne.s32.totalorder %s238, %s239
    %p248 = scmp.eq.s32.totalorder %s25, 0
    %p249 = por %p247, %p248
    %p250 = scmp.ne.s32.totalorder %s238, %s239
    %p251 = scmp.eq.s32.totalorder %s26, 1
    %p252 = por %p250, %p251
    %p254 = scmp.ne.s32.totalorder %s239, %s253
    %p255 = scmp.eq.s32.totalorder %s26, 0
    %p256 = por %p254, %p255
    %s258 = sadd.s32 %s257, 1
    %p261 = scmp.eq.s32.totalorder %s20, 1
    %p262 = scmp.ne.s32.totalorder %s257, %s259
    %p263 = scmp.eq.s32.totalorder %s20, 0
    %p264 = por %p262, %p263
    %p265 = scmp.ne.s32.totalorder %s257, %s259
    %p266 = scmp.eq.s32.totalorder %s25, 1
    %p267 = por %p265, %p266
    %p268 = scmp.ne.s32.totalorder %s259, %s260
    %p269 = scmp.eq.s32.totalorder %s25, 0
    %p270 = por %p268, %p269
    %p271 = scmp.ne.s32.totalorder %s259, %s260
    %p272 = scmp.eq.s32.totalorder %s26, 1
    %p273 = por %p271, %p272
    %p275 = scmp.ne.s32.totalorder %s260, %s274
    %p276 = scmp.eq.s32.totalorder %s26, 0
    %p277 = por %p275, %p276
    %s279 = sadd.s32 %s278, 1
    %p282 = scmp.eq.s32.totalorder %s20, 1
    %p283 = scmp.ne.s32.totalorder %s278, %s280
    %p284 = scmp.eq.s32.totalorder %s20, 0
    %p285 = por %p283, %p284
    %p286 = scmp.ne.s32.totalorder %s278, %s280
    %p287 = scmp.eq.s32.totalorder %s25, 1
    %p288 = por %p286, %p287
    %p289 = scmp.ne.s32.totalorder %s280, %s281
    %p290 = scmp.eq.s32.totalorder %s25, 0
    %p291 = por %p289, %p290
    %p292 = scmp.ne.s32.totalorder %s280, %s281
    %p293 = scmp.eq.s32.totalorder %s26, 1
    %p294 = por %p292, %p293
    %p296 = scmp.ne.s32.totalorder %s281, %s295
    %p297 = scmp.eq.s32.totalorder %s26, 0
    %p298 = por %p296, %p297
    %s300 = sadd.s32 %s299, 1
    %p303 = scmp.eq.s32.totalorder %s20, 1
    %p304 = scmp.ne.s32.totalorder %s299, %s301
    %p305 = scmp.eq.s32.totalorder %s20, 0
    %p306 = por %p304, %p305
    %p307 = scmp.ne.s32.totalorder %s299, %s301
    %p308 = scmp.eq.s32.totalorder %s25, 1
    %p309 = por %p307, %p308
    %p310 = scmp.ne.s32.totalorder %s301, %s302
    %p311 = scmp.eq.s32.totalorder %s25, 0
    %p312 = por %p310, %p311
    %p313 = scmp.ne.s32.totalorder %s301, %s302
    %p314 = scmp.eq.s32.totalorder %s26, 1
    %p315 = por %p313, %p314
    %p317 = scmp.ne.s32.totalorder %s302, %s316
    %p318 = scmp.eq.s32.totalorder %s26, 0
    %p319 = por %p317, %p318
    %s321 = sadd.s32 %s320, 1
    %p324 = scmp.eq.s32.totalorder %s20, 1
    %p325 = scmp.ne.s32.totalorder %s320, %s322
    %p326 = scmp.eq.s32.totalorder %s20, 0
    %p327 = por %p325, %p326
    %p328 = scmp.ne.s32.totalorder %s320, %s322
    %p329 = scmp.eq.s32.totalorder %s25, 1
    %p330 = por %p328, %p329
    %p331 = scmp.ne.s32.totalorder %s322, %s323
    %p332 = scmp.eq.s32.totalorder %s25, 0
    %p333 = por %p331, %p332
    %p334 = scmp.ne.s32.totalorder %s322, %s323
    %p335 = scmp.eq.s32.totalorder %s26, 1
    %p336 = por %p334, %p335
    %p338 = scmp.ne.s32.totalorder %s323, %s337
    %p339 = scmp.eq.s32.totalorder %s26, 0
    %p340 = por %p338, %p339
    %s341 = ssub.s32 %s27, %s39
    %s342 = ssub.s32 %s28, %s35
    %s343 = sor.u32 %s341, %s342
    %p344 = scmp.eq.s32.totalorder %s343, 0
    %s346 = sadd.s32 %s345, 1
    %s347 = scalar_select %p344, %s345, %s346
    %p350 = pneg %p344
    %p351 = scmp.eq.s32.totalorder %s20, 1
    %p352 = por %p350, %p351
    %p353 = scmp.ne.s32.totalorder %s345, %s348
    %p354 = scmp.eq.s32.totalorder %s20, 0
    %p355 = por %p353, %p354
    %p356 = scmp.ne.s32.totalorder %s345, %s348
    %p357 = scmp.eq.s32.totalorder %s25, 1
    %p358 = por %p356, %p357
    %p359 = scmp.ne.s32.totalorder %s348, %s349
    %p360 = scmp.eq.s32.totalorder %s25, 0
    %p361 = por %p359, %p360
    %p362 = scmp.ne.s32.totalorder %s348, %s349
    %p363 = scmp.eq.s32.totalorder %s26, 1
    %p364 = por %p362, %p363
    %p366 = scmp.ne.s32.totalorder %s349, %s365
    %p367 = scmp.eq.s32.totalorder %s26, 0
    %p368 = por %p366, %p367
    %p369 = scmp.le.s32.totalorder 1, %s20
    %p370 = scmp.lt.s32.totalorder %s20, 3
    %p371 = pnand %p369, %p370
    %p372 = pneg %p371
    // Predicated region
    $region9: #{swin_forward.10} parent=5 // pred_check
      _
    $region10: #{swin_forward.10} parent=5 // pred_check_branch
      %374 = sbr.rel (%p371) target = $region12
    $region11: #{swin_forward.10} parent=5 // pred_region
      %s375 = ssub.s32 %s20, 1
      // Predicated region
      $region13: #{swin_forward.10} parent=11 // pred_check
        %p376 = pneg %p81
      $region14: #{swin_forward.10} parent=11 // pred_check_branch
        %378 = sbr.rel (%p376) target = $region16
      $region15: #{swin_forward.10} parent=11 // pred_region
        _
      $region16: #{swin_forward.10} parent=11 // pred_fallthru
        _
      // Predicated region
      $region17: #{swin_forward.10} parent=11 // pred_check
        %p379 = pneg %p102
      $region18: #{swin_forward.10} parent=11 // pred_check_branch
        %381 = sbr.rel (%p379) target = $region20
      $region19: #{swin_forward.10} parent=11 // pred_region
        _
      $region20: #{swin_forward.10} parent=11 // pred_fallthru
        _
      // Predicated region
      $region21: #{swin_forward.10} parent=11 // pred_check
        %p382 = pneg %p123
      $region22: #{swin_forward.10} parent=11 // pred_check_branch
        %384 = sbr.rel (%p382) target = $region24
      $region23: #{swin_forward.10} parent=11 // pred_region
        _
      $region24: #{swin_forward.10} parent=11 // pred_fallthru
        _
      // Predicated region
      $region25: #{swin_forward.10} parent=11 // pred_check
        %p385 = pneg %p144
      $region26: #{swin_forward.10} parent=11 // pred_check_branch
        %387 = sbr.rel (%p385) target = $region28
      $region27: #{swin_forward.10} parent=11 // pred_region
        _
      $region28: #{swin_forward.10} parent=11 // pred_fallthru
        _
      // Predicated region
      $region29: #{swin_forward.10} parent=11 // pred_check
        %p388 = pneg %p165
      $region30: #{swin_forward.10} parent=11 // pred_check_branch
        %390 = sbr.rel (%p388) target = $region32
      $region31: #{swin_forward.10} parent=11 // pred_region
        _
      $region32: #{swin_forward.10} parent=11 // pred_fallthru
        _
      // Predicated region
      $region33: #{swin_forward.10} parent=11 // pred_check
        %p391 = pneg %p186
      $region34: #{swin_forward.10} parent=11 // pred_check_branch
        %393 = sbr.rel (%p391) target = $region36
      $region35: #{swin_forward.10} parent=11 // pred_region
        _
      $region36: #{swin_forward.10} parent=11 // pred_fallthru
        _
      // Predicated region
      $region37: #{swin_forward.10} parent=11 // pred_check
        %p394 = pneg %p207
      $region38: #{swin_forward.10} parent=11 // pred_check_branch
        %396 = sbr.rel (%p394) target = $region40
      $region39: #{swin_forward.10} parent=11 // pred_region
        _
      $region40: #{swin_forward.10} parent=11 // pred_fallthru
        _
      // Predicated region
      $region41: #{swin_forward.10} parent=11 // pred_check
        %p397 = pneg %p228
      $region42: #{swin_forward.10} parent=11 // pred_check_branch
        %399 = sbr.rel (%p397) target = $region44
      $region43: #{swin_forward.10} parent=11 // pred_region
        _
      $region44: #{swin_forward.10} parent=11 // pred_fallthru
        _
      // Predicated region
      $region45: #{swin_forward.10} parent=11 // pred_check
        %p400 = pneg %p249
      $region46: #{swin_forward.10} parent=11 // pred_check_branch
        %402 = sbr.rel (%p400) target = $region48
      $region47: #{swin_forward.10} parent=11 // pred_region
        _
      $region48: #{swin_forward.10} parent=11 // pred_fallthru
        _
      // Predicated region
      $region49: #{swin_forward.10} parent=11 // pred_check
        %p403 = pneg %p270
      $region50: #{swin_forward.10} parent=11 // pred_check_branch
        %405 = sbr.rel (%p403) target = $region52
      $region51: #{swin_forward.10} parent=11 // pred_region
        _
      $region52: #{swin_forward.10} parent=11 // pred_fallthru
        _
      // Predicated region
      $region53: #{swin_forward.10} parent=11 // pred_check
        %p406 = pneg %p291
      $region54: #{swin_forward.10} parent=11 // pred_check_branch
        %408 = sbr.rel (%p406) target = $region56
      $region55: #{swin_forward.10} parent=11 // pred_region
        _
      $region56: #{swin_forward.10} parent=11 // pred_fallthru
        _
      // Predicated region
      $region57: #{swin_forward.10} parent=11 // pred_check
        %p409 = pneg %p312
      $region58: #{swin_forward.10} parent=11 // pred_check_branch
        %411 = sbr.rel (%p409) target = $region60
      $region59: #{swin_forward.10} parent=11 // pred_region
        _
      $region60: #{swin_forward.10} parent=11 // pred_fallthru
        _
      // Predicated region
      $region61: #{swin_forward.10} parent=11 // pred_check
        %p412 = pneg %p333
      $region62: #{swin_forward.10} parent=11 // pred_check_branch
        %414 = sbr.rel (%p412) target = $region64
      $region63: #{swin_forward.10} parent=11 // pred_region
        _
      $region64: #{swin_forward.10} parent=11 // pred_fallthru
        _
    $region12: #{swin_forward.10} parent=5 // pred_fallthru
      _
    %p415 = scmp.lt.s32.totalorder %s20, 2
    // Predicated region
    $region65: #{swin_forward.10} parent=5 // pred_check
      %p416 = pneg %p415
    $region66: #{swin_forward.10} parent=5 // pred_check_branch
      %418 = sbr.rel (%p416) target = $region68
    $region67: #{swin_forward.10} parent=5 // pred_region
      // Predicated region
      $region69: #{swin_forward.10} parent=67 // pred_check
        %p419 = pneg %p54
      $region70: #{swin_forward.10} parent=67 // pred_check_branch
        %421 = sbr.rel (%p419) target = $region72
      $region71: #{swin_forward.10} parent=67 // pred_region
        %p422 = scmp.lt.s32.totalorder %s27, 1
        %s423 = scalar_select %p422, %s27, 1
        %p424 = scmp.lt.s32.totalorder %s28, 0
        %s425 = scalar_select %p424, %s28, 0
        %s426 = smul.addr %s425, 2
        %s427 = smul.addr %s423, 2
        %s428 = sadd.s32 %s426, %s427
        %s429 = smul.addr %s428, 4
        %s430 = scalar_lea.vmem %s0, %s429
      $region72: #{swin_forward.10} parent=67 // pred_fallthru
        _
    $region68: #{swin_forward.10} parent=5 // pred_fallthru
      _
    %p431 = scmp.le.s32.totalorder 1, %s20
    %p432 = scmp.lt.s32.totalorder %s20, 3
    %p433 = pnand %p431, %p432
    %p434 = pneg %p433
    // Predicated region
    $region73: #{swin_forward.10} parent=5 // pred_check
      _
    $region74: #{swin_forward.10} parent=5 // pred_check_branch
      %436 = sbr.rel (%p433) target = $region76
    $region75: #{swin_forward.10} parent=5 // pred_region
      %s437 = ssub.s32 %s20, 1
      %p438 = scmp.lt.s32.totalorder %s29, 1
      %s439 = scalar_select %p438, %s29, 1
      %p440 = scmp.lt.s32.totalorder %s30, 0
      %s441 = scalar_select %p440, %s30, 0
      %s442 = smul.addr %s441, 2
      %s443 = smul.addr %s439, 2
      %s444 = sadd.s32 %s442, %s443
      %s445 = smul.addr %s444, 4
      %s446 = scalar_lea.vmem %s0, %s445
      %p447 = pneg %p60
      %p448 = pneg %p57
      %p449 = pneg %p81
      %p450 = pneg %p78
      %p451 = pneg %p102
      %p452 = pneg %p99
      %p453 = pneg %p123
      %p454 = pneg %p120
      %p455 = pneg %p144
      %p456 = pneg %p141
      %p457 = pneg %p165
      %p458 = pneg %p162
      %p459 = pneg %p186
      %p460 = pneg %p183
      %p461 = pneg %p207
      %p462 = pneg %p204
      %p463 = pneg %p228
      %p464 = pneg %p225
      %p465 = pneg %p249
      %p466 = pneg %p246
      %p467 = pneg %p270
      %p468 = pneg %p267
      %p469 = pneg %p291
      %p470 = pneg %p288
      %p471 = pneg %p312
      %p472 = pneg %p309
      %p473 = pneg %p333
      %p474 = pneg %p330
      %p475 = pneg %p361
      %p476 = pneg %p358
      %p477 = scmp.lt.s32.totalorder %s29, 1
      %s478 = scalar_select %p477, %s29, 1
      %p479 = scmp.lt.s32.totalorder %s30, 0
      %s480 = scalar_select %p479, %s30, 0
      %s481 = smul.addr %s480, 2
      %s482 = smul.addr %s478, 2
      %s483 = sadd.s32 %s481, %s482
      %s484 = smul.addr %s483, 4
      %s485 = scalar_lea.vmem %s14, %s484
      %p486 = scmp.lt.s32.totalorder %s29, 1
      %s487 = scalar_select %p486, %s29, 1
      %p488 = scmp.lt.s32.totalorder %s30, 0
      %s489 = scalar_select %p488, %s30, 0
      %s490 = smul.addr %s489, 2
      %s491 = smul.addr %s487, 2
      %s492 = sadd.s32 %s490, %s491
      %s493 = smul.addr %s492, 4
      %s494 = scalar_lea.vmem %s0, %s493
      %p495 = scmp.lt.s32.totalorder %s29, 1
      %s496 = scalar_select %p495, %s29, 1
      %p497 = scmp.lt.s32.totalorder %s30, 0
      %s498 = scalar_select %p497, %s30, 0
      %s499 = smul.addr %s498, 2
      %s500 = smul.addr %s496, 2
      %s501 = sadd.s32 %s499, %s500
      %s502 = smul.addr %s501, 4
      %s503 = scalar_lea.vmem %s14, %s502
      %v505 = vld [vmem:[%s494] sm:$0xf]
      %v506 = vld [vmem:[%s494 + $0x4] sm:$0xf]
      %v507 = vunpack.c.l.bf16 %v505
      %v508 = vunpack.c.l.bf16 %v506
      %v509 = vld [vmem:[%s1] sm:$0x1]
      %v510 = vld [vmem:[%s2] sm:$0x1]
      %vm511 = vcmask 261120
      %v512 = vsel %vm511, %v507, 0.0
      %513 = vadd.xlane.f32.xlu0 %v512
      %v514 = vpop.xlane.xlu0 %513
      %v515 = vsel %vm511, %v508, 0.0
      %516 = vadd.xlane.f32.xlu0 %v515
      %v517 = vpop.xlane.xlu0 %516
      %v518 = vrcp.pop 32.0
      %v519 = vmul.f32 %v514, %v518
      %v520 = vmul.f32 %v517, %v518
      %v521 = vsub.f32 %v507, %v519
      %v522 = vsub.f32 %v508, %v520
      %v523 = vmul.f32 %v521, %v521
      %v524 = vmul.f32 %v522, %v522
      %v525 = vsel %vm511, %v523, 0.0
      %526 = vadd.xlane.f32.xlu0 %v525
      %v527 = vpop.xlane.xlu0 %526
      %v528 = vsel %vm511, %v524, 0.0
      %529 = vadd.xlane.f32.xlu0 %v528
      %v530 = vpop.xlane.xlu0 %529
      %v531 = vmul.f32 %v527, %v518
      %v532 = vmul.f32 %v530, %v518
      %v533 = vadd.f32 %v531, 1e-05
      %v534 = vadd.f32 %v532, 1e-05
      %v535 = vrsqrt.pop %v533
      %v536 = vrsqrt.pop %v534
      %v537 = vmul.f32 %v521, %v535
      %v538 = vmul.f32 %v522, %v536
      %v540 = vlaneseq
      %v541 = vshrl.u32 %v540, 7
      %v542 = vsub.s32 0, %v541
      %v543 = vrot.slane %v509, %v542
      %v545 = vmul.f32 %v537, %v543
      %v546 = vmul.f32 %v538, %v543
      %v548 = vlaneseq
      %v549 = vshrl.u32 %v548, 7
      %v550 = vsub.s32 0, %v549
      %v551 = vrot.slane %v510, %v550
      %v553 = vadd.f32 %v545, %v551
      %v554 = vadd.f32 %v546, %v551
      %v555 = vpack.c.bf16 %v554, %v553
      %v556 = vld [vmem:[%s3] sm:$0xf]
      %v557 = vld [vmem:[%s3 + $0x4] sm:$0xf]
      %v558 = vld [vmem:[%s3 + $0x8] sm:$0xf]
      %v559 = vld [vmem:[%s3 + $0xc] sm:$0xf]
      %v560 = vld [vmem:[%s4] sm:$0x1]
      %v562 = vlaneseq
      %v563 = vshrl.u32 %v562, 7
      %v564 = vsub.s32 0, %v563
      %v565 = vrot.slane %v560, %v564
      %v571 = vunpack.c.l.b16 %v556
      %v572 = vunpack.c.l.b16 %v557
      %v573 = vunpack.c.l.b16 %v558
      %v574 = vunpack.c.l.b16 %v559
      %v575 = vpack.c.b16 %v572, %v571
      %v576 = vpack.c.b16 %v574, %v573
      %v580 = vsel %vm511, %v555, 0
      %582 = vmatprep.subr.bf16.mxu0 0
      %583 = vmatpush1.bf16.msra.mxu0 %v575
      %584 = vmatprep.subr.bf16.mxu0 0
      %585 = vmatpush1.bf16.msra.mxu0 %v576
      %586 = vmatprep.subr.bf16.mxu0 0
      %587 = vmatpush1.bf16.msra.mxu0 0
      %588 = vmatprep.subr.bf16.mxu0 0
      %589 = vmatpush1.bf16.msra.mxu0 0
      %590 = vmatprep.subr.bf16.mxu0 0
      %591 = vmatpush1.bf16.msra.mxu0 0
      %592 = vmatprep.subr.bf16.mxu0 0
      %593 = vmatpush1.bf16.msra.mxu0 0
      %594 = vmatprep.subr.bf16.mxu0 0
      %595 = vmatpush1.bf16.msra.mxu0 0
      %596 = vmatprep.subr.bf16.mxu0 0
      %597 = vmatpush1.bf16.msra.mxu0 0
      %598 = vmatprep.subr.bf16.mxu0 0
      %599 = vmatpush1.bf16.msra.mxu0 0
      %600 = vmatprep.subr.bf16.mxu0 0
      %601 = vmatpush1.bf16.msra.mxu0 0
      %602 = vmatprep.subr.bf16.mxu0 0
      %603 = vmatpush1.bf16.msra.mxu0 0
      %604 = vmatprep.subr.bf16.mxu0 0
      %605 = vmatpush1.bf16.msra.mxu0 0
      %606 = vmatprep.subr.bf16.mxu0 0
      %607 = vmatpush1.bf16.msra.mxu0 0
      %608 = vmatprep.subr.bf16.mxu0 0
      %609 = vmatpush1.bf16.msra.mxu0 0
      %610 = vmatprep.subr.bf16.mxu0 0
      %611 = vmatpush1.bf16.msra.mxu0 0
      %612 = vmatprep.subr.bf16.mxu0 0
      %613 = vmatpush1.bf16.msra.mxu0 0
      %614 = vmatprep.mubr.bf16.mxu0 0
      %615 = vmatmul.mubr.bf16.gmra.mrb[0].mxu0 %v580
      %v616 = vpop.f32.mrb[0].mxu0
      %v617 = vadd.f32 %v565, %v616
      %v618 = vpop.f32.mrb[0].mxu0
      %v619 = vpop.f32.mrb[0].mxu0
      %v620 = vadd.f32 %v565, %v619
      %v621 = vpop.f32.mrb[0].mxu0
      %622 = vdwg.mxu0
      %625 = vrot.lane.b32.xlu0 %v617, 120
      %v626 = vpop.permute.xlu0 %625
      %627 = vrot.lane.b32.xlu0 %v620, 120
      %v628 = vpop.permute.xlu0 %627
      %631 = vrot.lane.b32.xlu0 %v617, 112
      %v632 = vpop.permute.xlu0 %631
      %633 = vrot.lane.b32.xlu0 %v620, 112
      %v634 = vpop.permute.xlu0 %633
      %637 = vrot.lane.b32.xlu0 %v617, 104
      %v638 = vpop.permute.xlu0 %637
      %639 = vrot.lane.b32.xlu0 %v620, 104
      %v640 = vpop.permute.xlu0 %639
      %v643 = vpack.c.bf16 %v620, %v617
      %v644 = vpack.c.bf16 %v628, %v626
      %v645 = vpack.c.bf16 %v634, %v632
      %v646 = vpack.c.bf16 %v640, %v638
      %648 = vrot.lane.b32.xlu0 %v643, 96
      %v649 = vpop.permute.xlu0 %648
      %vm650 = vcmask 64512
      %v652 = vsel %vm650, %v643, 0
      %v655 = vsel %vm650, %v649, 0
      %657 = vmatprep.subr.bf16.mxu0 0
      %658 = vmatpush1.bf16.xpose.msra.mxu0 %v655
      %659 = vmatprep.subr.bf16.mxu0 0
      %660 = vmatpush1.bf16.xpose.msra.mxu0 0
      %661 = vmatprep.subr.bf16.mxu0 0
      %662 = vmatpush1.bf16.xpose.msra.mxu0 0
      %663 = vmatprep.subr.bf16.mxu0 0
      %664 = vmatpush1.bf16.xpose.msra.mxu0 0
      %665 = vmatprep.subr.bf16.mxu0 0
      %666 = vmatpush1.bf16.xpose.msra.mxu0 0
      %667 = vmatprep.subr.bf16.mxu0 0
      %668 = vmatpush1.bf16.xpose.msra.mxu0 0
      %669 = vmatprep.subr.bf16.mxu0 0
      %670 = vmatpush1.bf16.xpose.msra.mxu0 0
      %671 = vmatprep.subr.bf16.mxu0 0
      %672 = vmatpush1.bf16.xpose.msra.mxu0 0
      %673 = vmatprep.subr.bf16.mxu0 0
      %674 = vmatpush1.bf16.xpose.msra.mxu0 0
      %675 = vmatprep.subr.bf16.mxu0 0
      %676 = vmatpush1.bf16.xpose.msra.mxu0 0
      %677 = vmatprep.subr.bf16.mxu0 0
      %678 = vmatpush1.bf16.xpose.msra.mxu0 0
      %679 = vmatprep.subr.bf16.mxu0 0
      %680 = vmatpush1.bf16.xpose.msra.mxu0 0
      %681 = vmatprep.subr.bf16.mxu0 0
      %682 = vmatpush1.bf16.xpose.msra.mxu0 0
      %683 = vmatprep.subr.bf16.mxu0 0
      %684 = vmatpush1.bf16.xpose.msra.mxu0 0
      %685 = vmatprep.subr.bf16.mxu0 0
      %686 = vmatpush1.bf16.xpose.msra.mxu0 0
      %687 = vmatprep.subr.bf16.mxu0 0
      %688 = vmatpush1.bf16.xpose.msra.mxu0 0
      %689 = vmatprep.mubr.bf16.mxu0 0
      %690 = vmatmul.mubr.bf16.gmra.mrb[0].mxu0 %v652
      %v691 = vpop.f32.mrb[0].mxu0
      %v692 = vadd.f32 0.0, %v691
      %v693 = vpop.f32.mrb[0].mxu0
      %v694 = vpop.f32.mrb[0].mxu0
      %v695 = vadd.f32 0.0, %v694
      %v696 = vpop.f32.mrb[0].mxu0
      %697 = vdwg.mxu0
      %699 = vrot.lane.b32.xlu0 %v644, 96
      %v700 = vpop.permute.xlu0 %699
      %v702 = vsel %vm650, %v644, 0
      %v705 = vsel %vm650, %v700, 0
      %707 = vmatprep.subr.bf16.mxu0 0
      %708 = vmatpush1.bf16.xpose.msra.mxu0 %v705
      %709 = vmatprep.subr.bf16.mxu0 0
      %710 = vmatpush1.bf16.xpose.msra.mxu0 0
      %711 = vmatprep.subr.bf16.mxu0 0
      %712 = vmatpush1.bf16.xpose.msra.mxu0 0
      %713 = vmatprep.subr.bf16.mxu0 0
      %714 = vmatpush1.bf16.xpose.msra.mxu0 0
      %715 = vmatprep.subr.bf16.mxu0 0
      %716 = vmatpush1.bf16.xpose.msra.mxu0 0
      %717 = vmatprep.subr.bf16.mxu0 0
      %718 = vmatpush1.bf16.xpose.msra.mxu0 0
      %719 = vmatprep.subr.bf16.mxu0 0
      %720 = vmatpush1.bf16.xpose.msra.mxu0 0
      %721 = vmatprep.subr.bf16.mxu0 0
      %722 = vmatpush1.bf16.xpose.msra.mxu0 0
      %723 = vmatprep.subr.bf16.mxu0 0
      %724 = vmatpush1.bf16.xpose.msra.mxu0 0
      %725 = vmatprep.subr.bf16.mxu0 0
      %726 = vmatpush1.bf16.xpose.msra.mxu0 0
      %727 = vmatprep.subr.bf16.mxu0 0
      %728 = vmatpush1.bf16.xpose.msra.mxu0 0
      %729 = vmatprep.subr.bf16.mxu0 0
      %730 = vmatpush1.bf16.xpose.msra.mxu0 0
      %731 = vmatprep.subr.bf16.mxu0 0
      %732 = vmatpush1.bf16.xpose.msra.mxu0 0
      %733 = vmatprep.subr.bf16.mxu0 0
      %734 = vmatpush1.bf16.xpose.msra.mxu0 0
      %735 = vmatprep.subr.bf16.mxu0 0
      %736 = vmatpush1.bf16.xpose.msra.mxu0 0
      %737 = vmatprep.subr.bf16.mxu0 0
      %738 = vmatpush1.bf16.xpose.msra.mxu0 0
      %739 = vmatprep.mubr.bf16.mxu0 0
      %740 = vmatmul.mubr.bf16.gmra.mrb[0].mxu0 %v702
      %v741 = vpop.f32.mrb[0].mxu0
      %v742 = vadd.f32 0.0, %v741
      %v743 = vpop.f32.mrb[0].mxu0
      %v744 = vpop.f32.mrb[0].mxu0
      %v745 = vadd.f32 0.0, %v744
      %v746 = vpop.f32.mrb[0].mxu0
      %747 = vdwg.mxu0
      %749 = vrot.lane.b32.xlu0 %v645, 96
      %v750 = vpop.permute.xlu0 %749
      %v752 = vsel %vm650, %v645, 0
      %v755 = vsel %vm650, %v750, 0
      %757 = vmatprep.subr.bf16.mxu0 0
      %758 = vmatpush1.bf16.xpose.msra.mxu0 %v755
      %759 = vmatprep.subr.bf16.mxu0 0
      %760 = vmatpush1.bf16.xpose.msra.mxu0 0
      %761 = vmatprep.subr.bf16.mxu0 0
      %762 = vmatpush1.bf16.xpose.msra.mxu0 0
      %763 = vmatprep.subr.bf16.mxu0 0
      %764 = vmatpush1.bf16.xpose.msra.mxu0 0
      %765 = vmatprep.subr.bf16.mxu0 0
      %766 = vmatpush1.bf16.xpose.msra.mxu0 0
      %767 = vmatprep.subr.bf16.mxu0 0
      %768 = vmatpush1.bf16.xpose.msra.mxu0 0
      %769 = vmatprep.subr.bf16.mxu0 0
      %770 = vmatpush1.bf16.xpose.msra.mxu0 0
      %771 = vmatprep.subr.bf16.mxu0 0
      %772 = vmatpush1.bf16.xpose.msra.mxu0 0
      %773 = vmatprep.subr.bf16.mxu0 0
      %774 = vmatpush1.bf16.xpose.msra.mxu0 0
      %775 = vmatprep.subr.bf16.mxu0 0
      %776 = vmatpush1.bf16.xpose.msra.mxu0 0
      %777 = vmatprep.subr.bf16.mxu0 0
      %778 = vmatpush1.bf16.xpose.msra.mxu0 0
      %779 = vmatprep.subr.bf16.mxu0 0
      %780 = vmatpush1.bf16.xpose.msra.mxu0 0
      %781 = vmatprep.subr.bf16.mxu0 0
      %782 = vmatpush1.bf16.xpose.msra.mxu0 0
      %783 = vmatprep.subr.bf16.mxu0 0
      %784 = vmatpush1.bf16.xpose.msra.mxu0 0
      %785 = vmatprep.subr.bf16.mxu0 0
      %786 = vmatpush1.bf16.xpose.msra.mxu0 0
      %787 = vmatprep.subr.bf16.mxu0 0
      %788 = vmatpush1.bf16.xpose.msra.mxu0 0
      %789 = vmatprep.mubr.bf16.mxu0 0
      %790 = vmatmul.mubr.bf16.gmra.mrb[0].mxu0 %v752
      %v791 = vpop.f32.mrb[0].mxu0
      %v792 = vadd.f32 0.0, %v791
      %v793 = vpop.f32.mrb[0].mxu0
      %v794 = vpop.f32.mrb[0].mxu0
      %v795 = vadd.f32 0.0, %v794
      %v796 = vpop.f32.mrb[0].mxu0
      %797 = vdwg.mxu0
      %799 = vrot.lane.b32.xlu0 %v646, 96
      %v800 = vpop.permute.xlu0 %799
      %v802 = vsel %vm650, %v646, 0
      %v805 = vsel %vm650, %v800, 0
      %807 = vmatprep.subr.bf16.mxu0 0
      %808 = vmatpush1.bf16.xpose.msra.mxu0 %v805
      %809 = vmatprep.subr.bf16.mxu0 0
      %810 = vmatpush1.bf16.xpose.msra.mxu0 0
      %811 = vmatprep.subr.bf16.mxu0 0
      %812 = vmatpush1.bf16.xpose.msra.mxu0 0
      %813 = vmatprep.subr.bf16.mxu0 0
      %814 = vmatpush1.bf16.xpose.msra.mxu0 0
      %815 = vmatprep.subr.bf16.mxu0 0
      %816 = vmatpush1.bf16.xpose.msra.mxu0 0
      %817 = vmatprep.subr.bf16.mxu0 0
      %818 = vmatpush1.bf16.xpose.msra.mxu0 0
      %819 = vmatprep.subr.bf16.mxu0 0
      %820 = vmatpush1.bf16.xpose.msra.mxu0 0
      %821 = vmatprep.subr.bf16.mxu0 0
      %822 = vmatpush1.bf16.xpose.msra.mxu0 0
      %823 = vmatprep.subr.bf16.mxu0 0
      %824 = vmatpush1.bf16.xpose.msra.mxu0 0
      %825 = vmatprep.subr.bf16.mxu0 0
      %826 = vmatpush1.bf16.xpose.msra.mxu0 0
      %827 = vmatprep.subr.bf16.mxu0 0
      %828 = vmatpush1.bf16.xpose.msra.mxu0 0
      %829 = vmatprep.subr.bf16.mxu0 0
      %830 = vmatpush1.bf16.xpose.msra.mxu0 0
      %831 = vmatprep.subr.bf16.mxu0 0
      %832 = vmatpush1.bf16.xpose.msra.mxu0 0
      %833 = vmatprep.subr.bf16.mxu0 0
      %834 = vmatpush1.bf16.xpose.msra.mxu0 0
      %835 = vmatprep.subr.bf16.mxu0 0
      %836 = vmatpush1.bf16.xpose.msra.mxu0 0
      %837 = vmatprep.subr.bf16.mxu0 0
      %838 = vmatpush1.bf16.xpose.msra.mxu0 0
      %839 = vmatprep.mubr.bf16.mxu0 0
      %840 = vmatmul.mubr.bf16.gmra.mrb[0].mxu0 %v802
      %v841 = vpop.f32.mrb[0].mxu0
      %v842 = vadd.f32 0.0, %v841
      %v843 = vpop.f32.mrb[0].mxu0
      %v844 = vpop.f32.mrb[0].mxu0
      %v845 = vadd.f32 0.0, %v844
      %v846 = vpop.f32.mrb[0].mxu0
      %847 = vdwg.mxu0
      %v848 = vld [vmem:[%s7] sm:$0xff]
      %v849 = vld [vmem:[%s7 + $0x8] sm:$0xff]
      %v850 = vld [vmem:[%s7 + $0x10] sm:$0xff]
      %v851 = vld [vmem:[%s7 + $0x18] sm:$0xff]
      %v852 = vld [vmem:[%s7 + $0x20] sm:$0xff]
      %v853 = vld [vmem:[%s7 + $0x28] sm:$0xff]
      %v854 = vld [vmem:[%s7 + $0x30] sm:$0xff]
      %v855 = vld [vmem:[%s7 + $0x38] sm:$0xff]
      %v856 = vadd.f32 %v692, %v848
      %v857 = vadd.f32 %v695, %v849
      %v858 = vadd.f32 %v742, %v850
      %v859 = vadd.f32 %v745, %v851
      %v860 = vadd.f32 %v792, %v852
      %v861 = vadd.f32 %v795, %v853
      %v862 = vadd.f32 %v842, %v854
      %v863 = vadd.f32 %v845, %v855
      %vm864 = vcmask 130048
      %v865 = vsel %vm864, %v856, -inf
      %866 = vmax.xlane.f32.xlu0 %v865
      %v867 = vpop.xlane.xlu0 %866
      %v868 = vsel %vm864, %v857, -inf
      %869 = vmax.xlane.f32.xlu0 %v868
      %v870 = vpop.xlane.xlu0 %869
      %v871 = vsel %vm864, %v858, -inf
      %872 = vmax.xlane.f32.xlu0 %v871
      %v873 = vpop.xlane.xlu0 %872
      %v874 = vsel %vm864, %v859, -inf
      %875 = vmax.xlane.f32.xlu0 %v874
      %v876 = vpop.xlane.xlu0 %875
      %v877 = vsel %vm864, %v860, -inf
      %878 = vmax.xlane.f32.xlu0 %v877
      %v879 = vpop.xlane.xlu0 %878
      %v880 = vsel %vm864, %v861, -inf
      %881 = vmax.xlane.f32.xlu0 %v880
      %v882 = vpop.xlane.xlu0 %881
      %v883 = vsel %vm864, %v862, -inf
      %884 = vmax.xlane.f32.xlu0 %v883
      %v885 = vpop.xlane.xlu0 %884
      %v886 = vsel %vm864, %v863, -inf
      %887 = vmax.xlane.f32.xlu0 %v886
      %v888 = vpop.xlane.xlu0 %887
      %v889 = vsub.f32 %v856, %v867
      %v890 = vsub.f32 %v857, %v870
      %v891 = vsub.f32 %v858, %v873
      %v892 = vsub.f32 %v859, %v876
      %v893 = vsub.f32 %v860, %v879
      %v894 = vsub.f32 %v861, %v882
      %v895 = vsub.f32 %v862, %v885
      %v896 = vsub.f32 %v863, %v888
      %v897 = vmul.f32 %v889, 1.442695
      %v898 = vpow.pop %v897
      %v899 = vmul.f32 %v890, 1.442695
      %v900 = vpow.pop %v899
      %v901 = vmul.f32 %v891, 1.442695
      %v902 = vpow.pop %v901
      %v903 = vmul.f32 %v892, 1.442695
      %v904 = vpow.pop %v903
      %v905 = vmul.f32 %v893, 1.442695
      %v906 = vpow.pop %v905
      %v907 = vmul.f32 %v894, 1.442695
      %v908 = vpow.pop %v907
      %v909 = vmul.f32 %v895, 1.442695
      %v910 = vpow.pop %v909
      %v911 = vmul.f32 %v896, 1.442695
      %v912 = vpow.pop %v911
      %v913 = vsel %vm864, %v898, 0.0
      %914 = vadd.xlane.f32.xlu0 %v913
      %v915 = vpop.xlane.xlu0 %914
      %v916 = vsel %vm864, %v900, 0.0
      %917 = vadd.xlane.f32.xlu0 %v916
      %v918 = vpop.xlane.xlu0 %917
      %v919 = vsel %vm864, %v902, 0.0
      %920 = vadd.xlane.f32.xlu0 %v919
      %v921 = vpop.xlane.xlu0 %920
      %v922 = vsel %vm864, %v904, 0.0
      %923 = vadd.xlane.f32.xlu0 %v922
      %v924 = vpop.xlane.xlu0 %923
      %v925 = vsel %vm864, %v906, 0.0
      %926 = vadd.xlane.f32.xlu0 %v925
      %v927 = vpop.xlane.xlu0 %926
      %v928 = vsel %vm864, %v908, 0.0
      %929 = vadd.xlane.f32.xlu0 %v928
      %v930 = vpop.xlane.xlu0 %929
      %v931 = vsel %vm864, %v910, 0.0
      %932 = vadd.xlane.f32.xlu0 %v931
      %v933 = vpop.xlane.xlu0 %932
      %v934 = vsel %vm864, %v912, 0.0
      %935 = vadd.xlane.f32.xlu0 %v934
      %v936 = vpop.xlane.xlu0 %935
      %v937 = vrcp.pop %v915
      %v938 = vrcp.pop %v918
      %v939 = vrcp.pop %v921
      %v940 = vrcp.pop %v924
      %v941 = vrcp.pop %v927
      %v942 = vrcp.pop %v930
      %v943 = vrcp.pop %v933
      %v944 = vrcp.pop %v936
      %v945 = vmul.f32 %v898, %v937
      %v946 = vmul.f32 %v900, %v938
      %v947 = vmul.f32 %v902, %v939
      %v948 = vmul.f32 %v904, %v940
      %v949 = vmul.f32 %v906, %v941
      %v950 = vmul.f32 %v908, %v942
      %v951 = vmul.f32 %v910, %v943
      %v952 = vmul.f32 %v912, %v944
      %v953 = vpack.c.bf16 %v946, %v945
      %v954 = vpack.c.bf16 %v948, %v947
      %v955 = vpack.c.bf16 %v950, %v949
      %v956 = vpack.c.bf16 %v952, %v951
      %957 = vrot.lane.b32.xlu0 %v643, 64
      %v958 = vpop.permute.xlu0 %957
      %v961 = vsel %vm864, %v953, 0
      %963 = vmatprep.subr.bf16.mxu0 0
      %964 = vmatpush1.bf16.msra.mxu0 %v958
      %965 = vmatprep.subr.bf16.mxu0 0
      %966 = vmatpush1.bf16.msra.mxu0 0
      %967 = vmatprep.subr.bf16.mxu0 0
      %968 = vmatpush1.bf16.msra.mxu0 0
      %969 = vmatprep.subr.bf16.mxu0 0
      %970 = vmatpush1.bf16.msra.mxu0 0
      %971 = vmatprep.subr.bf16.mxu0 0
      %972 = vmatpush1.bf16.msra.mxu0 0
      %973 = vmatprep.subr.bf16.mxu0 0
      %974 = vmatpush1.bf16.msra.mxu0 0
      %975 = vmatprep.subr.bf16.mxu0 0
      %976 = vmatpush1.bf16.msra.mxu0 0
      %977 = vmatprep.subr.bf16.mxu0 0
      %978 = vmatpush1.bf16.msra.mxu0 0
      %979 = vmatprep.subr.bf16.mxu0 0
      %980 = vmatpush1.bf16.msra.mxu0 0
      %981 = vmatprep.subr.bf16.mxu0 0
      %982 = vmatpush1.bf16.msra.mxu0 0
      %983 = vmatprep.subr.bf16.mxu0 0
      %984 = vmatpush1.bf16.msra.mxu0 0
      %985 = vmatprep.subr.bf16.mxu0 0
      %986 = vmatpush1.bf16.msra.mxu0 0
      %987 = vmatprep.subr.bf16.mxu0 0
      %988 = vmatpush1.bf16.msra.mxu0 0
      %989 = vmatprep.subr.bf16.mxu0 0
      %990 = vmatpush1.bf16.msra.mxu0 0
      %991 = vmatprep.subr.bf16.mxu0 0
      %992 = vmatpush1.bf16.msra.mxu0 0
      %993 = vmatprep.subr.bf16.mxu0 0
      %994 = vmatpush1.bf16.msra.mxu0 0
      %995 = vmatprep.mubr.bf16.mxu0 0
      %996 = vmatmul.mubr.bf16.gmra.mrb[0].mxu0 %v961
      %v997 = vpop.f32.mrb[0].mxu0
      %v998 = vadd.f32 0.0, %v997
      %v999 = vpop.f32.mrb[0].mxu0
      %v1000 = vpop.f32.mrb[0].mxu0
      %v1001 = vadd.f32 0.0, %v1000
      %v1002 = vpop.f32.mrb[0].mxu0
      %1003 = vdwg.mxu0
      %1004 = vrot.lane.b32.xlu0 %v644, 64
      %v1005 = vpop.permute.xlu0 %1004
      %v1008 = vsel %vm864, %v954, 0
      %1010 = vmatprep.subr.bf16.mxu0 0
      %1011 = vmatpush1.bf16.msra.mxu0 %v1005
      %1012 = vmatprep.subr.bf16.mxu0 0
      %1013 = vmatpush1.bf16.msra.mxu0 0
      %1014 = vmatprep.subr.bf16.mxu0 0
      %1015 = vmatpush1.bf16.msra.mxu0 0
      %1016 = vmatprep.subr.bf16.mxu0 0
      %1017 = vmatpush1.bf16.msra.mxu0 0
      %1018 = vmatprep.subr.bf16.mxu0 0
      %1019 = vmatpush1.bf16.msra.mxu0 0
      %1020 = vmatprep.subr.bf16.mxu0 0
      %1021 = vmatpush1.bf16.msra.mxu0 0
      %1022 = vmatprep.subr.bf16.mxu0 0
      %1023 = vmatpush1.bf16.msra.mxu0 0
      %1024 = vmatprep.subr.bf16.mxu0 0
      %1025 = vmatpush1.bf16.msra.mxu0 0
      %1026 = vmatprep.subr.bf16.mxu0 0
      %1027 = vmatpush1.bf16.msra.mxu0 0
      %1028 = vmatprep.subr.bf16.mxu0 0
      %1029 = vmatpush1.bf16.msra.mxu0 0
      %1030 = vmatprep.subr.bf16.mxu0 0
      %1031 = vmatpush1.bf16.msra.mxu0 0
      %1032 = vmatprep.subr.bf16.mxu0 0
      %1033 = vmatpush1.bf16.msra.mxu0 0
      %1034 = vmatprep.subr.bf16.mxu0 0
      %1035 = vmatpush1.bf16.msra.mxu0 0
      %1036 = vmatprep.subr.bf16.mxu0 0
      %1037 = vmatpush1.bf16.msra.mxu0 0
      %1038 = vmatprep.subr.bf16.mxu0 0
      %1039 = vmatpush1.bf16.msra.mxu0 0
      %1040 = vmatprep.subr.bf16.mxu0 0
      %1041 = vmatpush1.bf16.msra.mxu0 0
      %1042 = vmatprep.mubr.bf16.mxu0 0
      %1043 = vmatmul.mubr.bf16.gmra.mrb[0].mxu0 %v1008
      %v1044 = vpop.f32.mrb[0].mxu0
      %v1045 = vadd.f32 0.0, %v1044
      %v1046 = vpop.f32.mrb[0].mxu0
      %v1047 = vpop.f32.mrb[0].mxu0
      %v1048 = vadd.f32 0.0, %v1047
      %v1049 = vpop.f32.mrb[0].mxu0
      %1050 = vdwg.mxu0
      %1051 = vrot.lane.b32.xlu0 %v645, 64
      %v1052 = vpop.permute.xlu0 %1051
      %v1055 = vsel %vm864, %v955, 0
      %1057 = vmatprep.subr.bf16.mxu0 0
      %1058 = vmatpush1.bf16.msra.mxu0 %v1052
      %1059 = vmatprep.subr.bf16.mxu0 0
      %1060 = vmatpush1.bf16.msra.mxu0 0
      %1061 = vmatprep.subr.bf16.mxu0 0
      %1062 = vmatpush1.bf16.msra.mxu0 0
      %1063 = vmatprep.subr.bf16.mxu0 0
      %1064 = vmatpush1.bf16.msra.mxu0 0
      %1065 = vmatprep.subr.bf16.mxu0 0
      %1066 = vmatpush1.bf16.msra.mxu0 0
      %1067 = vmatprep.subr.bf16.mxu0 0
      %1068 = vmatpush1.bf16.msra.mxu0 0
      %1069 = vmatprep.subr.bf16.mxu0 0
      %1070 = vmatpush1.bf16.msra.mxu0 0
      %1071 = vmatprep.subr.bf16.mxu0 0
      %1072 = vmatpush1.bf16.msra.mxu0 0
      %1073 = vmatprep.subr.bf16.mxu0 0
      %1074 = vmatpush1.bf16.msra.mxu0 0
      %1075 = vmatprep.subr.bf16.mxu0 0
      %1076 = vmatpush1.bf16.msra.mxu0 0
      %1077 = vmatprep.subr.bf16.mxu0 0
      %1078 = vmatpush1.bf16.msra.mxu0 0
      %1079 = vmatprep.subr.bf16.mxu0 0
      %1080 = vmatpush1.bf16.msra.mxu0 0
      %1081 = vmatprep.subr.bf16.mxu0 0
      %1082 = vmatpush1.bf16.msra.mxu0 0
      %1083 = vmatprep.subr.bf16.mxu0 0
      %1084 = vmatpush1.bf16.msra.mxu0 0
      %1085 = vmatprep.subr.bf16.mxu0 0
      %1086 = vmatpush1.bf16.msra.mxu0 0
      %1087 = vmatprep.subr.bf16.mxu0 0
      %1088 = vmatpush1.bf16.msra.mxu0 0
      %1089 = vmatprep.mubr.bf16.mxu0 0
      %1090 = vmatmul.mubr.bf16.gmra.mrb[0].mxu0 %v1055
      %v1091 = vpop.f32.mrb[0].mxu0
      %v1092 = vadd.f32 0.0, %v1091
      %v1093 = vpop.f32.mrb[0].mxu0
      %v1094 = vpop.f32.mrb[0].mxu0
      %v1095 = vadd.f32 0.0, %v1094
      %v1096 = vpop.f32.mrb[0].mxu0
      %1097 = vdwg.mxu0
      %1098 = vrot.lane.b32.xlu0 %v646, 64
      %v1099 = vpop.permute.xlu0 %1098
      %v1102 = vsel %vm864, %v956, 0
      %1104 = vmatprep.subr.bf16.mxu0 0
      %1105 = vmatpush1.bf16.msra.mxu0 %v1099
      %1106 = vmatprep.subr.bf16.mxu0 0
      %1107 = vmatpush1.bf16.msra.mxu0 0
      %1108 = vmatprep.subr.bf16.mxu0 0
      %1109 = vmatpush1.bf16.msra.mxu0 0
      %1110 = vmatprep.subr.bf16.mxu0 0
      %1111 = vmatpush1.bf16.msra.mxu0 0
      %1112 = vmatprep.subr.bf16.mxu0 0
      %1113 = vmatpush1.bf16.msra.mxu0 0
      %1114 = vmatprep.subr.bf16.mxu0 0
      %1115 = vmatpush1.bf16.msra.mxu0 0
      %1116 = vmatprep.subr.bf16.mxu0 0
      %1117 = vmatpush1.bf16.msra.mxu0 0
      %1118 = vmatprep.subr.bf16.mxu0 0
      %1119 = vmatpush1.bf16.msra.mxu0 0
      %1120 = vmatprep.subr.bf16.mxu0 0
      %1121 = vmatpush1.bf16.msra.mxu0 0
      %1122 = vmatprep.subr.bf16.mxu0 0
      %1123 = vmatpush1.bf16.msra.mxu0 0
      %1124 = vmatprep.subr.bf16.mxu0 0
      %1125 = vmatpush1.bf16.msra.mxu0 0
      %1126 = vmatprep.subr.bf16.mxu0 0
      %1127 = vmatpush1.bf16.msra.mxu0 0
      %1128 = vmatprep.subr.bf16.mxu0 0
      %1129 = vmatpush1.bf16.msra.mxu0 0
      %1130 = vmatprep.subr.bf16.mxu0 0
      %1131 = vmatpush1.bf16.msra.mxu0 0
      %1132 = vmatprep.subr.bf16.mxu0 0
      %1133 = vmatpush1.bf16.msra.mxu0 0
      %1134 = vmatprep.subr.bf16.mxu0 0
      %1135 = vmatpush1.bf16.msra.mxu0 0
      %1136 = vmatprep.mubr.bf16.mxu0 0
      %1137 = vmatmul.mubr.bf16.gmra.mrb[0].mxu0 %v1102
      %v1138 = vpop.f32.mrb[0].mxu0
      %v1139 = vadd.f32 0.0, %v1138
      %v1140 = vpop.f32.mrb[0].mxu0
      %v1141 = vpop.f32.mrb[0].mxu0
      %v1142 = vadd.f32 0.0, %v1141
      %v1143 = vpop.f32.mrb[0].mxu0
      %1144 = vdwg.mxu0
      %v1145 = vld [vmem:[%s6] sm:$0x1]
      %v1146 = vpack.c.bf16 %v1001, %v998
      %v1147 = vld [vmem:[%s5] sm:$0xf]
      %v1149 = vsel %vm650, %v1146, 0
      %vm1151 = vcmask 1043456
      %v1153 = vsel %vm1151, %v1147, 0
      %1155 = vmatprep.subr.bf16.mxu0 0
      %1156 = vmatpush1.bf16.msra.mxu0 %v1153
      %1157 = vmatprep.subr.bf16.mxu0 0
      %1158 = vmatpush1.bf16.msra.mxu0 0
      %1159 = vmatprep.subr.bf16.mxu0 0
      %1160 = vmatpush1.bf16.msra.mxu0 0
      %1161 = vmatprep.subr.bf16.mxu0 0
      %1162 = vmatpush1.bf16.msra.mxu0 0
      %1163 = vmatprep.subr.bf16.mxu0 0
      %1164 = vmatpush1.bf16.msra.mxu0 0
      %1165 = vmatprep.subr.bf16.mxu0 0
      %1166 = vmatpush1.bf16.msra.mxu0 0
      %1167 = vmatprep.subr.bf16.mxu0 0
      %1168 = vmatpush1.bf16.msra.mxu0 0
      %1169 = vmatprep.subr.bf16.mxu0 0
      %1170 = vmatpush1.bf16.msra.mxu0 0
      %1171 = vmatprep.subr.bf16.mxu0 0
      %1172 = vmatpush1.bf16.msra.mxu0 0
      %1173 = vmatprep.subr.bf16.mxu0 0
      %1174 = vmatpush1.bf16.msra.mxu0 0
      %1175 = vmatprep.subr.bf16.mxu0 0
      %1176 = vmatpush1.bf16.msra.mxu0 0
      %1177 = vmatprep.subr.bf16.mxu0 0
      %1178 = vmatpush1.bf16.msra.mxu0 0
      %1179 = vmatprep.subr.bf16.mxu0 0
      %1180 = vmatpush1.bf16.msra.mxu0 0
      %1181 = vmatprep.subr.bf16.mxu0 0
      %1182 = vmatpush1.bf16.msra.mxu0 0
      %1183 = vmatprep.subr.bf16.mxu0 0
      %1184 = vmatpush1.bf16.msra.mxu0 0
      %1185 = vmatprep.subr.bf16.mxu0 0
      %1186 = vmatpush1.bf16.msra.mxu0 0
      %1187 = vmatprep.mubr.bf16.mxu0 0
      %1188 = vmatmul.mubr.bf16.gmra.mrb[0].mxu0 %v1149
      %v1189 = vpop.f32.mrb[0].mxu0
      %v1190 = vadd.f32 0.0, %v1189
      %v1191 = vpop.f32.mrb[0].mxu0
      %v1192 = vpop.f32.mrb[0].mxu0
      %v1193 = vadd.f32 0.0, %v1192
      %v1194 = vpop.f32.mrb[0].mxu0
      %1195 = vdwg.mxu0
      %v1197 = vlaneseq
      %v1198 = vshrl.u32 %v1197, 7
      %v1199 = vsub.s32 0, %v1198
      %v1200 = vrot.slane %v1145, %v1199
      %v1202 = vadd.f32 %v1200, %v1190
      %v1203 = vadd.f32 %v1200, %v1193
      %v1204 = vpack.c.bf16 %v1048, %v1045
      %s1205 = scalar_lea.vmem %s5, 4
      %v1206 = vld [vmem:[%s1205] sm:$0xf]
      %v1208 = vsel %vm650, %v1204, 0
      %v1211 = vsel %vm1151, %v1206, 0
      %1213 = vmatprep.subr.bf16.mxu0 0
      %1214 = vmatpush1.bf16.msra.mxu0 %v1211
      %1215 = vmatprep.subr.bf16.mxu0 0
      %1216 = vmatpush1.bf16.msra.mxu0 0
      %1217 = vmatprep.subr.bf16.mxu0 0
      %1218 = vmatpush1.bf16.msra.mxu0 0
      %1219 = vmatprep.subr.bf16.mxu0 0
      %1220 = vmatpush1.bf16.msra.mxu0 0
      %1221 = vmatprep.subr.bf16.mxu0 0
      %1222 = vmatpush1.bf16.msra.mxu0 0
      %1223 = vmatprep.subr.bf16.mxu0 0
      %1224 = vmatpush1.bf16.msra.mxu0 0
      %1225 = vmatprep.subr.bf16.mxu0 0
      %1226 = vmatpush1.bf16.msra.mxu0 0
      %1227 = vmatprep.subr.bf16.mxu0 0
      %1228 = vmatpush1.bf16.msra.mxu0 0
      %1229 = vmatprep.subr.bf16.mxu0 0
      %1230 = vmatpush1.bf16.msra.mxu0 0
      %1231 = vmatprep.subr.bf16.mxu0 0
      %1232 = vmatpush1.bf16.msra.mxu0 0
      %1233 = vmatprep.subr.bf16.mxu0 0
      %1234 = vmatpush1.bf16.msra.mxu0 0
      %1235 = vmatprep.subr.bf16.mxu0 0
      %1236 = vmatpush1.bf16.msra.mxu0 0
      %1237 = vmatprep.subr.bf16.mxu0 0
      %1238 = vmatpush1.bf16.msra.mxu0 0
      %1239 = vmatprep.subr.bf16.mxu0 0
      %1240 = vmatpush1.bf16.msra.mxu0 0
      %1241 = vmatprep.subr.bf16.mxu0 0
      %1242 = vmatpush1.bf16.msra.mxu0 0
      %1243 = vmatprep.subr.bf16.mxu0 0
      %1244 = vmatpush1.bf16.msra.mxu0 0
      %1245 = vmatprep.mubr.bf16.mxu0 0
      %1246 = vmatmul.mubr.bf16.gmra.mrb[0].mxu0 %v1208
      %v1247 = vpop.f32.mrb[0].mxu0
      %v1248 = vadd.f32 0.0, %v1247
      %v1249 = vpop.f32.mrb[0].mxu0
      %v1250 = vpop.f32.mrb[0].mxu0
      %v1251 = vadd.f32 0.0, %v1250
      %v1252 = vpop.f32.mrb[0].mxu0
      %1253 = vdwg.mxu0
      %v1254 = vadd.f32 %v1202, %v1248
      %v1255 = vadd.f32 %v1203, %v1251
      %v1256 = vpack.c.bf16 %v1095, %v1092
      %s1257 = scalar_lea.vmem %s5, 8
      %v1258 = vld [vmem:[%s1257] sm:$0xf]
      %v1260 = vsel %vm650, %v1256, 0
      %v1263 = vsel %vm1151, %v1258, 0
      %1265 = vmatprep.subr.bf16.mxu0 0
      %1266 = vmatpush1.bf16.msra.mxu0 %v1263
      %1267 = vmatprep.subr.bf16.mxu0 0
      %1268 = vmatpush1.bf16.msra.mxu0 0
      %1269 = vmatprep.subr.bf16.mxu0 0
      %1270 = vmatpush1.bf16.msra.mxu0 0
      %1271 = vmatprep.subr.bf16.mxu0 0
      %1272 = vmatpush1.bf16.msra.mxu0 0
      %1273 = vmatprep.subr.bf16.mxu0 0
      %1274 = vmatpush1.bf16.msra.mxu0 0
      %1275 = vmatprep.subr.bf16.mxu0 0
      %1276 = vmatpush1.bf16.msra.mxu0 0
      %1277 = vmatprep.subr.bf16.mxu0 0
      %1278 = vmatpush1.bf16.msra.mxu0 0
      %1279 = vmatprep.subr.bf16.mxu0 0
      %1280 = vmatpush1.bf16.msra.mxu0 0
      %1281 = vmatprep.subr.bf16.mxu0 0
      %1282 = vmatpush1.bf16.msra.mxu0 0
      %1283 = vmatprep.subr.bf16.mxu0 0
      %1284 = vmatpush1.bf16.msra.mxu0 0
      %1285 = vmatprep.subr.bf16.mxu0 0
      %1286 = vmatpush1.bf16.msra.mxu0 0
      %1287 = vmatprep.subr.bf16.mxu0 0
      %1288 = vmatpush1.bf16.msra.mxu0 0
      %1289 = vmatprep.subr.bf16.mxu0 0
      %1290 = vmatpush1.bf16.msra.mxu0 0
      %1291 = vmatprep.subr.bf16.mxu0 0
      %1292 = vmatpush1.bf16.msra.mxu0 0
      %1293 = vmatprep.subr.bf16.mxu0 0
      %1294 = vmatpush1.bf16.msra.mxu0 0
      %1295 = vmatprep.subr.bf16.mxu0 0
      %1296 = vmatpush1.bf16.msra.mxu0 0
      %1297 = vmatprep.mubr.bf16.mxu0 0
      %1298 = vmatmul.mubr.bf16.gmra.mrb[0].mxu0 %v1260
      %v1299 = vpop.f32.mrb[0].mxu0
      %v1300 = vadd.f32 0.0, %v1299
      %v1301 = vpop.f32.mrb[0].mxu0
      %v1302 = vpop.f32.mrb[0].mxu0
      %v1303 = vadd.f32 0.0, %v1302
      %v1304 = vpop.f32.mrb[0].mxu0
      %1305 = vdwg.mxu0
      %v1306 = vadd.f32 %v1254, %v1300
      %v1307 = vadd.f32 %v1255, %v1303
      %v1308 = vpack.c.bf16 %v1142, %v1139
      %s1309 = scalar_lea.vmem %s5, 12
      %v1310 = vld [vmem:[%s1309] sm:$0xf]
      %v1312 = vsel %vm650, %v1308, 0
      %v1315 = vsel %vm1151, %v1310, 0
      %1317 = vmatprep.subr.bf16.mxu0 0
      %1318 = vmatpush1.bf16.msra.mxu0 %v1315
      %1319 = vmatprep.subr.bf16.mxu0 0
      %1320 = vmatpush1.bf16.msra.mxu0 0
      %1321 = vmatprep.subr.bf16.mxu0 0
      %1322 = vmatpush1.bf16.msra.mxu0 0
      %1323 = vmatprep.subr.bf16.mxu0 0
      %1324 = vmatpush1.bf16.msra.mxu0 0
      %1325 = vmatprep.subr.bf16.mxu0 0
      %1326 = vmatpush1.bf16.msra.mxu0 0
      %1327 = vmatprep.subr.bf16.mxu0 0
      %1328 = vmatpush1.bf16.msra.mxu0 0
      %1329 = vmatprep.subr.bf16.mxu0 0
      %1330 = vmatpush1.bf16.msra.mxu0 0
      %1331 = vmatprep.subr.bf16.mxu0 0
      %1332 = vmatpush1.bf16.msra.mxu0 0
      %1333 = vmatprep.subr.bf16.mxu0 0
      %1334 = vmatpush1.bf16.msra.mxu0 0
      %1335 = vmatprep.subr.bf16.mxu0 0
      %1336 = vmatpush1.bf16.msra.mxu0 0
      %1337 = vmatprep.subr.bf16.mxu0 0
      %1338 = vmatpush1.bf16.msra.mxu0 0
      %1339 = vmatprep.subr.bf16.mxu0 0
      %1340 = vmatpush1.bf16.msra.mxu0 0
      %1341 = vmatprep.subr.bf16.mxu0 0
      %1342 = vmatpush1.bf16.msra.mxu0 0
      %1343 = vmatprep.subr.bf16.mxu0 0
      %1344 = vmatpush1.bf16.msra.mxu0 0
      %1345 = vmatprep.subr.bf16.mxu0 0
      %1346 = vmatpush1.bf16.msra.mxu0 0
      %1347 = vmatprep.subr.bf16.mxu0 0
      %1348 = vmatpush1.bf16.msra.mxu0 0
      %1349 = vmatprep.mubr.bf16.mxu0 0
      %1350 = vmatmul.mubr.bf16.gmra.mrb[0].mxu0 %v1312
      %v1351 = vpop.f32.mrb[0].mxu0
      %v1352 = vadd.f32 0.0, %v1351
      %v1353 = vpop.f32.mrb[0].mxu0
      %v1354 = vpop.f32.mrb[0].mxu0
      %v1355 = vadd.f32 0.0, %v1354
      %v1356 = vpop.f32.mrb[0].mxu0
      %1357 = vdwg.mxu0
      %v1358 = vadd.f32 %v1306, %v1352
      %v1359 = vadd.f32 %v1307, %v1355
      %v1360 = vadd.f32 %v507, %v1358
      %v1361 = vadd.f32 %v508, %v1359
      %v1362 = vld [vmem:[%s8] sm:$0x1]
      %v1363 = vld [vmem:[%s9] sm:$0x1]
      %v1364 = vsel %vm511, %v1360, 0.0
      %1365 = vadd.xlane.f32.xlu0 %v1364
      %v1366 = vpop.xlane.xlu0 %1365
      %v1367 = vsel %vm511, %v1361, 0.0
      %1368 = vadd.xlane.f32.xlu0 %v1367
      %v1369 = vpop.xlane.xlu0 %1368
      %v1370 = vmul.f32 %v1366, %v518
      %v1371 = vmul.f32 %v1369, %v518
      %v1372 = vsub.f32 %v1360, %v1370
      %v1373 = vsub.f32 %v1361, %v1371
      %v1374 = vmul.f32 %v1372, %v1372
      %v1375 = vmul.f32 %v1373, %v1373
      %v1376 = vsel %vm511, %v1374, 0.0
      %1377 = vadd.xlane.f32.xlu0 %v1376
      %v1378 = vpop.xlane.xlu0 %1377
      %v1379 = vsel %vm511, %v1375, 0.0
      %1380 = vadd.xlane.f32.xlu0 %v1379
      %v1381 = vpop.xlane.xlu0 %1380
      %v1382 = vmul.f32 %v1378, %v518
      %v1383 = vmul.f32 %v1381, %v518
      %v1384 = vadd.f32 %v1382, 1e-05
      %v1385 = vadd.f32 %v1383, 1e-05
      %v1386 = vrsqrt.pop %v1384
      %v1387 = vrsqrt.pop %v1385
      %v1388 = vmul.f32 %v1372, %v1386
      %v1389 = vmul.f32 %v1373, %v1387
      %v1391 = vlaneseq
      %v1392 = vshrl.u32 %v1391, 7
      %v1393 = vsub.s32 0, %v1392
      %v1394 = vrot.slane %v1362, %v1393
      %v1396 = vmul.f32 %v1388, %v1394
      %v1397 = vmul.f32 %v1389, %v1394
      %v1399 = vlaneseq
      %v1400 = vshrl.u32 %v1399, 7
      %v1401 = vsub.s32 0, %v1400
      %v1402 = vrot.slane %v1363, %v1401
      %v1404 = vadd.f32 %v1396, %v1402
      %v1405 = vadd.f32 %v1397, %v1402
      %v1406 = vpack.c.bf16 %v1405, %v1404
      %v1407 = vld [vmem:[%s10] sm:$0xf]
      %v1408 = vld [vmem:[%s10 + $0x4] sm:$0xf]
      %v1409 = vld [vmem:[%s10 + $0x8] sm:$0xf]
      %v1410 = vld [vmem:[%s10 + $0xc] sm:$0xf]
      %v1411 = vld [vmem:[%s11] sm:$0x1]
      %v1413 = vlaneseq
      %v1414 = vshrl.u32 %v1413, 7
      %v1415 = vsub.s32 0, %v1414
      %v1416 = vrot.slane %v1411, %v1415
      %v1422 = vunpack.c.l.b16 %v1407
      %v1423 = vunpack.c.l.b16 %v1408
      %v1424 = vunpack.c.l.b16 %v1409
      %v1425 = vunpack.c.l.b16 %v1410
      %v1426 = vpack.c.b16 %v1423, %v1422
      %v1427 = vpack.c.b16 %v1425, %v1424
      %v1431 = vsel %vm511, %v1406, 0
      %1433 = vmatprep.subr.bf16.mxu0 0
      %1434 = vmatpush1.bf16.msra.mxu0 %v1426
      %1435 = vmatprep.subr.bf16.mxu0 0
      %1436 = vmatpush1.bf16.msra.mxu0 %v1427
      %1437 = vmatprep.subr.bf16.mxu0 0
      %1438 = vmatpush1.bf16.msra.mxu0 0
      %1439 = vmatprep.subr.bf16.mxu0 0
      %1440 = vmatpush1.bf16.msra.mxu0 0
      %1441 = vmatprep.subr.bf16.mxu0 0
      %1442 = vmatpush1.bf16.msra.mxu0 0
      %1443 = vmatprep.subr.bf16.mxu0 0
      %1444 = vmatpush1.bf16.msra.mxu0 0
      %1445 = vmatprep.subr.bf16.mxu0 0
      %1446 = vmatpush1.bf16.msra.mxu0 0
      %1447 = vmatprep.subr.bf16.mxu0 0
      %1448 = vmatpush1.bf16.msra.mxu0 0
      %1449 = vmatprep.subr.bf16.mxu0 0
      %1450 = vmatpush1.bf16.msra.mxu0 0
      %1451 = vmatprep.subr.bf16.mxu0 0
      %1452 = vmatpush1.bf16.msra.mxu0 0
      %1453 = vmatprep.subr.bf16.mxu0 0
      %1454 = vmatpush1.bf16.msra.mxu0 0
      %1455 = vmatprep.subr.bf16.mxu0 0
      %1456 = vmatpush1.bf16.msra.mxu0 0
      %1457 = vmatprep.subr.bf16.mxu0 0
      %1458 = vmatpush1.bf16.msra.mxu0 0
      %1459 = vmatprep.subr.bf16.mxu0 0
      %1460 = vmatpush1.bf16.msra.mxu0 0
      %1461 = vmatprep.subr.bf16.mxu0 0
      %1462 = vmatpush1.bf16.msra.mxu0 0
      %1463 = vmatprep.subr.bf16.mxu0 0
      %1464 = vmatpush1.bf16.msra.mxu0 0
      %1465 = vmatprep.mubr.bf16.mxu0 0
      %1466 = vmatmul.mubr.bf16.gmra.mrb[0].mxu0 %v1431
      %v1467 = vpop.f32.mrb[0].mxu0
      %v1468 = vadd.f32 %v1416, %v1467
      %v1469 = vpop.f32.mrb[0].mxu0
      %v1470 = vpop.f32.mrb[0].mxu0
      %v1471 = vadd.f32 %v1416, %v1470
      %v1472 = vpop.f32.mrb[0].mxu0
      %1473 = vdwg.mxu0
      %v1474 = vmul.f32 %v1468, 0.5
      %v1475 = vmul.f32 %v1471, 0.5
      %v1476 = vmul.f32 %v1468, 0.70710677
      %v1477 = vmul.f32 %v1471, 0.70710677
      %vm1478 = vcmp.ge.f32.partialorder %v1476, 0.0
      %vm1479 = vcmp.ge.f32.partialorder %v1477, 0.0
      %v1480 = vsel %vm1478, 1.0, -1.0
      %v1481 = vsel %vm1479, 1.0, -1.0
      %v1482 = vand.u32 2147483647, %v1476
      %v1483 = vand.u32 2147483647, %v1477
      %v1484 = vmul.f32 %v1482, 0.3275911
      %v1485 = vmul.f32 %v1483, 0.3275911
      %v1486 = vadd.f32 %v1484, 1.0
      %v1487 = vadd.f32 %v1485, 1.0
      %v1488 = vrcp.pop %v1486
      %v1489 = vrcp.pop %v1487
      %v1490 = vmul.f32 %v1488, 1.0614054
      %v1491 = vmul.f32 %v1489, 1.0614054
      %v1492 = vadd.f32 %v1490, -1.4531521
      %v1493 = vadd.f32 %v1491, -1.4531521
      %v1494 = vmul.f32 %v1492, %v1488
      %v1495 = vmul.f32 %v1493, %v1489
      %v1496 = vadd.f32 %v1494, 1.4214138
      %v1497 = vadd.f32 %v1495, 1.4214138
      %v1498 = vmul.f32 %v1496, %v1488
      %v1499 = vmul.f32 %v1497, %v1489
      %v1500 = vadd.f32 %v1498, -0.28449672
      %v1501 = vadd.f32 %v1499, -0.28449672
      %v1502 = vmul.f32 %v1500, %v1488
      %v1503 = vmul.f32 %v1501, %v1489
      %v1504 = vadd.f32 %v1502, 0.2548296
      %v1505 = vadd.f32 %v1503, 0.2548296
      %v1506 = vmul.f32 %v1504, %v1488
      %v1507 = vmul.f32 %v1505, %v1489
      %v1508 = vsub.f32 0.0, %v1482
      %v1509 = vsub.f32 0.0, %v1483
      %v1510 = vmul.f32 %v1508, %v1482
      %v1511 = vmul.f32 %v1509, %v1483
      %v1512 = vmul.f32 %v1510, 1.442695
      %v1513 = vpow.pop %v1512
      %v1514 = vmul.f32 %v1511, 1.442695
      %v1515 = vpow.pop %v1514
      %v1516 = vmul.f32 %v1506, %v1513
      %v1517 = vmul.f32 %v1507, %v1515
      %v1518 = vsub.f32 1.0, %v1516
      %v1519 = vsub.f32 1.0, %v1517
      %v1520 = vmul.f32 %v1480, %v1518
      %v1521 = vmul.f32 %v1481, %v1519
      %v1522 = vadd.f32 %v1520, 1.0
      %v1523 = vadd.f32 %v1521, 1.0
      %v1524 = vmul.f32 %v1474, %v1522
      %v1525 = vmul.f32 %v1475, %v1523
      %v1526 = vpack.c.bf16 %v1525, %v1524
      %v1527 = vld [vmem:[%s12] sm:$0xf]
      %v1528 = vld [vmem:[%s12 + $0x4] sm:$0xf]
      %v1529 = vld [vmem:[%s12 + $0x8] sm:$0xf]
      %v1530 = vld [vmem:[%s12 + $0xc] sm:$0xf]
      %v1531 = vld [vmem:[%s12 + $0x10] sm:$0xf]
      %v1532 = vld [vmem:[%s12 + $0x14] sm:$0xf]
      %v1533 = vld [vmem:[%s12 + $0x18] sm:$0xf]
      %v1534 = vld [vmem:[%s12 + $0x1c] sm:$0xf]
      %v1535 = vld [vmem:[%s12 + $0x20] sm:$0xf]
      %v1536 = vld [vmem:[%s12 + $0x24] sm:$0xf]
      %v1537 = vld [vmem:[%s12 + $0x28] sm:$0xf]
      %v1538 = vld [vmem:[%s12 + $0x2c] sm:$0xf]
      %v1539 = vld [vmem:[%s12 + $0x30] sm:$0xf]
      %v1540 = vld [vmem:[%s12 + $0x34] sm:$0xf]
      %v1541 = vld [vmem:[%s12 + $0x38] sm:$0xf]
      %v1542 = vld [vmem:[%s12 + $0x3c] sm:$0xf]
      %v1543 = vld [vmem:[%s13] sm:$0x1]
      %v1545 = vlaneseq
      %v1546 = vshrl.u32 %v1545, 7
      %v1547 = vsub.s32 0, %v1546
      %v1548 = vrot.slane %v1543, %v1547
      %v1566 = vunpack.c.l.b16 %v1527
      %v1567 = vunpack.c.l.b16 %v1528
      %v1568 = vunpack.c.l.b16 %v1529
      %v1569 = vunpack.c.l.b16 %v1530
      %v1570 = vunpack.c.l.b16 %v1531
      %v1571 = vunpack.c.l.b16 %v1532
      %v1572 = vunpack.c.l.b16 %v1533
      %v1573 = vunpack.c.l.b16 %v1534
      %v1574 = vunpack.c.l.b16 %v1535
      %v1575 = vunpack.c.l.b16 %v1536
      %v1576 = vunpack.c.l.b16 %v1537
      %v1577 = vunpack.c.l.b16 %v1538
      %v1578 = vunpack.c.l.b16 %v1539
      %v1579 = vunpack.c.l.b16 %v1540
      %v1580 = vunpack.c.l.b16 %v1541
      %v1581 = vunpack.c.l.b16 %v1542
      %v1582 = vpack.c.b16 %v1567, %v1566
      %v1583 = vpack.c.b16 %v1569, %v1568
      %v1584 = vpack.c.b16 %v1571, %v1570
      %v1585 = vpack.c.b16 %v1573, %v1572
      %v1586 = vpack.c.b16 %v1575, %v1574
      %v1587 = vpack.c.b16 %v1577, %v1576
      %v1588 = vpack.c.b16 %v1579, %v1578
      %v1589 = vpack.c.b16 %v1581, %v1580
      %1598 = vmatprep.subr.bf16.mxu0 0
      %1599 = vmatpush1.bf16.msra.mxu0 %v1582
      %1600 = vmatprep.subr.bf16.mxu0 0
      %1601 = vmatpush1.bf16.msra.mxu0 %v1583
      %1602 = vmatprep.subr.bf16.mxu0 0
      %1603 = vmatpush1.bf16.msra.mxu0 %v1584
      %1604 = vmatprep.subr.bf16.mxu0 0
      %1605 = vmatpush1.bf16.msra.mxu0 %v1585
      %1606 = vmatprep.subr.bf16.mxu0 0
      %1607 = vmatpush1.bf16.msra.mxu0 %v1586
      %1608 = vmatprep.subr.bf16.mxu0 0
      %1609 = vmatpush1.bf16.msra.mxu0 %v1587
      %1610 = vmatprep.subr.bf16.mxu0 0
      %1611 = vmatpush1.bf16.msra.mxu0 %v1588
      %1612 = vmatprep.subr.bf16.mxu0 0
      %1613 = vmatpush1.bf16.msra.mxu0 %v1589
      %1614 = vmatprep.subr.bf16.mxu0 0
      %1615 = vmatpush1.bf16.msra.mxu0 0
      %1616 = vmatprep.subr.bf16.mxu0 0
      %1617 = vmatpush1.bf16.msra.mxu0 0
      %1618 = vmatprep.subr.bf16.mxu0 0
      %1619 = vmatpush1.bf16.msra.mxu0 0
      %1620 = vmatprep.subr.bf16.mxu0 0
      %1621 = vmatpush1.bf16.msra.mxu0 0
      %1622 = vmatprep.subr.bf16.mxu0 0
      %1623 = vmatpush1.bf16.msra.mxu0 0
      %1624 = vmatprep.subr.bf16.mxu0 0
      %1625 = vmatpush1.bf16.msra.mxu0 0
      %1626 = vmatprep.subr.bf16.mxu0 0
      %1627 = vmatpush1.bf16.msra.mxu0 0
      %1628 = vmatprep.subr.bf16.mxu0 0
      %1629 = vmatpush1.bf16.msra.mxu0 0
      %1630 = vmatprep.mubr.bf16.mxu0 0
      %1631 = vmatmul.mubr.bf16.gmra.mrb[0].mxu0 %v1526
      %v1632 = vpop.f32.mrb[0].mxu0
      %v1633 = vadd.f32 %v1548, %v1632
      %v1634 = vpop.f32.mrb[0].mxu0
      %v1635 = vpop.f32.mrb[0].mxu0
      %v1636 = vadd.f32 %v1548, %v1635
      %v1637 = vpop.f32.mrb[0].mxu0
      %1638 = vdwg.mxu0
      %v1639 = vadd.f32 %v1360, %v1633
      %v1640 = vadd.f32 %v1361, %v1636
      %v1641 = vpack.c.bf16 %v1640, %v1639
      %v1643 = vunpack.c.l.b16 %v1641
      %v1644 = vunpack.c.h.b16 %v1641
      %v1645 = vpack.c.b16 %v1643, %v1643
      %v1646 = vpack.c.b16 %v1644, %v1644
      %vm1649 = vcmask 257024
      %1650 = vst.msk [vmem:[%s503] sm:$0xf] %vm1649, %v1645
      %1651 = vst.msk [vmem:[%s503 + $0x4] sm:$0xf] %vm1649, %v1646
      %p1652 = scmp.lt.s32.totalorder %s29, 1
      %s1653 = scalar_select %p1652, %s29, 1
      %p1654 = scmp.lt.s32.totalorder %s30, 0
      %s1655 = scalar_select %p1654, %s30, 0
      %s1656 = smul.addr %s1655, 2
      %s1657 = smul.addr %s1653, 2
      %s1658 = sadd.s32 %s1656, %s1657
      %s1659 = smul.addr %s1658, 4
      %s1660 = scalar_lea.vmem %s14, %s1659
      // Predicated region
      $region77: #{swin_forward.10} parent=75 // pred_check
        %p1661 = pneg %p358
      $region78: #{swin_forward.10} parent=75 // pred_check_branch
        %1663 = sbr.rel (%p1661) target = $region80
      $region79: #{swin_forward.10} parent=75 // pred_region
        _
      $region80: #{swin_forward.10} parent=75 // pred_fallthru
        _
    $region76: #{swin_forward.10} parent=5 // pred_fallthru
      _
    %p1664 = scmp.le.s32.totalorder 2, %s20
    // Predicated region
    $region81: #{swin_forward.10} parent=5 // pred_check
      %p1665 = pneg %p1664
    $region82: #{swin_forward.10} parent=5 // pred_check_branch
      %1667 = sbr.rel (%p1665) target = $region84
    $region83: #{swin_forward.10} parent=5 // pred_region
      %s1668 = ssub.s32 %s20, 2
      // Predicated region
      $region85: #{swin_forward.10} parent=83 // pred_check
        %p1669 = pneg %p364
      $region86: #{swin_forward.10} parent=83 // pred_check_branch
        %1671 = sbr.rel (%p1669) target = $region88
      $region87: #{swin_forward.10} parent=83 // pred_region
        %p1672 = scmp.lt.s32.totalorder %s31, 1
        %s1673 = scalar_select %p1672, %s31, 1
        %p1674 = scmp.lt.s32.totalorder %s32, 0
        %s1675 = scalar_select %p1674, %s32, 0
        %s1676 = smul.addr %s1675, 2
        %s1677 = smul.addr %s1673, 2
        %s1678 = sadd.s32 %s1676, %s1677
        %s1679 = smul.addr %s1678, 4
        %s1680 = scalar_lea.vmem %s14, %s1679
      $region88: #{swin_forward.10} parent=83 // pred_fallthru
        _
    $region84: #{swin_forward.10} parent=5 // pred_fallthru
      _
  $region6: #{swin_forward.10} parent=0 // loop_footer
    %s24 = sadd.s32 1, %s20
  $region7: #{swin_forward.10} parent=0 // loop_footer_branch
    %19 = sbr.rel target = $region3
  $region8: #{swin_forward.10} parent=0 // loop_exit
    _

// kernel: swin_forward.11
$region0: #{swin_forward.11}
  #allocation0 [shape = 'u32[]', space=smem, size = 0x4, offset = 0x4, fixed_abs, tag = 'smem constant byte address 0x4 - core index']
  #allocation1 [shape = 'u32[144,128]{1,0:T(1,128)}', space=vmem, size = 0x12000, scoped, tag = 'internal scratch']
  %s0 = inlined_call_operand.vmem [shape: bf16[2,1,16,32], index: 0, kind: input, shape index: {}]
  %s1 = inlined_call_operand.vmem [shape: f32[1,32], index: 1, kind: input, shape index: {}, may-alias: {1,8,14}]
  %s2 = inlined_call_operand.vmem [shape: f32[1,32], index: 2, kind: input, shape index: {}, may-alias: {2,6,9,13,15}]
  %s3 = inlined_call_operand.vmem [shape: bf16[32,96], index: 3, kind: input, shape index: {}]
  %s4 = inlined_call_operand.vmem [shape: f32[1,96], index: 4, kind: input, shape index: {}]
  %s5 = inlined_call_operand.vmem [shape: bf16[4,8,32], index: 5, kind: input, shape index: {}]
  %s6 = inlined_call_operand.vmem [shape: f32[1,32], index: 6, kind: input, shape index: {}, may-alias: {2,6,9,13,15}]
  %s7 = inlined_call_operand.vmem [shape: f32[4,16,16], index: 7, kind: input, shape index: {}]
  %s8 = inlined_call_operand.vmem [shape: f32[1,32], index: 8, kind: input, shape index: {}, may-alias: {1,8,14}]
  %s9 = inlined_call_operand.vmem [shape: f32[1,32], index: 9, kind: input, shape index: {}, may-alias: {2,6,9,13,15}]
  %s10 = inlined_call_operand.vmem [shape: bf16[32,128], index: 10, kind: input, shape index: {}]
  %s11 = inlined_call_operand.vmem [shape: f32[1,128], index: 11, kind: input, shape index: {}]
  %s12 = inlined_call_operand.vmem [shape: bf16[128,32], index: 12, kind: input, shape index: {}]
  %s13 = inlined_call_operand.vmem [shape: f32[1,32], index: 13, kind: input, shape index: {}, may-alias: {2,6,9,13,15}]
  %s14 = inlined_call_operand.vmem [shape: f32[1,32], index: 14, kind: input, shape index: {}, may-alias: {1,8,14}]
  %s15 = inlined_call_operand.vmem [shape: f32[1,32], index: 15, kind: input, shape index: {}, may-alias: {2,6,9,13,15}]
  %s16 = inlined_call_operand.hbm [shape: f32[2,1,16,32], index: 16, kind: output, shape index: {}]
  %s17 = sld [smem:[#allocation0]]
  $region97: #{swin_forward.11} parent=0
    _
  %s19 = ssub.s32 1, %s17
  %s20 = scalar_select 0, %s19, %s17
  $region1: #{swin_forward.11} parent=0
    #allocation2 [shape = 'u8[16384]{0}', space=vmem, size = 0x4000, scoped, tag = 'output window, operand 0']
    #allocation3 [shape = 's32[2]{0}', space=sflag, size = 0x8, scoped, tag = 'scoped memory for swin_forward.11']
    %21 = vsyncpa [#allocation3], 0
    %s22 = scalar_lea.sflag [#allocation3], 1
    %23 = vsyncpa %s22, 0
    loop: start=0, step=1, limit=4
    $region2: #{swin_forward.11} parent=1 // loop_pre_header
      _
    $region3: #{swin_forward.11} parent=1 // loop_header
      %s25 = sphi 0, %s29
      %p26 = scmp.ge.s32.totalorder %s25, 4
      %s32 = sphi 0, %s44
      %s33 = sphi 0, %s40
      %s34 = sphi 0, %s32
      %s35 = sphi 0, %s33
      %s36 = sphi 0, %s34
      %s37 = sphi 0, %s35
      %s49 = sphi 0, %s51
      %s52 = sphi 0, %s49
      %s53 = sphi 0, %s52
      %s69 = sphi 0, %s53
      %s73 = sphi 0, %s73
      %s75 = sphi 0, %s73
      %s76 = sphi 0, %s75
      %s90 = sphi 0, %s76
      %s94 = sphi 0, %s94
      %s96 = sphi 0, %s94
      %s97 = sphi 0, %s96
      %s111 = sphi 0, %s97
      %s115 = sphi 0, %s115
      %s117 = sphi 0, %s115
      %s118 = sphi 0, %s117
      %s132 = sphi 0, %s118
      %s136 = sphi 0, %s136
      %s138 = sphi 0, %s136
      %s139 = sphi 0, %s138
      %s153 = sphi 0, %s139
      %s157 = sphi 0, %s157
      %s159 = sphi 0, %s157
      %s160 = sphi 0, %s159
      %s174 = sphi 0, %s160
      %s178 = sphi 0, %s178
      %s180 = sphi 0, %s178
      %s181 = sphi 0, %s180
      %s195 = sphi 0, %s181
      %s199 = sphi 0, %s199
      %s201 = sphi 0, %s199
      %s202 = sphi 0, %s201
      %s216 = sphi 0, %s202
      %s220 = sphi 0, %s220
      %s222 = sphi 0, %s220
      %s223 = sphi 0, %s222
      %s237 = sphi 0, %s223
      %s241 = sphi 0, %s241
      %s243 = sphi 0, %s241
      %s244 = sphi 0, %s243
      %s258 = sphi 0, %s244
      %s262 = sphi 0, %s262
      %s264 = sphi 0, %s262
      %s265 = sphi 0, %s264
      %s279 = sphi 0, %s265
      %s283 = sphi 0, %s283
      %s285 = sphi 0, %s283
      %s286 = sphi 0, %s285
      %s300 = sphi 0, %s286
      %s304 = sphi 0, %s304
      %s306 = sphi 0, %s304
      %s307 = sphi 0, %s306
      %s321 = sphi 0, %s307
      %s325 = sphi 0, %s325
      %s327 = sphi 0, %s325
      %s328 = sphi 0, %s327
      %s342 = sphi 0, %s328
      %s346 = sphi 0, %s346
      %s348 = sphi 0, %s346
      %s349 = sphi 0, %s348
      %s363 = sphi 0, %s349
      %s367 = sphi 0, %s367
      %s369 = sphi 0, %s367
      %s370 = sphi 0, %s369
      %s384 = sphi 0, %s370
      %s392 = sphi 0, %s394
      %s395 = sphi 0, %s392
      %s396 = sphi 0, %s395
      %s412 = sphi 0, %s396
    $region4: #{swin_forward.11} parent=1 // loop_header_branch
      %28 = sbr.rel (%p26) target = $region8
    $region5: #{swin_forward.11} parent=1 // loop_body
      %s30 = ssub.s32 %s25, 1
      %s31 = ssub.s32 %s25, 2
      %s38 = sadd.s32 1, %s33
      %p39 = scmp.ge.s32.totalorder %s38, 1
      %s40 = scalar_select %p39, 0, %s38
      %s41 = sadd.s32 1, %s32
      %s42 = scalar_select %p39, %s41, %s32
      %p43 = scmp.ge.s32.totalorder %s42, 2
      %s44 = scalar_select %p43, 0, %s42
      %s45 = ssub.s32 %s32, %s44
      %s46 = ssub.s32 %s33, %s40
      %s47 = sor.u32 %s45, %s46
      %p48 = scmp.eq.s32.totalorder %s47, 0
      %s50 = sadd.s32 %s49, 1
      %s51 = scalar_select %p48, %s49, %s50
      %p54 = pneg %p48
      %p55 = scmp.eq.s32.totalorder %s25, 1
      %p56 = por %p54, %p55
      %p57 = scmp.ne.s32.totalorder %s49, %s52
      %p58 = scmp.eq.s32.totalorder %s25, 0
      %p59 = por %p57, %p58
      %p60 = scmp.ne.s32.totalorder %s49, %s52
      %p61 = scmp.eq.s32.totalorder %s30, 1
      %p62 = por %p60, %p61
      %p63 = scmp.ne.s32.totalorder %s52, %s53
      %p64 = scmp.eq.s32.totalorder %s30, 0
      %p65 = por %p63, %p64
      %p66 = scmp.ne.s32.totalorder %s52, %s53
      %p67 = scmp.eq.s32.totalorder %s31, 1
      %p68 = por %p66, %p67
      %p70 = scmp.ne.s32.totalorder %s53, %s69
      %p71 = scmp.eq.s32.totalorder %s31, 0
      %p72 = por %p70, %p71
      %s74 = sadd.s32 %s73, 1
      %p77 = scmp.eq.s32.totalorder %s25, 1
      %p78 = scmp.ne.s32.totalorder %s73, %s75
      %p79 = scmp.eq.s32.totalorder %s25, 0
      %p80 = por %p78, %p79
      %p81 = scmp.ne.s32.totalorder %s73, %s75
      %p82 = scmp.eq.s32.totalorder %s30, 1
      %p83 = por %p81, %p82
      %p84 = scmp.ne.s32.totalorder %s75, %s76
      %p85 = scmp.eq.s32.totalorder %s30, 0
      %p86 = por %p84, %p85
      %p87 = scmp.ne.s32.totalorder %s75, %s76
      %p88 = scmp.eq.s32.totalorder %s31, 1
      %p89 = por %p87, %p88
      %p91 = scmp.ne.s32.totalorder %s76, %s90
      %p92 = scmp.eq.s32.totalorder %s31, 0
      %p93 = por %p91, %p92
      %s95 = sadd.s32 %s94, 1
      %p98 = scmp.eq.s32.totalorder %s25, 1
      %p99 = scmp.ne.s32.totalorder %s94, %s96
      %p100 = scmp.eq.s32.totalorder %s25, 0
      %p101 = por %p99, %p100
      %p102 = scmp.ne.s32.totalorder %s94, %s96
      %p103 = scmp.eq.s32.totalorder %s30, 1
      %p104 = por %p102, %p103
      %p105 = scmp.ne.s32.totalorder %s96, %s97
      %p106 = scmp.eq.s32.totalorder %s30, 0
      %p107 = por %p105, %p106
      %p108 = scmp.ne.s32.totalorder %s96, %s97
      %p109 = scmp.eq.s32.totalorder %s31, 1
      %p110 = por %p108, %p109
      %p112 = scmp.ne.s32.totalorder %s97, %s111
      %p113 = scmp.eq.s32.totalorder %s31, 0
      %p114 = por %p112, %p113
      %s116 = sadd.s32 %s115, 1
      %p119 = scmp.eq.s32.totalorder %s25, 1
      %p120 = scmp.ne.s32.totalorder %s115, %s117
      %p121 = scmp.eq.s32.totalorder %s25, 0
      %p122 = por %p120, %p121
      %p123 = scmp.ne.s32.totalorder %s115, %s117
      %p124 = scmp.eq.s32.totalorder %s30, 1
      %p125 = por %p123, %p124
      %p126 = scmp.ne.s32.totalorder %s117, %s118
      %p127 = scmp.eq.s32.totalorder %s30, 0
      %p128 = por %p126, %p127
      %p129 = scmp.ne.s32.totalorder %s117, %s118
      %p130 = scmp.eq.s32.totalorder %s31, 1
      %p131 = por %p129, %p130
      %p133 = scmp.ne.s32.totalorder %s118, %s132
      %p134 = scmp.eq.s32.totalorder %s31, 0
      %p135 = por %p133, %p134
      %s137 = sadd.s32 %s136, 1
      %p140 = scmp.eq.s32.totalorder %s25, 1
      %p141 = scmp.ne.s32.totalorder %s136, %s138
      %p142 = scmp.eq.s32.totalorder %s25, 0
      %p143 = por %p141, %p142
      %p144 = scmp.ne.s32.totalorder %s136, %s138
      %p145 = scmp.eq.s32.totalorder %s30, 1
      %p146 = por %p144, %p145
      %p147 = scmp.ne.s32.totalorder %s138, %s139
      %p148 = scmp.eq.s32.totalorder %s30, 0
      %p149 = por %p147, %p148
      %p150 = scmp.ne.s32.totalorder %s138, %s139
      %p151 = scmp.eq.s32.totalorder %s31, 1
      %p152 = por %p150, %p151
      %p154 = scmp.ne.s32.totalorder %s139, %s153
      %p155 = scmp.eq.s32.totalorder %s31, 0
      %p156 = por %p154, %p155
      %s158 = sadd.s32 %s157, 1
      %p161 = scmp.eq.s32.totalorder %s25, 1
      %p162 = scmp.ne.s32.totalorder %s157, %s159
      %p163 = scmp.eq.s32.totalorder %s25, 0
      %p164 = por %p162, %p163
      %p165 = scmp.ne.s32.totalorder %s157, %s159
      %p166 = scmp.eq.s32.totalorder %s30, 1
      %p167 = por %p165, %p166
      %p168 = scmp.ne.s32.totalorder %s159, %s160
      %p169 = scmp.eq.s32.totalorder %s30, 0
      %p170 = por %p168, %p169
      %p171 = scmp.ne.s32.totalorder %s159, %s160
      %p172 = scmp.eq.s32.totalorder %s31, 1
      %p173 = por %p171, %p172
      %p175 = scmp.ne.s32.totalorder %s160, %s174
      %p176 = scmp.eq.s32.totalorder %s31, 0
      %p177 = por %p175, %p176
      %s179 = sadd.s32 %s178, 1
      %p182 = scmp.eq.s32.totalorder %s25, 1
      %p183 = scmp.ne.s32.totalorder %s178, %s180
      %p184 = scmp.eq.s32.totalorder %s25, 0
      %p185 = por %p183, %p184
      %p186 = scmp.ne.s32.totalorder %s178, %s180
      %p187 = scmp.eq.s32.totalorder %s30, 1
      %p188 = por %p186, %p187
      %p189 = scmp.ne.s32.totalorder %s180, %s181
      %p190 = scmp.eq.s32.totalorder %s30, 0
      %p191 = por %p189, %p190
      %p192 = scmp.ne.s32.totalorder %s180, %s181
      %p193 = scmp.eq.s32.totalorder %s31, 1
      %p194 = por %p192, %p193
      %p196 = scmp.ne.s32.totalorder %s181, %s195
      %p197 = scmp.eq.s32.totalorder %s31, 0
      %p198 = por %p196, %p197
      %s200 = sadd.s32 %s199, 1
      %p203 = scmp.eq.s32.totalorder %s25, 1
      %p204 = scmp.ne.s32.totalorder %s199, %s201
      %p205 = scmp.eq.s32.totalorder %s25, 0
      %p206 = por %p204, %p205
      %p207 = scmp.ne.s32.totalorder %s199, %s201
      %p208 = scmp.eq.s32.totalorder %s30, 1
      %p209 = por %p207, %p208
      %p210 = scmp.ne.s32.totalorder %s201, %s202
      %p211 = scmp.eq.s32.totalorder %s30, 0
      %p212 = por %p210, %p211
      %p213 = scmp.ne.s32.totalorder %s201, %s202
      %p214 = scmp.eq.s32.totalorder %s31, 1
      %p215 = por %p213, %p214
      %p217 = scmp.ne.s32.totalorder %s202, %s216
      %p218 = scmp.eq.s32.totalorder %s31, 0
      %p219 = por %p217, %p218
      %s221 = sadd.s32 %s220, 1
      %p224 = scmp.eq.s32.totalorder %s25, 1
      %p225 = scmp.ne.s32.totalorder %s220, %s222
      %p226 = scmp.eq.s32.totalorder %s25, 0
      %p227 = por %p225, %p226
      %p228 = scmp.ne.s32.totalorder %s220, %s222
      %p229 = scmp.eq.s32.totalorder %s30, 1
      %p230 = por %p228, %p229
      %p231 = scmp.ne.s32.totalorder %s222, %s223
      %p232 = scmp.eq.s32.totalorder %s30, 0
      %p233 = por %p231, %p232
      %p234 = scmp.ne.s32.totalorder %s222, %s223
      %p235 = scmp.eq.s32.totalorder %s31, 1
      %p236 = por %p234, %p235
      %p238 = scmp.ne.s32.totalorder %s223, %s237
      %p239 = scmp.eq.s32.totalorder %s31, 0
      %p240 = por %p238, %p239
      %s242 = sadd.s32 %s241, 1
      %p245 = scmp.eq.s32.totalorder %s25, 1
      %p246 = scmp.ne.s32.totalorder %s241, %s243
      %p247 = scmp.eq.s32.totalorder %s25, 0
      %p248 = por %p246, %p247
      %p249 = scmp.ne.s32.totalorder %s241, %s243
      %p250 = scmp.eq.s32.totalorder %s30, 1
      %p251 = por %p249, %p250
      %p252 = scmp.ne.s32.totalorder %s243, %s244
      %p253 = scmp.eq.s32.totalorder %s30, 0
      %p254 = por %p252, %p253
      %p255 = scmp.ne.s32.totalorder %s243, %s244
      %p256 = scmp.eq.s32.totalorder %s31, 1
      %p257 = por %p255, %p256
      %p259 = scmp.ne.s32.totalorder %s244, %s258
      %p260 = scmp.eq.s32.totalorder %s31, 0
      %p261 = por %p259, %p260
      %s263 = sadd.s32 %s262, 1
      %p266 = scmp.eq.s32.totalorder %s25, 1
      %p267 = scmp.ne.s32.totalorder %s262, %s264
      %p268 = scmp.eq.s32.totalorder %s25, 0
      %p269 = por %p267, %p268
      %p270 = scmp.ne.s32.totalorder %s262, %s264
      %p271 = scmp.eq.s32.totalorder %s30, 1
      %p272 = por %p270, %p271
      %p273 = scmp.ne.s32.totalorder %s264, %s265
      %p274 = scmp.eq.s32.totalorder %s30, 0
      %p275 = por %p273, %p274
      %p276 = scmp.ne.s32.totalorder %s264, %s265
      %p277 = scmp.eq.s32.totalorder %s31, 1
      %p278 = por %p276, %p277
      %p280 = scmp.ne.s32.totalorder %s265, %s279
      %p281 = scmp.eq.s32.totalorder %s31, 0
      %p282 = por %p280, %p281
      %s284 = sadd.s32 %s283, 1
      %p287 = scmp.eq.s32.totalorder %s25, 1
      %p288 = scmp.ne.s32.totalorder %s283, %s285
      %p289 = scmp.eq.s32.totalorder %s25, 0
      %p290 = por %p288, %p289
      %p291 = scmp.ne.s32.totalorder %s283, %s285
      %p292 = scmp.eq.s32.totalorder %s30, 1
      %p293 = por %p291, %p292
      %p294 = scmp.ne.s32.totalorder %s285, %s286
      %p295 = scmp.eq.s32.totalorder %s30, 0
      %p296 = por %p294, %p295
      %p297 = scmp.ne.s32.totalorder %s285, %s286
      %p298 = scmp.eq.s32.totalorder %s31, 1
      %p299 = por %p297, %p298
      %p301 = scmp.ne.s32.totalorder %s286, %s300
      %p302 = scmp.eq.s32.totalorder %s31, 0
      %p303 = por %p301, %p302
      %s305 = sadd.s32 %s304, 1
      %p308 = scmp.eq.s32.totalorder %s25, 1
      %p309 = scmp.ne.s32.totalorder %s304, %s306
      %p310 = scmp.eq.s32.totalorder %s25, 0
      %p311 = por %p309, %p310
      %p312 = scmp.ne.s32.totalorder %s304, %s306
      %p313 = scmp.eq.s32.totalorder %s30, 1
      %p314 = por %p312, %p313
      %p315 = scmp.ne.s32.totalorder %s306, %s307
      %p316 = scmp.eq.s32.totalorder %s30, 0
      %p317 = por %p315, %p316
      %p318 = scmp.ne.s32.totalorder %s306, %s307
      %p319 = scmp.eq.s32.totalorder %s31, 1
      %p320 = por %p318, %p319
      %p322 = scmp.ne.s32.totalorder %s307, %s321
      %p323 = scmp.eq.s32.totalorder %s31, 0
      %p324 = por %p322, %p323
      %s326 = sadd.s32 %s325, 1
      %p329 = scmp.eq.s32.totalorder %s25, 1
      %p330 = scmp.ne.s32.totalorder %s325, %s327
      %p331 = scmp.eq.s32.totalorder %s25, 0
      %p332 = por %p330, %p331
      %p333 = scmp.ne.s32.totalorder %s325, %s327
      %p334 = scmp.eq.s32.totalorder %s30, 1
      %p335 = por %p333, %p334
      %p336 = scmp.ne.s32.totalorder %s327, %s328
      %p337 = scmp.eq.s32.totalorder %s30, 0
      %p338 = por %p336, %p337
      %p339 = scmp.ne.s32.totalorder %s327, %s328
      %p340 = scmp.eq.s32.totalorder %s31, 1
      %p341 = por %p339, %p340
      %p343 = scmp.ne.s32.totalorder %s328, %s342
      %p344 = scmp.eq.s32.totalorder %s31, 0
      %p345 = por %p343, %p344
      %s347 = sadd.s32 %s346, 1
      %p350 = scmp.eq.s32.totalorder %s25, 1
      %p351 = scmp.ne.s32.totalorder %s346, %s348
      %p352 = scmp.eq.s32.totalorder %s25, 0
      %p353 = por %p351, %p352
      %p354 = scmp.ne.s32.totalorder %s346, %s348
      %p355 = scmp.eq.s32.totalorder %s30, 1
      %p356 = por %p354, %p355
      %p357 = scmp.ne.s32.totalorder %s348, %s349
      %p358 = scmp.eq.s32.totalorder %s30, 0
      %p359 = por %p357, %p358
      %p360 = scmp.ne.s32.totalorder %s348, %s349
      %p361 = scmp.eq.s32.totalorder %s31, 1
      %p362 = por %p360, %p361
      %p364 = scmp.ne.s32.totalorder %s349, %s363
      %p365 = scmp.eq.s32.totalorder %s31, 0
      %p366 = por %p364, %p365
      %s368 = sadd.s32 %s367, 1
      %p371 = scmp.eq.s32.totalorder %s25, 1
      %p372 = scmp.ne.s32.totalorder %s367, %s369
      %p373 = scmp.eq.s32.totalorder %s25, 0
      %p374 = por %p372, %p373
      %p375 = scmp.ne.s32.totalorder %s367, %s369
      %p376 = scmp.eq.s32.totalorder %s30, 1
      %p377 = por %p375, %p376
      %p378 = scmp.ne.s32.totalorder %s369, %s370
      %p379 = scmp.eq.s32.totalorder %s30, 0
      %p380 = por %p378, %p379
      %p381 = scmp.ne.s32.totalorder %s369, %s370
      %p382 = scmp.eq.s32.totalorder %s31, 1
      %p383 = por %p381, %p382
      %p385 = scmp.ne.s32.totalorder %s370, %s384
      %p386 = scmp.eq.s32.totalorder %s31, 0
      %p387 = por %p385, %p386
      %s388 = ssub.s32 %s32, %s44
      %s389 = ssub.s32 %s33, %s40
      %s390 = sor.u32 %s388, %s389
      %p391 = scmp.eq.s32.totalorder %s390, 0
      %s393 = sadd.s32 %s392, 1
      %s394 = scalar_select %p391, %s392, %s393
      %p397 = pneg %p391
      %p398 = scmp.eq.s32.totalorder %s25, 1
      %p399 = por %p397, %p398
      %p400 = scmp.ne.s32.totalorder %s392, %s395
      %p401 = scmp.eq.s32.totalorder %s25, 0
      %p402 = por %p400, %p401
      %p403 = scmp.ne.s32.totalorder %s392, %s395
      %p404 = scmp.eq.s32.totalorder %s30, 1
      %p405 = por %p403, %p404
      %p406 = scmp.ne.s32.totalorder %s395, %s396
      %p407 = scmp.eq.s32.totalorder %s30, 0
      %p408 = por %p406, %p407
      %p409 = scmp.ne.s32.totalorder %s395, %s396
      %p410 = scmp.eq.s32.totalorder %s31, 1
      %p411 = por %p409, %p410
      %p413 = scmp.ne.s32.totalorder %s396, %s412
      %p414 = scmp.eq.s32.totalorder %s31, 0
      %p415 = por %p413, %p414
      %p416 = scmp.le.s32.totalorder 1, %s25
      %p417 = scmp.lt.s32.totalorder %s25, 3
      %p418 = pnand %p416, %p417
      %p419 = pneg %p418
      // Predicated region
      $region9: #{swin_forward.11} parent=5 // pred_check
        _
      $region10: #{swin_forward.11} parent=5 // pred_check_branch
        %421 = sbr.rel (%p418) target = $region12
      $region11: #{swin_forward.11} parent=5 // pred_region
        %s422 = ssub.s32 %s25, 1
        // Predicated region
        $region13: #{swin_forward.11} parent=11 // pred_check
          %p423 = pneg %p86
        $region14: #{swin_forward.11} parent=11 // pred_check_branch
          %425 = sbr.rel (%p423) target = $region16
        $region15: #{swin_forward.11} parent=11 // pred_region
          _
        $region16: #{swin_forward.11} parent=11 // pred_fallthru
          _
        // Predicated region
        $region17: #{swin_forward.11} parent=11 // pred_check
          %p426 = pneg %p107
        $region18: #{swin_forward.11} parent=11 // pred_check_branch
          %428 = sbr.rel (%p426) target = $region20
        $region19: #{swin_forward.11} parent=11 // pred_region
          _
        $region20: #{swin_forward.11} parent=11 // pred_fallthru
          _
        // Predicated region
        $region21: #{swin_forward.11} parent=11 // pred_check
          %p429 = pneg %p128
        $region22: #{swin_forward.11} parent=11 // pred_check_branch
          %431 = sbr.rel (%p429) target = $region24
        $region23: #{swin_forward.11} parent=11 // pred_region
          _
        $region24: #{swin_forward.11} parent=11 // pred_fallthru
          _
        // Predicated region
        $region25: #{swin_forward.11} parent=11 // pred_check
          %p432 = pneg %p149
        $region26: #{swin_forward.11} parent=11 // pred_check_branch
          %434 = sbr.rel (%p432) target = $region28
        $region27: #{swin_forward.11} parent=11 // pred_region
          _
        $region28: #{swin_forward.11} parent=11 // pred_fallthru
          _
        // Predicated region
        $region29: #{swin_forward.11} parent=11 // pred_check
          %p435 = pneg %p170
        $region30: #{swin_forward.11} parent=11 // pred_check_branch
          %437 = sbr.rel (%p435) target = $region32
        $region31: #{swin_forward.11} parent=11 // pred_region
          _
        $region32: #{swin_forward.11} parent=11 // pred_fallthru
          _
        // Predicated region
        $region33: #{swin_forward.11} parent=11 // pred_check
          %p438 = pneg %p191
        $region34: #{swin_forward.11} parent=11 // pred_check_branch
          %440 = sbr.rel (%p438) target = $region36
        $region35: #{swin_forward.11} parent=11 // pred_region
          _
        $region36: #{swin_forward.11} parent=11 // pred_fallthru
          _
        // Predicated region
        $region37: #{swin_forward.11} parent=11 // pred_check
          %p441 = pneg %p212
        $region38: #{swin_forward.11} parent=11 // pred_check_branch
          %443 = sbr.rel (%p441) target = $region40
        $region39: #{swin_forward.11} parent=11 // pred_region
          _
        $region40: #{swin_forward.11} parent=11 // pred_fallthru
          _
        // Predicated region
        $region41: #{swin_forward.11} parent=11 // pred_check
          %p444 = pneg %p233
        $region42: #{swin_forward.11} parent=11 // pred_check_branch
          %446 = sbr.rel (%p444) target = $region44
        $region43: #{swin_forward.11} parent=11 // pred_region
          _
        $region44: #{swin_forward.11} parent=11 // pred_fallthru
          _
        // Predicated region
        $region45: #{swin_forward.11} parent=11 // pred_check
          %p447 = pneg %p254
        $region46: #{swin_forward.11} parent=11 // pred_check_branch
          %449 = sbr.rel (%p447) target = $region48
        $region47: #{swin_forward.11} parent=11 // pred_region
          _
        $region48: #{swin_forward.11} parent=11 // pred_fallthru
          _
        // Predicated region
        $region49: #{swin_forward.11} parent=11 // pred_check
          %p450 = pneg %p275
        $region50: #{swin_forward.11} parent=11 // pred_check_branch
          %452 = sbr.rel (%p450) target = $region52
        $region51: #{swin_forward.11} parent=11 // pred_region
          _
        $region52: #{swin_forward.11} parent=11 // pred_fallthru
          _
        // Predicated region
        $region53: #{swin_forward.11} parent=11 // pred_check
          %p453 = pneg %p296
        $region54: #{swin_forward.11} parent=11 // pred_check_branch
          %455 = sbr.rel (%p453) target = $region56
        $region55: #{swin_forward.11} parent=11 // pred_region
          _
        $region56: #{swin_forward.11} parent=11 // pred_fallthru
          _
        // Predicated region
        $region57: #{swin_forward.11} parent=11 // pred_check
          %p456 = pneg %p317
        $region58: #{swin_forward.11} parent=11 // pred_check_branch
          %458 = sbr.rel (%p456) target = $region60
        $region59: #{swin_forward.11} parent=11 // pred_region
          _
        $region60: #{swin_forward.11} parent=11 // pred_fallthru
          _
        // Predicated region
        $region61: #{swin_forward.11} parent=11 // pred_check
          %p459 = pneg %p338
        $region62: #{swin_forward.11} parent=11 // pred_check_branch
          %461 = sbr.rel (%p459) target = $region64
        $region63: #{swin_forward.11} parent=11 // pred_region
          _
        $region64: #{swin_forward.11} parent=11 // pred_fallthru
          _
        // Predicated region
        $region65: #{swin_forward.11} parent=11 // pred_check
          %p462 = pneg %p359
        $region66: #{swin_forward.11} parent=11 // pred_check_branch
          %464 = sbr.rel (%p462) target = $region68
        $region67: #{swin_forward.11} parent=11 // pred_region
          _
        $region68: #{swin_forward.11} parent=11 // pred_fallthru
          _
        // Predicated region
        $region69: #{swin_forward.11} parent=11 // pred_check
          %p465 = pneg %p380
        $region70: #{swin_forward.11} parent=11 // pred_check_branch
          %467 = sbr.rel (%p465) target = $region72
        $region71: #{swin_forward.11} parent=11 // pred_region
          _
        $region72: #{swin_forward.11} parent=11 // pred_fallthru
          _
      $region12: #{swin_forward.11} parent=5 // pred_fallthru
        _
      %p468 = scmp.lt.s32.totalorder %s25, 2
      // Predicated region
      $region73: #{swin_forward.11} parent=5 // pred_check
        %p469 = pneg %p468
      $region74: #{swin_forward.11} parent=5 // pred_check_branch
        %471 = sbr.rel (%p469) target = $region76
      $region75: #{swin_forward.11} parent=5 // pred_region
        // Predicated region
        $region77: #{swin_forward.11} parent=75 // pred_check
          %p472 = pneg %p59
        $region78: #{swin_forward.11} parent=75 // pred_check_branch
          %474 = sbr.rel (%p472) target = $region80
        $region79: #{swin_forward.11} parent=75 // pred_region
          %p475 = scmp.lt.s32.totalorder %s32, 1
          %s476 = scalar_select %p475, %s32, 1
          %p477 = scmp.lt.s32.totalorder %s33, 0
          %s478 = scalar_select %p477, %s33, 0
          %s479 = smul.addr %s478, 2
          %s480 = smul.addr %s476, 2
          %s481 = sadd.s32 %s479, %s480
          %s482 = smul.addr %s481, 4
          %s483 = scalar_lea.vmem %s0, %s482
        $region80: #{swin_forward.11} parent=75 // pred_fallthru
          _
      $region76: #{swin_forward.11} parent=5 // pred_fallthru
        _
      %p484 = scmp.le.s32.totalorder 1, %s25
      %p485 = scmp.lt.s32.totalorder %s25, 3
      %p486 = pnand %p484, %p485
      %p487 = pneg %p486
      // Predicated region
      $region81: #{swin_forward.11} parent=5 // pred_check
        _
      $region82: #{swin_forward.11} parent=5 // pred_check_branch
        %489 = sbr.rel (%p486) target = $region84
      $region83: #{swin_forward.11} parent=5 // pred_region
        %s490 = ssub.s32 %s25, 1
        %p491 = scmp.lt.s32.totalorder %s34, 1
        %s492 = scalar_select %p491, %s34, 1
        %p493 = scmp.lt.s32.totalorder %s35, 0
        %s494 = scalar_select %p493, %s35, 0
        %s495 = smul.addr %s494, 2
        %s496 = smul.addr %s492, 2
        %s497 = sadd.s32 %s495, %s496
        %s498 = smul.addr %s497, 4
        %s499 = scalar_lea.vmem %s0, %s498
        %p500 = pneg %p65
        %p501 = pneg %p62
        %p502 = pneg %p86
        %p503 = pneg %p83
        %p504 = pneg %p107
        %p505 = pneg %p104
        %p506 = pneg %p128
        %p507 = pneg %p125
        %p508 = pneg %p149
        %p509 = pneg %p146
        %p510 = pneg %p170
        %p511 = pneg %p167
        %p512 = pneg %p191
        %p513 = pneg %p188
        %p514 = pneg %p212
        %p515 = pneg %p209
        %p516 = pneg %p233
        %p517 = pneg %p230
        %p518 = pneg %p254
        %p519 = pneg %p251
        %p520 = pneg %p275
        %p521 = pneg %p272
        %p522 = pneg %p296
        %p523 = pneg %p293
        %p524 = pneg %p317
        %p525 = pneg %p314
        %p526 = pneg %p338
        %p527 = pneg %p335
        %p528 = pneg %p359
        %p529 = pneg %p356
        %p530 = pneg %p380
        %p531 = pneg %p377
        %p532 = pneg %p408
        %p533 = pneg %p405
        %s534 = sand.u32 %s395, 1
        %s535 = scalar_lea.sflag [#allocation3], %s534
        %s536 = sand.u32 %s395, 1
        %s537 = smul.addr %s536, 16
        %s538 = scalar_lea.vmem [#allocation2], %s537
        %p539 = scmp.lt.s32.totalorder %s34, 1
        %s540 = scalar_select %p539, %s34, 1
        %p541 = scmp.lt.s32.totalorder %s35, 0
        %s542 = scalar_select %p541, %s35, 0
        %s543 = smul.addr %s542, 2
        %s544 = smul.addr %s540, 2
        %s545 = sadd.s32 %s543, %s544
        %s546 = smul.addr %s545, 4
        %s547 = scalar_lea.vmem %s0, %s546
        %v549 = vld [vmem:[%s547] sm:$0xf]
        %v550 = vld [vmem:[%s547 + $0x4] sm:$0xf]
        %v551 = vunpack.c.l.bf16 %v549
        %v552 = vunpack.c.l.bf16 %v550
        %v553 = vld [vmem:[%s1] sm:$0x1]
        %v554 = vld [vmem:[%s2] sm:$0x1]
        %vm555 = vcmask 261120
        %v556 = vsel %vm555, %v551, 0.0
        %557 = vadd.xlane.f32.xlu0 %v556
        %v558 = vpop.xlane.xlu0 %557
        %v559 = vsel %vm555, %v552, 0.0
        %560 = vadd.xlane.f32.xlu0 %v559
        %v561 = vpop.xlane.xlu0 %560
        %v562 = vrcp.pop 32.0
        %v563 = vmul.f32 %v558, %v562
        %v564 = vmul.f32 %v561, %v562
        %v565 = vsub.f32 %v551, %v563
        %v566 = vsub.f32 %v552, %v564
        %v567 = vmul.f32 %v565, %v565
        %v568 = vmul.f32 %v566, %v566
        %v569 = vsel %vm555, %v567, 0.0
        %570 = vadd.xlane.f32.xlu0 %v569
        %v571 = vpop.xlane.xlu0 %570
        %v572 = vsel %vm555, %v568, 0.0
        %573 = vadd.xlane.f32.xlu0 %v572
        %v574 = vpop.xlane.xlu0 %573
        %v575 = vmul.f32 %v571, %v562
        %v576 = vmul.f32 %v574, %v562
        %v577 = vadd.f32 %v575, 1e-05
        %v578 = vadd.f32 %v576, 1e-05
        %v579 = vrsqrt.pop %v577
        %v580 = vrsqrt.pop %v578
        %v581 = vmul.f32 %v565, %v579
        %v582 = vmul.f32 %v566, %v580
        %v584 = vlaneseq
        %v585 = vshrl.u32 %v584, 7
        %v586 = vsub.s32 0, %v585
        %v587 = vrot.slane %v553, %v586
        %v589 = vmul.f32 %v581, %v587
        %v590 = vmul.f32 %v582, %v587
        %v592 = vlaneseq
        %v593 = vshrl.u32 %v592, 7
        %v594 = vsub.s32 0, %v593
        %v595 = vrot.slane %v554, %v594
        %v597 = vadd.f32 %v589, %v595
        %v598 = vadd.f32 %v590, %v595
        %v599 = vpack.c.bf16 %v598, %v597
        %v600 = vld [vmem:[%s3] sm:$0xf]
        %v601 = vld [vmem:[%s3 + $0x4] sm:$0xf]
        %v602 = vld [vmem:[%s3 + $0x8] sm:$0xf]
        %v603 = vld [vmem:[%s3 + $0xc] sm:$0xf]
        %v604 = vld [vmem:[%s4] sm:$0x1]
        %v606 = vlaneseq
        %v607 = vshrl.u32 %v606, 7
        %v608 = vsub.s32 0, %v607
        %v609 = vrot.slane %v604, %v608
        %v615 = vunpack.c.l.b16 %v600
        %v616 = vunpack.c.l.b16 %v601
        %v617 = vunpack.c.l.b16 %v602
        %v618 = vunpack.c.l.b16 %v603
        %v619 = vpack.c.b16 %v616, %v615
        %v620 = vpack.c.b16 %v618, %v617
        %v624 = vsel %vm555, %v599, 0
        %626 = vmatprep.subr.bf16.mxu0 0
        %627 = vmatpush1.bf16.msra.mxu0 %v619
        %628 = vmatprep.subr.bf16.mxu0 0
        %629 = vmatpush1.bf16.msra.mxu0 %v620
        %630 = vmatprep.subr.bf16.mxu0 0
        %631 = vmatpush1.bf16.msra.mxu0 0
        %632 = vmatprep.subr.bf16.mxu0 0
        %633 = vmatpush1.bf16.msra.mxu0 0
        %634 = vmatprep.subr.bf16.mxu0 0
        %635 = vmatpush1.bf16.msra.mxu0 0
        %636 = vmatprep.subr.bf16.mxu0 0
        %637 = vmatpush1.bf16.msra.mxu0 0
        %638 = vmatprep.subr.bf16.mxu0 0
        %639 = vmatpush1.bf16.msra.mxu0 0
        %640 = vmatprep.subr.bf16.mxu0 0
        %641 = vmatpush1.bf16.msra.mxu0 0
        %642 = vmatprep.subr.bf16.mxu0 0
        %643 = vmatpush1.bf16.msra.mxu0 0
        %644 = vmatprep.subr.bf16.mxu0 0
        %645 = vmatpush1.bf16.msra.mxu0 0
        %646 = vmatprep.subr.bf16.mxu0 0
        %647 = vmatpush1.bf16.msra.mxu0 0
        %648 = vmatprep.subr.bf16.mxu0 0
        %649 = vmatpush1.bf16.msra.mxu0 0
        %650 = vmatprep.subr.bf16.mxu0 0
        %651 = vmatpush1.bf16.msra.mxu0 0
        %652 = vmatprep.subr.bf16.mxu0 0
        %653 = vmatpush1.bf16.msra.mxu0 0
        %654 = vmatprep.subr.bf16.mxu0 0
        %655 = vmatpush1.bf16.msra.mxu0 0
        %656 = vmatprep.subr.bf16.mxu0 0
        %657 = vmatpush1.bf16.msra.mxu0 0
        %658 = vmatprep.mubr.bf16.mxu0 0
        %659 = vmatmul.mubr.bf16.gmra.mrb[0].mxu0 %v624
        %v660 = vpop.f32.mrb[0].mxu0
        %v661 = vadd.f32 %v609, %v660
        %v662 = vpop.f32.mrb[0].mxu0
        %v663 = vpop.f32.mrb[0].mxu0
        %v664 = vadd.f32 %v609, %v663
        %v665 = vpop.f32.mrb[0].mxu0
        %666 = vdwg.mxu0
        %669 = vrot.lane.b32.xlu0 %v661, 120
        %v670 = vpop.permute.xlu0 %669
        %671 = vrot.lane.b32.xlu0 %v664, 120
        %v672 = vpop.permute.xlu0 %671
        %675 = vrot.lane.b32.xlu0 %v661, 112
        %v676 = vpop.permute.xlu0 %675
        %677 = vrot.lane.b32.xlu0 %v664, 112
        %v678 = vpop.permute.xlu0 %677
        %681 = vrot.lane.b32.xlu0 %v661, 104
        %v682 = vpop.permute.xlu0 %681
        %683 = vrot.lane.b32.xlu0 %v664, 104
        %v684 = vpop.permute.xlu0 %683
        %v687 = vpack.c.bf16 %v664, %v661
        %v688 = vpack.c.bf16 %v672, %v670
        %v689 = vpack.c.bf16 %v678, %v676
        %v690 = vpack.c.bf16 %v684, %v682
        %692 = vrot.lane.b32.xlu0 %v687, 96
        %v693 = vpop.permute.xlu0 %692
        %vm694 = vcmask 64512
        %v696 = vsel %vm694, %v687, 0
        %v699 = vsel %vm694, %v693, 0
        %701 = vmatprep.subr.bf16.mxu0 0
        %702 = vmatpush1.bf16.xpose.msra.mxu0 %v699
        %703 = vmatprep.subr.bf16.mxu0 0
        %704 = vmatpush1.bf16.xpose.msra.mxu0 0
        %705 = vmatprep.subr.bf16.mxu0 0
        %706 = vmatpush1.bf16.xpose.msra.mxu0 0
        %707 = vmatprep.subr.bf16.mxu0 0
        %708 = vmatpush1.bf16.xpose.msra.mxu0 0
        %709 = vmatprep.subr.bf16.mxu0 0
        %710 = vmatpush1.bf16.xpose.msra.mxu0 0
        %711 = vmatprep.subr.bf16.mxu0 0
        %712 = vmatpush1.bf16.xpose.msra.mxu0 0
        %713 = vmatprep.subr.bf16.mxu0 0
        %714 = vmatpush1.bf16.xpose.msra.mxu0 0
        %715 = vmatprep.subr.bf16.mxu0 0
        %716 = vmatpush1.bf16.xpose.msra.mxu0 0
        %717 = vmatprep.subr.bf16.mxu0 0
        %718 = vmatpush1.bf16.xpose.msra.mxu0 0
        %719 = vmatprep.subr.bf16.mxu0 0
        %720 = vmatpush1.bf16.xpose.msra.mxu0 0
        %721 = vmatprep.subr.bf16.mxu0 0
        %722 = vmatpush1.bf16.xpose.msra.mxu0 0
        %723 = vmatprep.subr.bf16.mxu0 0
        %724 = vmatpush1.bf16.xpose.msra.mxu0 0
        %725 = vmatprep.subr.bf16.mxu0 0
        %726 = vmatpush1.bf16.xpose.msra.mxu0 0
        %727 = vmatprep.subr.bf16.mxu0 0
        %728 = vmatpush1.bf16.xpose.msra.mxu0 0
        %729 = vmatprep.subr.bf16.mxu0 0
        %730 = vmatpush1.bf16.xpose.msra.mxu0 0
        %731 = vmatprep.subr.bf16.mxu0 0
        %732 = vmatpush1.bf16.xpose.msra.mxu0 0
        %733 = vmatprep.mubr.bf16.mxu0 0
        %734 = vmatmul.mubr.bf16.gmra.mrb[0].mxu0 %v696
        %v735 = vpop.f32.mrb[0].mxu0
        %v736 = vadd.f32 0.0, %v735
        %v737 = vpop.f32.mrb[0].mxu0
        %v738 = vpop.f32.mrb[0].mxu0
        %v739 = vadd.f32 0.0, %v738
        %v740 = vpop.f32.mrb[0].mxu0
        %741 = vdwg.mxu0
        %743 = vrot.lane.b32.xlu0 %v688, 96
        %v744 = vpop.permute.xlu0 %743
        %v746 = vsel %vm694, %v688, 0
        %v749 = vsel %vm694, %v744, 0
        %751 = vmatprep.subr.bf16.mxu0 0
        %752 = vmatpush1.bf16.xpose.msra.mxu0 %v749
        %753 = vmatprep.subr.bf16.mxu0 0
        %754 = vmatpush1.bf16.xpose.msra.mxu0 0
        %755 = vmatprep.subr.bf16.mxu0 0
        %756 = vmatpush1.bf16.xpose.msra.mxu0 0
        %757 = vmatprep.subr.bf16.mxu0 0
        %758 = vmatpush1.bf16.xpose.msra.mxu0 0
        %759 = vmatprep.subr.bf16.mxu0 0
        %760 = vmatpush1.bf16.xpose.msra.mxu0 0
        %761 = vmatprep.subr.bf16.mxu0 0
        %762 = vmatpush1.bf16.xpose.msra.mxu0 0
        %763 = vmatprep.subr.bf16.mxu0 0
        %764 = vmatpush1.bf16.xpose.msra.mxu0 0
        %765 = vmatprep.subr.bf16.mxu0 0
        %766 = vmatpush1.bf16.xpose.msra.mxu0 0
        %767 = vmatprep.subr.bf16.mxu0 0
        %768 = vmatpush1.bf16.xpose.msra.mxu0 0
        %769 = vmatprep.subr.bf16.mxu0 0
        %770 = vmatpush1.bf16.xpose.msra.mxu0 0
        %771 = vmatprep.subr.bf16.mxu0 0
        %772 = vmatpush1.bf16.xpose.msra.mxu0 0
        %773 = vmatprep.subr.bf16.mxu0 0
        %774 = vmatpush1.bf16.xpose.msra.mxu0 0
        %775 = vmatprep.subr.bf16.mxu0 0
        %776 = vmatpush1.bf16.xpose.msra.mxu0 0
        %777 = vmatprep.subr.bf16.mxu0 0
        %778 = vmatpush1.bf16.xpose.msra.mxu0 0
        %779 = vmatprep.subr.bf16.mxu0 0
        %780 = vmatpush1.bf16.xpose.msra.mxu0 0
        %781 = vmatprep.subr.bf16.mxu0 0
        %782 = vmatpush1.bf16.xpose.msra.mxu0 0
        %783 = vmatprep.mubr.bf16.mxu0 0
        %784 = vmatmul.mubr.bf16.gmra.mrb[0].mxu0 %v746
        %v785 = vpop.f32.mrb[0].mxu0
        %v786 = vadd.f32 0.0, %v785
        %v787 = vpop.f32.mrb[0].mxu0
        %v788 = vpop.f32.mrb[0].mxu0
        %v789 = vadd.f32 0.0, %v788
        %v790 = vpop.f32.mrb[0].mxu0
        %791 = vdwg.mxu0
        %793 = vrot.lane.b32.xlu0 %v689, 96
        %v794 = vpop.permute.xlu0 %793
        %v796 = vsel %vm694, %v689, 0
        %v799 = vsel %vm694, %v794, 0
        %801 = vmatprep.subr.bf16.mxu0 0
        %802 = vmatpush1.bf16.xpose.msra.mxu0 %v799
        %803 = vmatprep.subr.bf16.mxu0 0
        %804 = vmatpush1.bf16.xpose.msra.mxu0 0
        %805 = vmatprep.subr.bf16.mxu0 0
        %806 = vmatpush1.bf16.xpose.msra.mxu0 0
        %807 = vmatprep.subr.bf16.mxu0 0
        %808 = vmatpush1.bf16.xpose.msra.mxu0 0
        %809 = vmatprep.subr.bf16.mxu0 0
        %810 = vmatpush1.bf16.xpose.msra.mxu0 0
        %811 = vmatprep.subr.bf16.mxu0 0
        %812 = vmatpush1.bf16.xpose.msra.mxu0 0
        %813 = vmatprep.subr.bf16.mxu0 0
        %814 = vmatpush1.bf16.xpose.msra.mxu0 0
        %815 = vmatprep.subr.bf16.mxu0 0
        %816 = vmatpush1.bf16.xpose.msra.mxu0 0
        %817 = vmatprep.subr.bf16.mxu0 0
        %818 = vmatpush1.bf16.xpose.msra.mxu0 0
        %819 = vmatprep.subr.bf16.mxu0 0
        %820 = vmatpush1.bf16.xpose.msra.mxu0 0
        %821 = vmatprep.subr.bf16.mxu0 0
        %822 = vmatpush1.bf16.xpose.msra.mxu0 0
        %823 = vmatprep.subr.bf16.mxu0 0
        %824 = vmatpush1.bf16.xpose.msra.mxu0 0
        %825 = vmatprep.subr.bf16.mxu0 0
        %826 = vmatpush1.bf16.xpose.msra.mxu0 0
        %827 = vmatprep.subr.bf16.mxu0 0
        %828 = vmatpush1.bf16.xpose.msra.mxu0 0
        %829 = vmatprep.subr.bf16.mxu0 0
        %830 = vmatpush1.bf16.xpose.msra.mxu0 0
        %831 = vmatprep.subr.bf16.mxu0 0
        %832 = vmatpush1.bf16.xpose.msra.mxu0 0
        %833 = vmatprep.mubr.bf16.mxu0 0
        %834 = vmatmul.mubr.bf16.gmra.mrb[0].mxu0 %v796
        %v835 = vpop.f32.mrb[0].mxu0
        %v836 = vadd.f32 0.0, %v835
        %v837 = vpop.f32.mrb[0].mxu0
        %v838 = vpop.f32.mrb[0].mxu0
        %v839 = vadd.f32 0.0, %v838
        %v840 = vpop.f32.mrb[0].mxu0
        %841 = vdwg.mxu0
        %843 = vrot.lane.b32.xlu0 %v690, 96
        %v844 = vpop.permute.xlu0 %843
        %v846 = vsel %vm694, %v690, 0
        %v849 = vsel %vm694, %v844, 0
        %851 = vmatprep.subr.bf16.mxu0 0
        %852 = vmatpush1.bf16.xpose.msra.mxu0 %v849
        %853 = vmatprep.subr.bf16.mxu0 0
        %854 = vmatpush1.bf16.xpose.msra.mxu0 0
        %855 = vmatprep.subr.bf16.mxu0 0
        %856 = vmatpush1.bf16.xpose.msra.mxu0 0
        %857 = vmatprep.subr.bf16.mxu0 0
        %858 = vmatpush1.bf16.xpose.msra.mxu0 0
        %859 = vmatprep.subr.bf16.mxu0 0
        %860 = vmatpush1.bf16.xpose.msra.mxu0 0
        %861 = vmatprep.subr.bf16.mxu0 0
        %862 = vmatpush1.bf16.xpose.msra.mxu0 0
        %863 = vmatprep.subr.bf16.mxu0 0
        %864 = vmatpush1.bf16.xpose.msra.mxu0 0
        %865 = vmatprep.subr.bf16.mxu0 0
        %866 = vmatpush1.bf16.xpose.msra.mxu0 0
        %867 = vmatprep.subr.bf16.mxu0 0
        %868 = vmatpush1.bf16.xpose.msra.mxu0 0
        %869 = vmatprep.subr.bf16.mxu0 0
        %870 = vmatpush1.bf16.xpose.msra.mxu0 0
        %871 = vmatprep.subr.bf16.mxu0 0
        %872 = vmatpush1.bf16.xpose.msra.mxu0 0
        %873 = vmatprep.subr.bf16.mxu0 0
        %874 = vmatpush1.bf16.xpose.msra.mxu0 0
        %875 = vmatprep.subr.bf16.mxu0 0
        %876 = vmatpush1.bf16.xpose.msra.mxu0 0
        %877 = vmatprep.subr.bf16.mxu0 0
        %878 = vmatpush1.bf16.xpose.msra.mxu0 0
        %879 = vmatprep.subr.bf16.mxu0 0
        %880 = vmatpush1.bf16.xpose.msra.mxu0 0
        %881 = vmatprep.subr.bf16.mxu0 0
        %882 = vmatpush1.bf16.xpose.msra.mxu0 0
        %883 = vmatprep.mubr.bf16.mxu0 0
        %884 = vmatmul.mubr.bf16.gmra.mrb[0].mxu0 %v846
        %v885 = vpop.f32.mrb[0].mxu0
        %v886 = vadd.f32 0.0, %v885
        %v887 = vpop.f32.mrb[0].mxu0
        %v888 = vpop.f32.mrb[0].mxu0
        %v889 = vadd.f32 0.0, %v888
        %v890 = vpop.f32.mrb[0].mxu0
        %891 = vdwg.mxu0
        %v892 = vld [vmem:[%s7] sm:$0xff]
        %v893 = vld [vmem:[%s7 + $0x8] sm:$0xff]
        %v894 = vld [vmem:[%s7 + $0x10] sm:$0xff]
        %v895 = vld [vmem:[%s7 + $0x18] sm:$0xff]
        %v896 = vld [vmem:[%s7 + $0x20] sm:$0xff]
        %v897 = vld [vmem:[%s7 + $0x28] sm:$0xff]
        %v898 = vld [vmem:[%s7 + $0x30] sm:$0xff]
        %v899 = vld [vmem:[%s7 + $0x38] sm:$0xff]
        %v900 = vadd.f32 %v736, %v892
        %v901 = vadd.f32 %v739, %v893
        %v902 = vadd.f32 %v786, %v894
        %v903 = vadd.f32 %v789, %v895
        %v904 = vadd.f32 %v836, %v896
        %v905 = vadd.f32 %v839, %v897
        %v906 = vadd.f32 %v886, %v898
        %v907 = vadd.f32 %v889, %v899
        %vm908 = vcmask 130048
        %v909 = vsel %vm908, %v900, -inf
        %910 = vmax.xlane.f32.xlu0 %v909
        %v911 = vpop.xlane.xlu0 %910
        %v912 = vsel %vm908, %v901, -inf
        %913 = vmax.xlane.f32.xlu0 %v912
        %v914 = vpop.xlane.xlu0 %913
        %v915 = vsel %vm908, %v902, -inf
        %916 = vmax.xlane.f32.xlu0 %v915
        %v917 = vpop.xlane.xlu0 %916
        %v918 = vsel %vm908, %v903, -inf
        %919 = vmax.xlane.f32.xlu0 %v918
        %v920 = vpop.xlane.xlu0 %919
        %v921 = vsel %vm908, %v904, -inf
        %922 = vmax.xlane.f32.xlu0 %v921
        %v923 = vpop.xlane.xlu0 %922
        %v924 = vsel %vm908, %v905, -inf
        %925 = vmax.xlane.f32.xlu0 %v924
        %v926 = vpop.xlane.xlu0 %925
        %v927 = vsel %vm908, %v906, -inf
        %928 = vmax.xlane.f32.xlu0 %v927
        %v929 = vpop.xlane.xlu0 %928
        %v930 = vsel %vm908, %v907, -inf
        %931 = vmax.xlane.f32.xlu0 %v930
        %v932 = vpop.xlane.xlu0 %931
        %v933 = vsub.f32 %v900, %v911
        %v934 = vsub.f32 %v901, %v914
        %v935 = vsub.f32 %v902, %v917
        %v936 = vsub.f32 %v903, %v920
        %v937 = vsub.f32 %v904, %v923
        %v938 = vsub.f32 %v905, %v926
        %v939 = vsub.f32 %v906, %v929
        %v940 = vsub.f32 %v907, %v932
        %v941 = vmul.f32 %v933, 1.442695
        %v942 = vpow.pop %v941
        %v943 = vmul.f32 %v934, 1.442695
        %v944 = vpow.pop %v943
        %v945 = vmul.f32 %v935, 1.442695
        %v946 = vpow.pop %v945
        %v947 = vmul.f32 %v936, 1.442695
        %v948 = vpow.pop %v947
        %v949 = vmul.f32 %v937, 1.442695
        %v950 = vpow.pop %v949
        %v951 = vmul.f32 %v938, 1.442695
        %v952 = vpow.pop %v951
        %v953 = vmul.f32 %v939, 1.442695
        %v954 = vpow.pop %v953
        %v955 = vmul.f32 %v940, 1.442695
        %v956 = vpow.pop %v955
        %v957 = vsel %vm908, %v942, 0.0
        %958 = vadd.xlane.f32.xlu0 %v957
        %v959 = vpop.xlane.xlu0 %958
        %v960 = vsel %vm908, %v944, 0.0
        %961 = vadd.xlane.f32.xlu0 %v960
        %v962 = vpop.xlane.xlu0 %961
        %v963 = vsel %vm908, %v946, 0.0
        %964 = vadd.xlane.f32.xlu0 %v963
        %v965 = vpop.xlane.xlu0 %964
        %v966 = vsel %vm908, %v948, 0.0
        %967 = vadd.xlane.f32.xlu0 %v966
        %v968 = vpop.xlane.xlu0 %967
        %v969 = vsel %vm908, %v950, 0.0
        %970 = vadd.xlane.f32.xlu0 %v969
        %v971 = vpop.xlane.xlu0 %970
        %v972 = vsel %vm908, %v952, 0.0
        %973 = vadd.xlane.f32.xlu0 %v972
        %v974 = vpop.xlane.xlu0 %973
        %v975 = vsel %vm908, %v954, 0.0
        %976 = vadd.xlane.f32.xlu0 %v975
        %v977 = vpop.xlane.xlu0 %976
        %v978 = vsel %vm908, %v956, 0.0
        %979 = vadd.xlane.f32.xlu0 %v978
        %v980 = vpop.xlane.xlu0 %979
        %v981 = vrcp.pop %v959
        %v982 = vrcp.pop %v962
        %v983 = vrcp.pop %v965
        %v984 = vrcp.pop %v968
        %v985 = vrcp.pop %v971
        %v986 = vrcp.pop %v974
        %v987 = vrcp.pop %v977
        %v988 = vrcp.pop %v980
        %v989 = vmul.f32 %v942, %v981
        %v990 = vmul.f32 %v944, %v982
        %v991 = vmul.f32 %v946, %v983
        %v992 = vmul.f32 %v948, %v984
        %v993 = vmul.f32 %v950, %v985
        %v994 = vmul.f32 %v952, %v986
        %v995 = vmul.f32 %v954, %v987
        %v996 = vmul.f32 %v956, %v988
        %v997 = vpack.c.bf16 %v990, %v989
        %v998 = vpack.c.bf16 %v992, %v991
        %v999 = vpack.c.bf16 %v994, %v993
        %v1000 = vpack.c.bf16 %v996, %v995
        %1001 = vrot.lane.b32.xlu0 %v687, 64
        %v1002 = vpop.permute.xlu0 %1001
        %v1005 = vsel %vm908, %v997, 0
        %1007 = vmatprep.subr.bf16.mxu0 0
        %1008 = vmatpush1.bf16.msra.mxu0 %v1002
        %1009 = vmatprep.subr.bf16.mxu0 0
        %1010 = vmatpush1.bf16.msra.mxu0 0
        %1011 = vmatprep.subr.bf16.mxu0 0
        %1012 = vmatpush1.bf16.msra.mxu0 0
        %1013 = vmatprep.subr.bf16.mxu0 0
        %1014 = vmatpush1.bf16.msra.mxu0 0
        %1015 = vmatprep.subr.bf16.mxu0 0
        %1016 = vmatpush1.bf16.msra.mxu0 0
        %1017 = vmatprep.subr.bf16.mxu0 0
        %1018 = vmatpush1.bf16.msra.mxu0 0
        %1019 = vmatprep.subr.bf16.mxu0 0
        %1020 = vmatpush1.bf16.msra.mxu0 0
        %1021 = vmatprep.subr.bf16.mxu0 0
        %1022 = vmatpush1.bf16.msra.mxu0 0
        %1023 = vmatprep.subr.bf16.mxu0 0
        %1024 = vmatpush1.bf16.msra.mxu0 0
        %1025 = vmatprep.subr.bf16.mxu0 0
        %1026 = vmatpush1.bf16.msra.mxu0 0
        %1027 = vmatprep.subr.bf16.mxu0 0
        %1028 = vmatpush1.bf16.msra.mxu0 0
        %1029 = vmatprep.subr.bf16.mxu0 0
        %1030 = vmatpush1.bf16.msra.mxu0 0
        %1031 = vmatprep.subr.bf16.mxu0 0
        %1032 = vmatpush1.bf16.msra.mxu0 0
        %1033 = vmatprep.subr.bf16.mxu0 0
        %1034 = vmatpush1.bf16.msra.mxu0 0
        %1035 = vmatprep.subr.bf16.mxu0 0
        %1036 = vmatpush1.bf16.msra.mxu0 0
        %1037 = vmatprep.subr.bf16.mxu0 0
        %1038 = vmatpush1.bf16.msra.mxu0 0
        %1039 = vmatprep.mubr.bf16.mxu0 0
        %1040 = vmatmul.mubr.bf16.gmra.mrb[0].mxu0 %v1005
        %v1041 = vpop.f32.mrb[0].mxu0
        %v1042 = vadd.f32 0.0, %v1041
        %v1043 = vpop.f32.mrb[0].mxu0
        %v1044 = vpop.f32.mrb[0].mxu0
        %v1045 = vadd.f32 0.0, %v1044
        %v1046 = vpop.f32.mrb[0].mxu0
        %1047 = vdwg.mxu0
        %1048 = vrot.lane.b32.xlu0 %v688, 64
        %v1049 = vpop.permute.xlu0 %1048
        %v1052 = vsel %vm908, %v998, 0
        %1054 = vmatprep.subr.bf16.mxu0 0
        %1055 = vmatpush1.bf16.msra.mxu0 %v1049
        %1056 = vmatprep.subr.bf16.mxu0 0
        %1057 = vmatpush1.bf16.msra.mxu0 0
        %1058 = vmatprep.subr.bf16.mxu0 0
        %1059 = vmatpush1.bf16.msra.mxu0 0
        %1060 = vmatprep.subr.bf16.mxu0 0
        %1061 = vmatpush1.bf16.msra.mxu0 0
        %1062 = vmatprep.subr.bf16.mxu0 0
        %1063 = vmatpush1.bf16.msra.mxu0 0
        %1064 = vmatprep.subr.bf16.mxu0 0
        %1065 = vmatpush1.bf16.msra.mxu0 0
        %1066 = vmatprep.subr.bf16.mxu0 0
        %1067 = vmatpush1.bf16.msra.mxu0 0
        %1068 = vmatprep.subr.bf16.mxu0 0
        %1069 = vmatpush1.bf16.msra.mxu0 0
        %1070 = vmatprep.subr.bf16.mxu0 0
        %1071 = vmatpush1.bf16.msra.mxu0 0
        %1072 = vmatprep.subr.bf16.mxu0 0
        %1073 = vmatpush1.bf16.msra.mxu0 0
        %1074 = vmatprep.subr.bf16.mxu0 0
        %1075 = vmatpush1.bf16.msra.mxu0 0
        %1076 = vmatprep.subr.bf16.mxu0 0
        %1077 = vmatpush1.bf16.msra.mxu0 0
        %1078 = vmatprep.subr.bf16.mxu0 0
        %1079 = vmatpush1.bf16.msra.mxu0 0
        %1080 = vmatprep.subr.bf16.mxu0 0
        %1081 = vmatpush1.bf16.msra.mxu0 0
        %1082 = vmatprep.subr.bf16.mxu0 0
        %1083 = vmatpush1.bf16.msra.mxu0 0
        %1084 = vmatprep.subr.bf16.mxu0 0
        %1085 = vmatpush1.bf16.msra.mxu0 0
        %1086 = vmatprep.mubr.bf16.mxu0 0
        %1087 = vmatmul.mubr.bf16.gmra.mrb[0].mxu0 %v1052
        %v1088 = vpop.f32.mrb[0].mxu0
        %v1089 = vadd.f32 0.0, %v1088
        %v1090 = vpop.f32.mrb[0].mxu0
        %v1091 = vpop.f32.mrb[0].mxu0
        %v1092 = vadd.f32 0.0, %v1091
        %v1093 = vpop.f32.mrb[0].mxu0
        %1094 = vdwg.mxu0
        %1095 = vrot.lane.b32.xlu0 %v689, 64
        %v1096 = vpop.permute.xlu0 %1095
        %v1099 = vsel %vm908, %v999, 0
        %1101 = vmatprep.subr.bf16.mxu0 0
        %1102 = vmatpush1.bf16.msra.mxu0 %v1096
        %1103 = vmatprep.subr.bf16.mxu0 0
        %1104 = vmatpush1.bf16.msra.mxu0 0
        %1105 = vmatprep.subr.bf16.mxu0 0
        %1106 = vmatpush1.bf16.msra.mxu0 0
        %1107 = vmatprep.subr.bf16.mxu0 0
        %1108 = vmatpush1.bf16.msra.mxu0 0
        %1109 = vmatprep.subr.bf16.mxu0 0
        %1110 = vmatpush1.bf16.msra.mxu0 0
        %1111 = vmatprep.subr.bf16.mxu0 0
        %1112 = vmatpush1.bf16.msra.mxu0 0
        %1113 = vmatprep.subr.bf16.mxu0 0
        %1114 = vmatpush1.bf16.msra.mxu0 0
        %1115 = vmatprep.subr.bf16.mxu0 0
        %1116 = vmatpush1.bf16.msra.mxu0 0
        %1117 = vmatprep.subr.bf16.mxu0 0
        %1118 = vmatpush1.bf16.msra.mxu0 0
        %1119 = vmatprep.subr.bf16.mxu0 0
        %1120 = vmatpush1.bf16.msra.mxu0 0
        %1121 = vmatprep.subr.bf16.mxu0 0
        %1122 = vmatpush1.bf16.msra.mxu0 0
        %1123 = vmatprep.subr.bf16.mxu0 0
        %1124 = vmatpush1.bf16.msra.mxu0 0
        %1125 = vmatprep.subr.bf16.mxu0 0
        %1126 = vmatpush1.bf16.msra.mxu0 0
        %1127 = vmatprep.subr.bf16.mxu0 0
        %1128 = vmatpush1.bf16.msra.mxu0 0
        %1129 = vmatprep.subr.bf16.mxu0 0
        %1130 = vmatpush1.bf16.msra.mxu0 0
        %1131 = vmatprep.subr.bf16.mxu0 0
        %1132 = vmatpush1.bf16.msra.mxu0 0
        %1133 = vmatprep.mubr.bf16.mxu0 0
        %1134 = vmatmul.mubr.bf16.gmra.mrb[0].mxu0 %v1099
        %v1135 = vpop.f32.mrb[0].mxu0
        %v1136 = vadd.f32 0.0, %v1135
        %v1137 = vpop.f32.mrb[0].mxu0
        %v1138 = vpop.f32.mrb[0].mxu0
        %v1139 = vadd.f32 0.0, %v1138
        %v1140 = vpop.f32.mrb[0].mxu0
        %1141 = vdwg.mxu0
        %1142 = vrot.lane.b32.xlu0 %v690, 64
        %v1143 = vpop.permute.xlu0 %1142
        %v1146 = vsel %vm908, %v1000, 0
        %1148 = vmatprep.subr.bf16.mxu0 0
        %1149 = vmatpush1.bf16.msra.mxu0 %v1143
        %1150 = vmatprep.subr.bf16.mxu0 0
        %1151 = vmatpush1.bf16.msra.mxu0 0
        %1152 = vmatprep.subr.bf16.mxu0 0
        %1153 = vmatpush1.bf16.msra.mxu0 0
        %1154 = vmatprep.subr.bf16.mxu0 0
        %1155 = vmatpush1.bf16.msra.mxu0 0
        %1156 = vmatprep.subr.bf16.mxu0 0
        %1157 = vmatpush1.bf16.msra.mxu0 0
        %1158 = vmatprep.subr.bf16.mxu0 0
        %1159 = vmatpush1.bf16.msra.mxu0 0
        %1160 = vmatprep.subr.bf16.mxu0 0
        %1161 = vmatpush1.bf16.msra.mxu0 0
        %1162 = vmatprep.subr.bf16.mxu0 0
        %1163 = vmatpush1.bf16.msra.mxu0 0
        %1164 = vmatprep.subr.bf16.mxu0 0
        %1165 = vmatpush1.bf16.msra.mxu0 0
        %1166 = vmatprep.subr.bf16.mxu0 0
        %1167 = vmatpush1.bf16.msra.mxu0 0
        %1168 = vmatprep.subr.bf16.mxu0 0
        %1169 = vmatpush1.bf16.msra.mxu0 0
        %1170 = vmatprep.subr.bf16.mxu0 0
        %1171 = vmatpush1.bf16.msra.mxu0 0
        %1172 = vmatprep.subr.bf16.mxu0 0
        %1173 = vmatpush1.bf16.msra.mxu0 0
        %1174 = vmatprep.subr.bf16.mxu0 0
        %1175 = vmatpush1.bf16.msra.mxu0 0
        %1176 = vmatprep.subr.bf16.mxu0 0
        %1177 = vmatpush1.bf16.msra.mxu0 0
        %1178 = vmatprep.subr.bf16.mxu0 0
        %1179 = vmatpush1.bf16.msra.mxu0 0
        %1180 = vmatprep.mubr.bf16.mxu0 0
        %1181 = vmatmul.mubr.bf16.gmra.mrb[0].mxu0 %v1146
        %v1182 = vpop.f32.mrb[0].mxu0
        %v1183 = vadd.f32 0.0, %v1182
        %v1184 = vpop.f32.mrb[0].mxu0
        %v1185 = vpop.f32.mrb[0].mxu0
        %v1186 = vadd.f32 0.0, %v1185
        %v1187 = vpop.f32.mrb[0].mxu0
        %1188 = vdwg.mxu0
        %v1189 = vld [vmem:[%s6] sm:$0x1]
        %v1190 = vpack.c.bf16 %v1045, %v1042
        %v1191 = vld [vmem:[%s5] sm:$0xf]
        %v1193 = vsel %vm694, %v1190, 0
        %vm1195 = vcmask 1043456
        %v1197 = vsel %vm1195, %v1191, 0
        %1199 = vmatprep.subr.bf16.mxu0 0
        %1200 = vmatpush1.bf16.msra.mxu0 %v1197
        %1201 = vmatprep.subr.bf16.mxu0 0
        %1202 = vmatpush1.bf16.msra.mxu0 0
        %1203 = vmatprep.subr.bf16.mxu0 0
        %1204 = vmatpush1.bf16.msra.mxu0 0
        %1205 = vmatprep.subr.bf16.mxu0 0
        %1206 = vmatpush1.bf16.msra.mxu0 0
        %1207 = vmatprep.subr.bf16.mxu0 0
        %1208 = vmatpush1.bf16.msra.mxu0 0
        %1209 = vmatprep.subr.bf16.mxu0 0
        %1210 = vmatpush1.bf16.msra.mxu0 0
        %1211 = vmatprep.subr.bf16.mxu0 0
        %1212 = vmatpush1.bf16.msra.mxu0 0
        %1213 = vmatprep.subr.bf16.mxu0 0
        %1214 = vmatpush1.bf16.msra.mxu0 0
        %1215 = vmatprep.subr.bf16.mxu0 0
        %1216 = vmatpush1.bf16.msra.mxu0 0
        %1217 = vmatprep.subr.bf16.mxu0 0
        %1218 = vmatpush1.bf16.msra.mxu0 0
        %1219 = vmatprep.subr.bf16.mxu0 0
        %1220 = vmatpush1.bf16.msra.mxu0 0
        %1221 = vmatprep.subr.bf16.mxu0 0
        %1222 = vmatpush1.bf16.msra.mxu0 0
        %1223 = vmatprep.subr.bf16.mxu0 0
        %1224 = vmatpush1.bf16.msra.mxu0 0
        %1225 = vmatprep.subr.bf16.mxu0 0
        %1226 = vmatpush1.bf16.msra.mxu0 0
        %1227 = vmatprep.subr.bf16.mxu0 0
        %1228 = vmatpush1.bf16.msra.mxu0 0
        %1229 = vmatprep.subr.bf16.mxu0 0
        %1230 = vmatpush1.bf16.msra.mxu0 0
        %1231 = vmatprep.mubr.bf16.mxu0 0
        %1232 = vmatmul.mubr.bf16.gmra.mrb[0].mxu0 %v1193
        %v1233 = vpop.f32.mrb[0].mxu0
        %v1234 = vadd.f32 0.0, %v1233
        %v1235 = vpop.f32.mrb[0].mxu0
        %v1236 = vpop.f32.mrb[0].mxu0
        %v1237 = vadd.f32 0.0, %v1236
        %v1238 = vpop.f32.mrb[0].mxu0
        %1239 = vdwg.mxu0
        %v1241 = vlaneseq
        %v1242 = vshrl.u32 %v1241, 7
        %v1243 = vsub.s32 0, %v1242
        %v1244 = vrot.slane %v1189, %v1243
        %v1246 = vadd.f32 %v1244, %v1234
        %v1247 = vadd.f32 %v1244, %v1237
        %v1248 = vpack.c.bf16 %v1092, %v1089
        %s1249 = scalar_lea.vmem %s5, 4
        %v1250 = vld [vmem:[%s1249] sm:$0xf]
        %v1252 = vsel %vm694, %v1248, 0
        %v1255 = vsel %vm1195, %v1250, 0
        %1257 = vmatprep.subr.bf16.mxu0 0
        %1258 = vmatpush1.bf16.msra.mxu0 %v1255
        %1259 = vmatprep.subr.bf16.mxu0 0
        %1260 = vmatpush1.bf16.msra.mxu0 0
        %1261 = vmatprep.subr.bf16.mxu0 0
        %1262 = vmatpush1.bf16.msra.mxu0 0
        %1263 = vmatprep.subr.bf16.mxu0 0
        %1264 = vmatpush1.bf16.msra.mxu0 0
        %1265 = vmatprep.subr.bf16.mxu0 0
        %1266 = vmatpush1.bf16.msra.mxu0 0
        %1267 = vmatprep.subr.bf16.mxu0 0
        %1268 = vmatpush1.bf16.msra.mxu0 0
        %1269 = vmatprep.subr.bf16.mxu0 0
        %1270 = vmatpush1.bf16.msra.mxu0 0
        %1271 = vmatprep.subr.bf16.mxu0 0
        %1272 = vmatpush1.bf16.msra.mxu0 0
        %1273 = vmatprep.subr.bf16.mxu0 0
        %1274 = vmatpush1.bf16.msra.mxu0 0
        %1275 = vmatprep.subr.bf16.mxu0 0
        %1276 = vmatpush1.bf16.msra.mxu0 0
        %1277 = vmatprep.subr.bf16.mxu0 0
        %1278 = vmatpush1.bf16.msra.mxu0 0
        %1279 = vmatprep.subr.bf16.mxu0 0
        %1280 = vmatpush1.bf16.msra.mxu0 0
        %1281 = vmatprep.subr.bf16.mxu0 0
        %1282 = vmatpush1.bf16.msra.mxu0 0
        %1283 = vmatprep.subr.bf16.mxu0 0
        %1284 = vmatpush1.bf16.msra.mxu0 0
        %1285 = vmatprep.subr.bf16.mxu0 0
        %1286 = vmatpush1.bf16.msra.mxu0 0
        %1287 = vmatprep.subr.bf16.mxu0 0
        %1288 = vmatpush1.bf16.msra.mxu0 0
        %1289 = vmatprep.mubr.bf16.mxu0 0
        %1290 = vmatmul.mubr.bf16.gmra.mrb[0].mxu0 %v1252
        %v1291 = vpop.f32.mrb[0].mxu0
        %v1292 = vadd.f32 0.0, %v1291
        %v1293 = vpop.f32.mrb[0].mxu0
        %v1294 = vpop.f32.mrb[0].mxu0
        %v1295 = vadd.f32 0.0, %v1294
        %v1296 = vpop.f32.mrb[0].mxu0
        %1297 = vdwg.mxu0
        %v1298 = vadd.f32 %v1246, %v1292
        %v1299 = vadd.f32 %v1247, %v1295
        %v1300 = vpack.c.bf16 %v1139, %v1136
        %s1301 = scalar_lea.vmem %s5, 8
        %v1302 = vld [vmem:[%s1301] sm:$0xf]
        %v1304 = vsel %vm694, %v1300, 0
        %v1307 = vsel %vm1195, %v1302, 0
        %1309 = vmatprep.subr.bf16.mxu0 0
        %1310 = vmatpush1.bf16.msra.mxu0 %v1307
        %1311 = vmatprep.subr.bf16.mxu0 0
        %1312 = vmatpush1.bf16.msra.mxu0 0
        %1313 = vmatprep.subr.bf16.mxu0 0
        %1314 = vmatpush1.bf16.msra.mxu0 0
        %1315 = vmatprep.subr.bf16.mxu0 0
        %1316 = vmatpush1.bf16.msra.mxu0 0
        %1317 = vmatprep.subr.bf16.mxu0 0
        %1318 = vmatpush1.bf16.msra.mxu0 0
        %1319 = vmatprep.subr.bf16.mxu0 0
        %1320 = vmatpush1.bf16.msra.mxu0 0
        %1321 = vmatprep.subr.bf16.mxu0 0
        %1322 = vmatpush1.bf16.msra.mxu0 0
        %1323 = vmatprep.subr.bf16.mxu0 0
        %1324 = vmatpush1.bf16.msra.mxu0 0
        %1325 = vmatprep.subr.bf16.mxu0 0
        %1326 = vmatpush1.bf16.msra.mxu0 0
        %1327 = vmatprep.subr.bf16.mxu0 0
        %1328 = vmatpush1.bf16.msra.mxu0 0
        %1329 = vmatprep.subr.bf16.mxu0 0
        %1330 = vmatpush1.bf16.msra.mxu0 0
        %1331 = vmatprep.subr.bf16.mxu0 0
        %1332 = vmatpush1.bf16.msra.mxu0 0
        %1333 = vmatprep.subr.bf16.mxu0 0
        %1334 = vmatpush1.bf16.msra.mxu0 0
        %1335 = vmatprep.subr.bf16.mxu0 0
        %1336 = vmatpush1.bf16.msra.mxu0 0
        %1337 = vmatprep.subr.bf16.mxu0 0
        %1338 = vmatpush1.bf16.msra.mxu0 0
        %1339 = vmatprep.subr.bf16.mxu0 0
        %1340 = vmatpush1.bf16.msra.mxu0 0
        %1341 = vmatprep.mubr.bf16.mxu0 0
        %1342 = vmatmul.mubr.bf16.gmra.mrb[0].mxu0 %v1304
        %v1343 = vpop.f32.mrb[0].mxu0
        %v1344 = vadd.f32 0.0, %v1343
        %v1345 = vpop.f32.mrb[0].mxu0
        %v1346 = vpop.f32.mrb[0].mxu0
        %v1347 = vadd.f32 0.0, %v1346
        %v1348 = vpop.f32.mrb[0].mxu0
        %1349 = vdwg.mxu0
        %v1350 = vadd.f32 %v1298, %v1344
        %v1351 = vadd.f32 %v1299, %v1347
        %v1352 = vpack.c.bf16 %v1186, %v1183
        %s1353 = scalar_lea.vmem %s5, 12
        %v1354 = vld [vmem:[%s1353] sm:$0xf]
        %v1356 = vsel %vm694, %v1352, 0
        %v1359 = vsel %vm1195, %v1354, 0
        %1361 = vmatprep.subr.bf16.mxu0 0
        %1362 = vmatpush1.bf16.msra.mxu0 %v1359
        %1363 = vmatprep.subr.bf16.mxu0 0
        %1364 = vmatpush1.bf16.msra.mxu0 0
        %1365 = vmatprep.subr.bf16.mxu0 0
        %1366 = vmatpush1.bf16.msra.mxu0 0
        %1367 = vmatprep.subr.bf16.mxu0 0
        %1368 = vmatpush1.bf16.msra.mxu0 0
        %1369 = vmatprep.subr.bf16.mxu0 0
        %1370 = vmatpush1.bf16.msra.mxu0 0
        %1371 = vmatprep.subr.bf16.mxu0 0
        %1372 = vmatpush1.bf16.msra.mxu0 0
        %1373 = vmatprep.subr.bf16.mxu0 0
        %1374 = vmatpush1.bf16.msra.mxu0 0
        %1375 = vmatprep.subr.bf16.mxu0 0
        %1376 = vmatpush1.bf16.msra.mxu0 0
        %1377 = vmatprep.subr.bf16.mxu0 0
        %1378 = vmatpush1.bf16.msra.mxu0 0
        %1379 = vmatprep.subr.bf16.mxu0 0
        %1380 = vmatpush1.bf16.msra.mxu0 0
        %1381 = vmatprep.subr.bf16.mxu0 0
        %1382 = vmatpush1.bf16.msra.mxu0 0
        %1383 = vmatprep.subr.bf16.mxu0 0
        %1384 = vmatpush1.bf16.msra.mxu0 0
        %1385 = vmatprep.subr.bf16.mxu0 0
        %1386 = vmatpush1.bf16.msra.mxu0 0
        %1387 = vmatprep.subr.bf16.mxu0 0
        %1388 = vmatpush1.bf16.msra.mxu0 0
        %1389 = vmatprep.subr.bf16.mxu0 0
        %1390 = vmatpush1.bf16.msra.mxu0 0
        %1391 = vmatprep.subr.bf16.mxu0 0
        %1392 = vmatpush1.bf16.msra.mxu0 0
        %1393 = vmatprep.mubr.bf16.mxu0 0
        %1394 = vmatmul.mubr.bf16.gmra.mrb[0].mxu0 %v1356
        %v1395 = vpop.f32.mrb[0].mxu0
        %v1396 = vadd.f32 0.0, %v1395
        %v1397 = vpop.f32.mrb[0].mxu0
        %v1398 = vpop.f32.mrb[0].mxu0
        %v1399 = vadd.f32 0.0, %v1398
        %v1400 = vpop.f32.mrb[0].mxu0
        %1401 = vdwg.mxu0
        %v1402 = vadd.f32 %v1350, %v1396
        %v1403 = vadd.f32 %v1351, %v1399
        %v1404 = vadd.f32 %v551, %v1402
        %v1405 = vadd.f32 %v552, %v1403
        %v1406 = vld [vmem:[%s8] sm:$0x1]
        %v1407 = vld [vmem:[%s9] sm:$0x1]
        %v1408 = vsel %vm555, %v1404, 0.0
        %1409 = vadd.xlane.f32.xlu0 %v1408
        %v1410 = vpop.xlane.xlu0 %1409
        %v1411 = vsel %vm555, %v1405, 0.0
        %1412 = vadd.xlane.f32.xlu0 %v1411
        %v1413 = vpop.xlane.xlu0 %1412
        %v1414 = vmul.f32 %v1410, %v562
        %v1415 = vmul.f32 %v1413, %v562
        %v1416 = vsub.f32 %v1404, %v1414
        %v1417 = vsub.f32 %v1405, %v1415
        %v1418 = vmul.f32 %v1416, %v1416
        %v1419 = vmul.f32 %v1417, %v1417
        %v1420 = vsel %vm555, %v1418, 0.0
        %1421 = vadd.xlane.f32.xlu0 %v1420
        %v1422 = vpop.xlane.xlu0 %1421
        %v1423 = vsel %vm555, %v1419, 0.0
        %1424 = vadd.xlane.f32.xlu0 %v1423
        %v1425 = vpop.xlane.xlu0 %1424
        %v1426 = vmul.f32 %v1422, %v562
        %v1427 = vmul.f32 %v1425, %v562
        %v1428 = vadd.f32 %v1426, 1e-05
        %v1429 = vadd.f32 %v1427, 1e-05
        %v1430 = vrsqrt.pop %v1428
        %v1431 = vrsqrt.pop %v1429
        %v1432 = vmul.f32 %v1416, %v1430
        %v1433 = vmul.f32 %v1417, %v1431
        %v1435 = vlaneseq
        %v1436 = vshrl.u32 %v1435, 7
        %v1437 = vsub.s32 0, %v1436
        %v1438 = vrot.slane %v1406, %v1437
        %v1440 = vmul.f32 %v1432, %v1438
        %v1441 = vmul.f32 %v1433, %v1438
        %v1443 = vlaneseq
        %v1444 = vshrl.u32 %v1443, 7
        %v1445 = vsub.s32 0, %v1444
        %v1446 = vrot.slane %v1407, %v1445
        %v1448 = vadd.f32 %v1440, %v1446
        %v1449 = vadd.f32 %v1441, %v1446
        %v1450 = vpack.c.bf16 %v1449, %v1448
        %v1451 = vld [vmem:[%s10] sm:$0xf]
        %v1452 = vld [vmem:[%s10 + $0x4] sm:$0xf]
        %v1453 = vld [vmem:[%s10 + $0x8] sm:$0xf]
        %v1454 = vld [vmem:[%s10 + $0xc] sm:$0xf]
        %v1455 = vld [vmem:[%s11] sm:$0x1]
        %v1457 = vlaneseq
        %v1458 = vshrl.u32 %v1457, 7
        %v1459 = vsub.s32 0, %v1458
        %v1460 = vrot.slane %v1455, %v1459
        %v1466 = vunpack.c.l.b16 %v1451
        %v1467 = vunpack.c.l.b16 %v1452
        %v1468 = vunpack.c.l.b16 %v1453
        %v1469 = vunpack.c.l.b16 %v1454
        %v1470 = vpack.c.b16 %v1467, %v1466
        %v1471 = vpack.c.b16 %v1469, %v1468
        %v1475 = vsel %vm555, %v1450, 0
        %1477 = vmatprep.subr.bf16.mxu0 0
        %1478 = vmatpush1.bf16.msra.mxu0 %v1470
        %1479 = vmatprep.subr.bf16.mxu0 0
        %1480 = vmatpush1.bf16.msra.mxu0 %v1471
        %1481 = vmatprep.subr.bf16.mxu0 0
        %1482 = vmatpush1.bf16.msra.mxu0 0
        %1483 = vmatprep.subr.bf16.mxu0 0
        %1484 = vmatpush1.bf16.msra.mxu0 0
        %1485 = vmatprep.subr.bf16.mxu0 0
        %1486 = vmatpush1.bf16.msra.mxu0 0
        %1487 = vmatprep.subr.bf16.mxu0 0
        %1488 = vmatpush1.bf16.msra.mxu0 0
        %1489 = vmatprep.subr.bf16.mxu0 0
        %1490 = vmatpush1.bf16.msra.mxu0 0
        %1491 = vmatprep.subr.bf16.mxu0 0
        %1492 = vmatpush1.bf16.msra.mxu0 0
        %1493 = vmatprep.subr.bf16.mxu0 0
        %1494 = vmatpush1.bf16.msra.mxu0 0
        %1495 = vmatprep.subr.bf16.mxu0 0
        %1496 = vmatpush1.bf16.msra.mxu0 0
        %1497 = vmatprep.subr.bf16.mxu0 0
        %1498 = vmatpush1.bf16.msra.mxu0 0
        %1499 = vmatprep.subr.bf16.mxu0 0
        %1500 = vmatpush1.bf16.msra.mxu0 0
        %1501 = vmatprep.subr.bf16.mxu0 0
        %1502 = vmatpush1.bf16.msra.mxu0 0
        %1503 = vmatprep.subr.bf16.mxu0 0
        %1504 = vmatpush1.bf16.msra.mxu0 0
        %1505 = vmatprep.subr.bf16.mxu0 0
        %1506 = vmatpush1.bf16.msra.mxu0 0
        %1507 = vmatprep.subr.bf16.mxu0 0
        %1508 = vmatpush1.bf16.msra.mxu0 0
        %1509 = vmatprep.mubr.bf16.mxu0 0
        %1510 = vmatmul.mubr.bf16.gmra.mrb[0].mxu0 %v1475
        %v1511 = vpop.f32.mrb[0].mxu0
        %v1512 = vadd.f32 %v1460, %v1511
        %v1513 = vpop.f32.mrb[0].mxu0
        %v1514 = vpop.f32.mrb[0].mxu0
        %v1515 = vadd.f32 %v1460, %v1514
        %v1516 = vpop.f32.mrb[0].mxu0
        %1517 = vdwg.mxu0
        %v1518 = vmul.f32 %v1512, 0.5
        %v1519 = vmul.f32 %v1515, 0.5
        %v1520 = vmul.f32 %v1512, 0.70710677
        %v1521 = vmul.f32 %v1515, 0.70710677
        %vm1522 = vcmp.ge.f32.partialorder %v1520, 0.0
        %vm1523 = vcmp.ge.f32.partialorder %v1521, 0.0
        %v1524 = vsel %vm1522, 1.0, -1.0
        %v1525 = vsel %vm1523, 1.0, -1.0
        %v1526 = vand.u32 2147483647, %v1520
        %v1527 = vand.u32 2147483647, %v1521
        %v1528 = vmul.f32 %v1526, 0.3275911
        %v1529 = vmul.f32 %v1527, 0.3275911
        %v1530 = vadd.f32 %v1528, 1.0
        %v1531 = vadd.f32 %v1529, 1.0
        %v1532 = vrcp.pop %v1530
        %v1533 = vrcp.pop %v1531
        %v1534 = vmul.f32 %v1532, 1.0614054
        %v1535 = vmul.f32 %v1533, 1.0614054
        %v1536 = vadd.f32 %v1534, -1.4531521
        %v1537 = vadd.f32 %v1535, -1.4531521
        %v1538 = vmul.f32 %v1536, %v1532
        %v1539 = vmul.f32 %v1537, %v1533
        %v1540 = vadd.f32 %v1538, 1.4214138
        %v1541 = vadd.f32 %v1539, 1.4214138
        %v1542 = vmul.f32 %v1540, %v1532
        %v1543 = vmul.f32 %v1541, %v1533
        %v1544 = vadd.f32 %v1542, -0.28449672
        %v1545 = vadd.f32 %v1543, -0.28449672
        %v1546 = vmul.f32 %v1544, %v1532
        %v1547 = vmul.f32 %v1545, %v1533
        %v1548 = vadd.f32 %v1546, 0.2548296
        %v1549 = vadd.f32 %v1547, 0.2548296
        %v1550 = vmul.f32 %v1548, %v1532
        %v1551 = vmul.f32 %v1549, %v1533
        %v1552 = vsub.f32 0.0, %v1526
        %v1553 = vsub.f32 0.0, %v1527
        %v1554 = vmul.f32 %v1552, %v1526
        %v1555 = vmul.f32 %v1553, %v1527
        %v1556 = vmul.f32 %v1554, 1.442695
        %v1557 = vpow.pop %v1556
        %v1558 = vmul.f32 %v1555, 1.442695
        %v1559 = vpow.pop %v1558
        %v1560 = vmul.f32 %v1550, %v1557
        %v1561 = vmul.f32 %v1551, %v1559
        %v1562 = vsub.f32 1.0, %v1560
        %v1563 = vsub.f32 1.0, %v1561
        %v1564 = vmul.f32 %v1524, %v1562
        %v1565 = vmul.f32 %v1525, %v1563
        %v1566 = vadd.f32 %v1564, 1.0
        %v1567 = vadd.f32 %v1565, 1.0
        %v1568 = vmul.f32 %v1518, %v1566
        %v1569 = vmul.f32 %v1519, %v1567
        %v1570 = vpack.c.bf16 %v1569, %v1568
        %v1571 = vld [vmem:[%s12] sm:$0xf]
        %v1572 = vld [vmem:[%s12 + $0x4] sm:$0xf]
        %v1573 = vld [vmem:[%s12 + $0x8] sm:$0xf]
        %v1574 = vld [vmem:[%s12 + $0xc] sm:$0xf]
        %v1575 = vld [vmem:[%s12 + $0x10] sm:$0xf]
        %v1576 = vld [vmem:[%s12 + $0x14] sm:$0xf]
        %v1577 = vld [vmem:[%s12 + $0x18] sm:$0xf]
        %v1578 = vld [vmem:[%s12 + $0x1c] sm:$0xf]
        %v1579 = vld [vmem:[%s12 + $0x20] sm:$0xf]
        %v1580 = vld [vmem:[%s12 + $0x24] sm:$0xf]
        %v1581 = vld [vmem:[%s12 + $0x28] sm:$0xf]
        %v1582 = vld [vmem:[%s12 + $0x2c] sm:$0xf]
        %v1583 = vld [vmem:[%s12 + $0x30] sm:$0xf]
        %v1584 = vld [vmem:[%s12 + $0x34] sm:$0xf]
        %v1585 = vld [vmem:[%s12 + $0x38] sm:$0xf]
        %v1586 = vld [vmem:[%s12 + $0x3c] sm:$0xf]
        %v1587 = vld [vmem:[%s13] sm:$0x1]
        %v1589 = vlaneseq
        %v1590 = vshrl.u32 %v1589, 7
        %v1591 = vsub.s32 0, %v1590
        %v1592 = vrot.slane %v1587, %v1591
        %v1610 = vunpack.c.l.b16 %v1571
        %v1611 = vunpack.c.l.b16 %v1572
        %v1612 = vunpack.c.l.b16 %v1573
        %v1613 = vunpack.c.l.b16 %v1574
        %v1614 = vunpack.c.l.b16 %v1575
        %v1615 = vunpack.c.l.b16 %v1576
        %v1616 = vunpack.c.l.b16 %v1577
        %v1617 = vunpack.c.l.b16 %v1578
        %v1618 = vunpack.c.l.b16 %v1579
        %v1619 = vunpack.c.l.b16 %v1580
        %v1620 = vunpack.c.l.b16 %v1581
        %v1621 = vunpack.c.l.b16 %v1582
        %v1622 = vunpack.c.l.b16 %v1583
        %v1623 = vunpack.c.l.b16 %v1584
        %v1624 = vunpack.c.l.b16 %v1585
        %v1625 = vunpack.c.l.b16 %v1586
        %v1626 = vpack.c.b16 %v1611, %v1610
        %v1627 = vpack.c.b16 %v1613, %v1612
        %v1628 = vpack.c.b16 %v1615, %v1614
        %v1629 = vpack.c.b16 %v1617, %v1616
        %v1630 = vpack.c.b16 %v1619, %v1618
        %v1631 = vpack.c.b16 %v1621, %v1620
        %v1632 = vpack.c.b16 %v1623, %v1622
        %v1633 = vpack.c.b16 %v1625, %v1624
        %1642 = vmatprep.subr.bf16.mxu0 0
        %1643 = vmatpush1.bf16.msra.mxu0 %v1626
        %1644 = vmatprep.subr.bf16.mxu0 0
        %1645 = vmatpush1.bf16.msra.mxu0 %v1627
        %1646 = vmatprep.subr.bf16.mxu0 0
        %1647 = vmatpush1.bf16.msra.mxu0 %v1628
        %1648 = vmatprep.subr.bf16.mxu0 0
        %1649 = vmatpush1.bf16.msra.mxu0 %v1629
        %1650 = vmatprep.subr.bf16.mxu0 0
        %1651 = vmatpush1.bf16.msra.mxu0 %v1630
        %1652 = vmatprep.subr.bf16.mxu0 0
        %1653 = vmatpush1.bf16.msra.mxu0 %v1631
        %1654 = vmatprep.subr.bf16.mxu0 0
        %1655 = vmatpush1.bf16.msra.mxu0 %v1632
        %1656 = vmatprep.subr.bf16.mxu0 0
        %1657 = vmatpush1.bf16.msra.mxu0 %v1633
        %1658 = vmatprep.subr.bf16.mxu0 0
        %1659 = vmatpush1.bf16.msra.mxu0 0
        %1660 = vmatprep.subr.bf16.mxu0 0
        %1661 = vmatpush1.bf16.msra.mxu0 0
        %1662 = vmatprep.subr.bf16.mxu0 0
        %1663 = vmatpush1.bf16.msra.mxu0 0
        %1664 = vmatprep.subr.bf16.mxu0 0
        %1665 = vmatpush1.bf16.msra.mxu0 0
        %1666 = vmatprep.subr.bf16.mxu0 0
        %1667 = vmatpush1.bf16.msra.mxu0 0
        %1668 = vmatprep.subr.bf16.mxu0 0
        %1669 = vmatpush1.bf16.msra.mxu0 0
        %1670 = vmatprep.subr.bf16.mxu0 0
        %1671 = vmatpush1.bf16.msra.mxu0 0
        %1672 = vmatprep.subr.bf16.mxu0 0
        %1673 = vmatpush1.bf16.msra.mxu0 0
        %1674 = vmatprep.mubr.bf16.mxu0 0
        %1675 = vmatmul.mubr.bf16.gmra.mrb[0].mxu0 %v1570
        %v1676 = vpop.f32.mrb[0].mxu0
        %v1677 = vadd.f32 %v1592, %v1676
        %v1678 = vpop.f32.mrb[0].mxu0
        %v1679 = vpop.f32.mrb[0].mxu0
        %v1680 = vadd.f32 %v1592, %v1679
        %v1681 = vpop.f32.mrb[0].mxu0
        %1682 = vdwg.mxu0
        %v1683 = vadd.f32 %v1404, %v1677
        %v1684 = vadd.f32 %v1405, %v1680
        %v1685 = vld [vmem:[%s14] sm:$0x1]
        %v1686 = vld [vmem:[%s15] sm:$0x1]
        %v1687 = vsel %vm555, %v1683, 0.0
        %1688 = vadd.xlane.f32.xlu0 %v1687
        %v1689 = vpop.xlane.xlu0 %1688
        %v1690 = vsel %vm555, %v1684, 0.0
        %1691 = vadd.xlane.f32.xlu0 %v1690
        %v1692 = vpop.xlane.xlu0 %1691
        %v1693 = vmul.f32 %v1689, %v562
        %v1694 = vmul.f32 %v1692, %v562
        %v1695 = vsub.f32 %v1683, %v1693
        %v1696 = vsub.f32 %v1684, %v1694
        %v1697 = vmul.f32 %v1695, %v1695
        %v1698 = vmul.f32 %v1696, %v1696
        %v1699 = vsel %vm555, %v1697, 0.0
        %1700 = vadd.xlane.f32.xlu0 %v1699
        %v1701 = vpop.xlane.xlu0 %1700
        %v1702 = vsel %vm555, %v1698, 0.0
        %1703 = vadd.xlane.f32.xlu0 %v1702
        %v1704 = vpop.xlane.xlu0 %1703
        %v1705 = vmul.f32 %v1701, %v562
        %v1706 = vmul.f32 %v1704, %v562
        %v1707 = vadd.f32 %v1705, 1e-05
        %v1708 = vadd.f32 %v1706, 1e-05
        %v1709 = vrsqrt.pop %v1707
        %v1710 = vrsqrt.pop %v1708
        %v1711 = vmul.f32 %v1695, %v1709
        %v1712 = vmul.f32 %v1696, %v1710
        %v1714 = vlaneseq
        %v1715 = vshrl.u32 %v1714, 7
        %v1716 = vsub.s32 0, %v1715
        %v1717 = vrot.slane %v1685, %v1716
        %v1719 = vmul.f32 %v1711, %v1717
        %v1720 = vmul.f32 %v1712, %v1717
        %v1722 = vlaneseq
        %v1723 = vshrl.u32 %v1722, 7
        %v1724 = vsub.s32 0, %v1723
        %v1725 = vrot.slane %v1686, %v1724
        %v1727 = vadd.f32 %v1719, %v1725
        %v1728 = vadd.f32 %v1720, %v1725
        %1729 = vst.msk [vmem:[%s538] sm:$0xff] %vm555, %v1727
        %1730 = vst.msk [vmem:[%s538 + $0x8] sm:$0xff] %vm555, %v1728
        %s1731 = sand.u32 %s395, 1
        %s1732 = scalar_lea.sflag [#allocation3], %s1731
        %s1733 = sand.u32 %s395, 1
        %s1734 = smul.addr %s1733, 16
        %s1735 = scalar_lea.vmem [#allocation2], %s1734
        // Predicated region
        $region85: #{swin_forward.11} parent=83 // pred_check
          %p1736 = pneg %p405
        $region86: #{swin_forward.11} parent=83 // pred_check_branch
          %1738 = sbr.rel (%p1736) target = $region88
        $region87: #{swin_forward.11} parent=83 // pred_region
          %s1740 = ssub.s32 256, 256
          %1741 = vsyncadd %s1732, %s1740
          %s1742 = smul.addr %s35, 2
          %s1743 = smul.addr %s34, 2
          %s1744 = sadd.s32 %s1742, %s1743
          %s1745 = smul.addr %s1744, 128
          %s1746 = scalar_lea.hbm %s16, %s1745
          %s1747 = sshll.u32 %s1735, 4
          %s1748 = int_to_ptr.vmem [resolvable:$true] %s1747
          %1753 = dma.vmem_to_hbm [thread:$0]  %s1748, 256, %s1746, %s1732, 128, 128, 8
        $region88: #{swin_forward.11} parent=83 // pred_fallthru
          _
      $region84: #{swin_forward.11} parent=5 // pred_fallthru
        _
      %p1754 = scmp.le.s32.totalorder 2, %s25
      // Predicated region
      $region89: #{swin_forward.11} parent=5 // pred_check
        %p1755 = pneg %p1754
      $region90: #{swin_forward.11} parent=5 // pred_check_branch
        %1757 = sbr.rel (%p1755) target = $region92
      $region91: #{swin_forward.11} parent=5 // pred_region
        %s1758 = ssub.s32 %s25, 2
        // Predicated region
        $region93: #{swin_forward.11} parent=91 // pred_check
          %p1759 = pneg %p411
        $region94: #{swin_forward.11} parent=91 // pred_check_branch
          %1761 = sbr.rel (%p1759) target = $region96
        $region95: #{swin_forward.11} parent=91 // pred_region
          %s1762 = sand.u32 %s396, 1
          %s1763 = scalar_lea.sflag [#allocation3], %s1762
          %s1764 = sand.u32 %s396, 1
          %s1765 = smul.addr %s1764, 16
          %s1766 = scalar_lea.vmem [#allocation2], %s1765
          %1767 = dma.done %s1763, 256
        $region96: #{swin_forward.11} parent=91 // pred_fallthru
          _
      $region92: #{swin_forward.11} parent=5 // pred_fallthru
        _
    $region6: #{swin_forward.11} parent=1 // loop_footer
      %s29 = sadd.s32 1, %s25
    $region7: #{swin_forward.11} parent=1 // loop_footer_branch
      %24 = sbr.rel target = $region3
    $region8: #{swin_forward.11} parent=1 // loop_exit
      _
    %1768 = vsyncpa [#allocation3], 1
    %s1769 = scalar_lea.sflag [#allocation3], 1
    %1770 = vsyncpa %s1769, 1

</llo_original>
